<compile_context>
chip_gen: v6e
topology: v6e:2x2x1
jax: 0.10.0
libtpu: 0.0.40
codegen_flags: <defaults>
</compile_context>

<pallas_src>
import functools

import numpy as np
import jax
import jax.numpy as jnp
from jax import lax
from jax.experimental import pallas as pl
from jax.experimental.pallas import tpu as pltpu


def _round_up(n, m):
    return ((n + m - 1) // m) * m


# ------------------------------ fused kernel --------------------------------

def _fused_kernel(x_ref, masks_ref, ws_ref, bs_ref, w1_ref, b1_ref,
                  w2_ref, b2_ref, wp_ref, bp_ref, labels_ref,
                  logits_ref, loss_ref, *, B, H, W, num_classes, eps):
    HW = H * W
    M = B * HW

    # ---- stem: one (M, K0) x (K0, cpad) bf16 MXU matmul on wrapper-built im2col ----
    h1 = jnp.dot(x_ref[...], ws_ref[...], preferred_element_type=jnp.float32)
    h1 = jnp.maximum(h1 + bs_ref[...], 0.0)                       # BN bias + ReLU (f32)

    # ---- BasicBlock 3x3 convs: in-kernel im2col (roll + border mask), one deep dot ----
    def conv3x3(act, w_ref, b_ref, residual=None):
        taps = []
        for oy in (-1, 0, 1):                                     # fully unrolled 9 taps
            for ox in (-1, 0, 1):
                t = (oy + 1) * 3 + (ox + 1)
                d = oy * W + ox
                shifted = act if d == 0 else pltpu.roll(act, (-d) % M, 0)
                # (M,1) f32 mask zeroes out-of-image rows (incl. cross-image wrap).
                taps.append((shifted * masks_ref[t]).astype(jnp.bfloat16))
        im2col = jnp.concatenate(taps, axis=-1)                   # (M, 9*cpad) bf16
        acc = jnp.dot(im2col, w_ref[...], preferred_element_type=jnp.float32)
        acc = acc + b_ref[...]                                    # BN bias (scale folded)
        if residual is not None:
            acc = acc + residual
        return jnp.maximum(acc, 0.0)                              # ReLU (f32 epilogue)

    h2 = conv3x3(h1, w1_ref, b1_ref)
    h3 = conv3x3(h2, w2_ref, b2_ref, residual=h1)

    # ---- global average pool (per image; static aligned slices, B is small) ----
    inv_hw = 1.0 / HW
    rows = []
    for b in range(B):
        sl = h3[b * HW:(b + 1) * HW, :]
        rows.append(jnp.sum(sl, axis=0, keepdims=True) * inv_hw)
    pooled = jnp.concatenate(rows, axis=0)                        # (B, cpad) f32

    # ---- head: Dropout(p=0.5) is identity in eval mode; Linear + smoothed CE ----
    # TODO(synk): training-mode dropout RNG (parity with torch) is not implemented.
    logits = jnp.dot(pooled.astype(jnp.bfloat16), wp_ref[...],
                     preferred_element_type=jnp.float32) + bp_ref[...]   # (B, ncpad)
    logits_ref[...] = logits

    ncpad = logits.shape[-1]
    class_ids = lax.broadcasted_iota(jnp.int32, (B, ncpad), 1)
    class_mask = class_ids < num_classes                          # drop padded classes
    onehot = (class_ids == labels_ref[...]).astype(jnp.float32)   # vectorized one-hot

    masked_logits = jnp.where(class_mask, logits, jnp.float32(-1e30))
    m = jnp.max(masked_logits, axis=-1, keepdims=True)
    shifted = masked_logits - m
    lse = jnp.log(jnp.sum(jnp.exp(shifted), axis=-1, keepdims=True))
    logp = shifted - lse

    # CrossEntropyLoss(label_smoothing=eps), mean reduction over the batch.
    q = (1.0 - eps) * onehot + (eps / num_classes) * class_mask.astype(jnp.float32)
    per_example = -jnp.sum(q * logp, axis=-1, keepdims=True)      # (B, 1)
    loss_ref[...] = jnp.mean(per_example, axis=0, keepdims=True)  # (1, 1)


# ------------------------------- JAX wrappers --------------------------------

def _build_tap_masks(H, W, B):
    """(9, B*H*W, 1) f32 validity masks for the 3x3 taps (zero pad at image border)."""
    h = np.arange(H)[:, None]
    w = np.arange(W)[None, :]
    masks = []
    for oy in (-1, 0, 1):
        for ox in (-1, 0, 1):
            m = (h + oy >= 0) & (h + oy < H) & (w + ox >= 0) & (w + ox < W)
            masks.append(m.reshape(H * W, 1))
    m = np.stack(masks, axis=0).astype(np.float32)                # (9, HW, 1)
    return jnp.asarray(np.tile(m, (1, B, 1)))                     # tiled per image


def _prep_block_weight(w_oihw, bn_scale, cpad):
    """torch (Cout, Cin, 3, 3) -> (9*cpad, cpad) bf16, BN scale folded, tap-major K."""
    cout, cin, kh, kw = w_oihw.shape
    w = jnp.transpose(w_oihw, (2, 3, 1, 0)).reshape(kh * kw, cin, cout)
    w = w * bn_scale.reshape(1, 1, cout)
    w = jnp.pad(w, ((0, 0), (0, cpad - cin), (0, cpad - cout)))
    return w.reshape(kh * kw * cpad, cpad).astype(jnp.bfloat16)


def _prep_stem_weight(w_oihw, bn_scale, kpad, cpad):
    """torch (Cout, Cin, 3, 3) -> (kpad, cpad) bf16 matching wrapper im2col K layout."""
    cout, cin, kh, kw = w_oihw.shape
    w = jnp.transpose(w_oihw, (2, 3, 1, 0)).reshape(kh * kw * cin, cout)
    w = w * bn_scale.reshape(1, cout)
    w = jnp.pad(w, ((0, kpad - kh * kw * cin), (0, cpad - cout)))
    return w.astype(jnp.bfloat16)


def _prep_bias(bias, cpad):
    b = bias.reshape(1, -1).astype(jnp.float32)
    return jnp.pad(b, ((0, 0), (0, cpad - b.shape[1])))


def _forward_impl(x_nchw, labels, params):
    """Mirrors ResNetPredictor.forward (single_label_classification, eval mode)."""
    B, Cin, H, W = x_nchw.shape
    C = params["w_stem"].shape[0]            # resnet.out_channels
    NC = params["w_pred"].shape[0]           # num_classes
    HW = H * W
    cpad = _round_up(C, 128)
    ncpad = _round_up(NC, 128)
    k0 = 9 * Cin
    k0pad = _round_up(k0, 128)

    # Stem im2col built once in XLA (tiny), lane-dense K padded to 128, bf16.
    x_nhwc = jnp.transpose(x_nchw, (0, 2, 3, 1)).astype(jnp.float32)
    xp = jnp.pad(x_nhwc, ((0, 0), (1, 1), (1, 1), (0, 0)))
    patches = [xp[:, 1 + oy:1 + oy + H, 1 + ox:1 + ox + W, :]
               for oy in (-1, 0, 1) for ox in (-1, 0, 1)]
    x_i2c = jnp.concatenate(patches, axis=-1).reshape(B * HW, k0)
    x_i2c = jnp.pad(x_i2c, ((0, 0), (0, k0pad - k0))).astype(jnp.bfloat16)

    masks = _build_tap_masks(H, W, B)
    ws = _prep_stem_weight(params["w_stem"], params["s_stem"], k0pad, cpad)
    bs = _prep_bias(params["b_stem"], cpad)
    w1 = _prep_block_weight(params["w_b1"], params["s_b1"], cpad)
    b1 = _prep_bias(params["b_b1"], cpad)
    w2 = _prep_block_weight(params["w_b2"], params["s_b2"], cpad)
    b2 = _prep_bias(params["b_b2"], cpad)
    wp = jnp.pad(jnp.transpose(params["w_pred"]),
                 ((0, cpad - C), (0, ncpad - NC))).astype(jnp.bfloat16)
    bp = _prep_bias(params["b_pred"], ncpad)
    lab = labels.reshape(B, 1).astype(jnp.int32)

    vmem = pl.BlockSpec(memory_space=pltpu.MemorySpace.VMEM)
    logits_pad, loss = pl.pallas_call(
        functools.partial(_fused_kernel, B=B, H=H, W=W, num_classes=NC, eps=0.1),
        out_shape=(jax.ShapeDtypeStruct((B, ncpad), jnp.float32),
                   jax.ShapeDtypeStruct((1, 1), jnp.float32)),
        in_specs=[vmem] * 11,
        out_specs=(vmem, vmem),
        compiler_params=pltpu.CompilerParams(vmem_limit_bytes=16 * 1024 * 1024),
    )(x_i2c, masks, ws, bs, w1, b1, w2, b2, wp, bp, lab)
    return logits_pad[:, :NC], loss[0, 0]


resnet_predictor_forward = jax.jit(_forward_impl)


# ---------------------------------- main ------------------------------------

if __name__ == "__main__":
    B, Cin, H, W = 2, 4, 16, 16
    C = 16          # resnet.out_channels
    NC = 8          # num_classes

    key = jax.random.PRNGKey(0)
    ks = jax.random.split(key, 12)
    x = jax.random.normal(ks[0], (B, Cin, H, W), jnp.float32)
    labels = jax.random.randint(ks[1], (B,), 0, NC, dtype=jnp.int32)

    def bn_params(kg, kb, c):
        gamma = 1.0 + 0.1 * jax.random.normal(kg, (c,), jnp.float32)
        beta = 0.1 * jax.random.normal(kb, (c,), jnp.float32)
        running_mean = jnp.zeros((c,), jnp.float32)
        running_var = jnp.ones((c,), jnp.float32)
        scale = gamma / jnp.sqrt(running_var + 1e-5)
        bias = beta - running_mean * scale
        return scale, bias

    s_stem, b_stem = bn_params(ks[3], ks[4], C)
    s_b1, b_b1 = bn_params(ks[6], ks[7], C)
    s_b2, b_b2 = bn_params(ks[9], ks[10], C)

    params = {
        "w_stem": 0.1 * jax.random.normal(ks[2], (C, Cin, 3, 3), jnp.float32),
        "s_stem": s_stem, "b_stem": b_stem,
        "w_b1": 0.1 * jax.random.normal(ks[5], (C, C, 3, 3), jnp.float32),
        "s_b1": s_b1, "b_b1": b_b1,
        "w_b2": 0.1 * jax.random.normal(ks[8], (C, C, 3, 3), jnp.float32),
        "s_b2": s_b2, "b_b2": b_b2,
        "w_pred": 0.1 * jax.random.normal(ks[11], (NC, C), jnp.float32),
        "b_pred": jnp.zeros((NC,), jnp.float32),
    }

    logits, loss = resnet_predictor_forward(x, labels, params)
    jax.block_until_ready((logits, loss))
    assert logits.shape == (B, NC) and loss.shape == ()
    assert bool(jnp.all(jnp.isfinite(logits))) and bool(jnp.isfinite(loss))
    print("KERNEL_OK")
</pallas_src>

<mosaic_0001>
module attributes {stable_mosaic.version = 11 : i64} {
  func.func @_fused_kernel(%arg0: memref<512x128xbf16, #tpu.memory_space<vmem>>, %arg1: memref<9x512x1xf32, #tpu.memory_space<vmem>>, %arg2: memref<128x128xbf16, #tpu.memory_space<vmem>>, %arg3: memref<1x128xf32, #tpu.memory_space<vmem>>, %arg4: memref<1152x128xbf16, #tpu.memory_space<vmem>>, %arg5: memref<1x128xf32, #tpu.memory_space<vmem>>, %arg6: memref<1152x128xbf16, #tpu.memory_space<vmem>>, %arg7: memref<1x128xf32, #tpu.memory_space<vmem>>, %arg8: memref<128x128xbf16, #tpu.memory_space<vmem>>, %arg9: memref<1x128xf32, #tpu.memory_space<vmem>>, %arg10: memref<2x1xi32, #tpu.memory_space<vmem>>, %arg11: memref<2x128xf32, #tpu.memory_space<vmem>>, %arg12: memref<1x1xf32, #tpu.memory_space<vmem>>) attributes {dimension_semantics = [], scalar_prefetch = 0 : i64, scratch_operands = 0 : i64, tpu.core_type = #tpu.core_type<tc>} {
    %c0 = arith.constant 0 : index
    %c0_0 = arith.constant 0 : index
    %0 = vector.load %arg0[%c0, %c0_0] : memref<512x128xbf16, #tpu.memory_space<vmem>>, vector<512x128xbf16>
    %c0_1 = arith.constant 0 : index
    %c0_2 = arith.constant 0 : index
    %1 = vector.load %arg2[%c0_1, %c0_2] : memref<128x128xbf16, #tpu.memory_space<vmem>>, vector<128x128xbf16>
    %cst = arith.constant dense<0.000000e+00> : vector<512x128xf32>
    %2 = tpu.matmul %0, %1, %cst {dimension_numbers = #tpu.dot_dimension_numbers<[1], [0], [0], [1], [0, 0, 1, 1], [], []>} : vector<512x128xbf16>, vector<128x128xbf16>, vector<512x128xf32> -> vector<512x128xf32>
    %c0_3 = arith.constant 0 : index
    %c0_4 = arith.constant 0 : index
    %3 = vector.load %arg3[%c0_3, %c0_4] : memref<1x128xf32, #tpu.memory_space<vmem>>, vector<1x128xf32>
    %4 = vector.broadcast %3 : vector<1x128xf32> to vector<512x128xf32>
    %5 = arith.addf %2, %4 : vector<512x128xf32>
    %cst_5 = arith.constant 0.000000e+00 : f32
    %6 = vector.broadcast %cst_5 : f32 to vector<512x128xf32>
    %7 = arith.maximumf %5, %6 : vector<512x128xf32>
    %c17_i32 = arith.constant 17 : i32
    %8 = tpu.dynamic_rotate %7 by %c17_i32 dim 0 : vector<512x128xf32>, i32 -> vector<512x128xf32>
    %c0_6 = arith.constant 0 : index
    %c0_7 = arith.constant 0 : index
    %c0_8 = arith.constant 0 : index
    %9 = vector.load %arg1[%c0_6, %c0_7, %c0_8] : memref<9x512x1xf32, #tpu.memory_space<vmem>>, vector<1x512x1xf32>
    %10 = vector.shape_cast %9 : vector<1x512x1xf32> to vector<512x1xf32>
    %11 = vector.broadcast %10 : vector<512x1xf32> to vector<512x128xf32>
    %12 = arith.mulf %8, %11 : vector<512x128xf32>
    %13 = arith.truncf %12 : vector<512x128xf32> to vector<512x128xbf16>
    %c16_i32 = arith.constant 16 : i32
    %14 = tpu.dynamic_rotate %7 by %c16_i32 dim 0 : vector<512x128xf32>, i32 -> vector<512x128xf32>
    %c1 = arith.constant 1 : index
    %c0_9 = arith.constant 0 : index
    %c0_10 = arith.constant 0 : index
    %15 = vector.load %arg1[%c1, %c0_9, %c0_10] : memref<9x512x1xf32, #tpu.memory_space<vmem>>, vector<1x512x1xf32>
    %16 = vector.shape_cast %15 : vector<1x512x1xf32> to vector<512x1xf32>
    %17 = vector.broadcast %16 : vector<512x1xf32> to vector<512x128xf32>
    %18 = arith.mulf %14, %17 : vector<512x128xf32>
    %19 = arith.truncf %18 : vector<512x128xf32> to vector<512x128xbf16>
    %c15_i32 = arith.constant 15 : i32
    %20 = tpu.dynamic_rotate %7 by %c15_i32 dim 0 : vector<512x128xf32>, i32 -> vector<512x128xf32>
    %c2 = arith.constant 2 : index
    %c0_11 = arith.constant 0 : index
    %c0_12 = arith.constant 0 : index
    %21 = vector.load %arg1[%c2, %c0_11, %c0_12] : memref<9x512x1xf32, #tpu.memory_space<vmem>>, vector<1x512x1xf32>
    %22 = vector.shape_cast %21 : vector<1x512x1xf32> to vector<512x1xf32>
    %23 = vector.broadcast %22 : vector<512x1xf32> to vector<512x128xf32>
    %24 = arith.mulf %20, %23 : vector<512x128xf32>
    %25 = arith.truncf %24 : vector<512x128xf32> to vector<512x128xbf16>
    %c1_i32 = arith.constant 1 : i32
    %26 = tpu.dynamic_rotate %7 by %c1_i32 dim 0 : vector<512x128xf32>, i32 -> vector<512x128xf32>
    %c3 = arith.constant 3 : index
    %c0_13 = arith.constant 0 : index
    %c0_14 = arith.constant 0 : index
    %27 = vector.load %arg1[%c3, %c0_13, %c0_14] : memref<9x512x1xf32, #tpu.memory_space<vmem>>, vector<1x512x1xf32>
    %28 = vector.shape_cast %27 : vector<1x512x1xf32> to vector<512x1xf32>
    %29 = vector.broadcast %28 : vector<512x1xf32> to vector<512x128xf32>
    %30 = arith.mulf %26, %29 : vector<512x128xf32>
    %31 = arith.truncf %30 : vector<512x128xf32> to vector<512x128xbf16>
    %c4 = arith.constant 4 : index
    %c0_15 = arith.constant 0 : index
    %c0_16 = arith.constant 0 : index
    %32 = vector.load %arg1[%c4, %c0_15, %c0_16] : memref<9x512x1xf32, #tpu.memory_space<vmem>>, vector<1x512x1xf32>
    %33 = vector.shape_cast %32 : vector<1x512x1xf32> to vector<512x1xf32>
    %34 = vector.broadcast %33 : vector<512x1xf32> to vector<512x128xf32>
    %35 = arith.mulf %7, %34 : vector<512x128xf32>
    %36 = arith.truncf %35 : vector<512x128xf32> to vector<512x128xbf16>
    %c511_i32 = arith.constant 511 : i32
    %37 = tpu.dynamic_rotate %7 by %c511_i32 dim 0 : vector<512x128xf32>, i32 -> vector<512x128xf32>
    %c5 = arith.constant 5 : index
    %c0_17 = arith.constant 0 : index
    %c0_18 = arith.constant 0 : index
    %38 = vector.load %arg1[%c5, %c0_17, %c0_18] : memref<9x512x1xf32, #tpu.memory_space<vmem>>, vector<1x512x1xf32>
    %39 = vector.shape_cast %38 : vector<1x512x1xf32> to vector<512x1xf32>
    %40 = vector.broadcast %39 : vector<512x1xf32> to vector<512x128xf32>
    %41 = arith.mulf %37, %40 : vector<512x128xf32>
    %42 = arith.truncf %41 : vector<512x128xf32> to vector<512x128xbf16>
    %c497_i32 = arith.constant 497 : i32
    %43 = tpu.dynamic_rotate %7 by %c497_i32 dim 0 : vector<512x128xf32>, i32 -> vector<512x128xf32>
    %c6 = arith.constant 6 : index
    %c0_19 = arith.constant 0 : index
    %c0_20 = arith.constant 0 : index
    %44 = vector.load %arg1[%c6, %c0_19, %c0_20] : memref<9x512x1xf32, #tpu.memory_space<vmem>>, vector<1x512x1xf32>
    %45 = vector.shape_cast %44 : vector<1x512x1xf32> to vector<512x1xf32>
    %46 = vector.broadcast %45 : vector<512x1xf32> to vector<512x128xf32>
    %47 = arith.mulf %43, %46 : vector<512x128xf32>
    %48 = arith.truncf %47 : vector<512x128xf32> to vector<512x128xbf16>
    %c496_i32 = arith.constant 496 : i32
    %49 = tpu.dynamic_rotate %7 by %c496_i32 dim 0 : vector<512x128xf32>, i32 -> vector<512x128xf32>
    %c7 = arith.constant 7 : index
    %c0_21 = arith.constant 0 : index
    %c0_22 = arith.constant 0 : index
    %50 = vector.load %arg1[%c7, %c0_21, %c0_22] : memref<9x512x1xf32, #tpu.memory_space<vmem>>, vector<1x512x1xf32>
    %51 = vector.shape_cast %50 : vector<1x512x1xf32> to vector<512x1xf32>
    %52 = vector.broadcast %51 : vector<512x1xf32> to vector<512x128xf32>
    %53 = arith.mulf %49, %52 : vector<512x128xf32>
    %54 = arith.truncf %53 : vector<512x128xf32> to vector<512x128xbf16>
    %c495_i32 = arith.constant 495 : i32
    %55 = tpu.dynamic_rotate %7 by %c495_i32 dim 0 : vector<512x128xf32>, i32 -> vector<512x128xf32>
    %c8 = arith.constant 8 : index
    %c0_23 = arith.constant 0 : index
    %c0_24 = arith.constant 0 : index
    %56 = vector.load %arg1[%c8, %c0_23, %c0_24] : memref<9x512x1xf32, #tpu.memory_space<vmem>>, vector<1x512x1xf32>
    %57 = vector.shape_cast %56 : vector<1x512x1xf32> to vector<512x1xf32>
    %58 = vector.broadcast %57 : vector<512x1xf32> to vector<512x128xf32>
    %59 = arith.mulf %55, %58 : vector<512x128xf32>
    %60 = arith.truncf %59 : vector<512x128xf32> to vector<512x128xbf16>
    %61 = tpu.concatenate %13, %19, %25, %31, %36, %42, %48, %54, %60 in 1 : vector<512x128xbf16>, vector<512x128xbf16>, vector<512x128xbf16>, vector<512x128xbf16>, vector<512x128xbf16>, vector<512x128xbf16>, vector<512x128xbf16>, vector<512x128xbf16>, vector<512x128xbf16> -> vector<512x1152xbf16>
    %c0_25 = arith.constant 0 : index
    %c0_26 = arith.constant 0 : index
    %62 = vector.load %arg4[%c0_25, %c0_26] : memref<1152x128xbf16, #tpu.memory_space<vmem>>, vector<1152x128xbf16>
    %cst_27 = arith.constant dense<0.000000e+00> : vector<512x128xf32>
    %63 = tpu.matmul %61, %62, %cst_27 {dimension_numbers = #tpu.dot_dimension_numbers<[1], [0], [0], [1], [0, 0, 1, 1], [], []>} : vector<512x1152xbf16>, vector<1152x128xbf16>, vector<512x128xf32> -> vector<512x128xf32>
    %c0_28 = arith.constant 0 : index
    %c0_29 = arith.constant 0 : index
    %64 = vector.load %arg5[%c0_28, %c0_29] : memref<1x128xf32, #tpu.memory_space<vmem>>, vector<1x128xf32>
    %65 = vector.broadcast %64 : vector<1x128xf32> to vector<512x128xf32>
    %66 = arith.addf %63, %65 : vector<512x128xf32>
    %cst_30 = arith.constant 0.000000e+00 : f32
    %67 = vector.broadcast %cst_30 : f32 to vector<512x128xf32>
    %68 = arith.maximumf %66, %67 : vector<512x128xf32>
    %c17_i32_31 = arith.constant 17 : i32
    %69 = tpu.dynamic_rotate %68 by %c17_i32_31 dim 0 : vector<512x128xf32>, i32 -> vector<512x128xf32>
    %c0_32 = arith.constant 0 : index
    %c0_33 = arith.constant 0 : index
    %c0_34 = arith.constant 0 : index
    %70 = vector.load %arg1[%c0_32, %c0_33, %c0_34] : memref<9x512x1xf32, #tpu.memory_space<vmem>>, vector<1x512x1xf32>
    %71 = vector.shape_cast %70 : vector<1x512x1xf32> to vector<512x1xf32>
    %72 = vector.broadcast %71 : vector<512x1xf32> to vector<512x128xf32>
    %73 = arith.mulf %69, %72 : vector<512x128xf32>
    %74 = arith.truncf %73 : vector<512x128xf32> to vector<512x128xbf16>
    %c16_i32_35 = arith.constant 16 : i32
    %75 = tpu.dynamic_rotate %68 by %c16_i32_35 dim 0 : vector<512x128xf32>, i32 -> vector<512x128xf32>
    %c1_36 = arith.constant 1 : index
    %c0_37 = arith.constant 0 : index
    %c0_38 = arith.constant 0 : index
    %76 = vector.load %arg1[%c1_36, %c0_37, %c0_38] : memref<9x512x1xf32, #tpu.memory_space<vmem>>, vector<1x512x1xf32>
    %77 = vector.shape_cast %76 : vector<1x512x1xf32> to vector<512x1xf32>
    %78 = vector.broadcast %77 : vector<512x1xf32> to vector<512x128xf32>
    %79 = arith.mulf %75, %78 : vector<512x128xf32>
    %80 = arith.truncf %79 : vector<512x128xf32> to vector<512x128xbf16>
    %c15_i32_39 = arith.constant 15 : i32
    %81 = tpu.dynamic_rotate %68 by %c15_i32_39 dim 0 : vector<512x128xf32>, i32 -> vector<512x128xf32>
    %c2_40 = arith.constant 2 : index
    %c0_41 = arith.constant 0 : index
    %c0_42 = arith.constant 0 : index
    %82 = vector.load %arg1[%c2_40, %c0_41, %c0_42] : memref<9x512x1xf32, #tpu.memory_space<vmem>>, vector<1x512x1xf32>
    %83 = vector.shape_cast %82 : vector<1x512x1xf32> to vector<512x1xf32>
    %84 = vector.broadcast %83 : vector<512x1xf32> to vector<512x128xf32>
    %85 = arith.mulf %81, %84 : vector<512x128xf32>
    %86 = arith.truncf %85 : vector<512x128xf32> to vector<512x128xbf16>
    %c1_i32_43 = arith.constant 1 : i32
    %87 = tpu.dynamic_rotate %68 by %c1_i32_43 dim 0 : vector<512x128xf32>, i32 -> vector<512x128xf32>
    %c3_44 = arith.constant 3 : index
    %c0_45 = arith.constant 0 : index
    %c0_46 = arith.constant 0 : index
    %88 = vector.load %arg1[%c3_44, %c0_45, %c0_46] : memref<9x512x1xf32, #tpu.memory_space<vmem>>, vector<1x512x1xf32>
    %89 = vector.shape_cast %88 : vector<1x512x1xf32> to vector<512x1xf32>
    %90 = vector.broadcast %89 : vector<512x1xf32> to vector<512x128xf32>
    %91 = arith.mulf %87, %90 : vector<512x128xf32>
    %92 = arith.truncf %91 : vector<512x128xf32> to vector<512x128xbf16>
    %c4_47 = arith.constant 4 : index
    %c0_48 = arith.constant 0 : index
    %c0_49 = arith.constant 0 : index
    %93 = vector.load %arg1[%c4_47, %c0_48, %c0_49] : memref<9x512x1xf32, #tpu.memory_space<vmem>>, vector<1x512x1xf32>
    %94 = vector.shape_cast %93 : vector<1x512x1xf32> to vector<512x1xf32>
    %95 = vector.broadcast %94 : vector<512x1xf32> to vector<512x128xf32>
    %96 = arith.mulf %68, %95 : vector<512x128xf32>
    %97 = arith.truncf %96 : vector<512x128xf32> to vector<512x128xbf16>
    %c511_i32_50 = arith.constant 511 : i32
    %98 = tpu.dynamic_rotate %68 by %c511_i32_50 dim 0 : vector<512x128xf32>, i32 -> vector<512x128xf32>
    %c5_51 = arith.constant 5 : index
    %c0_52 = arith.constant 0 : index
    %c0_53 = arith.constant 0 : index
    %99 = vector.load %arg1[%c5_51, %c0_52, %c0_53] : memref<9x512x1xf32, #tpu.memory_space<vmem>>, vector<1x512x1xf32>
    %100 = vector.shape_cast %99 : vector<1x512x1xf32> to vector<512x1xf32>
    %101 = vector.broadcast %100 : vector<512x1xf32> to vector<512x128xf32>
    %102 = arith.mulf %98, %101 : vector<512x128xf32>
    %103 = arith.truncf %102 : vector<512x128xf32> to vector<512x128xbf16>
    %c497_i32_54 = arith.constant 497 : i32
    %104 = tpu.dynamic_rotate %68 by %c497_i32_54 dim 0 : vector<512x128xf32>, i32 -> vector<512x128xf32>
    %c6_55 = arith.constant 6 : index
    %c0_56 = arith.constant 0 : index
    %c0_57 = arith.constant 0 : index
    %105 = vector.load %arg1[%c6_55, %c0_56, %c0_57] : memref<9x512x1xf32, #tpu.memory_space<vmem>>, vector<1x512x1xf32>
    %106 = vector.shape_cast %105 : vector<1x512x1xf32> to vector<512x1xf32>
    %107 = vector.broadcast %106 : vector<512x1xf32> to vector<512x128xf32>
    %108 = arith.mulf %104, %107 : vector<512x128xf32>
    %109 = arith.truncf %108 : vector<512x128xf32> to vector<512x128xbf16>
    %c496_i32_58 = arith.constant 496 : i32
    %110 = tpu.dynamic_rotate %68 by %c496_i32_58 dim 0 : vector<512x128xf32>, i32 -> vector<512x128xf32>
    %c7_59 = arith.constant 7 : index
    %c0_60 = arith.constant 0 : index
    %c0_61 = arith.constant 0 : index
    %111 = vector.load %arg1[%c7_59, %c0_60, %c0_61] : memref<9x512x1xf32, #tpu.memory_space<vmem>>, vector<1x512x1xf32>
    %112 = vector.shape_cast %111 : vector<1x512x1xf32> to vector<512x1xf32>
    %113 = vector.broadcast %112 : vector<512x1xf32> to vector<512x128xf32>
    %114 = arith.mulf %110, %113 : vector<512x128xf32>
    %115 = arith.truncf %114 : vector<512x128xf32> to vector<512x128xbf16>
    %c495_i32_62 = arith.constant 495 : i32
    %116 = tpu.dynamic_rotate %68 by %c495_i32_62 dim 0 : vector<512x128xf32>, i32 -> vector<512x128xf32>
    %c8_63 = arith.constant 8 : index
    %c0_64 = arith.constant 0 : index
    %c0_65 = arith.constant 0 : index
    %117 = vector.load %arg1[%c8_63, %c0_64, %c0_65] : memref<9x512x1xf32, #tpu.memory_space<vmem>>, vector<1x512x1xf32>
    %118 = vector.shape_cast %117 : vector<1x512x1xf32> to vector<512x1xf32>
    %119 = vector.broadcast %118 : vector<512x1xf32> to vector<512x128xf32>
    %120 = arith.mulf %116, %119 : vector<512x128xf32>
    %121 = arith.truncf %120 : vector<512x128xf32> to vector<512x128xbf16>
    %122 = tpu.concatenate %74, %80, %86, %92, %97, %103, %109, %115, %121 in 1 : vector<512x128xbf16>, vector<512x128xbf16>, vector<512x128xbf16>, vector<512x128xbf16>, vector<512x128xbf16>, vector<512x128xbf16>, vector<512x128xbf16>, vector<512x128xbf16>, vector<512x128xbf16> -> vector<512x1152xbf16>
    %c0_66 = arith.constant 0 : index
    %c0_67 = arith.constant 0 : index
    %123 = vector.load %arg6[%c0_66, %c0_67] : memref<1152x128xbf16, #tpu.memory_space<vmem>>, vector<1152x128xbf16>
    %cst_68 = arith.constant dense<0.000000e+00> : vector<512x128xf32>
    %124 = tpu.matmul %122, %123, %cst_68 {dimension_numbers = #tpu.dot_dimension_numbers<[1], [0], [0], [1], [0, 0, 1, 1], [], []>} : vector<512x1152xbf16>, vector<1152x128xbf16>, vector<512x128xf32> -> vector<512x128xf32>
    %c0_69 = arith.constant 0 : index
    %c0_70 = arith.constant 0 : index
    %125 = vector.load %arg7[%c0_69, %c0_70] : memref<1x128xf32, #tpu.memory_space<vmem>>, vector<1x128xf32>
    %126 = vector.broadcast %125 : vector<1x128xf32> to vector<512x128xf32>
    %127 = arith.addf %124, %126 : vector<512x128xf32>
    %128 = arith.addf %127, %7 : vector<512x128xf32>
    %cst_71 = arith.constant 0.000000e+00 : f32
    %129 = vector.broadcast %cst_71 : f32 to vector<512x128xf32>
    %130 = arith.maximumf %128, %129 : vector<512x128xf32>
    %131 = vector.extract_strided_slice %130 {offsets = [0, 0], sizes = [256, 128], strides = [1, 1]} : vector<512x128xf32> to vector<256x128xf32>
    %cst_72 = arith.constant dense<0.000000e+00> : vector<128xf32>
    %132 = vector.multi_reduction <add>, %131, %cst_72 [0] : vector<256x128xf32> to vector<128xf32>
    %133 = vector.shape_cast %132 : vector<128xf32> to vector<1x128xf32>
    %cst_73 = arith.constant 3.906250e-03 : f32
    %134 = vector.broadcast %cst_73 : f32 to vector<1x128xf32>
    %135 = arith.mulf %133, %134 : vector<1x128xf32>
    %136 = vector.extract_strided_slice %130 {offsets = [256, 0], sizes = [256, 128], strides = [1, 1]} : vector<512x128xf32> to vector<256x128xf32>
    %cst_74 = arith.constant dense<0.000000e+00> : vector<128xf32>
    %137 = vector.multi_reduction <add>, %136, %cst_74 [0] : vector<256x128xf32> to vector<128xf32>
    %138 = vector.shape_cast %137 : vector<128xf32> to vector<1x128xf32>
    %cst_75 = arith.constant 3.906250e-03 : f32
    %139 = vector.broadcast %cst_75 : f32 to vector<1x128xf32>
    %140 = arith.mulf %138, %139 : vector<1x128xf32>
    %141 = tpu.concatenate %135, %140 in 0 : vector<1x128xf32>, vector<1x128xf32> -> vector<2x128xf32>
    %142 = arith.truncf %141 : vector<2x128xf32> to vector<2x128xbf16>
    %c0_76 = arith.constant 0 : index
    %c0_77 = arith.constant 0 : index
    %143 = vector.load %arg8[%c0_76, %c0_77] : memref<128x128xbf16, #tpu.memory_space<vmem>>, vector<128x128xbf16>
    %cst_78 = arith.constant dense<0.000000e+00> : vector<2x128xf32>
    %144 = tpu.matmul %142, %143, %cst_78 {dimension_numbers = #tpu.dot_dimension_numbers<[1], [0], [0], [1], [0, 0, 1, 1], [], []>} : vector<2x128xbf16>, vector<128x128xbf16>, vector<2x128xf32> -> vector<2x128xf32>
    %c0_79 = arith.constant 0 : index
    %c0_80 = arith.constant 0 : index
    %145 = vector.load %arg9[%c0_79, %c0_80] : memref<1x128xf32, #tpu.memory_space<vmem>>, vector<1x128xf32>
    %146 = vector.broadcast %145 : vector<1x128xf32> to vector<2x128xf32>
    %147 = arith.addf %144, %146 : vector<2x128xf32>
    %c0_81 = arith.constant 0 : index
    %c0_82 = arith.constant 0 : index
    %148 = vector.load %arg11[%c0_81, %c0_82] : memref<2x128xf32, #tpu.memory_space<vmem>>, vector<2x128xf32>
    tpu.vector_store %arg11[%c0_81, %c0_82], %147 {strides = array<i32>} : memref<2x128xf32, #tpu.memory_space<vmem>>, vector<2x128xf32>,
    %149 = tpu.iota {dimensions = array<i32: 1>} : vector<2x128xi32>
    %c8_i32 = arith.constant 8 : i32
    %150 = vector.broadcast %c8_i32 : i32 to vector<2x128xi32>
    %151 = arith.cmpi slt, %149, %150 : vector<2x128xi32>
    %c0_83 = arith.constant 0 : index
    %c0_84 = arith.constant 0 : index
    %152 = vector.load %arg10[%c0_83, %c0_84] : memref<2x1xi32, #tpu.memory_space<vmem>>, vector<2x1xi32>
    %153 = vector.broadcast %152 : vector<2x1xi32> to vector<2x128xi32>
    %154 = arith.cmpi eq, %149, %153 : vector<2x128xi32>
    %155 = arith.extui %154 : vector<2x128xi1> to vector<2x128xi32>
    %156 = arith.sitofp %155 : vector<2x128xi32> to vector<2x128xf32>
    %cst_85 = arith.constant -1.000000e+30 : f32
    %157 = vector.broadcast %cst_85 : f32 to vector<2x128xf32>
    %158 = arith.select %151, %147, %157 : vector<2x128xi1>, vector<2x128xf32>
    %cst_86 = arith.constant dense<0xFF800000> : vector<2xf32>
    %159 = vector.multi_reduction <maximumf>, %158, %cst_86 [1] : vector<2x128xf32> to vector<2xf32>
    %160 = vector.shape_cast %159 : vector<2xf32> to vector<2x1xf32>
    %161 = vector.broadcast %160 : vector<2x1xf32> to vector<2x128xf32>
    %162 = arith.subf %158, %161 : vector<2x128xf32>
    %163 = math.exp %162 : vector<2x128xf32>
    %cst_87 = arith.constant dense<0.000000e+00> : vector<2xf32>
    %164 = vector.multi_reduction <add>, %163, %cst_87 [1] : vector<2x128xf32> to vector<2xf32>
    %165 = vector.shape_cast %164 : vector<2xf32> to vector<2x1xf32>
    %166 = math.log %165 : vector<2x1xf32>
    %167 = vector.broadcast %166 : vector<2x1xf32> to vector<2x128xf32>
    %168 = arith.subf %162, %167 : vector<2x128xf32>
    %cst_88 = arith.constant 0.899999976 : f32
    %169 = vector.broadcast %cst_88 : f32 to vector<2x128xf32>
    %170 = arith.mulf %169, %156 : vector<2x128xf32>
    %171 = arith.extui %151 : vector<2x128xi1> to vector<2x128xi32>
    %172 = arith.sitofp %171 : vector<2x128xi32> to vector<2x128xf32>
    %cst_89 = arith.constant 1.250000e-02 : f32
    %173 = vector.broadcast %cst_89 : f32 to vector<2x128xf32>
    %174 = arith.mulf %173, %172 : vector<2x128xf32>
    %175 = arith.addf %170, %174 : vector<2x128xf32>
    %176 = arith.mulf %175, %168 : vector<2x128xf32>
    %cst_90 = arith.constant dense<0.000000e+00> : vector<2xf32>
    %177 = vector.multi_reduction <add>, %176, %cst_90 [1] : vector<2x128xf32> to vector<2xf32>
    %178 = vector.shape_cast %177 : vector<2xf32> to vector<2x1xf32>
    %cst_91 = arith.constant 0.000000e+00 : f32
    %179 = vector.broadcast %cst_91 : f32 to vector<2x1xf32>
    %180 = arith.subf %179, %178 : vector<2x1xf32>
    %cst_92 = arith.constant dense<0.000000e+00> : vector<1xf32>
    %181 = vector.multi_reduction <add>, %180, %cst_92 [0] : vector<2x1xf32> to vector<1xf32>
    %182 = vector.shape_cast %181 : vector<1xf32> to vector<1x1xf32>
    %cst_93 = arith.constant 2.000000e+00 : f32
    %183 = vector.broadcast %cst_93 : f32 to vector<1x1xf32>
    %184 = arith.divf %182, %183 : vector<1x1xf32>
    %c0_94 = arith.constant 0 : index
    %c0_95 = arith.constant 0 : index
    %185 = vector.load %arg12[%c0_94, %c0_95] : memref<1x1xf32, #tpu.memory_space<vmem>>, vector<1x1xf32>
    tpu.vector_store %arg12[%c0_94, %c0_95], %184 {strides = array<i32>} : memref<1x1xf32, #tpu.memory_space<vmem>>, vector<1x1xf32>,
    return
  }
}

</mosaic_0001>

<llo_original>
// kernel: _forward_impl.1
$region0: #{_forward_impl.1}
  #allocation0 [shape = 'u32[]', space=smem, size = 0x4, offset = 0x4, fixed_abs, tag = 'smem constant byte address 0x4 - core index']
  #allocation1 [shape = 'u32[144,128]{1,0:T(1,128)}', space=vmem, size = 0x12000, scoped, tag = 'internal scratch']
  %s0 = inlined_call_operand.vmem [shape: bf16[512,128], index: 0, kind: input, shape index: {}]
  %s1 = inlined_call_operand.vmem [shape: f32[9,512,1], index: 1, kind: input, shape index: {}]
  %s2 = inlined_call_operand.vmem [shape: bf16[128,128], index: 2, kind: input, shape index: {}]
  %s3 = inlined_call_operand.vmem [shape: f32[1,128], index: 3, kind: input, shape index: {}]
  %s4 = inlined_call_operand.vmem [shape: bf16[1152,128], index: 4, kind: input, shape index: {}]
  %s5 = inlined_call_operand.vmem [shape: f32[1,128], index: 5, kind: input, shape index: {}]
  %s6 = inlined_call_operand.vmem [shape: bf16[1152,128], index: 6, kind: input, shape index: {}]
  %s7 = inlined_call_operand.vmem [shape: f32[1,128], index: 7, kind: input, shape index: {}]
  %s8 = inlined_call_operand.vmem [shape: bf16[128,128], index: 8, kind: input, shape index: {}]
  %s9 = inlined_call_operand.vmem [shape: f32[1,128], index: 9, kind: input, shape index: {}]
  %s10 = inlined_call_operand.vmem [shape: s32[2,1], index: 10, kind: input, shape index: {}]
  %s11 = inlined_call_operand.hbm [shape: f32[2,128], index: 11, kind: output, shape index: {0}]
  %s12 = inlined_call_operand.hbm [shape: f32[1,1], index: 12, kind: output, shape index: {1}]
  %13 = xla_tuple %s11, %s12
  %s14 = sld [smem:[#allocation0]]
  $region62: #{_forward_impl.1} parent=0
    _
  %s16 = ssub.s32 1, %s14
  %s17 = scalar_select 0, %s16, %s14
  $region1: #{_forward_impl.1} parent=0
    #allocation2 [shape = 'u8[1024]{0}', space=vmem, size = 0x400, scoped, tag = 'output window, operand 0, single buffered']
    #allocation3 [shape = 's32[1]{0}', space=sflag, size = 0x4, scoped, tag = 'scoped memory for _forward_impl.1']
    #allocation4 [shape = 'u8[512]{0}', space=vmem, size = 0x400, scoped, tag = 'output window, operand 1, single buffered']
    #allocation5 [shape = 's32[1]{0}', space=sflag, size = 0x4, scoped, tag = 'scoped memory for _forward_impl.1']
    %18 = vsyncpa [#allocation3], 0
    %19 = vsyncpa [#allocation5], 0
    // Predicated region
    $region2: #{_forward_impl.1} parent=1 // pred_check
      _
    $region3: #{_forward_impl.1} parent=1 // pred_check_branch
      %21 = sbr.rel (0) target = $region5
    $region4: #{_forward_impl.1} parent=1 // pred_region
      _
    $region5: #{_forward_impl.1} parent=1 // pred_fallthru
      _
    // Predicated region
    $region6: #{_forward_impl.1} parent=1 // pred_check
      _
    $region7: #{_forward_impl.1} parent=1 // pred_check_branch
      %23 = sbr.rel (0) target = $region9
    $region8: #{_forward_impl.1} parent=1 // pred_region
      _
    $region9: #{_forward_impl.1} parent=1 // pred_fallthru
      _
    // Predicated region
    $region10: #{_forward_impl.1} parent=1 // pred_check
      _
    $region11: #{_forward_impl.1} parent=1 // pred_check_branch
      %25 = sbr.rel (0) target = $region13
    $region12: #{_forward_impl.1} parent=1 // pred_region
      _
    $region13: #{_forward_impl.1} parent=1 // pred_fallthru
      _
    // Predicated region
    $region14: #{_forward_impl.1} parent=1 // pred_check
      _
    $region15: #{_forward_impl.1} parent=1 // pred_check_branch
      %27 = sbr.rel (0) target = $region17
    $region16: #{_forward_impl.1} parent=1 // pred_region
      _
    $region17: #{_forward_impl.1} parent=1 // pred_fallthru
      _
    // Predicated region
    $region18: #{_forward_impl.1} parent=1 // pred_check
      _
    $region19: #{_forward_impl.1} parent=1 // pred_check_branch
      %29 = sbr.rel (0) target = $region21
    $region20: #{_forward_impl.1} parent=1 // pred_region
      _
    $region21: #{_forward_impl.1} parent=1 // pred_fallthru
      _
    // Predicated region
    $region22: #{_forward_impl.1} parent=1 // pred_check
      _
    $region23: #{_forward_impl.1} parent=1 // pred_check_branch
      %31 = sbr.rel (0) target = $region25
    $region24: #{_forward_impl.1} parent=1 // pred_region
      _
    $region25: #{_forward_impl.1} parent=1 // pred_fallthru
      _
    // Predicated region
    $region26: #{_forward_impl.1} parent=1 // pred_check
      _
    $region27: #{_forward_impl.1} parent=1 // pred_check_branch
      %33 = sbr.rel (0) target = $region29
    $region28: #{_forward_impl.1} parent=1 // pred_region
      _
    $region29: #{_forward_impl.1} parent=1 // pred_fallthru
      _
    // Predicated region
    $region30: #{_forward_impl.1} parent=1 // pred_check
      _
    $region31: #{_forward_impl.1} parent=1 // pred_check_branch
      %35 = sbr.rel (0) target = $region33
    $region32: #{_forward_impl.1} parent=1 // pred_region
      _
    $region33: #{_forward_impl.1} parent=1 // pred_fallthru
      _
    // Predicated region
    $region34: #{_forward_impl.1} parent=1 // pred_check
      _
    $region35: #{_forward_impl.1} parent=1 // pred_check_branch
      %37 = sbr.rel (0) target = $region37
    $region36: #{_forward_impl.1} parent=1 // pred_region
      _
    $region37: #{_forward_impl.1} parent=1 // pred_fallthru
      _
    // Predicated region
    $region38: #{_forward_impl.1} parent=1 // pred_check
      _
    $region39: #{_forward_impl.1} parent=1 // pred_check_branch
      %39 = sbr.rel (0) target = $region41
    $region40: #{_forward_impl.1} parent=1 // pred_region
      _
    $region41: #{_forward_impl.1} parent=1 // pred_fallthru
      _
    // Predicated region
    $region42: #{_forward_impl.1} parent=1 // pred_check
      _
    $region43: #{_forward_impl.1} parent=1 // pred_check_branch
      %41 = sbr.rel (0) target = $region45
    $region44: #{_forward_impl.1} parent=1 // pred_region
      _
    $region45: #{_forward_impl.1} parent=1 // pred_fallthru
      _
    %v43 = vld [vmem:[%s0] sm:$0xf]
    %v44 = vld [vmem:[%s0 + $0x4] sm:$0xf]
    %v45 = vld [vmem:[%s0 + $0x8] sm:$0xf]
    %v46 = vld [vmem:[%s0 + $0xc] sm:$0xf]
    %v47 = vld [vmem:[%s0 + $0x10] sm:$0xf]
    %v48 = vld [vmem:[%s0 + $0x14] sm:$0xf]
    %v49 = vld [vmem:[%s0 + $0x18] sm:$0xf]
    %v50 = vld [vmem:[%s0 + $0x1c] sm:$0xf]
    %v51 = vld [vmem:[%s0 + $0x20] sm:$0xf]
    %v52 = vld [vmem:[%s0 + $0x24] sm:$0xf]
    %v53 = vld [vmem:[%s0 + $0x28] sm:$0xf]
    %v54 = vld [vmem:[%s0 + $0x2c] sm:$0xf]
    %v55 = vld [vmem:[%s0 + $0x30] sm:$0xf]
    %v56 = vld [vmem:[%s0 + $0x34] sm:$0xf]
    %v57 = vld [vmem:[%s0 + $0x38] sm:$0xf]
    %v58 = vld [vmem:[%s0 + $0x3c] sm:$0xf]
    %v59 = vld [vmem:[%s0 + $0x40] sm:$0xf]
    %v60 = vld [vmem:[%s0 + $0x44] sm:$0xf]
    %v61 = vld [vmem:[%s0 + $0x48] sm:$0xf]
    %v62 = vld [vmem:[%s0 + $0x4c] sm:$0xf]
    %v63 = vld [vmem:[%s0 + $0x50] sm:$0xf]
    %v64 = vld [vmem:[%s0 + $0x54] sm:$0xf]
    %v65 = vld [vmem:[%s0 + $0x58] sm:$0xf]
    %v66 = vld [vmem:[%s0 + $0x5c] sm:$0xf]
    %v67 = vld [vmem:[%s0 + $0x60] sm:$0xf]
    %v68 = vld [vmem:[%s0 + $0x64] sm:$0xf]
    %v69 = vld [vmem:[%s0 + $0x68] sm:$0xf]
    %v70 = vld [vmem:[%s0 + $0x6c] sm:$0xf]
    %v71 = vld [vmem:[%s0 + $0x70] sm:$0xf]
    %v72 = vld [vmem:[%s0 + $0x74] sm:$0xf]
    %v73 = vld [vmem:[%s0 + $0x78] sm:$0xf]
    %v74 = vld [vmem:[%s0 + $0x7c] sm:$0xf]
    %v75 = vld [vmem:[%s0 + $0x80] sm:$0xf]
    %v76 = vld [vmem:[%s0 + $0x84] sm:$0xf]
    %v77 = vld [vmem:[%s0 + $0x88] sm:$0xf]
    %v78 = vld [vmem:[%s0 + $0x8c] sm:$0xf]
    %v79 = vld [vmem:[%s0 + $0x90] sm:$0xf]
    %v80 = vld [vmem:[%s0 + $0x94] sm:$0xf]
    %v81 = vld [vmem:[%s0 + $0x98] sm:$0xf]
    %v82 = vld [vmem:[%s0 + $0x9c] sm:$0xf]
    %v83 = vld [vmem:[%s0 + $0xa0] sm:$0xf]
    %v84 = vld [vmem:[%s0 + $0xa4] sm:$0xf]
    %v85 = vld [vmem:[%s0 + $0xa8] sm:$0xf]
    %v86 = vld [vmem:[%s0 + $0xac] sm:$0xf]
    %v87 = vld [vmem:[%s0 + $0xb0] sm:$0xf]
    %v88 = vld [vmem:[%s0 + $0xb4] sm:$0xf]
    %v89 = vld [vmem:[%s0 + $0xb8] sm:$0xf]
    %v90 = vld [vmem:[%s0 + $0xbc] sm:$0xf]
    %v91 = vld [vmem:[%s0 + $0xc0] sm:$0xf]
    %v92 = vld [vmem:[%s0 + $0xc4] sm:$0xf]
    %v93 = vld [vmem:[%s0 + $0xc8] sm:$0xf]
    %v94 = vld [vmem:[%s0 + $0xcc] sm:$0xf]
    %v95 = vld [vmem:[%s0 + $0xd0] sm:$0xf]
    %v96 = vld [vmem:[%s0 + $0xd4] sm:$0xf]
    %v97 = vld [vmem:[%s0 + $0xd8] sm:$0xf]
    %v98 = vld [vmem:[%s0 + $0xdc] sm:$0xf]
    %v99 = vld [vmem:[%s0 + $0xe0] sm:$0xf]
    %v100 = vld [vmem:[%s0 + $0xe4] sm:$0xf]
    %v101 = vld [vmem:[%s0 + $0xe8] sm:$0xf]
    %v102 = vld [vmem:[%s0 + $0xec] sm:$0xf]
    %v103 = vld [vmem:[%s0 + $0xf0] sm:$0xf]
    %v104 = vld [vmem:[%s0 + $0xf4] sm:$0xf]
    %v105 = vld [vmem:[%s0 + $0xf8] sm:$0xf]
    %v106 = vld [vmem:[%s0 + $0xfc] sm:$0xf]
    %v107 = vld [vmem:[%s2] sm:$0xf]
    %v108 = vld [vmem:[%s2 + $0x4] sm:$0xf]
    %v109 = vld [vmem:[%s2 + $0x8] sm:$0xf]
    %v110 = vld [vmem:[%s2 + $0xc] sm:$0xf]
    %v111 = vld [vmem:[%s2 + $0x10] sm:$0xf]
    %v112 = vld [vmem:[%s2 + $0x14] sm:$0xf]
    %v113 = vld [vmem:[%s2 + $0x18] sm:$0xf]
    %v114 = vld [vmem:[%s2 + $0x1c] sm:$0xf]
    %v115 = vld [vmem:[%s2 + $0x20] sm:$0xf]
    %v116 = vld [vmem:[%s2 + $0x24] sm:$0xf]
    %v117 = vld [vmem:[%s2 + $0x28] sm:$0xf]
    %v118 = vld [vmem:[%s2 + $0x2c] sm:$0xf]
    %v119 = vld [vmem:[%s2 + $0x30] sm:$0xf]
    %v120 = vld [vmem:[%s2 + $0x34] sm:$0xf]
    %v121 = vld [vmem:[%s2 + $0x38] sm:$0xf]
    %v122 = vld [vmem:[%s2 + $0x3c] sm:$0xf]
    %v123 = vld [vmem:[%s3] sm:$0x1]
    %v125 = vlaneseq
    %v126 = vshrl.u32 %v125, 7
    %v127 = vsub.s32 0, %v126
    %v128 = vrot.slane %v123, %v127
    %v194 = vunpack.c.l.b16 %v43
    %v195 = vunpack.c.l.b16 %v44
    %v196 = vunpack.c.l.b16 %v45
    %v197 = vunpack.c.l.b16 %v46
    %v198 = vunpack.c.l.b16 %v47
    %v199 = vunpack.c.l.b16 %v48
    %v200 = vunpack.c.l.b16 %v49
    %v201 = vunpack.c.l.b16 %v50
    %v202 = vunpack.c.l.b16 %v51
    %v203 = vunpack.c.l.b16 %v52
    %v204 = vunpack.c.l.b16 %v53
    %v205 = vunpack.c.l.b16 %v54
    %v206 = vunpack.c.l.b16 %v55
    %v207 = vunpack.c.l.b16 %v56
    %v208 = vunpack.c.l.b16 %v57
    %v209 = vunpack.c.l.b16 %v58
    %v210 = vunpack.c.l.b16 %v59
    %v211 = vunpack.c.l.b16 %v60
    %v212 = vunpack.c.l.b16 %v61
    %v213 = vunpack.c.l.b16 %v62
    %v214 = vunpack.c.l.b16 %v63
    %v215 = vunpack.c.l.b16 %v64
    %v216 = vunpack.c.l.b16 %v65
    %v217 = vunpack.c.l.b16 %v66
    %v218 = vunpack.c.l.b16 %v67
    %v219 = vunpack.c.l.b16 %v68
    %v220 = vunpack.c.l.b16 %v69
    %v221 = vunpack.c.l.b16 %v70
    %v222 = vunpack.c.l.b16 %v71
    %v223 = vunpack.c.l.b16 %v72
    %v224 = vunpack.c.l.b16 %v73
    %v225 = vunpack.c.l.b16 %v74
    %v226 = vunpack.c.l.b16 %v75
    %v227 = vunpack.c.l.b16 %v76
    %v228 = vunpack.c.l.b16 %v77
    %v229 = vunpack.c.l.b16 %v78
    %v230 = vunpack.c.l.b16 %v79
    %v231 = vunpack.c.l.b16 %v80
    %v232 = vunpack.c.l.b16 %v81
    %v233 = vunpack.c.l.b16 %v82
    %v234 = vunpack.c.l.b16 %v83
    %v235 = vunpack.c.l.b16 %v84
    %v236 = vunpack.c.l.b16 %v85
    %v237 = vunpack.c.l.b16 %v86
    %v238 = vunpack.c.l.b16 %v87
    %v239 = vunpack.c.l.b16 %v88
    %v240 = vunpack.c.l.b16 %v89
    %v241 = vunpack.c.l.b16 %v90
    %v242 = vunpack.c.l.b16 %v91
    %v243 = vunpack.c.l.b16 %v92
    %v244 = vunpack.c.l.b16 %v93
    %v245 = vunpack.c.l.b16 %v94
    %v246 = vunpack.c.l.b16 %v95
    %v247 = vunpack.c.l.b16 %v96
    %v248 = vunpack.c.l.b16 %v97
    %v249 = vunpack.c.l.b16 %v98
    %v250 = vunpack.c.l.b16 %v99
    %v251 = vunpack.c.l.b16 %v100
    %v252 = vunpack.c.l.b16 %v101
    %v253 = vunpack.c.l.b16 %v102
    %v254 = vunpack.c.l.b16 %v103
    %v255 = vunpack.c.l.b16 %v104
    %v256 = vunpack.c.l.b16 %v105
    %v257 = vunpack.c.l.b16 %v106
    %v258 = vpack.c.b16 %v195, %v194
    %v259 = vpack.c.b16 %v197, %v196
    %v260 = vpack.c.b16 %v199, %v198
    %v261 = vpack.c.b16 %v201, %v200
    %v262 = vpack.c.b16 %v203, %v202
    %v263 = vpack.c.b16 %v205, %v204
    %v264 = vpack.c.b16 %v207, %v206
    %v265 = vpack.c.b16 %v209, %v208
    %v266 = vpack.c.b16 %v211, %v210
    %v267 = vpack.c.b16 %v213, %v212
    %v268 = vpack.c.b16 %v215, %v214
    %v269 = vpack.c.b16 %v217, %v216
    %v270 = vpack.c.b16 %v219, %v218
    %v271 = vpack.c.b16 %v221, %v220
    %v272 = vpack.c.b16 %v223, %v222
    %v273 = vpack.c.b16 %v225, %v224
    %v274 = vpack.c.b16 %v227, %v226
    %v275 = vpack.c.b16 %v229, %v228
    %v276 = vpack.c.b16 %v231, %v230
    %v277 = vpack.c.b16 %v233, %v232
    %v278 = vpack.c.b16 %v235, %v234
    %v279 = vpack.c.b16 %v237, %v236
    %v280 = vpack.c.b16 %v239, %v238
    %v281 = vpack.c.b16 %v241, %v240
    %v282 = vpack.c.b16 %v243, %v242
    %v283 = vpack.c.b16 %v245, %v244
    %v284 = vpack.c.b16 %v247, %v246
    %v285 = vpack.c.b16 %v249, %v248
    %v286 = vpack.c.b16 %v251, %v250
    %v287 = vpack.c.b16 %v253, %v252
    %v288 = vpack.c.b16 %v255, %v254
    %v289 = vpack.c.b16 %v257, %v256
    %v338 = vunpack.c.l.b16 %v107
    %v339 = vunpack.c.l.b16 %v108
    %v340 = vunpack.c.l.b16 %v109
    %v341 = vunpack.c.l.b16 %v110
    %v342 = vunpack.c.l.b16 %v111
    %v343 = vunpack.c.l.b16 %v112
    %v344 = vunpack.c.l.b16 %v113
    %v345 = vunpack.c.l.b16 %v114
    %v346 = vunpack.c.l.b16 %v115
    %v347 = vunpack.c.l.b16 %v116
    %v348 = vunpack.c.l.b16 %v117
    %v349 = vunpack.c.l.b16 %v118
    %v350 = vunpack.c.l.b16 %v119
    %v351 = vunpack.c.l.b16 %v120
    %v352 = vunpack.c.l.b16 %v121
    %v353 = vunpack.c.l.b16 %v122
    %v354 = vpack.c.b16 %v339, %v338
    %v355 = vpack.c.b16 %v341, %v340
    %v356 = vpack.c.b16 %v343, %v342
    %v357 = vpack.c.b16 %v345, %v344
    %v358 = vpack.c.b16 %v347, %v346
    %v359 = vpack.c.b16 %v349, %v348
    %v360 = vpack.c.b16 %v351, %v350
    %v361 = vpack.c.b16 %v353, %v352
    %370 = vmatprep.subr.bf16.mxu0 0
    %371 = vmatpush1.bf16.msra.mxu0 %v361
    %372 = vmatprep.subr.bf16.mxu0 0
    %373 = vmatpush1.bf16.msra.mxu0 %v360
    %374 = vmatprep.subr.bf16.mxu0 0
    %375 = vmatpush1.bf16.msra.mxu0 %v359
    %376 = vmatprep.subr.bf16.mxu0 0
    %377 = vmatpush1.bf16.msra.mxu0 %v358
    %378 = vmatprep.subr.bf16.mxu0 0
    %379 = vmatpush1.bf16.msra.mxu0 %v357
    %380 = vmatprep.subr.bf16.mxu0 0
    %381 = vmatpush1.bf16.msra.mxu0 %v356
    %382 = vmatprep.subr.bf16.mxu0 0
    %383 = vmatpush1.bf16.msra.mxu0 %v355
    %384 = vmatprep.subr.bf16.mxu0 0
    %385 = vmatpush1.bf16.msra.mxu0 %v354
    %386 = vmatprep.subr.bf16.mxu0 0
    %387 = vmatpush2.bf16.msra.mxu0 0
    %388 = vmatprep.subr.bf16.mxu0 0
    %389 = vmatpush2.bf16.msra.mxu0 0
    %390 = vmatprep.subr.bf16.mxu0 0
    %391 = vmatpush2.bf16.msra.mxu0 0
    %392 = vmatprep.subr.bf16.mxu0 0
    %393 = vmatpush2.bf16.msra.mxu0 0
    %394 = vmatprep.subr.bf16.mxu0 0
    %395 = vmatpush2.bf16.msra.mxu0 0
    %396 = vmatprep.subr.bf16.mxu0 0
    %397 = vmatpush2.bf16.msra.mxu0 0
    %398 = vmatprep.subr.bf16.mxu0 0
    %399 = vmatpush2.bf16.msra.mxu0 0
    %400 = vmatprep.subr.bf16.mxu0 0
    %401 = vmatpush2.bf16.msra.mxu0 0
    %402 = vmatprep.mubr.bf16.mxu0 0
    %403 = vmatmul.mubr.bf16.gmra.mxu0 %v258
    %v404 = vpop.f32.mrf.mxu0
    %v405 = vadd.f32 %v128, %v404
    %v406 = vpop.f32.mrf.mxu0
    %v407 = vpop.f32.mrf.mxu0
    %v408 = vadd.f32 %v128, %v407
    %v409 = vpop.f32.mrf.mxu0
    %410 = vmatprep.mubr.bf16.mxu0 0
    %411 = vmatmul.mubr.bf16.gmra.mxu0 %v259
    %v412 = vpop.f32.mrf.mxu0
    %v413 = vadd.f32 %v128, %v412
    %v414 = vpop.f32.mrf.mxu0
    %v415 = vpop.f32.mrf.mxu0
    %v416 = vadd.f32 %v128, %v415
    %v417 = vpop.f32.mrf.mxu0
    %418 = vmatprep.mubr.bf16.mxu0 0
    %419 = vmatmul.mubr.bf16.gmra.mxu0 %v260
    %v420 = vpop.f32.mrf.mxu0
    %v421 = vadd.f32 %v128, %v420
    %v422 = vpop.f32.mrf.mxu0
    %v423 = vpop.f32.mrf.mxu0
    %v424 = vadd.f32 %v128, %v423
    %v425 = vpop.f32.mrf.mxu0
    %426 = vmatprep.mubr.bf16.mxu0 0
    %427 = vmatmul.mubr.bf16.gmra.mxu0 %v261
    %v428 = vpop.f32.mrf.mxu0
    %v429 = vadd.f32 %v128, %v428
    %v430 = vpop.f32.mrf.mxu0
    %v431 = vpop.f32.mrf.mxu0
    %v432 = vadd.f32 %v128, %v431
    %v433 = vpop.f32.mrf.mxu0
    %434 = vmatprep.mubr.bf16.mxu0 0
    %435 = vmatmul.mubr.bf16.gmra.mxu0 %v262
    %v436 = vpop.f32.mrf.mxu0
    %v437 = vadd.f32 %v128, %v436
    %v438 = vpop.f32.mrf.mxu0
    %v439 = vpop.f32.mrf.mxu0
    %v440 = vadd.f32 %v128, %v439
    %v441 = vpop.f32.mrf.mxu0
    %442 = vmatprep.mubr.bf16.mxu0 0
    %443 = vmatmul.mubr.bf16.gmra.mxu0 %v263
    %v444 = vpop.f32.mrf.mxu0
    %v445 = vadd.f32 %v128, %v444
    %v446 = vpop.f32.mrf.mxu0
    %v447 = vpop.f32.mrf.mxu0
    %v448 = vadd.f32 %v128, %v447
    %v449 = vpop.f32.mrf.mxu0
    %450 = vmatprep.mubr.bf16.mxu0 0
    %451 = vmatmul.mubr.bf16.gmra.mxu0 %v264
    %v452 = vpop.f32.mrf.mxu0
    %v453 = vadd.f32 %v128, %v452
    %v454 = vpop.f32.mrf.mxu0
    %v455 = vpop.f32.mrf.mxu0
    %v456 = vadd.f32 %v128, %v455
    %v457 = vpop.f32.mrf.mxu0
    %458 = vmatprep.mubr.bf16.mxu0 0
    %459 = vmatmul.mubr.bf16.gmra.mxu0 %v265
    %v460 = vpop.f32.mrf.mxu0
    %v461 = vadd.f32 %v128, %v460
    %v462 = vpop.f32.mrf.mxu0
    %v463 = vpop.f32.mrf.mxu0
    %v464 = vadd.f32 %v128, %v463
    %v465 = vpop.f32.mrf.mxu0
    %466 = vmatprep.mubr.bf16.mxu0 0
    %467 = vmatmul.mubr.bf16.gmra.mxu0 %v266
    %v468 = vpop.f32.mrf.mxu0
    %v469 = vadd.f32 %v128, %v468
    %v470 = vpop.f32.mrf.mxu0
    %v471 = vpop.f32.mrf.mxu0
    %v472 = vadd.f32 %v128, %v471
    %v473 = vpop.f32.mrf.mxu0
    %474 = vmatprep.mubr.bf16.mxu0 0
    %475 = vmatmul.mubr.bf16.gmra.mxu0 %v267
    %v476 = vpop.f32.mrf.mxu0
    %v477 = vadd.f32 %v128, %v476
    %v478 = vpop.f32.mrf.mxu0
    %v479 = vpop.f32.mrf.mxu0
    %v480 = vadd.f32 %v128, %v479
    %v481 = vpop.f32.mrf.mxu0
    %482 = vmatprep.mubr.bf16.mxu0 0
    %483 = vmatmul.mubr.bf16.gmra.mxu0 %v268
    %v484 = vpop.f32.mrf.mxu0
    %v485 = vadd.f32 %v128, %v484
    %v486 = vpop.f32.mrf.mxu0
    %v487 = vpop.f32.mrf.mxu0
    %v488 = vadd.f32 %v128, %v487
    %v489 = vpop.f32.mrf.mxu0
    %490 = vmatprep.mubr.bf16.mxu0 0
    %491 = vmatmul.mubr.bf16.gmra.mxu0 %v269
    %v492 = vpop.f32.mrf.mxu0
    %v493 = vadd.f32 %v128, %v492
    %v494 = vpop.f32.mrf.mxu0
    %v495 = vpop.f32.mrf.mxu0
    %v496 = vadd.f32 %v128, %v495
    %v497 = vpop.f32.mrf.mxu0
    %498 = vmatprep.mubr.bf16.mxu0 0
    %499 = vmatmul.mubr.bf16.gmra.mxu0 %v270
    %v500 = vpop.f32.mrf.mxu0
    %v501 = vadd.f32 %v128, %v500
    %v502 = vpop.f32.mrf.mxu0
    %v503 = vpop.f32.mrf.mxu0
    %v504 = vadd.f32 %v128, %v503
    %v505 = vpop.f32.mrf.mxu0
    %506 = vmatprep.mubr.bf16.mxu0 0
    %507 = vmatmul.mubr.bf16.gmra.mxu0 %v271
    %v508 = vpop.f32.mrf.mxu0
    %v509 = vadd.f32 %v128, %v508
    %v510 = vpop.f32.mrf.mxu0
    %v511 = vpop.f32.mrf.mxu0
    %v512 = vadd.f32 %v128, %v511
    %v513 = vpop.f32.mrf.mxu0
    %514 = vmatprep.mubr.bf16.mxu0 0
    %515 = vmatmul.mubr.bf16.gmra.mxu0 %v272
    %v516 = vpop.f32.mrf.mxu0
    %v517 = vadd.f32 %v128, %v516
    %v518 = vpop.f32.mrf.mxu0
    %v519 = vpop.f32.mrf.mxu0
    %v520 = vadd.f32 %v128, %v519
    %v521 = vpop.f32.mrf.mxu0
    %522 = vmatprep.mubr.bf16.mxu0 0
    %523 = vmatmul.mubr.bf16.gmra.mxu0 %v273
    %v524 = vpop.f32.mrf.mxu0
    %v525 = vadd.f32 %v128, %v524
    %v526 = vpop.f32.mrf.mxu0
    %v527 = vpop.f32.mrf.mxu0
    %v528 = vadd.f32 %v128, %v527
    %v529 = vpop.f32.mrf.mxu0
    %530 = vmatprep.mubr.bf16.mxu0 0
    %531 = vmatmul.mubr.bf16.gmra.mxu0 %v274
    %v532 = vpop.f32.mrf.mxu0
    %v533 = vadd.f32 %v128, %v532
    %v534 = vpop.f32.mrf.mxu0
    %v535 = vpop.f32.mrf.mxu0
    %v536 = vadd.f32 %v128, %v535
    %v537 = vpop.f32.mrf.mxu0
    %538 = vmatprep.mubr.bf16.mxu0 0
    %539 = vmatmul.mubr.bf16.gmra.mxu0 %v275
    %v540 = vpop.f32.mrf.mxu0
    %v541 = vadd.f32 %v128, %v540
    %v542 = vpop.f32.mrf.mxu0
    %v543 = vpop.f32.mrf.mxu0
    %v544 = vadd.f32 %v128, %v543
    %v545 = vpop.f32.mrf.mxu0
    %546 = vmatprep.mubr.bf16.mxu0 0
    %547 = vmatmul.mubr.bf16.gmra.mxu0 %v276
    %v548 = vpop.f32.mrf.mxu0
    %v549 = vadd.f32 %v128, %v548
    %v550 = vpop.f32.mrf.mxu0
    %v551 = vpop.f32.mrf.mxu0
    %v552 = vadd.f32 %v128, %v551
    %v553 = vpop.f32.mrf.mxu0
    %554 = vmatprep.mubr.bf16.mxu0 0
    %555 = vmatmul.mubr.bf16.gmra.mxu0 %v277
    %v556 = vpop.f32.mrf.mxu0
    %v557 = vadd.f32 %v128, %v556
    %v558 = vpop.f32.mrf.mxu0
    %v559 = vpop.f32.mrf.mxu0
    %v560 = vadd.f32 %v128, %v559
    %v561 = vpop.f32.mrf.mxu0
    %562 = vmatprep.mubr.bf16.mxu0 0
    %563 = vmatmul.mubr.bf16.gmra.mxu0 %v278
    %v564 = vpop.f32.mrf.mxu0
    %v565 = vadd.f32 %v128, %v564
    %v566 = vpop.f32.mrf.mxu0
    %v567 = vpop.f32.mrf.mxu0
    %v568 = vadd.f32 %v128, %v567
    %v569 = vpop.f32.mrf.mxu0
    %570 = vmatprep.mubr.bf16.mxu0 0
    %571 = vmatmul.mubr.bf16.gmra.mxu0 %v279
    %v572 = vpop.f32.mrf.mxu0
    %v573 = vadd.f32 %v128, %v572
    %v574 = vpop.f32.mrf.mxu0
    %v575 = vpop.f32.mrf.mxu0
    %v576 = vadd.f32 %v128, %v575
    %v577 = vpop.f32.mrf.mxu0
    %578 = vmatprep.mubr.bf16.mxu0 0
    %579 = vmatmul.mubr.bf16.gmra.mxu0 %v280
    %v580 = vpop.f32.mrf.mxu0
    %v581 = vadd.f32 %v128, %v580
    %v582 = vpop.f32.mrf.mxu0
    %v583 = vpop.f32.mrf.mxu0
    %v584 = vadd.f32 %v128, %v583
    %v585 = vpop.f32.mrf.mxu0
    %586 = vmatprep.mubr.bf16.mxu0 0
    %587 = vmatmul.mubr.bf16.gmra.mxu0 %v281
    %v588 = vpop.f32.mrf.mxu0
    %v589 = vadd.f32 %v128, %v588
    %v590 = vpop.f32.mrf.mxu0
    %v591 = vpop.f32.mrf.mxu0
    %v592 = vadd.f32 %v128, %v591
    %v593 = vpop.f32.mrf.mxu0
    %594 = vmatprep.mubr.bf16.mxu0 0
    %595 = vmatmul.mubr.bf16.gmra.mxu0 %v282
    %v596 = vpop.f32.mrf.mxu0
    %v597 = vadd.f32 %v128, %v596
    %v598 = vpop.f32.mrf.mxu0
    %v599 = vpop.f32.mrf.mxu0
    %v600 = vadd.f32 %v128, %v599
    %v601 = vpop.f32.mrf.mxu0
    %602 = vmatprep.mubr.bf16.mxu0 0
    %603 = vmatmul.mubr.bf16.gmra.mxu0 %v283
    %v604 = vpop.f32.mrf.mxu0
    %v605 = vadd.f32 %v128, %v604
    %v606 = vpop.f32.mrf.mxu0
    %v607 = vpop.f32.mrf.mxu0
    %v608 = vadd.f32 %v128, %v607
    %v609 = vpop.f32.mrf.mxu0
    %610 = vmatprep.mubr.bf16.mxu0 0
    %611 = vmatmul.mubr.bf16.gmra.mxu0 %v284
    %v612 = vpop.f32.mrf.mxu0
    %v613 = vadd.f32 %v128, %v612
    %v614 = vpop.f32.mrf.mxu0
    %v615 = vpop.f32.mrf.mxu0
    %v616 = vadd.f32 %v128, %v615
    %v617 = vpop.f32.mrf.mxu0
    %618 = vmatprep.mubr.bf16.mxu0 0
    %619 = vmatmul.mubr.bf16.gmra.mxu0 %v285
    %v620 = vpop.f32.mrf.mxu0
    %v621 = vadd.f32 %v128, %v620
    %v622 = vpop.f32.mrf.mxu0
    %v623 = vpop.f32.mrf.mxu0
    %v624 = vadd.f32 %v128, %v623
    %v625 = vpop.f32.mrf.mxu0
    %626 = vmatprep.mubr.bf16.mxu0 0
    %627 = vmatmul.mubr.bf16.gmra.mxu0 %v286
    %v628 = vpop.f32.mrf.mxu0
    %v629 = vadd.f32 %v128, %v628
    %v630 = vpop.f32.mrf.mxu0
    %v631 = vpop.f32.mrf.mxu0
    %v632 = vadd.f32 %v128, %v631
    %v633 = vpop.f32.mrf.mxu0
    %634 = vmatprep.mubr.bf16.mxu0 0
    %635 = vmatmul.mubr.bf16.gmra.mxu0 %v287
    %v636 = vpop.f32.mrf.mxu0
    %v637 = vadd.f32 %v128, %v636
    %v638 = vpop.f32.mrf.mxu0
    %v639 = vpop.f32.mrf.mxu0
    %v640 = vadd.f32 %v128, %v639
    %v641 = vpop.f32.mrf.mxu0
    %642 = vmatprep.mubr.bf16.mxu0 0
    %643 = vmatmul.mubr.bf16.gmra.mxu0 %v288
    %v644 = vpop.f32.mrf.mxu0
    %v645 = vadd.f32 %v128, %v644
    %v646 = vpop.f32.mrf.mxu0
    %v647 = vpop.f32.mrf.mxu0
    %v648 = vadd.f32 %v128, %v647
    %v649 = vpop.f32.mrf.mxu0
    %650 = vmatprep.mubr.bf16.mxu0 0
    %651 = vmatmul.mubr.bf16.gmra.mxu0 %v289
    %v652 = vpop.f32.mrf.mxu0
    %v653 = vadd.f32 %v128, %v652
    %v654 = vpop.f32.mrf.mxu0
    %v655 = vpop.f32.mrf.mxu0
    %v656 = vadd.f32 %v128, %v655
    %v657 = vpop.f32.mrf.mxu0
    %658 = vdwg.mxu0
    %v659 = vmax.f32 %v405, 0.0
    %v660 = vmax.f32 %v408, 0.0
    %v661 = vmax.f32 %v413, 0.0
    %v662 = vmax.f32 %v416, 0.0
    %v663 = vmax.f32 %v421, 0.0
    %v664 = vmax.f32 %v424, 0.0
    %v665 = vmax.f32 %v429, 0.0
    %v666 = vmax.f32 %v432, 0.0
    %v667 = vmax.f32 %v437, 0.0
    %v668 = vmax.f32 %v440, 0.0
    %v669 = vmax.f32 %v445, 0.0
    %v670 = vmax.f32 %v448, 0.0
    %v671 = vmax.f32 %v453, 0.0
    %v672 = vmax.f32 %v456, 0.0
    %v673 = vmax.f32 %v461, 0.0
    %v674 = vmax.f32 %v464, 0.0
    %v675 = vmax.f32 %v469, 0.0
    %v676 = vmax.f32 %v472, 0.0
    %v677 = vmax.f32 %v477, 0.0
    %v678 = vmax.f32 %v480, 0.0
    %v679 = vmax.f32 %v485, 0.0
    %v680 = vmax.f32 %v488, 0.0
    %v681 = vmax.f32 %v493, 0.0
    %v682 = vmax.f32 %v496, 0.0
    %v683 = vmax.f32 %v501, 0.0
    %v684 = vmax.f32 %v504, 0.0
    %v685 = vmax.f32 %v509, 0.0
    %v686 = vmax.f32 %v512, 0.0
    %v687 = vmax.f32 %v517, 0.0
    %v688 = vmax.f32 %v520, 0.0
    %v689 = vmax.f32 %v525, 0.0
    %v690 = vmax.f32 %v528, 0.0
    %v691 = vmax.f32 %v533, 0.0
    %v692 = vmax.f32 %v536, 0.0
    %v693 = vmax.f32 %v541, 0.0
    %v694 = vmax.f32 %v544, 0.0
    %v695 = vmax.f32 %v549, 0.0
    %v696 = vmax.f32 %v552, 0.0
    %v697 = vmax.f32 %v557, 0.0
    %v698 = vmax.f32 %v560, 0.0
    %v699 = vmax.f32 %v565, 0.0
    %v700 = vmax.f32 %v568, 0.0
    %v701 = vmax.f32 %v573, 0.0
    %v702 = vmax.f32 %v576, 0.0
    %v703 = vmax.f32 %v581, 0.0
    %v704 = vmax.f32 %v584, 0.0
    %v705 = vmax.f32 %v589, 0.0
    %v706 = vmax.f32 %v592, 0.0
    %v707 = vmax.f32 %v597, 0.0
    %v708 = vmax.f32 %v600, 0.0
    %v709 = vmax.f32 %v605, 0.0
    %v710 = vmax.f32 %v608, 0.0
    %v711 = vmax.f32 %v613, 0.0
    %v712 = vmax.f32 %v616, 0.0
    %v713 = vmax.f32 %v621, 0.0
    %v714 = vmax.f32 %v624, 0.0
    %v715 = vmax.f32 %v629, 0.0
    %v716 = vmax.f32 %v632, 0.0
    %v717 = vmax.f32 %v637, 0.0
    %v718 = vmax.f32 %v640, 0.0
    %v719 = vmax.f32 %v645, 0.0
    %v720 = vmax.f32 %v648, 0.0
    %v721 = vmax.f32 %v653, 0.0
    %v722 = vmax.f32 %v656, 0.0
    %v723 = vrot.slane %v659, 7
    %v724 = vrot.slane %v660, 7
    %v725 = vrot.slane %v661, 7
    %v726 = vrot.slane %v662, 7
    %v727 = vrot.slane %v663, 7
    %v728 = vrot.slane %v664, 7
    %v729 = vrot.slane %v665, 7
    %v730 = vrot.slane %v666, 7
    %v731 = vrot.slane %v667, 7
    %v732 = vrot.slane %v668, 7
    %v733 = vrot.slane %v669, 7
    %v734 = vrot.slane %v670, 7
    %v735 = vrot.slane %v671, 7
    %v736 = vrot.slane %v672, 7
    %v737 = vrot.slane %v673, 7
    %v738 = vrot.slane %v674, 7
    %v739 = vrot.slane %v675, 7
    %v740 = vrot.slane %v676, 7
    %v741 = vrot.slane %v677, 7
    %v742 = vrot.slane %v678, 7
    %v743 = vrot.slane %v679, 7
    %v744 = vrot.slane %v680, 7
    %v745 = vrot.slane %v681, 7
    %v746 = vrot.slane %v682, 7
    %v747 = vrot.slane %v683, 7
    %v748 = vrot.slane %v684, 7
    %v749 = vrot.slane %v685, 7
    %v750 = vrot.slane %v686, 7
    %v751 = vrot.slane %v687, 7
    %v752 = vrot.slane %v688, 7
    %v753 = vrot.slane %v689, 7
    %v754 = vrot.slane %v690, 7
    %v755 = vrot.slane %v691, 7
    %v756 = vrot.slane %v692, 7
    %v757 = vrot.slane %v693, 7
    %v758 = vrot.slane %v694, 7
    %v759 = vrot.slane %v695, 7
    %v760 = vrot.slane %v696, 7
    %v761 = vrot.slane %v697, 7
    %v762 = vrot.slane %v698, 7
    %v763 = vrot.slane %v699, 7
    %v764 = vrot.slane %v700, 7
    %v765 = vrot.slane %v701, 7
    %v766 = vrot.slane %v702, 7
    %v767 = vrot.slane %v703, 7
    %v768 = vrot.slane %v704, 7
    %v769 = vrot.slane %v705, 7
    %v770 = vrot.slane %v706, 7
    %v771 = vrot.slane %v707, 7
    %v772 = vrot.slane %v708, 7
    %v773 = vrot.slane %v709, 7
    %v774 = vrot.slane %v710, 7
    %v775 = vrot.slane %v711, 7
    %v776 = vrot.slane %v712, 7
    %v777 = vrot.slane %v713, 7
    %v778 = vrot.slane %v714, 7
    %v779 = vrot.slane %v715, 7
    %v780 = vrot.slane %v716, 7
    %v781 = vrot.slane %v717, 7
    %v782 = vrot.slane %v718, 7
    %v783 = vrot.slane %v719, 7
    %v784 = vrot.slane %v720, 7
    %v785 = vrot.slane %v721, 7
    %v786 = vrot.slane %v722, 7
    %v787 = vlaneseq
    %v788 = vshrl.u32 %v787, 7
    %vm789 = vcmp.lt.s32.totalorder %v788, 1
    %v790 = vsel %vm789, %v785, %v786
    %v791 = vsel %vm789, %v784, %v785
    %v792 = vsel %vm789, %v783, %v784
    %v793 = vsel %vm789, %v782, %v783
    %v794 = vsel %vm789, %v781, %v782
    %v795 = vsel %vm789, %v780, %v781
    %v796 = vsel %vm789, %v779, %v780
    %v797 = vsel %vm789, %v778, %v779
    %v798 = vsel %vm789, %v777, %v778
    %v799 = vsel %vm789, %v776, %v777
    %v800 = vsel %vm789, %v775, %v776
    %v801 = vsel %vm789, %v774, %v775
    %v802 = vsel %vm789, %v773, %v774
    %v803 = vsel %vm789, %v772, %v773
    %v804 = vsel %vm789, %v771, %v772
    %v805 = vsel %vm789, %v770, %v771
    %v806 = vsel %vm789, %v769, %v770
    %v807 = vsel %vm789, %v768, %v769
    %v808 = vsel %vm789, %v767, %v768
    %v809 = vsel %vm789, %v766, %v767
    %v810 = vsel %vm789, %v765, %v766
    %v811 = vsel %vm789, %v764, %v765
    %v812 = vsel %vm789, %v763, %v764
    %v813 = vsel %vm789, %v762, %v763
    %v814 = vsel %vm789, %v761, %v762
    %v815 = vsel %vm789, %v760, %v761
    %v816 = vsel %vm789, %v759, %v760
    %v817 = vsel %vm789, %v758, %v759
    %v818 = vsel %vm789, %v757, %v758
    %v819 = vsel %vm789, %v756, %v757
    %v820 = vsel %vm789, %v755, %v756
    %v821 = vsel %vm789, %v754, %v755
    %v822 = vsel %vm789, %v753, %v754
    %v823 = vsel %vm789, %v752, %v753
    %v824 = vsel %vm789, %v751, %v752
    %v825 = vsel %vm789, %v750, %v751
    %v826 = vsel %vm789, %v749, %v750
    %v827 = vsel %vm789, %v748, %v749
    %v828 = vsel %vm789, %v747, %v748
    %v829 = vsel %vm789, %v746, %v747
    %v830 = vsel %vm789, %v745, %v746
    %v831 = vsel %vm789, %v744, %v745
    %v832 = vsel %vm789, %v743, %v744
    %v833 = vsel %vm789, %v742, %v743
    %v834 = vsel %vm789, %v741, %v742
    %v835 = vsel %vm789, %v740, %v741
    %v836 = vsel %vm789, %v739, %v740
    %v837 = vsel %vm789, %v738, %v739
    %v838 = vsel %vm789, %v737, %v738
    %v839 = vsel %vm789, %v736, %v737
    %v840 = vsel %vm789, %v735, %v736
    %v841 = vsel %vm789, %v734, %v735
    %v842 = vsel %vm789, %v733, %v734
    %v843 = vsel %vm789, %v732, %v733
    %v844 = vsel %vm789, %v731, %v732
    %v845 = vsel %vm789, %v730, %v731
    %v846 = vsel %vm789, %v729, %v730
    %v847 = vsel %vm789, %v728, %v729
    %v848 = vsel %vm789, %v727, %v728
    %v849 = vsel %vm789, %v726, %v727
    %v850 = vsel %vm789, %v725, %v726
    %v851 = vsel %vm789, %v724, %v725
    %v852 = vsel %vm789, %v723, %v724
    %v853 = vsel %vm789, %v786, %v723
    %v854 = vld [vmem:[%s1] sm:$0xff]
    %v855 = vld [vmem:[%s1 + $0x8] sm:$0xff]
    %v856 = vld [vmem:[%s1 + $0x10] sm:$0xff]
    %v857 = vld [vmem:[%s1 + $0x18] sm:$0xff]
    %v858 = vld [vmem:[%s1 + $0x20] sm:$0xff]
    %v859 = vld [vmem:[%s1 + $0x28] sm:$0xff]
    %v860 = vld [vmem:[%s1 + $0x30] sm:$0xff]
    %v861 = vld [vmem:[%s1 + $0x38] sm:$0xff]
    %v862 = vld [vmem:[%s1 + $0x40] sm:$0xff]
    %v863 = vld [vmem:[%s1 + $0x48] sm:$0xff]
    %v864 = vld [vmem:[%s1 + $0x50] sm:$0xff]
    %v865 = vld [vmem:[%s1 + $0x58] sm:$0xff]
    %v866 = vld [vmem:[%s1 + $0x60] sm:$0xff]
    %v867 = vld [vmem:[%s1 + $0x68] sm:$0xff]
    %v868 = vld [vmem:[%s1 + $0x70] sm:$0xff]
    %v869 = vld [vmem:[%s1 + $0x78] sm:$0xff]
    %v870 = vld [vmem:[%s1 + $0x80] sm:$0xff]
    %v871 = vld [vmem:[%s1 + $0x88] sm:$0xff]
    %v872 = vld [vmem:[%s1 + $0x90] sm:$0xff]
    %v873 = vld [vmem:[%s1 + $0x98] sm:$0xff]
    %v874 = vld [vmem:[%s1 + $0xa0] sm:$0xff]
    %v875 = vld [vmem:[%s1 + $0xa8] sm:$0xff]
    %v876 = vld [vmem:[%s1 + $0xb0] sm:$0xff]
    %v877 = vld [vmem:[%s1 + $0xb8] sm:$0xff]
    %v878 = vld [vmem:[%s1 + $0xc0] sm:$0xff]
    %v879 = vld [vmem:[%s1 + $0xc8] sm:$0xff]
    %v880 = vld [vmem:[%s1 + $0xd0] sm:$0xff]
    %v881 = vld [vmem:[%s1 + $0xd8] sm:$0xff]
    %v882 = vld [vmem:[%s1 + $0xe0] sm:$0xff]
    %v883 = vld [vmem:[%s1 + $0xe8] sm:$0xff]
    %v884 = vld [vmem:[%s1 + $0xf0] sm:$0xff]
    %v885 = vld [vmem:[%s1 + $0xf8] sm:$0xff]
    %v886 = vld [vmem:[%s1 + $0x100] sm:$0xff]
    %v887 = vld [vmem:[%s1 + $0x108] sm:$0xff]
    %v888 = vld [vmem:[%s1 + $0x110] sm:$0xff]
    %v889 = vld [vmem:[%s1 + $0x118] sm:$0xff]
    %v890 = vld [vmem:[%s1 + $0x120] sm:$0xff]
    %v891 = vld [vmem:[%s1 + $0x128] sm:$0xff]
    %v892 = vld [vmem:[%s1 + $0x130] sm:$0xff]
    %v893 = vld [vmem:[%s1 + $0x138] sm:$0xff]
    %v894 = vld [vmem:[%s1 + $0x140] sm:$0xff]
    %v895 = vld [vmem:[%s1 + $0x148] sm:$0xff]
    %v896 = vld [vmem:[%s1 + $0x150] sm:$0xff]
    %v897 = vld [vmem:[%s1 + $0x158] sm:$0xff]
    %v898 = vld [vmem:[%s1 + $0x160] sm:$0xff]
    %v899 = vld [vmem:[%s1 + $0x168] sm:$0xff]
    %v900 = vld [vmem:[%s1 + $0x170] sm:$0xff]
    %v901 = vld [vmem:[%s1 + $0x178] sm:$0xff]
    %v902 = vld [vmem:[%s1 + $0x180] sm:$0xff]
    %v903 = vld [vmem:[%s1 + $0x188] sm:$0xff]
    %v904 = vld [vmem:[%s1 + $0x190] sm:$0xff]
    %v905 = vld [vmem:[%s1 + $0x198] sm:$0xff]
    %v906 = vld [vmem:[%s1 + $0x1a0] sm:$0xff]
    %v907 = vld [vmem:[%s1 + $0x1a8] sm:$0xff]
    %v908 = vld [vmem:[%s1 + $0x1b0] sm:$0xff]
    %v909 = vld [vmem:[%s1 + $0x1b8] sm:$0xff]
    %v910 = vld [vmem:[%s1 + $0x1c0] sm:$0xff]
    %v911 = vld [vmem:[%s1 + $0x1c8] sm:$0xff]
    %v912 = vld [vmem:[%s1 + $0x1d0] sm:$0xff]
    %v913 = vld [vmem:[%s1 + $0x1d8] sm:$0xff]
    %v914 = vld [vmem:[%s1 + $0x1e0] sm:$0xff]
    %v915 = vld [vmem:[%s1 + $0x1e8] sm:$0xff]
    %v916 = vld [vmem:[%s1 + $0x1f0] sm:$0xff]
    %v917 = vld [vmem:[%s1 + $0x1f8] sm:$0xff]
    %919 = vset.pattern.permute.xlu0 0
    %920 = vperm.xlu0 %919, %v854
    %v921 = vpop.permute.xlu0 %920
    %924 = vset.pattern.permute.xlu0 0
    %925 = vperm.xlu0 %924, %v855
    %v926 = vpop.permute.xlu0 %925
    %929 = vset.pattern.permute.xlu0 0
    %930 = vperm.xlu0 %929, %v856
    %v931 = vpop.permute.xlu0 %930
    %934 = vset.pattern.permute.xlu0 0
    %935 = vperm.xlu0 %934, %v857
    %v936 = vpop.permute.xlu0 %935
    %939 = vset.pattern.permute.xlu0 0
    %940 = vperm.xlu0 %939, %v858
    %v941 = vpop.permute.xlu0 %940
    %944 = vset.pattern.permute.xlu0 0
    %945 = vperm.xlu0 %944, %v859
    %v946 = vpop.permute.xlu0 %945
    %949 = vset.pattern.permute.xlu0 0
    %950 = vperm.xlu0 %949, %v860
    %v951 = vpop.permute.xlu0 %950
    %954 = vset.pattern.permute.xlu0 0
    %955 = vperm.xlu0 %954, %v861
    %v956 = vpop.permute.xlu0 %955
    %959 = vset.pattern.permute.xlu0 0
    %960 = vperm.xlu0 %959, %v862
    %v961 = vpop.permute.xlu0 %960
    %964 = vset.pattern.permute.xlu0 0
    %965 = vperm.xlu0 %964, %v863
    %v966 = vpop.permute.xlu0 %965
    %969 = vset.pattern.permute.xlu0 0
    %970 = vperm.xlu0 %969, %v864
    %v971 = vpop.permute.xlu0 %970
    %974 = vset.pattern.permute.xlu0 0
    %975 = vperm.xlu0 %974, %v865
    %v976 = vpop.permute.xlu0 %975
    %979 = vset.pattern.permute.xlu0 0
    %980 = vperm.xlu0 %979, %v866
    %v981 = vpop.permute.xlu0 %980
    %984 = vset.pattern.permute.xlu0 0
    %985 = vperm.xlu0 %984, %v867
    %v986 = vpop.permute.xlu0 %985
    %989 = vset.pattern.permute.xlu0 0
    %990 = vperm.xlu0 %989, %v868
    %v991 = vpop.permute.xlu0 %990
    %994 = vset.pattern.permute.xlu0 0
    %995 = vperm.xlu0 %994, %v869
    %v996 = vpop.permute.xlu0 %995
    %999 = vset.pattern.permute.xlu0 0
    %1000 = vperm.xlu0 %999, %v870
    %v1001 = vpop.permute.xlu0 %1000
    %1004 = vset.pattern.permute.xlu0 0
    %1005 = vperm.xlu0 %1004, %v871
    %v1006 = vpop.permute.xlu0 %1005
    %1009 = vset.pattern.permute.xlu0 0
    %1010 = vperm.xlu0 %1009, %v872
    %v1011 = vpop.permute.xlu0 %1010
    %1014 = vset.pattern.permute.xlu0 0
    %1015 = vperm.xlu0 %1014, %v873
    %v1016 = vpop.permute.xlu0 %1015
    %1019 = vset.pattern.permute.xlu0 0
    %1020 = vperm.xlu0 %1019, %v874
    %v1021 = vpop.permute.xlu0 %1020
    %1024 = vset.pattern.permute.xlu0 0
    %1025 = vperm.xlu0 %1024, %v875
    %v1026 = vpop.permute.xlu0 %1025
    %1029 = vset.pattern.permute.xlu0 0
    %1030 = vperm.xlu0 %1029, %v876
    %v1031 = vpop.permute.xlu0 %1030
    %1034 = vset.pattern.permute.xlu0 0
    %1035 = vperm.xlu0 %1034, %v877
    %v1036 = vpop.permute.xlu0 %1035
    %1039 = vset.pattern.permute.xlu0 0
    %1040 = vperm.xlu0 %1039, %v878
    %v1041 = vpop.permute.xlu0 %1040
    %1044 = vset.pattern.permute.xlu0 0
    %1045 = vperm.xlu0 %1044, %v879
    %v1046 = vpop.permute.xlu0 %1045
    %1049 = vset.pattern.permute.xlu0 0
    %1050 = vperm.xlu0 %1049, %v880
    %v1051 = vpop.permute.xlu0 %1050
    %1054 = vset.pattern.permute.xlu0 0
    %1055 = vperm.xlu0 %1054, %v881
    %v1056 = vpop.permute.xlu0 %1055
    %1059 = vset.pattern.permute.xlu0 0
    %1060 = vperm.xlu0 %1059, %v882
    %v1061 = vpop.permute.xlu0 %1060
    %1064 = vset.pattern.permute.xlu0 0
    %1065 = vperm.xlu0 %1064, %v883
    %v1066 = vpop.permute.xlu0 %1065
    %1069 = vset.pattern.permute.xlu0 0
    %1070 = vperm.xlu0 %1069, %v884
    %v1071 = vpop.permute.xlu0 %1070
    %1074 = vset.pattern.permute.xlu0 0
    %1075 = vperm.xlu0 %1074, %v885
    %v1076 = vpop.permute.xlu0 %1075
    %1079 = vset.pattern.permute.xlu0 0
    %1080 = vperm.xlu0 %1079, %v886
    %v1081 = vpop.permute.xlu0 %1080
    %1084 = vset.pattern.permute.xlu0 0
    %1085 = vperm.xlu0 %1084, %v887
    %v1086 = vpop.permute.xlu0 %1085
    %1089 = vset.pattern.permute.xlu0 0
    %1090 = vperm.xlu0 %1089, %v888
    %v1091 = vpop.permute.xlu0 %1090
    %1094 = vset.pattern.permute.xlu0 0
    %1095 = vperm.xlu0 %1094, %v889
    %v1096 = vpop.permute.xlu0 %1095
    %1099 = vset.pattern.permute.xlu0 0
    %1100 = vperm.xlu0 %1099, %v890
    %v1101 = vpop.permute.xlu0 %1100
    %1104 = vset.pattern.permute.xlu0 0
    %1105 = vperm.xlu0 %1104, %v891
    %v1106 = vpop.permute.xlu0 %1105
    %1109 = vset.pattern.permute.xlu0 0
    %1110 = vperm.xlu0 %1109, %v892
    %v1111 = vpop.permute.xlu0 %1110
    %1114 = vset.pattern.permute.xlu0 0
    %1115 = vperm.xlu0 %1114, %v893
    %v1116 = vpop.permute.xlu0 %1115
    %1119 = vset.pattern.permute.xlu0 0
    %1120 = vperm.xlu0 %1119, %v894
    %v1121 = vpop.permute.xlu0 %1120
    %1124 = vset.pattern.permute.xlu0 0
    %1125 = vperm.xlu0 %1124, %v895
    %v1126 = vpop.permute.xlu0 %1125
    %1129 = vset.pattern.permute.xlu0 0
    %1130 = vperm.xlu0 %1129, %v896
    %v1131 = vpop.permute.xlu0 %1130
    %1134 = vset.pattern.permute.xlu0 0
    %1135 = vperm.xlu0 %1134, %v897
    %v1136 = vpop.permute.xlu0 %1135
    %1139 = vset.pattern.permute.xlu0 0
    %1140 = vperm.xlu0 %1139, %v898
    %v1141 = vpop.permute.xlu0 %1140
    %1144 = vset.pattern.permute.xlu0 0
    %1145 = vperm.xlu0 %1144, %v899
    %v1146 = vpop.permute.xlu0 %1145
    %1149 = vset.pattern.permute.xlu0 0
    %1150 = vperm.xlu0 %1149, %v900
    %v1151 = vpop.permute.xlu0 %1150
    %1154 = vset.pattern.permute.xlu0 0
    %1155 = vperm.xlu0 %1154, %v901
    %v1156 = vpop.permute.xlu0 %1155
    %1159 = vset.pattern.permute.xlu0 0
    %1160 = vperm.xlu0 %1159, %v902
    %v1161 = vpop.permute.xlu0 %1160
    %1164 = vset.pattern.permute.xlu0 0
    %1165 = vperm.xlu0 %1164, %v903
    %v1166 = vpop.permute.xlu0 %1165
    %1169 = vset.pattern.permute.xlu0 0
    %1170 = vperm.xlu0 %1169, %v904
    %v1171 = vpop.permute.xlu0 %1170
    %1174 = vset.pattern.permute.xlu0 0
    %1175 = vperm.xlu0 %1174, %v905
    %v1176 = vpop.permute.xlu0 %1175
    %1179 = vset.pattern.permute.xlu0 0
    %1180 = vperm.xlu0 %1179, %v906
    %v1181 = vpop.permute.xlu0 %1180
    %1184 = vset.pattern.permute.xlu0 0
    %1185 = vperm.xlu0 %1184, %v907
    %v1186 = vpop.permute.xlu0 %1185
    %1189 = vset.pattern.permute.xlu0 0
    %1190 = vperm.xlu0 %1189, %v908
    %v1191 = vpop.permute.xlu0 %1190
    %1194 = vset.pattern.permute.xlu0 0
    %1195 = vperm.xlu0 %1194, %v909
    %v1196 = vpop.permute.xlu0 %1195
    %1199 = vset.pattern.permute.xlu0 0
    %1200 = vperm.xlu0 %1199, %v910
    %v1201 = vpop.permute.xlu0 %1200
    %1204 = vset.pattern.permute.xlu0 0
    %1205 = vperm.xlu0 %1204, %v911
    %v1206 = vpop.permute.xlu0 %1205
    %1209 = vset.pattern.permute.xlu0 0
    %1210 = vperm.xlu0 %1209, %v912
    %v1211 = vpop.permute.xlu0 %1210
    %1214 = vset.pattern.permute.xlu0 0
    %1215 = vperm.xlu0 %1214, %v913
    %v1216 = vpop.permute.xlu0 %1215
    %1219 = vset.pattern.permute.xlu0 0
    %1220 = vperm.xlu0 %1219, %v914
    %v1221 = vpop.permute.xlu0 %1220
    %1224 = vset.pattern.permute.xlu0 0
    %1225 = vperm.xlu0 %1224, %v915
    %v1226 = vpop.permute.xlu0 %1225
    %1229 = vset.pattern.permute.xlu0 0
    %1230 = vperm.xlu0 %1229, %v916
    %v1231 = vpop.permute.xlu0 %1230
    %1234 = vset.pattern.permute.xlu0 0
    %1235 = vperm.xlu0 %1234, %v917
    %v1236 = vpop.permute.xlu0 %1235
    %v1238 = vmul.f32 %v791, %v921
    %v1239 = vmul.f32 %v790, %v926
    %v1240 = vmul.f32 %v853, %v931
    %v1241 = vmul.f32 %v852, %v936
    %v1242 = vmul.f32 %v851, %v941
    %v1243 = vmul.f32 %v850, %v946
    %v1244 = vmul.f32 %v849, %v951
    %v1245 = vmul.f32 %v848, %v956
    %v1246 = vmul.f32 %v847, %v961
    %v1247 = vmul.f32 %v846, %v966
    %v1248 = vmul.f32 %v845, %v971
    %v1249 = vmul.f32 %v844, %v976
    %v1250 = vmul.f32 %v843, %v981
    %v1251 = vmul.f32 %v842, %v986
    %v1252 = vmul.f32 %v841, %v991
    %v1253 = vmul.f32 %v840, %v996
    %v1254 = vmul.f32 %v839, %v1001
    %v1255 = vmul.f32 %v838, %v1006
    %v1256 = vmul.f32 %v837, %v1011
    %v1257 = vmul.f32 %v836, %v1016
    %v1258 = vmul.f32 %v835, %v1021
    %v1259 = vmul.f32 %v834, %v1026
    %v1260 = vmul.f32 %v833, %v1031
    %v1261 = vmul.f32 %v832, %v1036
    %v1262 = vmul.f32 %v831, %v1041
    %v1263 = vmul.f32 %v830, %v1046
    %v1264 = vmul.f32 %v829, %v1051
    %v1265 = vmul.f32 %v828, %v1056
    %v1266 = vmul.f32 %v827, %v1061
    %v1267 = vmul.f32 %v826, %v1066
    %v1268 = vmul.f32 %v825, %v1071
    %v1269 = vmul.f32 %v824, %v1076
    %v1270 = vmul.f32 %v823, %v1081
    %v1271 = vmul.f32 %v822, %v1086
    %v1272 = vmul.f32 %v821, %v1091
    %v1273 = vmul.f32 %v820, %v1096
    %v1274 = vmul.f32 %v819, %v1101
    %v1275 = vmul.f32 %v818, %v1106
    %v1276 = vmul.f32 %v817, %v1111
    %v1277 = vmul.f32 %v816, %v1116
    %v1278 = vmul.f32 %v815, %v1121
    %v1279 = vmul.f32 %v814, %v1126
    %v1280 = vmul.f32 %v813, %v1131
    %v1281 = vmul.f32 %v812, %v1136
    %v1282 = vmul.f32 %v811, %v1141
    %v1283 = vmul.f32 %v810, %v1146
    %v1284 = vmul.f32 %v809, %v1151
    %v1285 = vmul.f32 %v808, %v1156
    %v1286 = vmul.f32 %v807, %v1161
    %v1287 = vmul.f32 %v806, %v1166
    %v1288 = vmul.f32 %v805, %v1171
    %v1289 = vmul.f32 %v804, %v1176
    %v1290 = vmul.f32 %v803, %v1181
    %v1291 = vmul.f32 %v802, %v1186
    %v1292 = vmul.f32 %v801, %v1191
    %v1293 = vmul.f32 %v800, %v1196
    %v1294 = vmul.f32 %v799, %v1201
    %v1295 = vmul.f32 %v798, %v1206
    %v1296 = vmul.f32 %v797, %v1211
    %v1297 = vmul.f32 %v796, %v1216
    %v1298 = vmul.f32 %v795, %v1221
    %v1299 = vmul.f32 %v794, %v1226
    %v1300 = vmul.f32 %v793, %v1231
    %v1301 = vmul.f32 %v792, %v1236
    %v1302 = vpack.c.bf16 %v1239, %v1238
    %v1303 = vpack.c.bf16 %v1241, %v1240
    %v1304 = vpack.c.bf16 %v1243, %v1242
    %v1305 = vpack.c.bf16 %v1245, %v1244
    %v1306 = vpack.c.bf16 %v1247, %v1246
    %v1307 = vpack.c.bf16 %v1249, %v1248
    %v1308 = vpack.c.bf16 %v1251, %v1250
    %v1309 = vpack.c.bf16 %v1253, %v1252
    %v1310 = vpack.c.bf16 %v1255, %v1254
    %v1311 = vpack.c.bf16 %v1257, %v1256
    %v1312 = vpack.c.bf16 %v1259, %v1258
    %v1313 = vpack.c.bf16 %v1261, %v1260
    %v1314 = vpack.c.bf16 %v1263, %v1262
    %v1315 = vpack.c.bf16 %v1265, %v1264
    %v1316 = vpack.c.bf16 %v1267, %v1266
    %v1317 = vpack.c.bf16 %v1269, %v1268
    %v1318 = vpack.c.bf16 %v1271, %v1270
    %v1319 = vpack.c.bf16 %v1273, %v1272
    %v1320 = vpack.c.bf16 %v1275, %v1274
    %v1321 = vpack.c.bf16 %v1277, %v1276
    %v1322 = vpack.c.bf16 %v1279, %v1278
    %v1323 = vpack.c.bf16 %v1281, %v1280
    %v1324 = vpack.c.bf16 %v1283, %v1282
    %v1325 = vpack.c.bf16 %v1285, %v1284
    %v1326 = vpack.c.bf16 %v1287, %v1286
    %v1327 = vpack.c.bf16 %v1289, %v1288
    %v1328 = vpack.c.bf16 %v1291, %v1290
    %v1329 = vpack.c.bf16 %v1293, %v1292
    %v1330 = vpack.c.bf16 %v1295, %v1294
    %v1331 = vpack.c.bf16 %v1297, %v1296
    %v1332 = vpack.c.bf16 %v1299, %v1298
    %v1333 = vpack.c.bf16 %v1301, %v1300
    %s1334 = scalar_lea.vmem %s1, 512
    %v1335 = vld [vmem:[%s1334] sm:$0xff]
    %v1336 = vld [vmem:[%s1334 + $0x8] sm:$0xff]
    %v1337 = vld [vmem:[%s1334 + $0x10] sm:$0xff]
    %v1338 = vld [vmem:[%s1334 + $0x18] sm:$0xff]
    %v1339 = vld [vmem:[%s1334 + $0x20] sm:$0xff]
    %v1340 = vld [vmem:[%s1334 + $0x28] sm:$0xff]
    %v1341 = vld [vmem:[%s1334 + $0x30] sm:$0xff]
    %v1342 = vld [vmem:[%s1334 + $0x38] sm:$0xff]
    %v1343 = vld [vmem:[%s1334 + $0x40] sm:$0xff]
    %v1344 = vld [vmem:[%s1334 + $0x48] sm:$0xff]
    %v1345 = vld [vmem:[%s1334 + $0x50] sm:$0xff]
    %v1346 = vld [vmem:[%s1334 + $0x58] sm:$0xff]
    %v1347 = vld [vmem:[%s1334 + $0x60] sm:$0xff]
    %v1348 = vld [vmem:[%s1334 + $0x68] sm:$0xff]
    %v1349 = vld [vmem:[%s1334 + $0x70] sm:$0xff]
    %v1350 = vld [vmem:[%s1334 + $0x78] sm:$0xff]
    %v1351 = vld [vmem:[%s1334 + $0x80] sm:$0xff]
    %v1352 = vld [vmem:[%s1334 + $0x88] sm:$0xff]
    %v1353 = vld [vmem:[%s1334 + $0x90] sm:$0xff]
    %v1354 = vld [vmem:[%s1334 + $0x98] sm:$0xff]
    %v1355 = vld [vmem:[%s1334 + $0xa0] sm:$0xff]
    %v1356 = vld [vmem:[%s1334 + $0xa8] sm:$0xff]
    %v1357 = vld [vmem:[%s1334 + $0xb0] sm:$0xff]
    %v1358 = vld [vmem:[%s1334 + $0xb8] sm:$0xff]
    %v1359 = vld [vmem:[%s1334 + $0xc0] sm:$0xff]
    %v1360 = vld [vmem:[%s1334 + $0xc8] sm:$0xff]
    %v1361 = vld [vmem:[%s1334 + $0xd0] sm:$0xff]
    %v1362 = vld [vmem:[%s1334 + $0xd8] sm:$0xff]
    %v1363 = vld [vmem:[%s1334 + $0xe0] sm:$0xff]
    %v1364 = vld [vmem:[%s1334 + $0xe8] sm:$0xff]
    %v1365 = vld [vmem:[%s1334 + $0xf0] sm:$0xff]
    %v1366 = vld [vmem:[%s1334 + $0xf8] sm:$0xff]
    %v1367 = vld [vmem:[%s1334 + $0x100] sm:$0xff]
    %v1368 = vld [vmem:[%s1334 + $0x108] sm:$0xff]
    %v1369 = vld [vmem:[%s1334 + $0x110] sm:$0xff]
    %v1370 = vld [vmem:[%s1334 + $0x118] sm:$0xff]
    %v1371 = vld [vmem:[%s1334 + $0x120] sm:$0xff]
    %v1372 = vld [vmem:[%s1334 + $0x128] sm:$0xff]
    %v1373 = vld [vmem:[%s1334 + $0x130] sm:$0xff]
    %v1374 = vld [vmem:[%s1334 + $0x138] sm:$0xff]
    %v1375 = vld [vmem:[%s1334 + $0x140] sm:$0xff]
    %v1376 = vld [vmem:[%s1334 + $0x148] sm:$0xff]
    %v1377 = vld [vmem:[%s1334 + $0x150] sm:$0xff]
    %v1378 = vld [vmem:[%s1334 + $0x158] sm:$0xff]
    %v1379 = vld [vmem:[%s1334 + $0x160] sm:$0xff]
    %v1380 = vld [vmem:[%s1334 + $0x168] sm:$0xff]
    %v1381 = vld [vmem:[%s1334 + $0x170] sm:$0xff]
    %v1382 = vld [vmem:[%s1334 + $0x178] sm:$0xff]
    %v1383 = vld [vmem:[%s1334 + $0x180] sm:$0xff]
    %v1384 = vld [vmem:[%s1334 + $0x188] sm:$0xff]
    %v1385 = vld [vmem:[%s1334 + $0x190] sm:$0xff]
    %v1386 = vld [vmem:[%s1334 + $0x198] sm:$0xff]
    %v1387 = vld [vmem:[%s1334 + $0x1a0] sm:$0xff]
    %v1388 = vld [vmem:[%s1334 + $0x1a8] sm:$0xff]
    %v1389 = vld [vmem:[%s1334 + $0x1b0] sm:$0xff]
    %v1390 = vld [vmem:[%s1334 + $0x1b8] sm:$0xff]
    %v1391 = vld [vmem:[%s1334 + $0x1c0] sm:$0xff]
    %v1392 = vld [vmem:[%s1334 + $0x1c8] sm:$0xff]
    %v1393 = vld [vmem:[%s1334 + $0x1d0] sm:$0xff]
    %v1394 = vld [vmem:[%s1334 + $0x1d8] sm:$0xff]
    %v1395 = vld [vmem:[%s1334 + $0x1e0] sm:$0xff]
    %v1396 = vld [vmem:[%s1334 + $0x1e8] sm:$0xff]
    %v1397 = vld [vmem:[%s1334 + $0x1f0] sm:$0xff]
    %v1398 = vld [vmem:[%s1334 + $0x1f8] sm:$0xff]
    %1400 = vset.pattern.permute.xlu0 0
    %1401 = vperm.xlu0 %1400, %v1335
    %v1402 = vpop.permute.xlu0 %1401
    %1405 = vset.pattern.permute.xlu0 0
    %1406 = vperm.xlu0 %1405, %v1336
    %v1407 = vpop.permute.xlu0 %1406
    %1410 = vset.pattern.permute.xlu0 0
    %1411 = vperm.xlu0 %1410, %v1337
    %v1412 = vpop.permute.xlu0 %1411
    %1415 = vset.pattern.permute.xlu0 0
    %1416 = vperm.xlu0 %1415, %v1338
    %v1417 = vpop.permute.xlu0 %1416
    %1420 = vset.pattern.permute.xlu0 0
    %1421 = vperm.xlu0 %1420, %v1339
    %v1422 = vpop.permute.xlu0 %1421
    %1425 = vset.pattern.permute.xlu0 0
    %1426 = vperm.xlu0 %1425, %v1340
    %v1427 = vpop.permute.xlu0 %1426
    %1430 = vset.pattern.permute.xlu0 0
    %1431 = vperm.xlu0 %1430, %v1341
    %v1432 = vpop.permute.xlu0 %1431
    %1435 = vset.pattern.permute.xlu0 0
    %1436 = vperm.xlu0 %1435, %v1342
    %v1437 = vpop.permute.xlu0 %1436
    %1440 = vset.pattern.permute.xlu0 0
    %1441 = vperm.xlu0 %1440, %v1343
    %v1442 = vpop.permute.xlu0 %1441
    %1445 = vset.pattern.permute.xlu0 0
    %1446 = vperm.xlu0 %1445, %v1344
    %v1447 = vpop.permute.xlu0 %1446
    %1450 = vset.pattern.permute.xlu0 0
    %1451 = vperm.xlu0 %1450, %v1345
    %v1452 = vpop.permute.xlu0 %1451
    %1455 = vset.pattern.permute.xlu0 0
    %1456 = vperm.xlu0 %1455, %v1346
    %v1457 = vpop.permute.xlu0 %1456
    %1460 = vset.pattern.permute.xlu0 0
    %1461 = vperm.xlu0 %1460, %v1347
    %v1462 = vpop.permute.xlu0 %1461
    %1465 = vset.pattern.permute.xlu0 0
    %1466 = vperm.xlu0 %1465, %v1348
    %v1467 = vpop.permute.xlu0 %1466
    %1470 = vset.pattern.permute.xlu0 0
    %1471 = vperm.xlu0 %1470, %v1349
    %v1472 = vpop.permute.xlu0 %1471
    %1475 = vset.pattern.permute.xlu0 0
    %1476 = vperm.xlu0 %1475, %v1350
    %v1477 = vpop.permute.xlu0 %1476
    %1480 = vset.pattern.permute.xlu0 0
    %1481 = vperm.xlu0 %1480, %v1351
    %v1482 = vpop.permute.xlu0 %1481
    %1485 = vset.pattern.permute.xlu0 0
    %1486 = vperm.xlu0 %1485, %v1352
    %v1487 = vpop.permute.xlu0 %1486
    %1490 = vset.pattern.permute.xlu0 0
    %1491 = vperm.xlu0 %1490, %v1353
    %v1492 = vpop.permute.xlu0 %1491
    %1495 = vset.pattern.permute.xlu0 0
    %1496 = vperm.xlu0 %1495, %v1354
    %v1497 = vpop.permute.xlu0 %1496
    %1500 = vset.pattern.permute.xlu0 0
    %1501 = vperm.xlu0 %1500, %v1355
    %v1502 = vpop.permute.xlu0 %1501
    %1505 = vset.pattern.permute.xlu0 0
    %1506 = vperm.xlu0 %1505, %v1356
    %v1507 = vpop.permute.xlu0 %1506
    %1510 = vset.pattern.permute.xlu0 0
    %1511 = vperm.xlu0 %1510, %v1357
    %v1512 = vpop.permute.xlu0 %1511
    %1515 = vset.pattern.permute.xlu0 0
    %1516 = vperm.xlu0 %1515, %v1358
    %v1517 = vpop.permute.xlu0 %1516
    %1520 = vset.pattern.permute.xlu0 0
    %1521 = vperm.xlu0 %1520, %v1359
    %v1522 = vpop.permute.xlu0 %1521
    %1525 = vset.pattern.permute.xlu0 0
    %1526 = vperm.xlu0 %1525, %v1360
    %v1527 = vpop.permute.xlu0 %1526
    %1530 = vset.pattern.permute.xlu0 0
    %1531 = vperm.xlu0 %1530, %v1361
    %v1532 = vpop.permute.xlu0 %1531
    %1535 = vset.pattern.permute.xlu0 0
    %1536 = vperm.xlu0 %1535, %v1362
    %v1537 = vpop.permute.xlu0 %1536
    %1540 = vset.pattern.permute.xlu0 0
    %1541 = vperm.xlu0 %1540, %v1363
    %v1542 = vpop.permute.xlu0 %1541
    %1545 = vset.pattern.permute.xlu0 0
    %1546 = vperm.xlu0 %1545, %v1364
    %v1547 = vpop.permute.xlu0 %1546
    %1550 = vset.pattern.permute.xlu0 0
    %1551 = vperm.xlu0 %1550, %v1365
    %v1552 = vpop.permute.xlu0 %1551
    %1555 = vset.pattern.permute.xlu0 0
    %1556 = vperm.xlu0 %1555, %v1366
    %v1557 = vpop.permute.xlu0 %1556
    %1560 = vset.pattern.permute.xlu0 0
    %1561 = vperm.xlu0 %1560, %v1367
    %v1562 = vpop.permute.xlu0 %1561
    %1565 = vset.pattern.permute.xlu0 0
    %1566 = vperm.xlu0 %1565, %v1368
    %v1567 = vpop.permute.xlu0 %1566
    %1570 = vset.pattern.permute.xlu0 0
    %1571 = vperm.xlu0 %1570, %v1369
    %v1572 = vpop.permute.xlu0 %1571
    %1575 = vset.pattern.permute.xlu0 0
    %1576 = vperm.xlu0 %1575, %v1370
    %v1577 = vpop.permute.xlu0 %1576
    %1580 = vset.pattern.permute.xlu0 0
    %1581 = vperm.xlu0 %1580, %v1371
    %v1582 = vpop.permute.xlu0 %1581
    %1585 = vset.pattern.permute.xlu0 0
    %1586 = vperm.xlu0 %1585, %v1372
    %v1587 = vpop.permute.xlu0 %1586
    %1590 = vset.pattern.permute.xlu0 0
    %1591 = vperm.xlu0 %1590, %v1373
    %v1592 = vpop.permute.xlu0 %1591
    %1595 = vset.pattern.permute.xlu0 0
    %1596 = vperm.xlu0 %1595, %v1374
    %v1597 = vpop.permute.xlu0 %1596
    %1600 = vset.pattern.permute.xlu0 0
    %1601 = vperm.xlu0 %1600, %v1375
    %v1602 = vpop.permute.xlu0 %1601
    %1605 = vset.pattern.permute.xlu0 0
    %1606 = vperm.xlu0 %1605, %v1376
    %v1607 = vpop.permute.xlu0 %1606
    %1610 = vset.pattern.permute.xlu0 0
    %1611 = vperm.xlu0 %1610, %v1377
    %v1612 = vpop.permute.xlu0 %1611
    %1615 = vset.pattern.permute.xlu0 0
    %1616 = vperm.xlu0 %1615, %v1378
    %v1617 = vpop.permute.xlu0 %1616
    %1620 = vset.pattern.permute.xlu0 0
    %1621 = vperm.xlu0 %1620, %v1379
    %v1622 = vpop.permute.xlu0 %1621
    %1625 = vset.pattern.permute.xlu0 0
    %1626 = vperm.xlu0 %1625, %v1380
    %v1627 = vpop.permute.xlu0 %1626
    %1630 = vset.pattern.permute.xlu0 0
    %1631 = vperm.xlu0 %1630, %v1381
    %v1632 = vpop.permute.xlu0 %1631
    %1635 = vset.pattern.permute.xlu0 0
    %1636 = vperm.xlu0 %1635, %v1382
    %v1637 = vpop.permute.xlu0 %1636
    %1640 = vset.pattern.permute.xlu0 0
    %1641 = vperm.xlu0 %1640, %v1383
    %v1642 = vpop.permute.xlu0 %1641
    %1645 = vset.pattern.permute.xlu0 0
    %1646 = vperm.xlu0 %1645, %v1384
    %v1647 = vpop.permute.xlu0 %1646
    %1650 = vset.pattern.permute.xlu0 0
    %1651 = vperm.xlu0 %1650, %v1385
    %v1652 = vpop.permute.xlu0 %1651
    %1655 = vset.pattern.permute.xlu0 0
    %1656 = vperm.xlu0 %1655, %v1386
    %v1657 = vpop.permute.xlu0 %1656
    %1660 = vset.pattern.permute.xlu0 0
    %1661 = vperm.xlu0 %1660, %v1387
    %v1662 = vpop.permute.xlu0 %1661
    %1665 = vset.pattern.permute.xlu0 0
    %1666 = vperm.xlu0 %1665, %v1388
    %v1667 = vpop.permute.xlu0 %1666
    %1670 = vset.pattern.permute.xlu0 0
    %1671 = vperm.xlu0 %1670, %v1389
    %v1672 = vpop.permute.xlu0 %1671
    %1675 = vset.pattern.permute.xlu0 0
    %1676 = vperm.xlu0 %1675, %v1390
    %v1677 = vpop.permute.xlu0 %1676
    %1680 = vset.pattern.permute.xlu0 0
    %1681 = vperm.xlu0 %1680, %v1391
    %v1682 = vpop.permute.xlu0 %1681
    %1685 = vset.pattern.permute.xlu0 0
    %1686 = vperm.xlu0 %1685, %v1392
    %v1687 = vpop.permute.xlu0 %1686
    %1690 = vset.pattern.permute.xlu0 0
    %1691 = vperm.xlu0 %1690, %v1393
    %v1692 = vpop.permute.xlu0 %1691
    %1695 = vset.pattern.permute.xlu0 0
    %1696 = vperm.xlu0 %1695, %v1394
    %v1697 = vpop.permute.xlu0 %1696
    %1700 = vset.pattern.permute.xlu0 0
    %1701 = vperm.xlu0 %1700, %v1395
    %v1702 = vpop.permute.xlu0 %1701
    %1705 = vset.pattern.permute.xlu0 0
    %1706 = vperm.xlu0 %1705, %v1396
    %v1707 = vpop.permute.xlu0 %1706
    %1710 = vset.pattern.permute.xlu0 0
    %1711 = vperm.xlu0 %1710, %v1397
    %v1712 = vpop.permute.xlu0 %1711
    %1715 = vset.pattern.permute.xlu0 0
    %1716 = vperm.xlu0 %1715, %v1398
    %v1717 = vpop.permute.xlu0 %1716
    %v1719 = vmul.f32 %v721, %v1402
    %v1720 = vmul.f32 %v722, %v1407
    %v1721 = vmul.f32 %v659, %v1412
    %v1722 = vmul.f32 %v660, %v1417
    %v1723 = vmul.f32 %v661, %v1422
    %v1724 = vmul.f32 %v662, %v1427
    %v1725 = vmul.f32 %v663, %v1432
    %v1726 = vmul.f32 %v664, %v1437
    %v1727 = vmul.f32 %v665, %v1442
    %v1728 = vmul.f32 %v666, %v1447
    %v1729 = vmul.f32 %v667, %v1452
    %v1730 = vmul.f32 %v668, %v1457
    %v1731 = vmul.f32 %v669, %v1462
    %v1732 = vmul.f32 %v670, %v1467
    %v1733 = vmul.f32 %v671, %v1472
    %v1734 = vmul.f32 %v672, %v1477
    %v1735 = vmul.f32 %v673, %v1482
    %v1736 = vmul.f32 %v674, %v1487
    %v1737 = vmul.f32 %v675, %v1492
    %v1738 = vmul.f32 %v676, %v1497
    %v1739 = vmul.f32 %v677, %v1502
    %v1740 = vmul.f32 %v678, %v1507
    %v1741 = vmul.f32 %v679, %v1512
    %v1742 = vmul.f32 %v680, %v1517
    %v1743 = vmul.f32 %v681, %v1522
    %v1744 = vmul.f32 %v682, %v1527
    %v1745 = vmul.f32 %v683, %v1532
    %v1746 = vmul.f32 %v684, %v1537
    %v1747 = vmul.f32 %v685, %v1542
    %v1748 = vmul.f32 %v686, %v1547
    %v1749 = vmul.f32 %v687, %v1552
    %v1750 = vmul.f32 %v688, %v1557
    %v1751 = vmul.f32 %v689, %v1562
    %v1752 = vmul.f32 %v690, %v1567
    %v1753 = vmul.f32 %v691, %v1572
    %v1754 = vmul.f32 %v692, %v1577
    %v1755 = vmul.f32 %v693, %v1582
    %v1756 = vmul.f32 %v694, %v1587
    %v1757 = vmul.f32 %v695, %v1592
    %v1758 = vmul.f32 %v696, %v1597
    %v1759 = vmul.f32 %v697, %v1602
    %v1760 = vmul.f32 %v698, %v1607
    %v1761 = vmul.f32 %v699, %v1612
    %v1762 = vmul.f32 %v700, %v1617
    %v1763 = vmul.f32 %v701, %v1622
    %v1764 = vmul.f32 %v702, %v1627
    %v1765 = vmul.f32 %v703, %v1632
    %v1766 = vmul.f32 %v704, %v1637
    %v1767 = vmul.f32 %v705, %v1642
    %v1768 = vmul.f32 %v706, %v1647
    %v1769 = vmul.f32 %v707, %v1652
    %v1770 = vmul.f32 %v708, %v1657
    %v1771 = vmul.f32 %v709, %v1662
    %v1772 = vmul.f32 %v710, %v1667
    %v1773 = vmul.f32 %v711, %v1672
    %v1774 = vmul.f32 %v712, %v1677
    %v1775 = vmul.f32 %v713, %v1682
    %v1776 = vmul.f32 %v714, %v1687
    %v1777 = vmul.f32 %v715, %v1692
    %v1778 = vmul.f32 %v716, %v1697
    %v1779 = vmul.f32 %v717, %v1702
    %v1780 = vmul.f32 %v718, %v1707
    %v1781 = vmul.f32 %v719, %v1712
    %v1782 = vmul.f32 %v720, %v1717
    %v1783 = vpack.c.bf16 %v1720, %v1719
    %v1784 = vpack.c.bf16 %v1722, %v1721
    %v1785 = vpack.c.bf16 %v1724, %v1723
    %v1786 = vpack.c.bf16 %v1726, %v1725
    %v1787 = vpack.c.bf16 %v1728, %v1727
    %v1788 = vpack.c.bf16 %v1730, %v1729
    %v1789 = vpack.c.bf16 %v1732, %v1731
    %v1790 = vpack.c.bf16 %v1734, %v1733
    %v1791 = vpack.c.bf16 %v1736, %v1735
    %v1792 = vpack.c.bf16 %v1738, %v1737
    %v1793 = vpack.c.bf16 %v1740, %v1739
    %v1794 = vpack.c.bf16 %v1742, %v1741
    %v1795 = vpack.c.bf16 %v1744, %v1743
    %v1796 = vpack.c.bf16 %v1746, %v1745
    %v1797 = vpack.c.bf16 %v1748, %v1747
    %v1798 = vpack.c.bf16 %v1750, %v1749
    %v1799 = vpack.c.bf16 %v1752, %v1751
    %v1800 = vpack.c.bf16 %v1754, %v1753
    %v1801 = vpack.c.bf16 %v1756, %v1755
    %v1802 = vpack.c.bf16 %v1758, %v1757
    %v1803 = vpack.c.bf16 %v1760, %v1759
    %v1804 = vpack.c.bf16 %v1762, %v1761
    %v1805 = vpack.c.bf16 %v1764, %v1763
    %v1806 = vpack.c.bf16 %v1766, %v1765
    %v1807 = vpack.c.bf16 %v1768, %v1767
    %v1808 = vpack.c.bf16 %v1770, %v1769
    %v1809 = vpack.c.bf16 %v1772, %v1771
    %v1810 = vpack.c.bf16 %v1774, %v1773
    %v1811 = vpack.c.bf16 %v1776, %v1775
    %v1812 = vpack.c.bf16 %v1778, %v1777
    %v1813 = vpack.c.bf16 %v1780, %v1779
    %v1814 = vpack.c.bf16 %v1782, %v1781
    %v1815 = vrot.slane %v659, 1
    %v1816 = vrot.slane %v660, 1
    %v1817 = vrot.slane %v661, 1
    %v1818 = vrot.slane %v662, 1
    %v1819 = vrot.slane %v663, 1
    %v1820 = vrot.slane %v664, 1
    %v1821 = vrot.slane %v665, 1
    %v1822 = vrot.slane %v666, 1
    %v1823 = vrot.slane %v667, 1
    %v1824 = vrot.slane %v668, 1
    %v1825 = vrot.slane %v669, 1
    %v1826 = vrot.slane %v670, 1
    %v1827 = vrot.slane %v671, 1
    %v1828 = vrot.slane %v672, 1
    %v1829 = vrot.slane %v673, 1
    %v1830 = vrot.slane %v674, 1
    %v1831 = vrot.slane %v675, 1
    %v1832 = vrot.slane %v676, 1
    %v1833 = vrot.slane %v677, 1
    %v1834 = vrot.slane %v678, 1
    %v1835 = vrot.slane %v679, 1
    %v1836 = vrot.slane %v680, 1
    %v1837 = vrot.slane %v681, 1
    %v1838 = vrot.slane %v682, 1
    %v1839 = vrot.slane %v683, 1
    %v1840 = vrot.slane %v684, 1
    %v1841 = vrot.slane %v685, 1
    %v1842 = vrot.slane %v686, 1
    %v1843 = vrot.slane %v687, 1
    %v1844 = vrot.slane %v688, 1
    %v1845 = vrot.slane %v689, 1
    %v1846 = vrot.slane %v690, 1
    %v1847 = vrot.slane %v691, 1
    %v1848 = vrot.slane %v692, 1
    %v1849 = vrot.slane %v693, 1
    %v1850 = vrot.slane %v694, 1
    %v1851 = vrot.slane %v695, 1
    %v1852 = vrot.slane %v696, 1
    %v1853 = vrot.slane %v697, 1
    %v1854 = vrot.slane %v698, 1
    %v1855 = vrot.slane %v699, 1
    %v1856 = vrot.slane %v700, 1
    %v1857 = vrot.slane %v701, 1
    %v1858 = vrot.slane %v702, 1
    %v1859 = vrot.slane %v703, 1
    %v1860 = vrot.slane %v704, 1
    %v1861 = vrot.slane %v705, 1
    %v1862 = vrot.slane %v706, 1
    %v1863 = vrot.slane %v707, 1
    %v1864 = vrot.slane %v708, 1
    %v1865 = vrot.slane %v709, 1
    %v1866 = vrot.slane %v710, 1
    %v1867 = vrot.slane %v711, 1
    %v1868 = vrot.slane %v712, 1
    %v1869 = vrot.slane %v713, 1
    %v1870 = vrot.slane %v714, 1
    %v1871 = vrot.slane %v715, 1
    %v1872 = vrot.slane %v716, 1
    %v1873 = vrot.slane %v717, 1
    %v1874 = vrot.slane %v718, 1
    %v1875 = vrot.slane %v719, 1
    %v1876 = vrot.slane %v720, 1
    %v1877 = vrot.slane %v721, 1
    %v1878 = vrot.slane %v722, 1
    %vm1879 = vcmp.lt.s32.totalorder %v788, 7
    %v1880 = vsel %vm1879, %v1877, %v1878
    %v1881 = vsel %vm1879, %v1876, %v1877
    %v1882 = vsel %vm1879, %v1875, %v1876
    %v1883 = vsel %vm1879, %v1874, %v1875
    %v1884 = vsel %vm1879, %v1873, %v1874
    %v1885 = vsel %vm1879, %v1872, %v1873
    %v1886 = vsel %vm1879, %v1871, %v1872
    %v1887 = vsel %vm1879, %v1870, %v1871
    %v1888 = vsel %vm1879, %v1869, %v1870
    %v1889 = vsel %vm1879, %v1868, %v1869
    %v1890 = vsel %vm1879, %v1867, %v1868
    %v1891 = vsel %vm1879, %v1866, %v1867
    %v1892 = vsel %vm1879, %v1865, %v1866
    %v1893 = vsel %vm1879, %v1864, %v1865
    %v1894 = vsel %vm1879, %v1863, %v1864
    %v1895 = vsel %vm1879, %v1862, %v1863
    %v1896 = vsel %vm1879, %v1861, %v1862
    %v1897 = vsel %vm1879, %v1860, %v1861
    %v1898 = vsel %vm1879, %v1859, %v1860
    %v1899 = vsel %vm1879, %v1858, %v1859
    %v1900 = vsel %vm1879, %v1857, %v1858
    %v1901 = vsel %vm1879, %v1856, %v1857
    %v1902 = vsel %vm1879, %v1855, %v1856
    %v1903 = vsel %vm1879, %v1854, %v1855
    %v1904 = vsel %vm1879, %v1853, %v1854
    %v1905 = vsel %vm1879, %v1852, %v1853
    %v1906 = vsel %vm1879, %v1851, %v1852
    %v1907 = vsel %vm1879, %v1850, %v1851
    %v1908 = vsel %vm1879, %v1849, %v1850
    %v1909 = vsel %vm1879, %v1848, %v1849
    %v1910 = vsel %vm1879, %v1847, %v1848
    %v1911 = vsel %vm1879, %v1846, %v1847
    %v1912 = vsel %vm1879, %v1845, %v1846
    %v1913 = vsel %vm1879, %v1844, %v1845
    %v1914 = vsel %vm1879, %v1843, %v1844
    %v1915 = vsel %vm1879, %v1842, %v1843
    %v1916 = vsel %vm1879, %v1841, %v1842
    %v1917 = vsel %vm1879, %v1840, %v1841
    %v1918 = vsel %vm1879, %v1839, %v1840
    %v1919 = vsel %vm1879, %v1838, %v1839
    %v1920 = vsel %vm1879, %v1837, %v1838
    %v1921 = vsel %vm1879, %v1836, %v1837
    %v1922 = vsel %vm1879, %v1835, %v1836
    %v1923 = vsel %vm1879, %v1834, %v1835
    %v1924 = vsel %vm1879, %v1833, %v1834
    %v1925 = vsel %vm1879, %v1832, %v1833
    %v1926 = vsel %vm1879, %v1831, %v1832
    %v1927 = vsel %vm1879, %v1830, %v1831
    %v1928 = vsel %vm1879, %v1829, %v1830
    %v1929 = vsel %vm1879, %v1828, %v1829
    %v1930 = vsel %vm1879, %v1827, %v1828
    %v1931 = vsel %vm1879, %v1826, %v1827
    %v1932 = vsel %vm1879, %v1825, %v1826
    %v1933 = vsel %vm1879, %v1824, %v1825
    %v1934 = vsel %vm1879, %v1823, %v1824
    %v1935 = vsel %vm1879, %v1822, %v1823
    %v1936 = vsel %vm1879, %v1821, %v1822
    %v1937 = vsel %vm1879, %v1820, %v1821
    %v1938 = vsel %vm1879, %v1819, %v1820
    %v1939 = vsel %vm1879, %v1818, %v1819
    %v1940 = vsel %vm1879, %v1817, %v1818
    %v1941 = vsel %vm1879, %v1816, %v1817
    %v1942 = vsel %vm1879, %v1815, %v1816
    %v1943 = vsel %vm1879, %v1878, %v1815
    %s1944 = scalar_lea.vmem %s1, 1024
    %v1945 = vld [vmem:[%s1944] sm:$0xff]
    %v1946 = vld [vmem:[%s1944 + $0x8] sm:$0xff]
    %v1947 = vld [vmem:[%s1944 + $0x10] sm:$0xff]
    %v1948 = vld [vmem:[%s1944 + $0x18] sm:$0xff]
    %v1949 = vld [vmem:[%s1944 + $0x20] sm:$0xff]
    %v1950 = vld [vmem:[%s1944 + $0x28] sm:$0xff]
    %v1951 = vld [vmem:[%s1944 + $0x30] sm:$0xff]
    %v1952 = vld [vmem:[%s1944 + $0x38] sm:$0xff]
    %v1953 = vld [vmem:[%s1944 + $0x40] sm:$0xff]
    %v1954 = vld [vmem:[%s1944 + $0x48] sm:$0xff]
    %v1955 = vld [vmem:[%s1944 + $0x50] sm:$0xff]
    %v1956 = vld [vmem:[%s1944 + $0x58] sm:$0xff]
    %v1957 = vld [vmem:[%s1944 + $0x60] sm:$0xff]
    %v1958 = vld [vmem:[%s1944 + $0x68] sm:$0xff]
    %v1959 = vld [vmem:[%s1944 + $0x70] sm:$0xff]
    %v1960 = vld [vmem:[%s1944 + $0x78] sm:$0xff]
    %v1961 = vld [vmem:[%s1944 + $0x80] sm:$0xff]
    %v1962 = vld [vmem:[%s1944 + $0x88] sm:$0xff]
    %v1963 = vld [vmem:[%s1944 + $0x90] sm:$0xff]
    %v1964 = vld [vmem:[%s1944 + $0x98] sm:$0xff]
    %v1965 = vld [vmem:[%s1944 + $0xa0] sm:$0xff]
    %v1966 = vld [vmem:[%s1944 + $0xa8] sm:$0xff]
    %v1967 = vld [vmem:[%s1944 + $0xb0] sm:$0xff]
    %v1968 = vld [vmem:[%s1944 + $0xb8] sm:$0xff]
    %v1969 = vld [vmem:[%s1944 + $0xc0] sm:$0xff]
    %v1970 = vld [vmem:[%s1944 + $0xc8] sm:$0xff]
    %v1971 = vld [vmem:[%s1944 + $0xd0] sm:$0xff]
    %v1972 = vld [vmem:[%s1944 + $0xd8] sm:$0xff]
    %v1973 = vld [vmem:[%s1944 + $0xe0] sm:$0xff]
    %v1974 = vld [vmem:[%s1944 + $0xe8] sm:$0xff]
    %v1975 = vld [vmem:[%s1944 + $0xf0] sm:$0xff]
    %v1976 = vld [vmem:[%s1944 + $0xf8] sm:$0xff]
    %v1977 = vld [vmem:[%s1944 + $0x100] sm:$0xff]
    %v1978 = vld [vmem:[%s1944 + $0x108] sm:$0xff]
    %v1979 = vld [vmem:[%s1944 + $0x110] sm:$0xff]
    %v1980 = vld [vmem:[%s1944 + $0x118] sm:$0xff]
    %v1981 = vld [vmem:[%s1944 + $0x120] sm:$0xff]
    %v1982 = vld [vmem:[%s1944 + $0x128] sm:$0xff]
    %v1983 = vld [vmem:[%s1944 + $0x130] sm:$0xff]
    %v1984 = vld [vmem:[%s1944 + $0x138] sm:$0xff]
    %v1985 = vld [vmem:[%s1944 + $0x140] sm:$0xff]
    %v1986 = vld [vmem:[%s1944 + $0x148] sm:$0xff]
    %v1987 = vld [vmem:[%s1944 + $0x150] sm:$0xff]
    %v1988 = vld [vmem:[%s1944 + $0x158] sm:$0xff]
    %v1989 = vld [vmem:[%s1944 + $0x160] sm:$0xff]
    %v1990 = vld [vmem:[%s1944 + $0x168] sm:$0xff]
    %v1991 = vld [vmem:[%s1944 + $0x170] sm:$0xff]
    %v1992 = vld [vmem:[%s1944 + $0x178] sm:$0xff]
    %v1993 = vld [vmem:[%s1944 + $0x180] sm:$0xff]
    %v1994 = vld [vmem:[%s1944 + $0x188] sm:$0xff]
    %v1995 = vld [vmem:[%s1944 + $0x190] sm:$0xff]
    %v1996 = vld [vmem:[%s1944 + $0x198] sm:$0xff]
    %v1997 = vld [vmem:[%s1944 + $0x1a0] sm:$0xff]
    %v1998 = vld [vmem:[%s1944 + $0x1a8] sm:$0xff]
    %v1999 = vld [vmem:[%s1944 + $0x1b0] sm:$0xff]
    %v2000 = vld [vmem:[%s1944 + $0x1b8] sm:$0xff]
    %v2001 = vld [vmem:[%s1944 + $0x1c0] sm:$0xff]
    %v2002 = vld [vmem:[%s1944 + $0x1c8] sm:$0xff]
    %v2003 = vld [vmem:[%s1944 + $0x1d0] sm:$0xff]
    %v2004 = vld [vmem:[%s1944 + $0x1d8] sm:$0xff]
    %v2005 = vld [vmem:[%s1944 + $0x1e0] sm:$0xff]
    %v2006 = vld [vmem:[%s1944 + $0x1e8] sm:$0xff]
    %v2007 = vld [vmem:[%s1944 + $0x1f0] sm:$0xff]
    %v2008 = vld [vmem:[%s1944 + $0x1f8] sm:$0xff]
    %2010 = vset.pattern.permute.xlu0 0
    %2011 = vperm.xlu0 %2010, %v1945
    %v2012 = vpop.permute.xlu0 %2011
    %2015 = vset.pattern.permute.xlu0 0
    %2016 = vperm.xlu0 %2015, %v1946
    %v2017 = vpop.permute.xlu0 %2016
    %2020 = vset.pattern.permute.xlu0 0
    %2021 = vperm.xlu0 %2020, %v1947
    %v2022 = vpop.permute.xlu0 %2021
    %2025 = vset.pattern.permute.xlu0 0
    %2026 = vperm.xlu0 %2025, %v1948
    %v2027 = vpop.permute.xlu0 %2026
    %2030 = vset.pattern.permute.xlu0 0
    %2031 = vperm.xlu0 %2030, %v1949
    %v2032 = vpop.permute.xlu0 %2031
    %2035 = vset.pattern.permute.xlu0 0
    %2036 = vperm.xlu0 %2035, %v1950
    %v2037 = vpop.permute.xlu0 %2036
    %2040 = vset.pattern.permute.xlu0 0
    %2041 = vperm.xlu0 %2040, %v1951
    %v2042 = vpop.permute.xlu0 %2041
    %2045 = vset.pattern.permute.xlu0 0
    %2046 = vperm.xlu0 %2045, %v1952
    %v2047 = vpop.permute.xlu0 %2046
    %2050 = vset.pattern.permute.xlu0 0
    %2051 = vperm.xlu0 %2050, %v1953
    %v2052 = vpop.permute.xlu0 %2051
    %2055 = vset.pattern.permute.xlu0 0
    %2056 = vperm.xlu0 %2055, %v1954
    %v2057 = vpop.permute.xlu0 %2056
    %2060 = vset.pattern.permute.xlu0 0
    %2061 = vperm.xlu0 %2060, %v1955
    %v2062 = vpop.permute.xlu0 %2061
    %2065 = vset.pattern.permute.xlu0 0
    %2066 = vperm.xlu0 %2065, %v1956
    %v2067 = vpop.permute.xlu0 %2066
    %2070 = vset.pattern.permute.xlu0 0
    %2071 = vperm.xlu0 %2070, %v1957
    %v2072 = vpop.permute.xlu0 %2071
    %2075 = vset.pattern.permute.xlu0 0
    %2076 = vperm.xlu0 %2075, %v1958
    %v2077 = vpop.permute.xlu0 %2076
    %2080 = vset.pattern.permute.xlu0 0
    %2081 = vperm.xlu0 %2080, %v1959
    %v2082 = vpop.permute.xlu0 %2081
    %2085 = vset.pattern.permute.xlu0 0
    %2086 = vperm.xlu0 %2085, %v1960
    %v2087 = vpop.permute.xlu0 %2086
    %2090 = vset.pattern.permute.xlu0 0
    %2091 = vperm.xlu0 %2090, %v1961
    %v2092 = vpop.permute.xlu0 %2091
    %2095 = vset.pattern.permute.xlu0 0
    %2096 = vperm.xlu0 %2095, %v1962
    %v2097 = vpop.permute.xlu0 %2096
    %2100 = vset.pattern.permute.xlu0 0
    %2101 = vperm.xlu0 %2100, %v1963
    %v2102 = vpop.permute.xlu0 %2101
    %2105 = vset.pattern.permute.xlu0 0
    %2106 = vperm.xlu0 %2105, %v1964
    %v2107 = vpop.permute.xlu0 %2106
    %2110 = vset.pattern.permute.xlu0 0
    %2111 = vperm.xlu0 %2110, %v1965
    %v2112 = vpop.permute.xlu0 %2111
    %2115 = vset.pattern.permute.xlu0 0
    %2116 = vperm.xlu0 %2115, %v1966
    %v2117 = vpop.permute.xlu0 %2116
    %2120 = vset.pattern.permute.xlu0 0
    %2121 = vperm.xlu0 %2120, %v1967
    %v2122 = vpop.permute.xlu0 %2121
    %2125 = vset.pattern.permute.xlu0 0
    %2126 = vperm.xlu0 %2125, %v1968
    %v2127 = vpop.permute.xlu0 %2126
    %2130 = vset.pattern.permute.xlu0 0
    %2131 = vperm.xlu0 %2130, %v1969
    %v2132 = vpop.permute.xlu0 %2131
    %2135 = vset.pattern.permute.xlu0 0
    %2136 = vperm.xlu0 %2135, %v1970
    %v2137 = vpop.permute.xlu0 %2136
    %2140 = vset.pattern.permute.xlu0 0
    %2141 = vperm.xlu0 %2140, %v1971
    %v2142 = vpop.permute.xlu0 %2141
    %2145 = vset.pattern.permute.xlu0 0
    %2146 = vperm.xlu0 %2145, %v1972
    %v2147 = vpop.permute.xlu0 %2146
    %2150 = vset.pattern.permute.xlu0 0
    %2151 = vperm.xlu0 %2150, %v1973
    %v2152 = vpop.permute.xlu0 %2151
    %2155 = vset.pattern.permute.xlu0 0
    %2156 = vperm.xlu0 %2155, %v1974
    %v2157 = vpop.permute.xlu0 %2156
    %2160 = vset.pattern.permute.xlu0 0
    %2161 = vperm.xlu0 %2160, %v1975
    %v2162 = vpop.permute.xlu0 %2161
    %2165 = vset.pattern.permute.xlu0 0
    %2166 = vperm.xlu0 %2165, %v1976
    %v2167 = vpop.permute.xlu0 %2166
    %2170 = vset.pattern.permute.xlu0 0
    %2171 = vperm.xlu0 %2170, %v1977
    %v2172 = vpop.permute.xlu0 %2171
    %2175 = vset.pattern.permute.xlu0 0
    %2176 = vperm.xlu0 %2175, %v1978
    %v2177 = vpop.permute.xlu0 %2176
    %2180 = vset.pattern.permute.xlu0 0
    %2181 = vperm.xlu0 %2180, %v1979
    %v2182 = vpop.permute.xlu0 %2181
    %2185 = vset.pattern.permute.xlu0 0
    %2186 = vperm.xlu0 %2185, %v1980
    %v2187 = vpop.permute.xlu0 %2186
    %2190 = vset.pattern.permute.xlu0 0
    %2191 = vperm.xlu0 %2190, %v1981
    %v2192 = vpop.permute.xlu0 %2191
    %2195 = vset.pattern.permute.xlu0 0
    %2196 = vperm.xlu0 %2195, %v1982
    %v2197 = vpop.permute.xlu0 %2196
    %2200 = vset.pattern.permute.xlu0 0
    %2201 = vperm.xlu0 %2200, %v1983
    %v2202 = vpop.permute.xlu0 %2201
    %2205 = vset.pattern.permute.xlu0 0
    %2206 = vperm.xlu0 %2205, %v1984
    %v2207 = vpop.permute.xlu0 %2206
    %2210 = vset.pattern.permute.xlu0 0
    %2211 = vperm.xlu0 %2210, %v1985
    %v2212 = vpop.permute.xlu0 %2211
    %2215 = vset.pattern.permute.xlu0 0
    %2216 = vperm.xlu0 %2215, %v1986
    %v2217 = vpop.permute.xlu0 %2216
    %2220 = vset.pattern.permute.xlu0 0
    %2221 = vperm.xlu0 %2220, %v1987
    %v2222 = vpop.permute.xlu0 %2221
    %2225 = vset.pattern.permute.xlu0 0
    %2226 = vperm.xlu0 %2225, %v1988
    %v2227 = vpop.permute.xlu0 %2226
    %2230 = vset.pattern.permute.xlu0 0
    %2231 = vperm.xlu0 %2230, %v1989
    %v2232 = vpop.permute.xlu0 %2231
    %2235 = vset.pattern.permute.xlu0 0
    %2236 = vperm.xlu0 %2235, %v1990
    %v2237 = vpop.permute.xlu0 %2236
    %2240 = vset.pattern.permute.xlu0 0
    %2241 = vperm.xlu0 %2240, %v1991
    %v2242 = vpop.permute.xlu0 %2241
    %2245 = vset.pattern.permute.xlu0 0
    %2246 = vperm.xlu0 %2245, %v1992
    %v2247 = vpop.permute.xlu0 %2246
    %2250 = vset.pattern.permute.xlu0 0
    %2251 = vperm.xlu0 %2250, %v1993
    %v2252 = vpop.permute.xlu0 %2251
    %2255 = vset.pattern.permute.xlu0 0
    %2256 = vperm.xlu0 %2255, %v1994
    %v2257 = vpop.permute.xlu0 %2256
    %2260 = vset.pattern.permute.xlu0 0
    %2261 = vperm.xlu0 %2260, %v1995
    %v2262 = vpop.permute.xlu0 %2261
    %2265 = vset.pattern.permute.xlu0 0
    %2266 = vperm.xlu0 %2265, %v1996
    %v2267 = vpop.permute.xlu0 %2266
    %2270 = vset.pattern.permute.xlu0 0
    %2271 = vperm.xlu0 %2270, %v1997
    %v2272 = vpop.permute.xlu0 %2271
    %2275 = vset.pattern.permute.xlu0 0
    %2276 = vperm.xlu0 %2275, %v1998
    %v2277 = vpop.permute.xlu0 %2276
    %2280 = vset.pattern.permute.xlu0 0
    %2281 = vperm.xlu0 %2280, %v1999
    %v2282 = vpop.permute.xlu0 %2281
    %2285 = vset.pattern.permute.xlu0 0
    %2286 = vperm.xlu0 %2285, %v2000
    %v2287 = vpop.permute.xlu0 %2286
    %2290 = vset.pattern.permute.xlu0 0
    %2291 = vperm.xlu0 %2290, %v2001
    %v2292 = vpop.permute.xlu0 %2291
    %2295 = vset.pattern.permute.xlu0 0
    %2296 = vperm.xlu0 %2295, %v2002
    %v2297 = vpop.permute.xlu0 %2296
    %2300 = vset.pattern.permute.xlu0 0
    %2301 = vperm.xlu0 %2300, %v2003
    %v2302 = vpop.permute.xlu0 %2301
    %2305 = vset.pattern.permute.xlu0 0
    %2306 = vperm.xlu0 %2305, %v2004
    %v2307 = vpop.permute.xlu0 %2306
    %2310 = vset.pattern.permute.xlu0 0
    %2311 = vperm.xlu0 %2310, %v2005
    %v2312 = vpop.permute.xlu0 %2311
    %2315 = vset.pattern.permute.xlu0 0
    %2316 = vperm.xlu0 %2315, %v2006
    %v2317 = vpop.permute.xlu0 %2316
    %2320 = vset.pattern.permute.xlu0 0
    %2321 = vperm.xlu0 %2320, %v2007
    %v2322 = vpop.permute.xlu0 %2321
    %2325 = vset.pattern.permute.xlu0 0
    %2326 = vperm.xlu0 %2325, %v2008
    %v2327 = vpop.permute.xlu0 %2326
    %v2329 = vmul.f32 %v1880, %v2012
    %v2330 = vmul.f32 %v1943, %v2017
    %v2331 = vmul.f32 %v1942, %v2022
    %v2332 = vmul.f32 %v1941, %v2027
    %v2333 = vmul.f32 %v1940, %v2032
    %v2334 = vmul.f32 %v1939, %v2037
    %v2335 = vmul.f32 %v1938, %v2042
    %v2336 = vmul.f32 %v1937, %v2047
    %v2337 = vmul.f32 %v1936, %v2052
    %v2338 = vmul.f32 %v1935, %v2057
    %v2339 = vmul.f32 %v1934, %v2062
    %v2340 = vmul.f32 %v1933, %v2067
    %v2341 = vmul.f32 %v1932, %v2072
    %v2342 = vmul.f32 %v1931, %v2077
    %v2343 = vmul.f32 %v1930, %v2082
    %v2344 = vmul.f32 %v1929, %v2087
    %v2345 = vmul.f32 %v1928, %v2092
    %v2346 = vmul.f32 %v1927, %v2097
    %v2347 = vmul.f32 %v1926, %v2102
    %v2348 = vmul.f32 %v1925, %v2107
    %v2349 = vmul.f32 %v1924, %v2112
    %v2350 = vmul.f32 %v1923, %v2117
    %v2351 = vmul.f32 %v1922, %v2122
    %v2352 = vmul.f32 %v1921, %v2127
    %v2353 = vmul.f32 %v1920, %v2132
    %v2354 = vmul.f32 %v1919, %v2137
    %v2355 = vmul.f32 %v1918, %v2142
    %v2356 = vmul.f32 %v1917, %v2147
    %v2357 = vmul.f32 %v1916, %v2152
    %v2358 = vmul.f32 %v1915, %v2157
    %v2359 = vmul.f32 %v1914, %v2162
    %v2360 = vmul.f32 %v1913, %v2167
    %v2361 = vmul.f32 %v1912, %v2172
    %v2362 = vmul.f32 %v1911, %v2177
    %v2363 = vmul.f32 %v1910, %v2182
    %v2364 = vmul.f32 %v1909, %v2187
    %v2365 = vmul.f32 %v1908, %v2192
    %v2366 = vmul.f32 %v1907, %v2197
    %v2367 = vmul.f32 %v1906, %v2202
    %v2368 = vmul.f32 %v1905, %v2207
    %v2369 = vmul.f32 %v1904, %v2212
    %v2370 = vmul.f32 %v1903, %v2217
    %v2371 = vmul.f32 %v1902, %v2222
    %v2372 = vmul.f32 %v1901, %v2227
    %v2373 = vmul.f32 %v1900, %v2232
    %v2374 = vmul.f32 %v1899, %v2237
    %v2375 = vmul.f32 %v1898, %v2242
    %v2376 = vmul.f32 %v1897, %v2247
    %v2377 = vmul.f32 %v1896, %v2252
    %v2378 = vmul.f32 %v1895, %v2257
    %v2379 = vmul.f32 %v1894, %v2262
    %v2380 = vmul.f32 %v1893, %v2267
    %v2381 = vmul.f32 %v1892, %v2272
    %v2382 = vmul.f32 %v1891, %v2277
    %v2383 = vmul.f32 %v1890, %v2282
    %v2384 = vmul.f32 %v1889, %v2287
    %v2385 = vmul.f32 %v1888, %v2292
    %v2386 = vmul.f32 %v1887, %v2297
    %v2387 = vmul.f32 %v1886, %v2302
    %v2388 = vmul.f32 %v1885, %v2307
    %v2389 = vmul.f32 %v1884, %v2312
    %v2390 = vmul.f32 %v1883, %v2317
    %v2391 = vmul.f32 %v1882, %v2322
    %v2392 = vmul.f32 %v1881, %v2327
    %v2393 = vpack.c.bf16 %v2330, %v2329
    %v2394 = vpack.c.bf16 %v2332, %v2331
    %v2395 = vpack.c.bf16 %v2334, %v2333
    %v2396 = vpack.c.bf16 %v2336, %v2335
    %v2397 = vpack.c.bf16 %v2338, %v2337
    %v2398 = vpack.c.bf16 %v2340, %v2339
    %v2399 = vpack.c.bf16 %v2342, %v2341
    %v2400 = vpack.c.bf16 %v2344, %v2343
    %v2401 = vpack.c.bf16 %v2346, %v2345
    %v2402 = vpack.c.bf16 %v2348, %v2347
    %v2403 = vpack.c.bf16 %v2350, %v2349
    %v2404 = vpack.c.bf16 %v2352, %v2351
    %v2405 = vpack.c.bf16 %v2354, %v2353
    %v2406 = vpack.c.bf16 %v2356, %v2355
    %v2407 = vpack.c.bf16 %v2358, %v2357
    %v2408 = vpack.c.bf16 %v2360, %v2359
    %v2409 = vpack.c.bf16 %v2362, %v2361
    %v2410 = vpack.c.bf16 %v2364, %v2363
    %v2411 = vpack.c.bf16 %v2366, %v2365
    %v2412 = vpack.c.bf16 %v2368, %v2367
    %v2413 = vpack.c.bf16 %v2370, %v2369
    %v2414 = vpack.c.bf16 %v2372, %v2371
    %v2415 = vpack.c.bf16 %v2374, %v2373
    %v2416 = vpack.c.bf16 %v2376, %v2375
    %v2417 = vpack.c.bf16 %v2378, %v2377
    %v2418 = vpack.c.bf16 %v2380, %v2379
    %v2419 = vpack.c.bf16 %v2382, %v2381
    %v2420 = vpack.c.bf16 %v2384, %v2383
    %v2421 = vpack.c.bf16 %v2386, %v2385
    %v2422 = vpack.c.bf16 %v2388, %v2387
    %v2423 = vpack.c.bf16 %v2390, %v2389
    %v2424 = vpack.c.bf16 %v2392, %v2391
    %s2425 = scalar_lea.vmem %s1, 1536
    %v2426 = vld [vmem:[%s2425] sm:$0xff]
    %v2427 = vld [vmem:[%s2425 + $0x8] sm:$0xff]
    %v2428 = vld [vmem:[%s2425 + $0x10] sm:$0xff]
    %v2429 = vld [vmem:[%s2425 + $0x18] sm:$0xff]
    %v2430 = vld [vmem:[%s2425 + $0x20] sm:$0xff]
    %v2431 = vld [vmem:[%s2425 + $0x28] sm:$0xff]
    %v2432 = vld [vmem:[%s2425 + $0x30] sm:$0xff]
    %v2433 = vld [vmem:[%s2425 + $0x38] sm:$0xff]
    %v2434 = vld [vmem:[%s2425 + $0x40] sm:$0xff]
    %v2435 = vld [vmem:[%s2425 + $0x48] sm:$0xff]
    %v2436 = vld [vmem:[%s2425 + $0x50] sm:$0xff]
    %v2437 = vld [vmem:[%s2425 + $0x58] sm:$0xff]
    %v2438 = vld [vmem:[%s2425 + $0x60] sm:$0xff]
    %v2439 = vld [vmem:[%s2425 + $0x68] sm:$0xff]
    %v2440 = vld [vmem:[%s2425 + $0x70] sm:$0xff]
    %v2441 = vld [vmem:[%s2425 + $0x78] sm:$0xff]
    %v2442 = vld [vmem:[%s2425 + $0x80] sm:$0xff]
    %v2443 = vld [vmem:[%s2425 + $0x88] sm:$0xff]
    %v2444 = vld [vmem:[%s2425 + $0x90] sm:$0xff]
    %v2445 = vld [vmem:[%s2425 + $0x98] sm:$0xff]
    %v2446 = vld [vmem:[%s2425 + $0xa0] sm:$0xff]
    %v2447 = vld [vmem:[%s2425 + $0xa8] sm:$0xff]
    %v2448 = vld [vmem:[%s2425 + $0xb0] sm:$0xff]
    %v2449 = vld [vmem:[%s2425 + $0xb8] sm:$0xff]
    %v2450 = vld [vmem:[%s2425 + $0xc0] sm:$0xff]
    %v2451 = vld [vmem:[%s2425 + $0xc8] sm:$0xff]
    %v2452 = vld [vmem:[%s2425 + $0xd0] sm:$0xff]
    %v2453 = vld [vmem:[%s2425 + $0xd8] sm:$0xff]
    %v2454 = vld [vmem:[%s2425 + $0xe0] sm:$0xff]
    %v2455 = vld [vmem:[%s2425 + $0xe8] sm:$0xff]
    %v2456 = vld [vmem:[%s2425 + $0xf0] sm:$0xff]
    %v2457 = vld [vmem:[%s2425 + $0xf8] sm:$0xff]
    %v2458 = vld [vmem:[%s2425 + $0x100] sm:$0xff]
    %v2459 = vld [vmem:[%s2425 + $0x108] sm:$0xff]
    %v2460 = vld [vmem:[%s2425 + $0x110] sm:$0xff]
    %v2461 = vld [vmem:[%s2425 + $0x118] sm:$0xff]
    %v2462 = vld [vmem:[%s2425 + $0x120] sm:$0xff]
    %v2463 = vld [vmem:[%s2425 + $0x128] sm:$0xff]
    %v2464 = vld [vmem:[%s2425 + $0x130] sm:$0xff]
    %v2465 = vld [vmem:[%s2425 + $0x138] sm:$0xff]
    %v2466 = vld [vmem:[%s2425 + $0x140] sm:$0xff]
    %v2467 = vld [vmem:[%s2425 + $0x148] sm:$0xff]
    %v2468 = vld [vmem:[%s2425 + $0x150] sm:$0xff]
    %v2469 = vld [vmem:[%s2425 + $0x158] sm:$0xff]
    %v2470 = vld [vmem:[%s2425 + $0x160] sm:$0xff]
    %v2471 = vld [vmem:[%s2425 + $0x168] sm:$0xff]
    %v2472 = vld [vmem:[%s2425 + $0x170] sm:$0xff]
    %v2473 = vld [vmem:[%s2425 + $0x178] sm:$0xff]
    %v2474 = vld [vmem:[%s2425 + $0x180] sm:$0xff]
    %v2475 = vld [vmem:[%s2425 + $0x188] sm:$0xff]
    %v2476 = vld [vmem:[%s2425 + $0x190] sm:$0xff]
    %v2477 = vld [vmem:[%s2425 + $0x198] sm:$0xff]
    %v2478 = vld [vmem:[%s2425 + $0x1a0] sm:$0xff]
    %v2479 = vld [vmem:[%s2425 + $0x1a8] sm:$0xff]
    %v2480 = vld [vmem:[%s2425 + $0x1b0] sm:$0xff]
    %v2481 = vld [vmem:[%s2425 + $0x1b8] sm:$0xff]
    %v2482 = vld [vmem:[%s2425 + $0x1c0] sm:$0xff]
    %v2483 = vld [vmem:[%s2425 + $0x1c8] sm:$0xff]
    %v2484 = vld [vmem:[%s2425 + $0x1d0] sm:$0xff]
    %v2485 = vld [vmem:[%s2425 + $0x1d8] sm:$0xff]
    %v2486 = vld [vmem:[%s2425 + $0x1e0] sm:$0xff]
    %v2487 = vld [vmem:[%s2425 + $0x1e8] sm:$0xff]
    %v2488 = vld [vmem:[%s2425 + $0x1f0] sm:$0xff]
    %v2489 = vld [vmem:[%s2425 + $0x1f8] sm:$0xff]
    %2491 = vset.pattern.permute.xlu0 0
    %2492 = vperm.xlu0 %2491, %v2426
    %v2493 = vpop.permute.xlu0 %2492
    %2496 = vset.pattern.permute.xlu0 0
    %2497 = vperm.xlu0 %2496, %v2427
    %v2498 = vpop.permute.xlu0 %2497
    %2501 = vset.pattern.permute.xlu0 0
    %2502 = vperm.xlu0 %2501, %v2428
    %v2503 = vpop.permute.xlu0 %2502
    %2506 = vset.pattern.permute.xlu0 0
    %2507 = vperm.xlu0 %2506, %v2429
    %v2508 = vpop.permute.xlu0 %2507
    %2511 = vset.pattern.permute.xlu0 0
    %2512 = vperm.xlu0 %2511, %v2430
    %v2513 = vpop.permute.xlu0 %2512
    %2516 = vset.pattern.permute.xlu0 0
    %2517 = vperm.xlu0 %2516, %v2431
    %v2518 = vpop.permute.xlu0 %2517
    %2521 = vset.pattern.permute.xlu0 0
    %2522 = vperm.xlu0 %2521, %v2432
    %v2523 = vpop.permute.xlu0 %2522
    %2526 = vset.pattern.permute.xlu0 0
    %2527 = vperm.xlu0 %2526, %v2433
    %v2528 = vpop.permute.xlu0 %2527
    %2531 = vset.pattern.permute.xlu0 0
    %2532 = vperm.xlu0 %2531, %v2434
    %v2533 = vpop.permute.xlu0 %2532
    %2536 = vset.pattern.permute.xlu0 0
    %2537 = vperm.xlu0 %2536, %v2435
    %v2538 = vpop.permute.xlu0 %2537
    %2541 = vset.pattern.permute.xlu0 0
    %2542 = vperm.xlu0 %2541, %v2436
    %v2543 = vpop.permute.xlu0 %2542
    %2546 = vset.pattern.permute.xlu0 0
    %2547 = vperm.xlu0 %2546, %v2437
    %v2548 = vpop.permute.xlu0 %2547
    %2551 = vset.pattern.permute.xlu0 0
    %2552 = vperm.xlu0 %2551, %v2438
    %v2553 = vpop.permute.xlu0 %2552
    %2556 = vset.pattern.permute.xlu0 0
    %2557 = vperm.xlu0 %2556, %v2439
    %v2558 = vpop.permute.xlu0 %2557
    %2561 = vset.pattern.permute.xlu0 0
    %2562 = vperm.xlu0 %2561, %v2440
    %v2563 = vpop.permute.xlu0 %2562
    %2566 = vset.pattern.permute.xlu0 0
    %2567 = vperm.xlu0 %2566, %v2441
    %v2568 = vpop.permute.xlu0 %2567
    %2571 = vset.pattern.permute.xlu0 0
    %2572 = vperm.xlu0 %2571, %v2442
    %v2573 = vpop.permute.xlu0 %2572
    %2576 = vset.pattern.permute.xlu0 0
    %2577 = vperm.xlu0 %2576, %v2443
    %v2578 = vpop.permute.xlu0 %2577
    %2581 = vset.pattern.permute.xlu0 0
    %2582 = vperm.xlu0 %2581, %v2444
    %v2583 = vpop.permute.xlu0 %2582
    %2586 = vset.pattern.permute.xlu0 0
    %2587 = vperm.xlu0 %2586, %v2445
    %v2588 = vpop.permute.xlu0 %2587
    %2591 = vset.pattern.permute.xlu0 0
    %2592 = vperm.xlu0 %2591, %v2446
    %v2593 = vpop.permute.xlu0 %2592
    %2596 = vset.pattern.permute.xlu0 0
    %2597 = vperm.xlu0 %2596, %v2447
    %v2598 = vpop.permute.xlu0 %2597
    %2601 = vset.pattern.permute.xlu0 0
    %2602 = vperm.xlu0 %2601, %v2448
    %v2603 = vpop.permute.xlu0 %2602
    %2606 = vset.pattern.permute.xlu0 0
    %2607 = vperm.xlu0 %2606, %v2449
    %v2608 = vpop.permute.xlu0 %2607
    %2611 = vset.pattern.permute.xlu0 0
    %2612 = vperm.xlu0 %2611, %v2450
    %v2613 = vpop.permute.xlu0 %2612
    %2616 = vset.pattern.permute.xlu0 0
    %2617 = vperm.xlu0 %2616, %v2451
    %v2618 = vpop.permute.xlu0 %2617
    %2621 = vset.pattern.permute.xlu0 0
    %2622 = vperm.xlu0 %2621, %v2452
    %v2623 = vpop.permute.xlu0 %2622
    %2626 = vset.pattern.permute.xlu0 0
    %2627 = vperm.xlu0 %2626, %v2453
    %v2628 = vpop.permute.xlu0 %2627
    %2631 = vset.pattern.permute.xlu0 0
    %2632 = vperm.xlu0 %2631, %v2454
    %v2633 = vpop.permute.xlu0 %2632
    %2636 = vset.pattern.permute.xlu0 0
    %2637 = vperm.xlu0 %2636, %v2455
    %v2638 = vpop.permute.xlu0 %2637
    %2641 = vset.pattern.permute.xlu0 0
    %2642 = vperm.xlu0 %2641, %v2456
    %v2643 = vpop.permute.xlu0 %2642
    %2646 = vset.pattern.permute.xlu0 0
    %2647 = vperm.xlu0 %2646, %v2457
    %v2648 = vpop.permute.xlu0 %2647
    %2651 = vset.pattern.permute.xlu0 0
    %2652 = vperm.xlu0 %2651, %v2458
    %v2653 = vpop.permute.xlu0 %2652
    %2656 = vset.pattern.permute.xlu0 0
    %2657 = vperm.xlu0 %2656, %v2459
    %v2658 = vpop.permute.xlu0 %2657
    %2661 = vset.pattern.permute.xlu0 0
    %2662 = vperm.xlu0 %2661, %v2460
    %v2663 = vpop.permute.xlu0 %2662
    %2666 = vset.pattern.permute.xlu0 0
    %2667 = vperm.xlu0 %2666, %v2461
    %v2668 = vpop.permute.xlu0 %2667
    %2671 = vset.pattern.permute.xlu0 0
    %2672 = vperm.xlu0 %2671, %v2462
    %v2673 = vpop.permute.xlu0 %2672
    %2676 = vset.pattern.permute.xlu0 0
    %2677 = vperm.xlu0 %2676, %v2463
    %v2678 = vpop.permute.xlu0 %2677
    %2681 = vset.pattern.permute.xlu0 0
    %2682 = vperm.xlu0 %2681, %v2464
    %v2683 = vpop.permute.xlu0 %2682
    %2686 = vset.pattern.permute.xlu0 0
    %2687 = vperm.xlu0 %2686, %v2465
    %v2688 = vpop.permute.xlu0 %2687
    %2691 = vset.pattern.permute.xlu0 0
    %2692 = vperm.xlu0 %2691, %v2466
    %v2693 = vpop.permute.xlu0 %2692
    %2696 = vset.pattern.permute.xlu0 0
    %2697 = vperm.xlu0 %2696, %v2467
    %v2698 = vpop.permute.xlu0 %2697
    %2701 = vset.pattern.permute.xlu0 0
    %2702 = vperm.xlu0 %2701, %v2468
    %v2703 = vpop.permute.xlu0 %2702
    %2706 = vset.pattern.permute.xlu0 0
    %2707 = vperm.xlu0 %2706, %v2469
    %v2708 = vpop.permute.xlu0 %2707
    %2711 = vset.pattern.permute.xlu0 0
    %2712 = vperm.xlu0 %2711, %v2470
    %v2713 = vpop.permute.xlu0 %2712
    %2716 = vset.pattern.permute.xlu0 0
    %2717 = vperm.xlu0 %2716, %v2471
    %v2718 = vpop.permute.xlu0 %2717
    %2721 = vset.pattern.permute.xlu0 0
    %2722 = vperm.xlu0 %2721, %v2472
    %v2723 = vpop.permute.xlu0 %2722
    %2726 = vset.pattern.permute.xlu0 0
    %2727 = vperm.xlu0 %2726, %v2473
    %v2728 = vpop.permute.xlu0 %2727
    %2731 = vset.pattern.permute.xlu0 0
    %2732 = vperm.xlu0 %2731, %v2474
    %v2733 = vpop.permute.xlu0 %2732
    %2736 = vset.pattern.permute.xlu0 0
    %2737 = vperm.xlu0 %2736, %v2475
    %v2738 = vpop.permute.xlu0 %2737
    %2741 = vset.pattern.permute.xlu0 0
    %2742 = vperm.xlu0 %2741, %v2476
    %v2743 = vpop.permute.xlu0 %2742
    %2746 = vset.pattern.permute.xlu0 0
    %2747 = vperm.xlu0 %2746, %v2477
    %v2748 = vpop.permute.xlu0 %2747
    %2751 = vset.pattern.permute.xlu0 0
    %2752 = vperm.xlu0 %2751, %v2478
    %v2753 = vpop.permute.xlu0 %2752
    %2756 = vset.pattern.permute.xlu0 0
    %2757 = vperm.xlu0 %2756, %v2479
    %v2758 = vpop.permute.xlu0 %2757
    %2761 = vset.pattern.permute.xlu0 0
    %2762 = vperm.xlu0 %2761, %v2480
    %v2763 = vpop.permute.xlu0 %2762
    %2766 = vset.pattern.permute.xlu0 0
    %2767 = vperm.xlu0 %2766, %v2481
    %v2768 = vpop.permute.xlu0 %2767
    %2771 = vset.pattern.permute.xlu0 0
    %2772 = vperm.xlu0 %2771, %v2482
    %v2773 = vpop.permute.xlu0 %2772
    %2776 = vset.pattern.permute.xlu0 0
    %2777 = vperm.xlu0 %2776, %v2483
    %v2778 = vpop.permute.xlu0 %2777
    %2781 = vset.pattern.permute.xlu0 0
    %2782 = vperm.xlu0 %2781, %v2484
    %v2783 = vpop.permute.xlu0 %2782
    %2786 = vset.pattern.permute.xlu0 0
    %2787 = vperm.xlu0 %2786, %v2485
    %v2788 = vpop.permute.xlu0 %2787
    %2791 = vset.pattern.permute.xlu0 0
    %2792 = vperm.xlu0 %2791, %v2486
    %v2793 = vpop.permute.xlu0 %2792
    %2796 = vset.pattern.permute.xlu0 0
    %2797 = vperm.xlu0 %2796, %v2487
    %v2798 = vpop.permute.xlu0 %2797
    %2801 = vset.pattern.permute.xlu0 0
    %2802 = vperm.xlu0 %2801, %v2488
    %v2803 = vpop.permute.xlu0 %2802
    %2806 = vset.pattern.permute.xlu0 0
    %2807 = vperm.xlu0 %2806, %v2489
    %v2808 = vpop.permute.xlu0 %2807
    %v2810 = vmul.f32 %v853, %v2493
    %v2811 = vmul.f32 %v852, %v2498
    %v2812 = vmul.f32 %v851, %v2503
    %v2813 = vmul.f32 %v850, %v2508
    %v2814 = vmul.f32 %v849, %v2513
    %v2815 = vmul.f32 %v848, %v2518
    %v2816 = vmul.f32 %v847, %v2523
    %v2817 = vmul.f32 %v846, %v2528
    %v2818 = vmul.f32 %v845, %v2533
    %v2819 = vmul.f32 %v844, %v2538
    %v2820 = vmul.f32 %v843, %v2543
    %v2821 = vmul.f32 %v842, %v2548
    %v2822 = vmul.f32 %v841, %v2553
    %v2823 = vmul.f32 %v840, %v2558
    %v2824 = vmul.f32 %v839, %v2563
    %v2825 = vmul.f32 %v838, %v2568
    %v2826 = vmul.f32 %v837, %v2573
    %v2827 = vmul.f32 %v836, %v2578
    %v2828 = vmul.f32 %v835, %v2583
    %v2829 = vmul.f32 %v834, %v2588
    %v2830 = vmul.f32 %v833, %v2593
    %v2831 = vmul.f32 %v832, %v2598
    %v2832 = vmul.f32 %v831, %v2603
    %v2833 = vmul.f32 %v830, %v2608
    %v2834 = vmul.f32 %v829, %v2613
    %v2835 = vmul.f32 %v828, %v2618
    %v2836 = vmul.f32 %v827, %v2623
    %v2837 = vmul.f32 %v826, %v2628
    %v2838 = vmul.f32 %v825, %v2633
    %v2839 = vmul.f32 %v824, %v2638
    %v2840 = vmul.f32 %v823, %v2643
    %v2841 = vmul.f32 %v822, %v2648
    %v2842 = vmul.f32 %v821, %v2653
    %v2843 = vmul.f32 %v820, %v2658
    %v2844 = vmul.f32 %v819, %v2663
    %v2845 = vmul.f32 %v818, %v2668
    %v2846 = vmul.f32 %v817, %v2673
    %v2847 = vmul.f32 %v816, %v2678
    %v2848 = vmul.f32 %v815, %v2683
    %v2849 = vmul.f32 %v814, %v2688
    %v2850 = vmul.f32 %v813, %v2693
    %v2851 = vmul.f32 %v812, %v2698
    %v2852 = vmul.f32 %v811, %v2703
    %v2853 = vmul.f32 %v810, %v2708
    %v2854 = vmul.f32 %v809, %v2713
    %v2855 = vmul.f32 %v808, %v2718
    %v2856 = vmul.f32 %v807, %v2723
    %v2857 = vmul.f32 %v806, %v2728
    %v2858 = vmul.f32 %v805, %v2733
    %v2859 = vmul.f32 %v804, %v2738
    %v2860 = vmul.f32 %v803, %v2743
    %v2861 = vmul.f32 %v802, %v2748
    %v2862 = vmul.f32 %v801, %v2753
    %v2863 = vmul.f32 %v800, %v2758
    %v2864 = vmul.f32 %v799, %v2763
    %v2865 = vmul.f32 %v798, %v2768
    %v2866 = vmul.f32 %v797, %v2773
    %v2867 = vmul.f32 %v796, %v2778
    %v2868 = vmul.f32 %v795, %v2783
    %v2869 = vmul.f32 %v794, %v2788
    %v2870 = vmul.f32 %v793, %v2793
    %v2871 = vmul.f32 %v792, %v2798
    %v2872 = vmul.f32 %v791, %v2803
    %v2873 = vmul.f32 %v790, %v2808
    %v2874 = vpack.c.bf16 %v2811, %v2810
    %v2875 = vpack.c.bf16 %v2813, %v2812
    %v2876 = vpack.c.bf16 %v2815, %v2814
    %v2877 = vpack.c.bf16 %v2817, %v2816
    %v2878 = vpack.c.bf16 %v2819, %v2818
    %v2879 = vpack.c.bf16 %v2821, %v2820
    %v2880 = vpack.c.bf16 %v2823, %v2822
    %v2881 = vpack.c.bf16 %v2825, %v2824
    %v2882 = vpack.c.bf16 %v2827, %v2826
    %v2883 = vpack.c.bf16 %v2829, %v2828
    %v2884 = vpack.c.bf16 %v2831, %v2830
    %v2885 = vpack.c.bf16 %v2833, %v2832
    %v2886 = vpack.c.bf16 %v2835, %v2834
    %v2887 = vpack.c.bf16 %v2837, %v2836
    %v2888 = vpack.c.bf16 %v2839, %v2838
    %v2889 = vpack.c.bf16 %v2841, %v2840
    %v2890 = vpack.c.bf16 %v2843, %v2842
    %v2891 = vpack.c.bf16 %v2845, %v2844
    %v2892 = vpack.c.bf16 %v2847, %v2846
    %v2893 = vpack.c.bf16 %v2849, %v2848
    %v2894 = vpack.c.bf16 %v2851, %v2850
    %v2895 = vpack.c.bf16 %v2853, %v2852
    %v2896 = vpack.c.bf16 %v2855, %v2854
    %v2897 = vpack.c.bf16 %v2857, %v2856
    %v2898 = vpack.c.bf16 %v2859, %v2858
    %v2899 = vpack.c.bf16 %v2861, %v2860
    %v2900 = vpack.c.bf16 %v2863, %v2862
    %v2901 = vpack.c.bf16 %v2865, %v2864
    %v2902 = vpack.c.bf16 %v2867, %v2866
    %v2903 = vpack.c.bf16 %v2869, %v2868
    %v2904 = vpack.c.bf16 %v2871, %v2870
    %v2905 = vpack.c.bf16 %v2873, %v2872
    %s2906 = scalar_lea.vmem %s1, 2048
    %v2907 = vld [vmem:[%s2906] sm:$0xff]
    %v2908 = vld [vmem:[%s2906 + $0x8] sm:$0xff]
    %v2909 = vld [vmem:[%s2906 + $0x10] sm:$0xff]
    %v2910 = vld [vmem:[%s2906 + $0x18] sm:$0xff]
    %v2911 = vld [vmem:[%s2906 + $0x20] sm:$0xff]
    %v2912 = vld [vmem:[%s2906 + $0x28] sm:$0xff]
    %v2913 = vld [vmem:[%s2906 + $0x30] sm:$0xff]
    %v2914 = vld [vmem:[%s2906 + $0x38] sm:$0xff]
    %v2915 = vld [vmem:[%s2906 + $0x40] sm:$0xff]
    %v2916 = vld [vmem:[%s2906 + $0x48] sm:$0xff]
    %v2917 = vld [vmem:[%s2906 + $0x50] sm:$0xff]
    %v2918 = vld [vmem:[%s2906 + $0x58] sm:$0xff]
    %v2919 = vld [vmem:[%s2906 + $0x60] sm:$0xff]
    %v2920 = vld [vmem:[%s2906 + $0x68] sm:$0xff]
    %v2921 = vld [vmem:[%s2906 + $0x70] sm:$0xff]
    %v2922 = vld [vmem:[%s2906 + $0x78] sm:$0xff]
    %v2923 = vld [vmem:[%s2906 + $0x80] sm:$0xff]
    %v2924 = vld [vmem:[%s2906 + $0x88] sm:$0xff]
    %v2925 = vld [vmem:[%s2906 + $0x90] sm:$0xff]
    %v2926 = vld [vmem:[%s2906 + $0x98] sm:$0xff]
    %v2927 = vld [vmem:[%s2906 + $0xa0] sm:$0xff]
    %v2928 = vld [vmem:[%s2906 + $0xa8] sm:$0xff]
    %v2929 = vld [vmem:[%s2906 + $0xb0] sm:$0xff]
    %v2930 = vld [vmem:[%s2906 + $0xb8] sm:$0xff]
    %v2931 = vld [vmem:[%s2906 + $0xc0] sm:$0xff]
    %v2932 = vld [vmem:[%s2906 + $0xc8] sm:$0xff]
    %v2933 = vld [vmem:[%s2906 + $0xd0] sm:$0xff]
    %v2934 = vld [vmem:[%s2906 + $0xd8] sm:$0xff]
    %v2935 = vld [vmem:[%s2906 + $0xe0] sm:$0xff]
    %v2936 = vld [vmem:[%s2906 + $0xe8] sm:$0xff]
    %v2937 = vld [vmem:[%s2906 + $0xf0] sm:$0xff]
    %v2938 = vld [vmem:[%s2906 + $0xf8] sm:$0xff]
    %v2939 = vld [vmem:[%s2906 + $0x100] sm:$0xff]
    %v2940 = vld [vmem:[%s2906 + $0x108] sm:$0xff]
    %v2941 = vld [vmem:[%s2906 + $0x110] sm:$0xff]
    %v2942 = vld [vmem:[%s2906 + $0x118] sm:$0xff]
    %v2943 = vld [vmem:[%s2906 + $0x120] sm:$0xff]
    %v2944 = vld [vmem:[%s2906 + $0x128] sm:$0xff]
    %v2945 = vld [vmem:[%s2906 + $0x130] sm:$0xff]
    %v2946 = vld [vmem:[%s2906 + $0x138] sm:$0xff]
    %v2947 = vld [vmem:[%s2906 + $0x140] sm:$0xff]
    %v2948 = vld [vmem:[%s2906 + $0x148] sm:$0xff]
    %v2949 = vld [vmem:[%s2906 + $0x150] sm:$0xff]
    %v2950 = vld [vmem:[%s2906 + $0x158] sm:$0xff]
    %v2951 = vld [vmem:[%s2906 + $0x160] sm:$0xff]
    %v2952 = vld [vmem:[%s2906 + $0x168] sm:$0xff]
    %v2953 = vld [vmem:[%s2906 + $0x170] sm:$0xff]
    %v2954 = vld [vmem:[%s2906 + $0x178] sm:$0xff]
    %v2955 = vld [vmem:[%s2906 + $0x180] sm:$0xff]
    %v2956 = vld [vmem:[%s2906 + $0x188] sm:$0xff]
    %v2957 = vld [vmem:[%s2906 + $0x190] sm:$0xff]
    %v2958 = vld [vmem:[%s2906 + $0x198] sm:$0xff]
    %v2959 = vld [vmem:[%s2906 + $0x1a0] sm:$0xff]
    %v2960 = vld [vmem:[%s2906 + $0x1a8] sm:$0xff]
    %v2961 = vld [vmem:[%s2906 + $0x1b0] sm:$0xff]
    %v2962 = vld [vmem:[%s2906 + $0x1b8] sm:$0xff]
    %v2963 = vld [vmem:[%s2906 + $0x1c0] sm:$0xff]
    %v2964 = vld [vmem:[%s2906 + $0x1c8] sm:$0xff]
    %v2965 = vld [vmem:[%s2906 + $0x1d0] sm:$0xff]
    %v2966 = vld [vmem:[%s2906 + $0x1d8] sm:$0xff]
    %v2967 = vld [vmem:[%s2906 + $0x1e0] sm:$0xff]
    %v2968 = vld [vmem:[%s2906 + $0x1e8] sm:$0xff]
    %v2969 = vld [vmem:[%s2906 + $0x1f0] sm:$0xff]
    %v2970 = vld [vmem:[%s2906 + $0x1f8] sm:$0xff]
    %2972 = vset.pattern.permute.xlu0 0
    %2973 = vperm.xlu0 %2972, %v2907
    %v2974 = vpop.permute.xlu0 %2973
    %2977 = vset.pattern.permute.xlu0 0
    %2978 = vperm.xlu0 %2977, %v2908
    %v2979 = vpop.permute.xlu0 %2978
    %2982 = vset.pattern.permute.xlu0 0
    %2983 = vperm.xlu0 %2982, %v2909
    %v2984 = vpop.permute.xlu0 %2983
    %2987 = vset.pattern.permute.xlu0 0
    %2988 = vperm.xlu0 %2987, %v2910
    %v2989 = vpop.permute.xlu0 %2988
    %2992 = vset.pattern.permute.xlu0 0
    %2993 = vperm.xlu0 %2992, %v2911
    %v2994 = vpop.permute.xlu0 %2993
    %2997 = vset.pattern.permute.xlu0 0
    %2998 = vperm.xlu0 %2997, %v2912
    %v2999 = vpop.permute.xlu0 %2998
    %3002 = vset.pattern.permute.xlu0 0
    %3003 = vperm.xlu0 %3002, %v2913
    %v3004 = vpop.permute.xlu0 %3003
    %3007 = vset.pattern.permute.xlu0 0
    %3008 = vperm.xlu0 %3007, %v2914
    %v3009 = vpop.permute.xlu0 %3008
    %3012 = vset.pattern.permute.xlu0 0
    %3013 = vperm.xlu0 %3012, %v2915
    %v3014 = vpop.permute.xlu0 %3013
    %3017 = vset.pattern.permute.xlu0 0
    %3018 = vperm.xlu0 %3017, %v2916
    %v3019 = vpop.permute.xlu0 %3018
    %3022 = vset.pattern.permute.xlu0 0
    %3023 = vperm.xlu0 %3022, %v2917
    %v3024 = vpop.permute.xlu0 %3023
    %3027 = vset.pattern.permute.xlu0 0
    %3028 = vperm.xlu0 %3027, %v2918
    %v3029 = vpop.permute.xlu0 %3028
    %3032 = vset.pattern.permute.xlu0 0
    %3033 = vperm.xlu0 %3032, %v2919
    %v3034 = vpop.permute.xlu0 %3033
    %3037 = vset.pattern.permute.xlu0 0
    %3038 = vperm.xlu0 %3037, %v2920
    %v3039 = vpop.permute.xlu0 %3038
    %3042 = vset.pattern.permute.xlu0 0
    %3043 = vperm.xlu0 %3042, %v2921
    %v3044 = vpop.permute.xlu0 %3043
    %3047 = vset.pattern.permute.xlu0 0
    %3048 = vperm.xlu0 %3047, %v2922
    %v3049 = vpop.permute.xlu0 %3048
    %3052 = vset.pattern.permute.xlu0 0
    %3053 = vperm.xlu0 %3052, %v2923
    %v3054 = vpop.permute.xlu0 %3053
    %3057 = vset.pattern.permute.xlu0 0
    %3058 = vperm.xlu0 %3057, %v2924
    %v3059 = vpop.permute.xlu0 %3058
    %3062 = vset.pattern.permute.xlu0 0
    %3063 = vperm.xlu0 %3062, %v2925
    %v3064 = vpop.permute.xlu0 %3063
    %3067 = vset.pattern.permute.xlu0 0
    %3068 = vperm.xlu0 %3067, %v2926
    %v3069 = vpop.permute.xlu0 %3068
    %3072 = vset.pattern.permute.xlu0 0
    %3073 = vperm.xlu0 %3072, %v2927
    %v3074 = vpop.permute.xlu0 %3073
    %3077 = vset.pattern.permute.xlu0 0
    %3078 = vperm.xlu0 %3077, %v2928
    %v3079 = vpop.permute.xlu0 %3078
    %3082 = vset.pattern.permute.xlu0 0
    %3083 = vperm.xlu0 %3082, %v2929
    %v3084 = vpop.permute.xlu0 %3083
    %3087 = vset.pattern.permute.xlu0 0
    %3088 = vperm.xlu0 %3087, %v2930
    %v3089 = vpop.permute.xlu0 %3088
    %3092 = vset.pattern.permute.xlu0 0
    %3093 = vperm.xlu0 %3092, %v2931
    %v3094 = vpop.permute.xlu0 %3093
    %3097 = vset.pattern.permute.xlu0 0
    %3098 = vperm.xlu0 %3097, %v2932
    %v3099 = vpop.permute.xlu0 %3098
    %3102 = vset.pattern.permute.xlu0 0
    %3103 = vperm.xlu0 %3102, %v2933
    %v3104 = vpop.permute.xlu0 %3103
    %3107 = vset.pattern.permute.xlu0 0
    %3108 = vperm.xlu0 %3107, %v2934
    %v3109 = vpop.permute.xlu0 %3108
    %3112 = vset.pattern.permute.xlu0 0
    %3113 = vperm.xlu0 %3112, %v2935
    %v3114 = vpop.permute.xlu0 %3113
    %3117 = vset.pattern.permute.xlu0 0
    %3118 = vperm.xlu0 %3117, %v2936
    %v3119 = vpop.permute.xlu0 %3118
    %3122 = vset.pattern.permute.xlu0 0
    %3123 = vperm.xlu0 %3122, %v2937
    %v3124 = vpop.permute.xlu0 %3123
    %3127 = vset.pattern.permute.xlu0 0
    %3128 = vperm.xlu0 %3127, %v2938
    %v3129 = vpop.permute.xlu0 %3128
    %3132 = vset.pattern.permute.xlu0 0
    %3133 = vperm.xlu0 %3132, %v2939
    %v3134 = vpop.permute.xlu0 %3133
    %3137 = vset.pattern.permute.xlu0 0
    %3138 = vperm.xlu0 %3137, %v2940
    %v3139 = vpop.permute.xlu0 %3138
    %3142 = vset.pattern.permute.xlu0 0
    %3143 = vperm.xlu0 %3142, %v2941
    %v3144 = vpop.permute.xlu0 %3143
    %3147 = vset.pattern.permute.xlu0 0
    %3148 = vperm.xlu0 %3147, %v2942
    %v3149 = vpop.permute.xlu0 %3148
    %3152 = vset.pattern.permute.xlu0 0
    %3153 = vperm.xlu0 %3152, %v2943
    %v3154 = vpop.permute.xlu0 %3153
    %3157 = vset.pattern.permute.xlu0 0
    %3158 = vperm.xlu0 %3157, %v2944
    %v3159 = vpop.permute.xlu0 %3158
    %3162 = vset.pattern.permute.xlu0 0
    %3163 = vperm.xlu0 %3162, %v2945
    %v3164 = vpop.permute.xlu0 %3163
    %3167 = vset.pattern.permute.xlu0 0
    %3168 = vperm.xlu0 %3167, %v2946
    %v3169 = vpop.permute.xlu0 %3168
    %3172 = vset.pattern.permute.xlu0 0
    %3173 = vperm.xlu0 %3172, %v2947
    %v3174 = vpop.permute.xlu0 %3173
    %3177 = vset.pattern.permute.xlu0 0
    %3178 = vperm.xlu0 %3177, %v2948
    %v3179 = vpop.permute.xlu0 %3178
    %3182 = vset.pattern.permute.xlu0 0
    %3183 = vperm.xlu0 %3182, %v2949
    %v3184 = vpop.permute.xlu0 %3183
    %3187 = vset.pattern.permute.xlu0 0
    %3188 = vperm.xlu0 %3187, %v2950
    %v3189 = vpop.permute.xlu0 %3188
    %3192 = vset.pattern.permute.xlu0 0
    %3193 = vperm.xlu0 %3192, %v2951
    %v3194 = vpop.permute.xlu0 %3193
    %3197 = vset.pattern.permute.xlu0 0
    %3198 = vperm.xlu0 %3197, %v2952
    %v3199 = vpop.permute.xlu0 %3198
    %3202 = vset.pattern.permute.xlu0 0
    %3203 = vperm.xlu0 %3202, %v2953
    %v3204 = vpop.permute.xlu0 %3203
    %3207 = vset.pattern.permute.xlu0 0
    %3208 = vperm.xlu0 %3207, %v2954
    %v3209 = vpop.permute.xlu0 %3208
    %3212 = vset.pattern.permute.xlu0 0
    %3213 = vperm.xlu0 %3212, %v2955
    %v3214 = vpop.permute.xlu0 %3213
    %3217 = vset.pattern.permute.xlu0 0
    %3218 = vperm.xlu0 %3217, %v2956
    %v3219 = vpop.permute.xlu0 %3218
    %3222 = vset.pattern.permute.xlu0 0
    %3223 = vperm.xlu0 %3222, %v2957
    %v3224 = vpop.permute.xlu0 %3223
    %3227 = vset.pattern.permute.xlu0 0
    %3228 = vperm.xlu0 %3227, %v2958
    %v3229 = vpop.permute.xlu0 %3228
    %3232 = vset.pattern.permute.xlu0 0
    %3233 = vperm.xlu0 %3232, %v2959
    %v3234 = vpop.permute.xlu0 %3233
    %3237 = vset.pattern.permute.xlu0 0
    %3238 = vperm.xlu0 %3237, %v2960
    %v3239 = vpop.permute.xlu0 %3238
    %3242 = vset.pattern.permute.xlu0 0
    %3243 = vperm.xlu0 %3242, %v2961
    %v3244 = vpop.permute.xlu0 %3243
    %3247 = vset.pattern.permute.xlu0 0
    %3248 = vperm.xlu0 %3247, %v2962
    %v3249 = vpop.permute.xlu0 %3248
    %3252 = vset.pattern.permute.xlu0 0
    %3253 = vperm.xlu0 %3252, %v2963
    %v3254 = vpop.permute.xlu0 %3253
    %3257 = vset.pattern.permute.xlu0 0
    %3258 = vperm.xlu0 %3257, %v2964
    %v3259 = vpop.permute.xlu0 %3258
    %3262 = vset.pattern.permute.xlu0 0
    %3263 = vperm.xlu0 %3262, %v2965
    %v3264 = vpop.permute.xlu0 %3263
    %3267 = vset.pattern.permute.xlu0 0
    %3268 = vperm.xlu0 %3267, %v2966
    %v3269 = vpop.permute.xlu0 %3268
    %3272 = vset.pattern.permute.xlu0 0
    %3273 = vperm.xlu0 %3272, %v2967
    %v3274 = vpop.permute.xlu0 %3273
    %3277 = vset.pattern.permute.xlu0 0
    %3278 = vperm.xlu0 %3277, %v2968
    %v3279 = vpop.permute.xlu0 %3278
    %3282 = vset.pattern.permute.xlu0 0
    %3283 = vperm.xlu0 %3282, %v2969
    %v3284 = vpop.permute.xlu0 %3283
    %3287 = vset.pattern.permute.xlu0 0
    %3288 = vperm.xlu0 %3287, %v2970
    %v3289 = vpop.permute.xlu0 %3288
    %v3291 = vmul.f32 %v659, %v2974
    %v3292 = vmul.f32 %v660, %v2979
    %v3293 = vmul.f32 %v661, %v2984
    %v3294 = vmul.f32 %v662, %v2989
    %v3295 = vmul.f32 %v663, %v2994
    %v3296 = vmul.f32 %v664, %v2999
    %v3297 = vmul.f32 %v665, %v3004
    %v3298 = vmul.f32 %v666, %v3009
    %v3299 = vmul.f32 %v667, %v3014
    %v3300 = vmul.f32 %v668, %v3019
    %v3301 = vmul.f32 %v669, %v3024
    %v3302 = vmul.f32 %v670, %v3029
    %v3303 = vmul.f32 %v671, %v3034
    %v3304 = vmul.f32 %v672, %v3039
    %v3305 = vmul.f32 %v673, %v3044
    %v3306 = vmul.f32 %v674, %v3049
    %v3307 = vmul.f32 %v675, %v3054
    %v3308 = vmul.f32 %v676, %v3059
    %v3309 = vmul.f32 %v677, %v3064
    %v3310 = vmul.f32 %v678, %v3069
    %v3311 = vmul.f32 %v679, %v3074
    %v3312 = vmul.f32 %v680, %v3079
    %v3313 = vmul.f32 %v681, %v3084
    %v3314 = vmul.f32 %v682, %v3089
    %v3315 = vmul.f32 %v683, %v3094
    %v3316 = vmul.f32 %v684, %v3099
    %v3317 = vmul.f32 %v685, %v3104
    %v3318 = vmul.f32 %v686, %v3109
    %v3319 = vmul.f32 %v687, %v3114
    %v3320 = vmul.f32 %v688, %v3119
    %v3321 = vmul.f32 %v689, %v3124
    %v3322 = vmul.f32 %v690, %v3129
    %v3323 = vmul.f32 %v691, %v3134
    %v3324 = vmul.f32 %v692, %v3139
    %v3325 = vmul.f32 %v693, %v3144
    %v3326 = vmul.f32 %v694, %v3149
    %v3327 = vmul.f32 %v695, %v3154
    %v3328 = vmul.f32 %v696, %v3159
    %v3329 = vmul.f32 %v697, %v3164
    %v3330 = vmul.f32 %v698, %v3169
    %v3331 = vmul.f32 %v699, %v3174
    %v3332 = vmul.f32 %v700, %v3179
    %v3333 = vmul.f32 %v701, %v3184
    %v3334 = vmul.f32 %v702, %v3189
    %v3335 = vmul.f32 %v703, %v3194
    %v3336 = vmul.f32 %v704, %v3199
    %v3337 = vmul.f32 %v705, %v3204
    %v3338 = vmul.f32 %v706, %v3209
    %v3339 = vmul.f32 %v707, %v3214
    %v3340 = vmul.f32 %v708, %v3219
    %v3341 = vmul.f32 %v709, %v3224
    %v3342 = vmul.f32 %v710, %v3229
    %v3343 = vmul.f32 %v711, %v3234
    %v3344 = vmul.f32 %v712, %v3239
    %v3345 = vmul.f32 %v713, %v3244
    %v3346 = vmul.f32 %v714, %v3249
    %v3347 = vmul.f32 %v715, %v3254
    %v3348 = vmul.f32 %v716, %v3259
    %v3349 = vmul.f32 %v717, %v3264
    %v3350 = vmul.f32 %v718, %v3269
    %v3351 = vmul.f32 %v719, %v3274
    %v3352 = vmul.f32 %v720, %v3279
    %v3353 = vmul.f32 %v721, %v3284
    %v3354 = vmul.f32 %v722, %v3289
    %v3355 = vpack.c.bf16 %v3292, %v3291
    %v3356 = vpack.c.bf16 %v3294, %v3293
    %v3357 = vpack.c.bf16 %v3296, %v3295
    %v3358 = vpack.c.bf16 %v3298, %v3297
    %v3359 = vpack.c.bf16 %v3300, %v3299
    %v3360 = vpack.c.bf16 %v3302, %v3301
    %v3361 = vpack.c.bf16 %v3304, %v3303
    %v3362 = vpack.c.bf16 %v3306, %v3305
    %v3363 = vpack.c.bf16 %v3308, %v3307
    %v3364 = vpack.c.bf16 %v3310, %v3309
    %v3365 = vpack.c.bf16 %v3312, %v3311
    %v3366 = vpack.c.bf16 %v3314, %v3313
    %v3367 = vpack.c.bf16 %v3316, %v3315
    %v3368 = vpack.c.bf16 %v3318, %v3317
    %v3369 = vpack.c.bf16 %v3320, %v3319
    %v3370 = vpack.c.bf16 %v3322, %v3321
    %v3371 = vpack.c.bf16 %v3324, %v3323
    %v3372 = vpack.c.bf16 %v3326, %v3325
    %v3373 = vpack.c.bf16 %v3328, %v3327
    %v3374 = vpack.c.bf16 %v3330, %v3329
    %v3375 = vpack.c.bf16 %v3332, %v3331
    %v3376 = vpack.c.bf16 %v3334, %v3333
    %v3377 = vpack.c.bf16 %v3336, %v3335
    %v3378 = vpack.c.bf16 %v3338, %v3337
    %v3379 = vpack.c.bf16 %v3340, %v3339
    %v3380 = vpack.c.bf16 %v3342, %v3341
    %v3381 = vpack.c.bf16 %v3344, %v3343
    %v3382 = vpack.c.bf16 %v3346, %v3345
    %v3383 = vpack.c.bf16 %v3348, %v3347
    %v3384 = vpack.c.bf16 %v3350, %v3349
    %v3385 = vpack.c.bf16 %v3352, %v3351
    %v3386 = vpack.c.bf16 %v3354, %v3353
    %s3387 = scalar_lea.vmem %s1, 2560
    %v3388 = vld [vmem:[%s3387] sm:$0xff]
    %v3389 = vld [vmem:[%s3387 + $0x8] sm:$0xff]
    %v3390 = vld [vmem:[%s3387 + $0x10] sm:$0xff]
    %v3391 = vld [vmem:[%s3387 + $0x18] sm:$0xff]
    %v3392 = vld [vmem:[%s3387 + $0x20] sm:$0xff]
    %v3393 = vld [vmem:[%s3387 + $0x28] sm:$0xff]
    %v3394 = vld [vmem:[%s3387 + $0x30] sm:$0xff]
    %v3395 = vld [vmem:[%s3387 + $0x38] sm:$0xff]
    %v3396 = vld [vmem:[%s3387 + $0x40] sm:$0xff]
    %v3397 = vld [vmem:[%s3387 + $0x48] sm:$0xff]
    %v3398 = vld [vmem:[%s3387 + $0x50] sm:$0xff]
    %v3399 = vld [vmem:[%s3387 + $0x58] sm:$0xff]
    %v3400 = vld [vmem:[%s3387 + $0x60] sm:$0xff]
    %v3401 = vld [vmem:[%s3387 + $0x68] sm:$0xff]
    %v3402 = vld [vmem:[%s3387 + $0x70] sm:$0xff]
    %v3403 = vld [vmem:[%s3387 + $0x78] sm:$0xff]
    %v3404 = vld [vmem:[%s3387 + $0x80] sm:$0xff]
    %v3405 = vld [vmem:[%s3387 + $0x88] sm:$0xff]
    %v3406 = vld [vmem:[%s3387 + $0x90] sm:$0xff]
    %v3407 = vld [vmem:[%s3387 + $0x98] sm:$0xff]
    %v3408 = vld [vmem:[%s3387 + $0xa0] sm:$0xff]
    %v3409 = vld [vmem:[%s3387 + $0xa8] sm:$0xff]
    %v3410 = vld [vmem:[%s3387 + $0xb0] sm:$0xff]
    %v3411 = vld [vmem:[%s3387 + $0xb8] sm:$0xff]
    %v3412 = vld [vmem:[%s3387 + $0xc0] sm:$0xff]
    %v3413 = vld [vmem:[%s3387 + $0xc8] sm:$0xff]
    %v3414 = vld [vmem:[%s3387 + $0xd0] sm:$0xff]
    %v3415 = vld [vmem:[%s3387 + $0xd8] sm:$0xff]
    %v3416 = vld [vmem:[%s3387 + $0xe0] sm:$0xff]
    %v3417 = vld [vmem:[%s3387 + $0xe8] sm:$0xff]
    %v3418 = vld [vmem:[%s3387 + $0xf0] sm:$0xff]
    %v3419 = vld [vmem:[%s3387 + $0xf8] sm:$0xff]
    %v3420 = vld [vmem:[%s3387 + $0x100] sm:$0xff]
    %v3421 = vld [vmem:[%s3387 + $0x108] sm:$0xff]
    %v3422 = vld [vmem:[%s3387 + $0x110] sm:$0xff]
    %v3423 = vld [vmem:[%s3387 + $0x118] sm:$0xff]
    %v3424 = vld [vmem:[%s3387 + $0x120] sm:$0xff]
    %v3425 = vld [vmem:[%s3387 + $0x128] sm:$0xff]
    %v3426 = vld [vmem:[%s3387 + $0x130] sm:$0xff]
    %v3427 = vld [vmem:[%s3387 + $0x138] sm:$0xff]
    %v3428 = vld [vmem:[%s3387 + $0x140] sm:$0xff]
    %v3429 = vld [vmem:[%s3387 + $0x148] sm:$0xff]
    %v3430 = vld [vmem:[%s3387 + $0x150] sm:$0xff]
    %v3431 = vld [vmem:[%s3387 + $0x158] sm:$0xff]
    %v3432 = vld [vmem:[%s3387 + $0x160] sm:$0xff]
    %v3433 = vld [vmem:[%s3387 + $0x168] sm:$0xff]
    %v3434 = vld [vmem:[%s3387 + $0x170] sm:$0xff]
    %v3435 = vld [vmem:[%s3387 + $0x178] sm:$0xff]
    %v3436 = vld [vmem:[%s3387 + $0x180] sm:$0xff]
    %v3437 = vld [vmem:[%s3387 + $0x188] sm:$0xff]
    %v3438 = vld [vmem:[%s3387 + $0x190] sm:$0xff]
    %v3439 = vld [vmem:[%s3387 + $0x198] sm:$0xff]
    %v3440 = vld [vmem:[%s3387 + $0x1a0] sm:$0xff]
    %v3441 = vld [vmem:[%s3387 + $0x1a8] sm:$0xff]
    %v3442 = vld [vmem:[%s3387 + $0x1b0] sm:$0xff]
    %v3443 = vld [vmem:[%s3387 + $0x1b8] sm:$0xff]
    %v3444 = vld [vmem:[%s3387 + $0x1c0] sm:$0xff]
    %v3445 = vld [vmem:[%s3387 + $0x1c8] sm:$0xff]
    %v3446 = vld [vmem:[%s3387 + $0x1d0] sm:$0xff]
    %v3447 = vld [vmem:[%s3387 + $0x1d8] sm:$0xff]
    %v3448 = vld [vmem:[%s3387 + $0x1e0] sm:$0xff]
    %v3449 = vld [vmem:[%s3387 + $0x1e8] sm:$0xff]
    %v3450 = vld [vmem:[%s3387 + $0x1f0] sm:$0xff]
    %v3451 = vld [vmem:[%s3387 + $0x1f8] sm:$0xff]
    %3453 = vset.pattern.permute.xlu0 0
    %3454 = vperm.xlu0 %3453, %v3388
    %v3455 = vpop.permute.xlu0 %3454
    %3458 = vset.pattern.permute.xlu0 0
    %3459 = vperm.xlu0 %3458, %v3389
    %v3460 = vpop.permute.xlu0 %3459
    %3463 = vset.pattern.permute.xlu0 0
    %3464 = vperm.xlu0 %3463, %v3390
    %v3465 = vpop.permute.xlu0 %3464
    %3468 = vset.pattern.permute.xlu0 0
    %3469 = vperm.xlu0 %3468, %v3391
    %v3470 = vpop.permute.xlu0 %3469
    %3473 = vset.pattern.permute.xlu0 0
    %3474 = vperm.xlu0 %3473, %v3392
    %v3475 = vpop.permute.xlu0 %3474
    %3478 = vset.pattern.permute.xlu0 0
    %3479 = vperm.xlu0 %3478, %v3393
    %v3480 = vpop.permute.xlu0 %3479
    %3483 = vset.pattern.permute.xlu0 0
    %3484 = vperm.xlu0 %3483, %v3394
    %v3485 = vpop.permute.xlu0 %3484
    %3488 = vset.pattern.permute.xlu0 0
    %3489 = vperm.xlu0 %3488, %v3395
    %v3490 = vpop.permute.xlu0 %3489
    %3493 = vset.pattern.permute.xlu0 0
    %3494 = vperm.xlu0 %3493, %v3396
    %v3495 = vpop.permute.xlu0 %3494
    %3498 = vset.pattern.permute.xlu0 0
    %3499 = vperm.xlu0 %3498, %v3397
    %v3500 = vpop.permute.xlu0 %3499
    %3503 = vset.pattern.permute.xlu0 0
    %3504 = vperm.xlu0 %3503, %v3398
    %v3505 = vpop.permute.xlu0 %3504
    %3508 = vset.pattern.permute.xlu0 0
    %3509 = vperm.xlu0 %3508, %v3399
    %v3510 = vpop.permute.xlu0 %3509
    %3513 = vset.pattern.permute.xlu0 0
    %3514 = vperm.xlu0 %3513, %v3400
    %v3515 = vpop.permute.xlu0 %3514
    %3518 = vset.pattern.permute.xlu0 0
    %3519 = vperm.xlu0 %3518, %v3401
    %v3520 = vpop.permute.xlu0 %3519
    %3523 = vset.pattern.permute.xlu0 0
    %3524 = vperm.xlu0 %3523, %v3402
    %v3525 = vpop.permute.xlu0 %3524
    %3528 = vset.pattern.permute.xlu0 0
    %3529 = vperm.xlu0 %3528, %v3403
    %v3530 = vpop.permute.xlu0 %3529
    %3533 = vset.pattern.permute.xlu0 0
    %3534 = vperm.xlu0 %3533, %v3404
    %v3535 = vpop.permute.xlu0 %3534
    %3538 = vset.pattern.permute.xlu0 0
    %3539 = vperm.xlu0 %3538, %v3405
    %v3540 = vpop.permute.xlu0 %3539
    %3543 = vset.pattern.permute.xlu0 0
    %3544 = vperm.xlu0 %3543, %v3406
    %v3545 = vpop.permute.xlu0 %3544
    %3548 = vset.pattern.permute.xlu0 0
    %3549 = vperm.xlu0 %3548, %v3407
    %v3550 = vpop.permute.xlu0 %3549
    %3553 = vset.pattern.permute.xlu0 0
    %3554 = vperm.xlu0 %3553, %v3408
    %v3555 = vpop.permute.xlu0 %3554
    %3558 = vset.pattern.permute.xlu0 0
    %3559 = vperm.xlu0 %3558, %v3409
    %v3560 = vpop.permute.xlu0 %3559
    %3563 = vset.pattern.permute.xlu0 0
    %3564 = vperm.xlu0 %3563, %v3410
    %v3565 = vpop.permute.xlu0 %3564
    %3568 = vset.pattern.permute.xlu0 0
    %3569 = vperm.xlu0 %3568, %v3411
    %v3570 = vpop.permute.xlu0 %3569
    %3573 = vset.pattern.permute.xlu0 0
    %3574 = vperm.xlu0 %3573, %v3412
    %v3575 = vpop.permute.xlu0 %3574
    %3578 = vset.pattern.permute.xlu0 0
    %3579 = vperm.xlu0 %3578, %v3413
    %v3580 = vpop.permute.xlu0 %3579
    %3583 = vset.pattern.permute.xlu0 0
    %3584 = vperm.xlu0 %3583, %v3414
    %v3585 = vpop.permute.xlu0 %3584
    %3588 = vset.pattern.permute.xlu0 0
    %3589 = vperm.xlu0 %3588, %v3415
    %v3590 = vpop.permute.xlu0 %3589
    %3593 = vset.pattern.permute.xlu0 0
    %3594 = vperm.xlu0 %3593, %v3416
    %v3595 = vpop.permute.xlu0 %3594
    %3598 = vset.pattern.permute.xlu0 0
    %3599 = vperm.xlu0 %3598, %v3417
    %v3600 = vpop.permute.xlu0 %3599
    %3603 = vset.pattern.permute.xlu0 0
    %3604 = vperm.xlu0 %3603, %v3418
    %v3605 = vpop.permute.xlu0 %3604
    %3608 = vset.pattern.permute.xlu0 0
    %3609 = vperm.xlu0 %3608, %v3419
    %v3610 = vpop.permute.xlu0 %3609
    %3613 = vset.pattern.permute.xlu0 0
    %3614 = vperm.xlu0 %3613, %v3420
    %v3615 = vpop.permute.xlu0 %3614
    %3618 = vset.pattern.permute.xlu0 0
    %3619 = vperm.xlu0 %3618, %v3421
    %v3620 = vpop.permute.xlu0 %3619
    %3623 = vset.pattern.permute.xlu0 0
    %3624 = vperm.xlu0 %3623, %v3422
    %v3625 = vpop.permute.xlu0 %3624
    %3628 = vset.pattern.permute.xlu0 0
    %3629 = vperm.xlu0 %3628, %v3423
    %v3630 = vpop.permute.xlu0 %3629
    %3633 = vset.pattern.permute.xlu0 0
    %3634 = vperm.xlu0 %3633, %v3424
    %v3635 = vpop.permute.xlu0 %3634
    %3638 = vset.pattern.permute.xlu0 0
    %3639 = vperm.xlu0 %3638, %v3425
    %v3640 = vpop.permute.xlu0 %3639
    %3643 = vset.pattern.permute.xlu0 0
    %3644 = vperm.xlu0 %3643, %v3426
    %v3645 = vpop.permute.xlu0 %3644
    %3648 = vset.pattern.permute.xlu0 0
    %3649 = vperm.xlu0 %3648, %v3427
    %v3650 = vpop.permute.xlu0 %3649
    %3653 = vset.pattern.permute.xlu0 0
    %3654 = vperm.xlu0 %3653, %v3428
    %v3655 = vpop.permute.xlu0 %3654
    %3658 = vset.pattern.permute.xlu0 0
    %3659 = vperm.xlu0 %3658, %v3429
    %v3660 = vpop.permute.xlu0 %3659
    %3663 = vset.pattern.permute.xlu0 0
    %3664 = vperm.xlu0 %3663, %v3430
    %v3665 = vpop.permute.xlu0 %3664
    %3668 = vset.pattern.permute.xlu0 0
    %3669 = vperm.xlu0 %3668, %v3431
    %v3670 = vpop.permute.xlu0 %3669
    %3673 = vset.pattern.permute.xlu0 0
    %3674 = vperm.xlu0 %3673, %v3432
    %v3675 = vpop.permute.xlu0 %3674
    %3678 = vset.pattern.permute.xlu0 0
    %3679 = vperm.xlu0 %3678, %v3433
    %v3680 = vpop.permute.xlu0 %3679
    %3683 = vset.pattern.permute.xlu0 0
    %3684 = vperm.xlu0 %3683, %v3434
    %v3685 = vpop.permute.xlu0 %3684
    %3688 = vset.pattern.permute.xlu0 0
    %3689 = vperm.xlu0 %3688, %v3435
    %v3690 = vpop.permute.xlu0 %3689
    %3693 = vset.pattern.permute.xlu0 0
    %3694 = vperm.xlu0 %3693, %v3436
    %v3695 = vpop.permute.xlu0 %3694
    %3698 = vset.pattern.permute.xlu0 0
    %3699 = vperm.xlu0 %3698, %v3437
    %v3700 = vpop.permute.xlu0 %3699
    %3703 = vset.pattern.permute.xlu0 0
    %3704 = vperm.xlu0 %3703, %v3438
    %v3705 = vpop.permute.xlu0 %3704
    %3708 = vset.pattern.permute.xlu0 0
    %3709 = vperm.xlu0 %3708, %v3439
    %v3710 = vpop.permute.xlu0 %3709
    %3713 = vset.pattern.permute.xlu0 0
    %3714 = vperm.xlu0 %3713, %v3440
    %v3715 = vpop.permute.xlu0 %3714
    %3718 = vset.pattern.permute.xlu0 0
    %3719 = vperm.xlu0 %3718, %v3441
    %v3720 = vpop.permute.xlu0 %3719
    %3723 = vset.pattern.permute.xlu0 0
    %3724 = vperm.xlu0 %3723, %v3442
    %v3725 = vpop.permute.xlu0 %3724
    %3728 = vset.pattern.permute.xlu0 0
    %3729 = vperm.xlu0 %3728, %v3443
    %v3730 = vpop.permute.xlu0 %3729
    %3733 = vset.pattern.permute.xlu0 0
    %3734 = vperm.xlu0 %3733, %v3444
    %v3735 = vpop.permute.xlu0 %3734
    %3738 = vset.pattern.permute.xlu0 0
    %3739 = vperm.xlu0 %3738, %v3445
    %v3740 = vpop.permute.xlu0 %3739
    %3743 = vset.pattern.permute.xlu0 0
    %3744 = vperm.xlu0 %3743, %v3446
    %v3745 = vpop.permute.xlu0 %3744
    %3748 = vset.pattern.permute.xlu0 0
    %3749 = vperm.xlu0 %3748, %v3447
    %v3750 = vpop.permute.xlu0 %3749
    %3753 = vset.pattern.permute.xlu0 0
    %3754 = vperm.xlu0 %3753, %v3448
    %v3755 = vpop.permute.xlu0 %3754
    %3758 = vset.pattern.permute.xlu0 0
    %3759 = vperm.xlu0 %3758, %v3449
    %v3760 = vpop.permute.xlu0 %3759
    %3763 = vset.pattern.permute.xlu0 0
    %3764 = vperm.xlu0 %3763, %v3450
    %v3765 = vpop.permute.xlu0 %3764
    %3768 = vset.pattern.permute.xlu0 0
    %3769 = vperm.xlu0 %3768, %v3451
    %v3770 = vpop.permute.xlu0 %3769
    %v3772 = vmul.f32 %v1942, %v3455
    %v3773 = vmul.f32 %v1941, %v3460
    %v3774 = vmul.f32 %v1940, %v3465
    %v3775 = vmul.f32 %v1939, %v3470
    %v3776 = vmul.f32 %v1938, %v3475
    %v3777 = vmul.f32 %v1937, %v3480
    %v3778 = vmul.f32 %v1936, %v3485
    %v3779 = vmul.f32 %v1935, %v3490
    %v3780 = vmul.f32 %v1934, %v3495
    %v3781 = vmul.f32 %v1933, %v3500
    %v3782 = vmul.f32 %v1932, %v3505
    %v3783 = vmul.f32 %v1931, %v3510
    %v3784 = vmul.f32 %v1930, %v3515
    %v3785 = vmul.f32 %v1929, %v3520
    %v3786 = vmul.f32 %v1928, %v3525
    %v3787 = vmul.f32 %v1927, %v3530
    %v3788 = vmul.f32 %v1926, %v3535
    %v3789 = vmul.f32 %v1925, %v3540
    %v3790 = vmul.f32 %v1924, %v3545
    %v3791 = vmul.f32 %v1923, %v3550
    %v3792 = vmul.f32 %v1922, %v3555
    %v3793 = vmul.f32 %v1921, %v3560
    %v3794 = vmul.f32 %v1920, %v3565
    %v3795 = vmul.f32 %v1919, %v3570
    %v3796 = vmul.f32 %v1918, %v3575
    %v3797 = vmul.f32 %v1917, %v3580
    %v3798 = vmul.f32 %v1916, %v3585
    %v3799 = vmul.f32 %v1915, %v3590
    %v3800 = vmul.f32 %v1914, %v3595
    %v3801 = vmul.f32 %v1913, %v3600
    %v3802 = vmul.f32 %v1912, %v3605
    %v3803 = vmul.f32 %v1911, %v3610
    %v3804 = vmul.f32 %v1910, %v3615
    %v3805 = vmul.f32 %v1909, %v3620
    %v3806 = vmul.f32 %v1908, %v3625
    %v3807 = vmul.f32 %v1907, %v3630
    %v3808 = vmul.f32 %v1906, %v3635
    %v3809 = vmul.f32 %v1905, %v3640
    %v3810 = vmul.f32 %v1904, %v3645
    %v3811 = vmul.f32 %v1903, %v3650
    %v3812 = vmul.f32 %v1902, %v3655
    %v3813 = vmul.f32 %v1901, %v3660
    %v3814 = vmul.f32 %v1900, %v3665
    %v3815 = vmul.f32 %v1899, %v3670
    %v3816 = vmul.f32 %v1898, %v3675
    %v3817 = vmul.f32 %v1897, %v3680
    %v3818 = vmul.f32 %v1896, %v3685
    %v3819 = vmul.f32 %v1895, %v3690
    %v3820 = vmul.f32 %v1894, %v3695
    %v3821 = vmul.f32 %v1893, %v3700
    %v3822 = vmul.f32 %v1892, %v3705
    %v3823 = vmul.f32 %v1891, %v3710
    %v3824 = vmul.f32 %v1890, %v3715
    %v3825 = vmul.f32 %v1889, %v3720
    %v3826 = vmul.f32 %v1888, %v3725
    %v3827 = vmul.f32 %v1887, %v3730
    %v3828 = vmul.f32 %v1886, %v3735
    %v3829 = vmul.f32 %v1885, %v3740
    %v3830 = vmul.f32 %v1884, %v3745
    %v3831 = vmul.f32 %v1883, %v3750
    %v3832 = vmul.f32 %v1882, %v3755
    %v3833 = vmul.f32 %v1881, %v3760
    %v3834 = vmul.f32 %v1880, %v3765
    %v3835 = vmul.f32 %v1943, %v3770
    %v3836 = vpack.c.bf16 %v3773, %v3772
    %v3837 = vpack.c.bf16 %v3775, %v3774
    %v3838 = vpack.c.bf16 %v3777, %v3776
    %v3839 = vpack.c.bf16 %v3779, %v3778
    %v3840 = vpack.c.bf16 %v3781, %v3780
    %v3841 = vpack.c.bf16 %v3783, %v3782
    %v3842 = vpack.c.bf16 %v3785, %v3784
    %v3843 = vpack.c.bf16 %v3787, %v3786
    %v3844 = vpack.c.bf16 %v3789, %v3788
    %v3845 = vpack.c.bf16 %v3791, %v3790
    %v3846 = vpack.c.bf16 %v3793, %v3792
    %v3847 = vpack.c.bf16 %v3795, %v3794
    %v3848 = vpack.c.bf16 %v3797, %v3796
    %v3849 = vpack.c.bf16 %v3799, %v3798
    %v3850 = vpack.c.bf16 %v3801, %v3800
    %v3851 = vpack.c.bf16 %v3803, %v3802
    %v3852 = vpack.c.bf16 %v3805, %v3804
    %v3853 = vpack.c.bf16 %v3807, %v3806
    %v3854 = vpack.c.bf16 %v3809, %v3808
    %v3855 = vpack.c.bf16 %v3811, %v3810
    %v3856 = vpack.c.bf16 %v3813, %v3812
    %v3857 = vpack.c.bf16 %v3815, %v3814
    %v3858 = vpack.c.bf16 %v3817, %v3816
    %v3859 = vpack.c.bf16 %v3819, %v3818
    %v3860 = vpack.c.bf16 %v3821, %v3820
    %v3861 = vpack.c.bf16 %v3823, %v3822
    %v3862 = vpack.c.bf16 %v3825, %v3824
    %v3863 = vpack.c.bf16 %v3827, %v3826
    %v3864 = vpack.c.bf16 %v3829, %v3828
    %v3865 = vpack.c.bf16 %v3831, %v3830
    %v3866 = vpack.c.bf16 %v3833, %v3832
    %v3867 = vpack.c.bf16 %v3835, %v3834
    %s3868 = scalar_lea.vmem %s1, 3072
    %v3869 = vld [vmem:[%s3868] sm:$0xff]
    %v3870 = vld [vmem:[%s3868 + $0x8] sm:$0xff]
    %v3871 = vld [vmem:[%s3868 + $0x10] sm:$0xff]
    %v3872 = vld [vmem:[%s3868 + $0x18] sm:$0xff]
    %v3873 = vld [vmem:[%s3868 + $0x20] sm:$0xff]
    %v3874 = vld [vmem:[%s3868 + $0x28] sm:$0xff]
    %v3875 = vld [vmem:[%s3868 + $0x30] sm:$0xff]
    %v3876 = vld [vmem:[%s3868 + $0x38] sm:$0xff]
    %v3877 = vld [vmem:[%s3868 + $0x40] sm:$0xff]
    %v3878 = vld [vmem:[%s3868 + $0x48] sm:$0xff]
    %v3879 = vld [vmem:[%s3868 + $0x50] sm:$0xff]
    %v3880 = vld [vmem:[%s3868 + $0x58] sm:$0xff]
    %v3881 = vld [vmem:[%s3868 + $0x60] sm:$0xff]
    %v3882 = vld [vmem:[%s3868 + $0x68] sm:$0xff]
    %v3883 = vld [vmem:[%s3868 + $0x70] sm:$0xff]
    %v3884 = vld [vmem:[%s3868 + $0x78] sm:$0xff]
    %v3885 = vld [vmem:[%s3868 + $0x80] sm:$0xff]
    %v3886 = vld [vmem:[%s3868 + $0x88] sm:$0xff]
    %v3887 = vld [vmem:[%s3868 + $0x90] sm:$0xff]
    %v3888 = vld [vmem:[%s3868 + $0x98] sm:$0xff]
    %v3889 = vld [vmem:[%s3868 + $0xa0] sm:$0xff]
    %v3890 = vld [vmem:[%s3868 + $0xa8] sm:$0xff]
    %v3891 = vld [vmem:[%s3868 + $0xb0] sm:$0xff]
    %v3892 = vld [vmem:[%s3868 + $0xb8] sm:$0xff]
    %v3893 = vld [vmem:[%s3868 + $0xc0] sm:$0xff]
    %v3894 = vld [vmem:[%s3868 + $0xc8] sm:$0xff]
    %v3895 = vld [vmem:[%s3868 + $0xd0] sm:$0xff]
    %v3896 = vld [vmem:[%s3868 + $0xd8] sm:$0xff]
    %v3897 = vld [vmem:[%s3868 + $0xe0] sm:$0xff]
    %v3898 = vld [vmem:[%s3868 + $0xe8] sm:$0xff]
    %v3899 = vld [vmem:[%s3868 + $0xf0] sm:$0xff]
    %v3900 = vld [vmem:[%s3868 + $0xf8] sm:$0xff]
    %v3901 = vld [vmem:[%s3868 + $0x100] sm:$0xff]
    %v3902 = vld [vmem:[%s3868 + $0x108] sm:$0xff]
    %v3903 = vld [vmem:[%s3868 + $0x110] sm:$0xff]
    %v3904 = vld [vmem:[%s3868 + $0x118] sm:$0xff]
    %v3905 = vld [vmem:[%s3868 + $0x120] sm:$0xff]
    %v3906 = vld [vmem:[%s3868 + $0x128] sm:$0xff]
    %v3907 = vld [vmem:[%s3868 + $0x130] sm:$0xff]
    %v3908 = vld [vmem:[%s3868 + $0x138] sm:$0xff]
    %v3909 = vld [vmem:[%s3868 + $0x140] sm:$0xff]
    %v3910 = vld [vmem:[%s3868 + $0x148] sm:$0xff]
    %v3911 = vld [vmem:[%s3868 + $0x150] sm:$0xff]
    %v3912 = vld [vmem:[%s3868 + $0x158] sm:$0xff]
    %v3913 = vld [vmem:[%s3868 + $0x160] sm:$0xff]
    %v3914 = vld [vmem:[%s3868 + $0x168] sm:$0xff]
    %v3915 = vld [vmem:[%s3868 + $0x170] sm:$0xff]
    %v3916 = vld [vmem:[%s3868 + $0x178] sm:$0xff]
    %v3917 = vld [vmem:[%s3868 + $0x180] sm:$0xff]
    %v3918 = vld [vmem:[%s3868 + $0x188] sm:$0xff]
    %v3919 = vld [vmem:[%s3868 + $0x190] sm:$0xff]
    %v3920 = vld [vmem:[%s3868 + $0x198] sm:$0xff]
    %v3921 = vld [vmem:[%s3868 + $0x1a0] sm:$0xff]
    %v3922 = vld [vmem:[%s3868 + $0x1a8] sm:$0xff]
    %v3923 = vld [vmem:[%s3868 + $0x1b0] sm:$0xff]
    %v3924 = vld [vmem:[%s3868 + $0x1b8] sm:$0xff]
    %v3925 = vld [vmem:[%s3868 + $0x1c0] sm:$0xff]
    %v3926 = vld [vmem:[%s3868 + $0x1c8] sm:$0xff]
    %v3927 = vld [vmem:[%s3868 + $0x1d0] sm:$0xff]
    %v3928 = vld [vmem:[%s3868 + $0x1d8] sm:$0xff]
    %v3929 = vld [vmem:[%s3868 + $0x1e0] sm:$0xff]
    %v3930 = vld [vmem:[%s3868 + $0x1e8] sm:$0xff]
    %v3931 = vld [vmem:[%s3868 + $0x1f0] sm:$0xff]
    %v3932 = vld [vmem:[%s3868 + $0x1f8] sm:$0xff]
    %3934 = vset.pattern.permute.xlu0 0
    %3935 = vperm.xlu0 %3934, %v3869
    %v3936 = vpop.permute.xlu0 %3935
    %3939 = vset.pattern.permute.xlu0 0
    %3940 = vperm.xlu0 %3939, %v3870
    %v3941 = vpop.permute.xlu0 %3940
    %3944 = vset.pattern.permute.xlu0 0
    %3945 = vperm.xlu0 %3944, %v3871
    %v3946 = vpop.permute.xlu0 %3945
    %3949 = vset.pattern.permute.xlu0 0
    %3950 = vperm.xlu0 %3949, %v3872
    %v3951 = vpop.permute.xlu0 %3950
    %3954 = vset.pattern.permute.xlu0 0
    %3955 = vperm.xlu0 %3954, %v3873
    %v3956 = vpop.permute.xlu0 %3955
    %3959 = vset.pattern.permute.xlu0 0
    %3960 = vperm.xlu0 %3959, %v3874
    %v3961 = vpop.permute.xlu0 %3960
    %3964 = vset.pattern.permute.xlu0 0
    %3965 = vperm.xlu0 %3964, %v3875
    %v3966 = vpop.permute.xlu0 %3965
    %3969 = vset.pattern.permute.xlu0 0
    %3970 = vperm.xlu0 %3969, %v3876
    %v3971 = vpop.permute.xlu0 %3970
    %3974 = vset.pattern.permute.xlu0 0
    %3975 = vperm.xlu0 %3974, %v3877
    %v3976 = vpop.permute.xlu0 %3975
    %3979 = vset.pattern.permute.xlu0 0
    %3980 = vperm.xlu0 %3979, %v3878
    %v3981 = vpop.permute.xlu0 %3980
    %3984 = vset.pattern.permute.xlu0 0
    %3985 = vperm.xlu0 %3984, %v3879
    %v3986 = vpop.permute.xlu0 %3985
    %3989 = vset.pattern.permute.xlu0 0
    %3990 = vperm.xlu0 %3989, %v3880
    %v3991 = vpop.permute.xlu0 %3990
    %3994 = vset.pattern.permute.xlu0 0
    %3995 = vperm.xlu0 %3994, %v3881
    %v3996 = vpop.permute.xlu0 %3995
    %3999 = vset.pattern.permute.xlu0 0
    %4000 = vperm.xlu0 %3999, %v3882
    %v4001 = vpop.permute.xlu0 %4000
    %4004 = vset.pattern.permute.xlu0 0
    %4005 = vperm.xlu0 %4004, %v3883
    %v4006 = vpop.permute.xlu0 %4005
    %4009 = vset.pattern.permute.xlu0 0
    %4010 = vperm.xlu0 %4009, %v3884
    %v4011 = vpop.permute.xlu0 %4010
    %4014 = vset.pattern.permute.xlu0 0
    %4015 = vperm.xlu0 %4014, %v3885
    %v4016 = vpop.permute.xlu0 %4015
    %4019 = vset.pattern.permute.xlu0 0
    %4020 = vperm.xlu0 %4019, %v3886
    %v4021 = vpop.permute.xlu0 %4020
    %4024 = vset.pattern.permute.xlu0 0
    %4025 = vperm.xlu0 %4024, %v3887
    %v4026 = vpop.permute.xlu0 %4025
    %4029 = vset.pattern.permute.xlu0 0
    %4030 = vperm.xlu0 %4029, %v3888
    %v4031 = vpop.permute.xlu0 %4030
    %4034 = vset.pattern.permute.xlu0 0
    %4035 = vperm.xlu0 %4034, %v3889
    %v4036 = vpop.permute.xlu0 %4035
    %4039 = vset.pattern.permute.xlu0 0
    %4040 = vperm.xlu0 %4039, %v3890
    %v4041 = vpop.permute.xlu0 %4040
    %4044 = vset.pattern.permute.xlu0 0
    %4045 = vperm.xlu0 %4044, %v3891
    %v4046 = vpop.permute.xlu0 %4045
    %4049 = vset.pattern.permute.xlu0 0
    %4050 = vperm.xlu0 %4049, %v3892
    %v4051 = vpop.permute.xlu0 %4050
    %4054 = vset.pattern.permute.xlu0 0
    %4055 = vperm.xlu0 %4054, %v3893
    %v4056 = vpop.permute.xlu0 %4055
    %4059 = vset.pattern.permute.xlu0 0
    %4060 = vperm.xlu0 %4059, %v3894
    %v4061 = vpop.permute.xlu0 %4060
    %4064 = vset.pattern.permute.xlu0 0
    %4065 = vperm.xlu0 %4064, %v3895
    %v4066 = vpop.permute.xlu0 %4065
    %4069 = vset.pattern.permute.xlu0 0
    %4070 = vperm.xlu0 %4069, %v3896
    %v4071 = vpop.permute.xlu0 %4070
    %4074 = vset.pattern.permute.xlu0 0
    %4075 = vperm.xlu0 %4074, %v3897
    %v4076 = vpop.permute.xlu0 %4075
    %4079 = vset.pattern.permute.xlu0 0
    %4080 = vperm.xlu0 %4079, %v3898
    %v4081 = vpop.permute.xlu0 %4080
    %4084 = vset.pattern.permute.xlu0 0
    %4085 = vperm.xlu0 %4084, %v3899
    %v4086 = vpop.permute.xlu0 %4085
    %4089 = vset.pattern.permute.xlu0 0
    %4090 = vperm.xlu0 %4089, %v3900
    %v4091 = vpop.permute.xlu0 %4090
    %4094 = vset.pattern.permute.xlu0 0
    %4095 = vperm.xlu0 %4094, %v3901
    %v4096 = vpop.permute.xlu0 %4095
    %4099 = vset.pattern.permute.xlu0 0
    %4100 = vperm.xlu0 %4099, %v3902
    %v4101 = vpop.permute.xlu0 %4100
    %4104 = vset.pattern.permute.xlu0 0
    %4105 = vperm.xlu0 %4104, %v3903
    %v4106 = vpop.permute.xlu0 %4105
    %4109 = vset.pattern.permute.xlu0 0
    %4110 = vperm.xlu0 %4109, %v3904
    %v4111 = vpop.permute.xlu0 %4110
    %4114 = vset.pattern.permute.xlu0 0
    %4115 = vperm.xlu0 %4114, %v3905
    %v4116 = vpop.permute.xlu0 %4115
    %4119 = vset.pattern.permute.xlu0 0
    %4120 = vperm.xlu0 %4119, %v3906
    %v4121 = vpop.permute.xlu0 %4120
    %4124 = vset.pattern.permute.xlu0 0
    %4125 = vperm.xlu0 %4124, %v3907
    %v4126 = vpop.permute.xlu0 %4125
    %4129 = vset.pattern.permute.xlu0 0
    %4130 = vperm.xlu0 %4129, %v3908
    %v4131 = vpop.permute.xlu0 %4130
    %4134 = vset.pattern.permute.xlu0 0
    %4135 = vperm.xlu0 %4134, %v3909
    %v4136 = vpop.permute.xlu0 %4135
    %4139 = vset.pattern.permute.xlu0 0
    %4140 = vperm.xlu0 %4139, %v3910
    %v4141 = vpop.permute.xlu0 %4140
    %4144 = vset.pattern.permute.xlu0 0
    %4145 = vperm.xlu0 %4144, %v3911
    %v4146 = vpop.permute.xlu0 %4145
    %4149 = vset.pattern.permute.xlu0 0
    %4150 = vperm.xlu0 %4149, %v3912
    %v4151 = vpop.permute.xlu0 %4150
    %4154 = vset.pattern.permute.xlu0 0
    %4155 = vperm.xlu0 %4154, %v3913
    %v4156 = vpop.permute.xlu0 %4155
    %4159 = vset.pattern.permute.xlu0 0
    %4160 = vperm.xlu0 %4159, %v3914
    %v4161 = vpop.permute.xlu0 %4160
    %4164 = vset.pattern.permute.xlu0 0
    %4165 = vperm.xlu0 %4164, %v3915
    %v4166 = vpop.permute.xlu0 %4165
    %4169 = vset.pattern.permute.xlu0 0
    %4170 = vperm.xlu0 %4169, %v3916
    %v4171 = vpop.permute.xlu0 %4170
    %4174 = vset.pattern.permute.xlu0 0
    %4175 = vperm.xlu0 %4174, %v3917
    %v4176 = vpop.permute.xlu0 %4175
    %4179 = vset.pattern.permute.xlu0 0
    %4180 = vperm.xlu0 %4179, %v3918
    %v4181 = vpop.permute.xlu0 %4180
    %4184 = vset.pattern.permute.xlu0 0
    %4185 = vperm.xlu0 %4184, %v3919
    %v4186 = vpop.permute.xlu0 %4185
    %4189 = vset.pattern.permute.xlu0 0
    %4190 = vperm.xlu0 %4189, %v3920
    %v4191 = vpop.permute.xlu0 %4190
    %4194 = vset.pattern.permute.xlu0 0
    %4195 = vperm.xlu0 %4194, %v3921
    %v4196 = vpop.permute.xlu0 %4195
    %4199 = vset.pattern.permute.xlu0 0
    %4200 = vperm.xlu0 %4199, %v3922
    %v4201 = vpop.permute.xlu0 %4200
    %4204 = vset.pattern.permute.xlu0 0
    %4205 = vperm.xlu0 %4204, %v3923
    %v4206 = vpop.permute.xlu0 %4205
    %4209 = vset.pattern.permute.xlu0 0
    %4210 = vperm.xlu0 %4209, %v3924
    %v4211 = vpop.permute.xlu0 %4210
    %4214 = vset.pattern.permute.xlu0 0
    %4215 = vperm.xlu0 %4214, %v3925
    %v4216 = vpop.permute.xlu0 %4215
    %4219 = vset.pattern.permute.xlu0 0
    %4220 = vperm.xlu0 %4219, %v3926
    %v4221 = vpop.permute.xlu0 %4220
    %4224 = vset.pattern.permute.xlu0 0
    %4225 = vperm.xlu0 %4224, %v3927
    %v4226 = vpop.permute.xlu0 %4225
    %4229 = vset.pattern.permute.xlu0 0
    %4230 = vperm.xlu0 %4229, %v3928
    %v4231 = vpop.permute.xlu0 %4230
    %4234 = vset.pattern.permute.xlu0 0
    %4235 = vperm.xlu0 %4234, %v3929
    %v4236 = vpop.permute.xlu0 %4235
    %4239 = vset.pattern.permute.xlu0 0
    %4240 = vperm.xlu0 %4239, %v3930
    %v4241 = vpop.permute.xlu0 %4240
    %4244 = vset.pattern.permute.xlu0 0
    %4245 = vperm.xlu0 %4244, %v3931
    %v4246 = vpop.permute.xlu0 %4245
    %4249 = vset.pattern.permute.xlu0 0
    %4250 = vperm.xlu0 %4249, %v3932
    %v4251 = vpop.permute.xlu0 %4250
    %v4253 = vmul.f32 %v851, %v3936
    %v4254 = vmul.f32 %v850, %v3941
    %v4255 = vmul.f32 %v849, %v3946
    %v4256 = vmul.f32 %v848, %v3951
    %v4257 = vmul.f32 %v847, %v3956
    %v4258 = vmul.f32 %v846, %v3961
    %v4259 = vmul.f32 %v845, %v3966
    %v4260 = vmul.f32 %v844, %v3971
    %v4261 = vmul.f32 %v843, %v3976
    %v4262 = vmul.f32 %v842, %v3981
    %v4263 = vmul.f32 %v841, %v3986
    %v4264 = vmul.f32 %v840, %v3991
    %v4265 = vmul.f32 %v839, %v3996
    %v4266 = vmul.f32 %v838, %v4001
    %v4267 = vmul.f32 %v837, %v4006
    %v4268 = vmul.f32 %v836, %v4011
    %v4269 = vmul.f32 %v835, %v4016
    %v4270 = vmul.f32 %v834, %v4021
    %v4271 = vmul.f32 %v833, %v4026
    %v4272 = vmul.f32 %v832, %v4031
    %v4273 = vmul.f32 %v831, %v4036
    %v4274 = vmul.f32 %v830, %v4041
    %v4275 = vmul.f32 %v829, %v4046
    %v4276 = vmul.f32 %v828, %v4051
    %v4277 = vmul.f32 %v827, %v4056
    %v4278 = vmul.f32 %v826, %v4061
    %v4279 = vmul.f32 %v825, %v4066
    %v4280 = vmul.f32 %v824, %v4071
    %v4281 = vmul.f32 %v823, %v4076
    %v4282 = vmul.f32 %v822, %v4081
    %v4283 = vmul.f32 %v821, %v4086
    %v4284 = vmul.f32 %v820, %v4091
    %v4285 = vmul.f32 %v819, %v4096
    %v4286 = vmul.f32 %v818, %v4101
    %v4287 = vmul.f32 %v817, %v4106
    %v4288 = vmul.f32 %v816, %v4111
    %v4289 = vmul.f32 %v815, %v4116
    %v4290 = vmul.f32 %v814, %v4121
    %v4291 = vmul.f32 %v813, %v4126
    %v4292 = vmul.f32 %v812, %v4131
    %v4293 = vmul.f32 %v811, %v4136
    %v4294 = vmul.f32 %v810, %v4141
    %v4295 = vmul.f32 %v809, %v4146
    %v4296 = vmul.f32 %v808, %v4151
    %v4297 = vmul.f32 %v807, %v4156
    %v4298 = vmul.f32 %v806, %v4161
    %v4299 = vmul.f32 %v805, %v4166
    %v4300 = vmul.f32 %v804, %v4171
    %v4301 = vmul.f32 %v803, %v4176
    %v4302 = vmul.f32 %v802, %v4181
    %v4303 = vmul.f32 %v801, %v4186
    %v4304 = vmul.f32 %v800, %v4191
    %v4305 = vmul.f32 %v799, %v4196
    %v4306 = vmul.f32 %v798, %v4201
    %v4307 = vmul.f32 %v797, %v4206
    %v4308 = vmul.f32 %v796, %v4211
    %v4309 = vmul.f32 %v795, %v4216
    %v4310 = vmul.f32 %v794, %v4221
    %v4311 = vmul.f32 %v793, %v4226
    %v4312 = vmul.f32 %v792, %v4231
    %v4313 = vmul.f32 %v791, %v4236
    %v4314 = vmul.f32 %v790, %v4241
    %v4315 = vmul.f32 %v853, %v4246
    %v4316 = vmul.f32 %v852, %v4251
    %v4317 = vpack.c.bf16 %v4254, %v4253
    %v4318 = vpack.c.bf16 %v4256, %v4255
    %v4319 = vpack.c.bf16 %v4258, %v4257
    %v4320 = vpack.c.bf16 %v4260, %v4259
    %v4321 = vpack.c.bf16 %v4262, %v4261
    %v4322 = vpack.c.bf16 %v4264, %v4263
    %v4323 = vpack.c.bf16 %v4266, %v4265
    %v4324 = vpack.c.bf16 %v4268, %v4267
    %v4325 = vpack.c.bf16 %v4270, %v4269
    %v4326 = vpack.c.bf16 %v4272, %v4271
    %v4327 = vpack.c.bf16 %v4274, %v4273
    %v4328 = vpack.c.bf16 %v4276, %v4275
    %v4329 = vpack.c.bf16 %v4278, %v4277
    %v4330 = vpack.c.bf16 %v4280, %v4279
    %v4331 = vpack.c.bf16 %v4282, %v4281
    %v4332 = vpack.c.bf16 %v4284, %v4283
    %v4333 = vpack.c.bf16 %v4286, %v4285
    %v4334 = vpack.c.bf16 %v4288, %v4287
    %v4335 = vpack.c.bf16 %v4290, %v4289
    %v4336 = vpack.c.bf16 %v4292, %v4291
    %v4337 = vpack.c.bf16 %v4294, %v4293
    %v4338 = vpack.c.bf16 %v4296, %v4295
    %v4339 = vpack.c.bf16 %v4298, %v4297
    %v4340 = vpack.c.bf16 %v4300, %v4299
    %v4341 = vpack.c.bf16 %v4302, %v4301
    %v4342 = vpack.c.bf16 %v4304, %v4303
    %v4343 = vpack.c.bf16 %v4306, %v4305
    %v4344 = vpack.c.bf16 %v4308, %v4307
    %v4345 = vpack.c.bf16 %v4310, %v4309
    %v4346 = vpack.c.bf16 %v4312, %v4311
    %v4347 = vpack.c.bf16 %v4314, %v4313
    %v4348 = vpack.c.bf16 %v4316, %v4315
    %s4349 = scalar_lea.vmem %s1, 3584
    %v4350 = vld [vmem:[%s4349] sm:$0xff]
    %v4351 = vld [vmem:[%s4349 + $0x8] sm:$0xff]
    %v4352 = vld [vmem:[%s4349 + $0x10] sm:$0xff]
    %v4353 = vld [vmem:[%s4349 + $0x18] sm:$0xff]
    %v4354 = vld [vmem:[%s4349 + $0x20] sm:$0xff]
    %v4355 = vld [vmem:[%s4349 + $0x28] sm:$0xff]
    %v4356 = vld [vmem:[%s4349 + $0x30] sm:$0xff]
    %v4357 = vld [vmem:[%s4349 + $0x38] sm:$0xff]
    %v4358 = vld [vmem:[%s4349 + $0x40] sm:$0xff]
    %v4359 = vld [vmem:[%s4349 + $0x48] sm:$0xff]
    %v4360 = vld [vmem:[%s4349 + $0x50] sm:$0xff]
    %v4361 = vld [vmem:[%s4349 + $0x58] sm:$0xff]
    %v4362 = vld [vmem:[%s4349 + $0x60] sm:$0xff]
    %v4363 = vld [vmem:[%s4349 + $0x68] sm:$0xff]
    %v4364 = vld [vmem:[%s4349 + $0x70] sm:$0xff]
    %v4365 = vld [vmem:[%s4349 + $0x78] sm:$0xff]
    %v4366 = vld [vmem:[%s4349 + $0x80] sm:$0xff]
    %v4367 = vld [vmem:[%s4349 + $0x88] sm:$0xff]
    %v4368 = vld [vmem:[%s4349 + $0x90] sm:$0xff]
    %v4369 = vld [vmem:[%s4349 + $0x98] sm:$0xff]
    %v4370 = vld [vmem:[%s4349 + $0xa0] sm:$0xff]
    %v4371 = vld [vmem:[%s4349 + $0xa8] sm:$0xff]
    %v4372 = vld [vmem:[%s4349 + $0xb0] sm:$0xff]
    %v4373 = vld [vmem:[%s4349 + $0xb8] sm:$0xff]
    %v4374 = vld [vmem:[%s4349 + $0xc0] sm:$0xff]
    %v4375 = vld [vmem:[%s4349 + $0xc8] sm:$0xff]
    %v4376 = vld [vmem:[%s4349 + $0xd0] sm:$0xff]
    %v4377 = vld [vmem:[%s4349 + $0xd8] sm:$0xff]
    %v4378 = vld [vmem:[%s4349 + $0xe0] sm:$0xff]
    %v4379 = vld [vmem:[%s4349 + $0xe8] sm:$0xff]
    %v4380 = vld [vmem:[%s4349 + $0xf0] sm:$0xff]
    %v4381 = vld [vmem:[%s4349 + $0xf8] sm:$0xff]
    %v4382 = vld [vmem:[%s4349 + $0x100] sm:$0xff]
    %v4383 = vld [vmem:[%s4349 + $0x108] sm:$0xff]
    %v4384 = vld [vmem:[%s4349 + $0x110] sm:$0xff]
    %v4385 = vld [vmem:[%s4349 + $0x118] sm:$0xff]
    %v4386 = vld [vmem:[%s4349 + $0x120] sm:$0xff]
    %v4387 = vld [vmem:[%s4349 + $0x128] sm:$0xff]
    %v4388 = vld [vmem:[%s4349 + $0x130] sm:$0xff]
    %v4389 = vld [vmem:[%s4349 + $0x138] sm:$0xff]
    %v4390 = vld [vmem:[%s4349 + $0x140] sm:$0xff]
    %v4391 = vld [vmem:[%s4349 + $0x148] sm:$0xff]
    %v4392 = vld [vmem:[%s4349 + $0x150] sm:$0xff]
    %v4393 = vld [vmem:[%s4349 + $0x158] sm:$0xff]
    %v4394 = vld [vmem:[%s4349 + $0x160] sm:$0xff]
    %v4395 = vld [vmem:[%s4349 + $0x168] sm:$0xff]
    %v4396 = vld [vmem:[%s4349 + $0x170] sm:$0xff]
    %v4397 = vld [vmem:[%s4349 + $0x178] sm:$0xff]
    %v4398 = vld [vmem:[%s4349 + $0x180] sm:$0xff]
    %v4399 = vld [vmem:[%s4349 + $0x188] sm:$0xff]
    %v4400 = vld [vmem:[%s4349 + $0x190] sm:$0xff]
    %v4401 = vld [vmem:[%s4349 + $0x198] sm:$0xff]
    %v4402 = vld [vmem:[%s4349 + $0x1a0] sm:$0xff]
    %v4403 = vld [vmem:[%s4349 + $0x1a8] sm:$0xff]
    %v4404 = vld [vmem:[%s4349 + $0x1b0] sm:$0xff]
    %v4405 = vld [vmem:[%s4349 + $0x1b8] sm:$0xff]
    %v4406 = vld [vmem:[%s4349 + $0x1c0] sm:$0xff]
    %v4407 = vld [vmem:[%s4349 + $0x1c8] sm:$0xff]
    %v4408 = vld [vmem:[%s4349 + $0x1d0] sm:$0xff]
    %v4409 = vld [vmem:[%s4349 + $0x1d8] sm:$0xff]
    %v4410 = vld [vmem:[%s4349 + $0x1e0] sm:$0xff]
    %v4411 = vld [vmem:[%s4349 + $0x1e8] sm:$0xff]
    %v4412 = vld [vmem:[%s4349 + $0x1f0] sm:$0xff]
    %v4413 = vld [vmem:[%s4349 + $0x1f8] sm:$0xff]
    %4415 = vset.pattern.permute.xlu0 0
    %4416 = vperm.xlu0 %4415, %v4350
    %v4417 = vpop.permute.xlu0 %4416
    %4420 = vset.pattern.permute.xlu0 0
    %4421 = vperm.xlu0 %4420, %v4351
    %v4422 = vpop.permute.xlu0 %4421
    %4425 = vset.pattern.permute.xlu0 0
    %4426 = vperm.xlu0 %4425, %v4352
    %v4427 = vpop.permute.xlu0 %4426
    %4430 = vset.pattern.permute.xlu0 0
    %4431 = vperm.xlu0 %4430, %v4353
    %v4432 = vpop.permute.xlu0 %4431
    %4435 = vset.pattern.permute.xlu0 0
    %4436 = vperm.xlu0 %4435, %v4354
    %v4437 = vpop.permute.xlu0 %4436
    %4440 = vset.pattern.permute.xlu0 0
    %4441 = vperm.xlu0 %4440, %v4355
    %v4442 = vpop.permute.xlu0 %4441
    %4445 = vset.pattern.permute.xlu0 0
    %4446 = vperm.xlu0 %4445, %v4356
    %v4447 = vpop.permute.xlu0 %4446
    %4450 = vset.pattern.permute.xlu0 0
    %4451 = vperm.xlu0 %4450, %v4357
    %v4452 = vpop.permute.xlu0 %4451
    %4455 = vset.pattern.permute.xlu0 0
    %4456 = vperm.xlu0 %4455, %v4358
    %v4457 = vpop.permute.xlu0 %4456
    %4460 = vset.pattern.permute.xlu0 0
    %4461 = vperm.xlu0 %4460, %v4359
    %v4462 = vpop.permute.xlu0 %4461
    %4465 = vset.pattern.permute.xlu0 0
    %4466 = vperm.xlu0 %4465, %v4360
    %v4467 = vpop.permute.xlu0 %4466
    %4470 = vset.pattern.permute.xlu0 0
    %4471 = vperm.xlu0 %4470, %v4361
    %v4472 = vpop.permute.xlu0 %4471
    %4475 = vset.pattern.permute.xlu0 0
    %4476 = vperm.xlu0 %4475, %v4362
    %v4477 = vpop.permute.xlu0 %4476
    %4480 = vset.pattern.permute.xlu0 0
    %4481 = vperm.xlu0 %4480, %v4363
    %v4482 = vpop.permute.xlu0 %4481
    %4485 = vset.pattern.permute.xlu0 0
    %4486 = vperm.xlu0 %4485, %v4364
    %v4487 = vpop.permute.xlu0 %4486
    %4490 = vset.pattern.permute.xlu0 0
    %4491 = vperm.xlu0 %4490, %v4365
    %v4492 = vpop.permute.xlu0 %4491
    %4495 = vset.pattern.permute.xlu0 0
    %4496 = vperm.xlu0 %4495, %v4366
    %v4497 = vpop.permute.xlu0 %4496
    %4500 = vset.pattern.permute.xlu0 0
    %4501 = vperm.xlu0 %4500, %v4367
    %v4502 = vpop.permute.xlu0 %4501
    %4505 = vset.pattern.permute.xlu0 0
    %4506 = vperm.xlu0 %4505, %v4368
    %v4507 = vpop.permute.xlu0 %4506
    %4510 = vset.pattern.permute.xlu0 0
    %4511 = vperm.xlu0 %4510, %v4369
    %v4512 = vpop.permute.xlu0 %4511
    %4515 = vset.pattern.permute.xlu0 0
    %4516 = vperm.xlu0 %4515, %v4370
    %v4517 = vpop.permute.xlu0 %4516
    %4520 = vset.pattern.permute.xlu0 0
    %4521 = vperm.xlu0 %4520, %v4371
    %v4522 = vpop.permute.xlu0 %4521
    %4525 = vset.pattern.permute.xlu0 0
    %4526 = vperm.xlu0 %4525, %v4372
    %v4527 = vpop.permute.xlu0 %4526
    %4530 = vset.pattern.permute.xlu0 0
    %4531 = vperm.xlu0 %4530, %v4373
    %v4532 = vpop.permute.xlu0 %4531
    %4535 = vset.pattern.permute.xlu0 0
    %4536 = vperm.xlu0 %4535, %v4374
    %v4537 = vpop.permute.xlu0 %4536
    %4540 = vset.pattern.permute.xlu0 0
    %4541 = vperm.xlu0 %4540, %v4375
    %v4542 = vpop.permute.xlu0 %4541
    %4545 = vset.pattern.permute.xlu0 0
    %4546 = vperm.xlu0 %4545, %v4376
    %v4547 = vpop.permute.xlu0 %4546
    %4550 = vset.pattern.permute.xlu0 0
    %4551 = vperm.xlu0 %4550, %v4377
    %v4552 = vpop.permute.xlu0 %4551
    %4555 = vset.pattern.permute.xlu0 0
    %4556 = vperm.xlu0 %4555, %v4378
    %v4557 = vpop.permute.xlu0 %4556
    %4560 = vset.pattern.permute.xlu0 0
    %4561 = vperm.xlu0 %4560, %v4379
    %v4562 = vpop.permute.xlu0 %4561
    %4565 = vset.pattern.permute.xlu0 0
    %4566 = vperm.xlu0 %4565, %v4380
    %v4567 = vpop.permute.xlu0 %4566
    %4570 = vset.pattern.permute.xlu0 0
    %4571 = vperm.xlu0 %4570, %v4381
    %v4572 = vpop.permute.xlu0 %4571
    %4575 = vset.pattern.permute.xlu0 0
    %4576 = vperm.xlu0 %4575, %v4382
    %v4577 = vpop.permute.xlu0 %4576
    %4580 = vset.pattern.permute.xlu0 0
    %4581 = vperm.xlu0 %4580, %v4383
    %v4582 = vpop.permute.xlu0 %4581
    %4585 = vset.pattern.permute.xlu0 0
    %4586 = vperm.xlu0 %4585, %v4384
    %v4587 = vpop.permute.xlu0 %4586
    %4590 = vset.pattern.permute.xlu0 0
    %4591 = vperm.xlu0 %4590, %v4385
    %v4592 = vpop.permute.xlu0 %4591
    %4595 = vset.pattern.permute.xlu0 0
    %4596 = vperm.xlu0 %4595, %v4386
    %v4597 = vpop.permute.xlu0 %4596
    %4600 = vset.pattern.permute.xlu0 0
    %4601 = vperm.xlu0 %4600, %v4387
    %v4602 = vpop.permute.xlu0 %4601
    %4605 = vset.pattern.permute.xlu0 0
    %4606 = vperm.xlu0 %4605, %v4388
    %v4607 = vpop.permute.xlu0 %4606
    %4610 = vset.pattern.permute.xlu0 0
    %4611 = vperm.xlu0 %4610, %v4389
    %v4612 = vpop.permute.xlu0 %4611
    %4615 = vset.pattern.permute.xlu0 0
    %4616 = vperm.xlu0 %4615, %v4390
    %v4617 = vpop.permute.xlu0 %4616
    %4620 = vset.pattern.permute.xlu0 0
    %4621 = vperm.xlu0 %4620, %v4391
    %v4622 = vpop.permute.xlu0 %4621
    %4625 = vset.pattern.permute.xlu0 0
    %4626 = vperm.xlu0 %4625, %v4392
    %v4627 = vpop.permute.xlu0 %4626
    %4630 = vset.pattern.permute.xlu0 0
    %4631 = vperm.xlu0 %4630, %v4393
    %v4632 = vpop.permute.xlu0 %4631
    %4635 = vset.pattern.permute.xlu0 0
    %4636 = vperm.xlu0 %4635, %v4394
    %v4637 = vpop.permute.xlu0 %4636
    %4640 = vset.pattern.permute.xlu0 0
    %4641 = vperm.xlu0 %4640, %v4395
    %v4642 = vpop.permute.xlu0 %4641
    %4645 = vset.pattern.permute.xlu0 0
    %4646 = vperm.xlu0 %4645, %v4396
    %v4647 = vpop.permute.xlu0 %4646
    %4650 = vset.pattern.permute.xlu0 0
    %4651 = vperm.xlu0 %4650, %v4397
    %v4652 = vpop.permute.xlu0 %4651
    %4655 = vset.pattern.permute.xlu0 0
    %4656 = vperm.xlu0 %4655, %v4398
    %v4657 = vpop.permute.xlu0 %4656
    %4660 = vset.pattern.permute.xlu0 0
    %4661 = vperm.xlu0 %4660, %v4399
    %v4662 = vpop.permute.xlu0 %4661
    %4665 = vset.pattern.permute.xlu0 0
    %4666 = vperm.xlu0 %4665, %v4400
    %v4667 = vpop.permute.xlu0 %4666
    %4670 = vset.pattern.permute.xlu0 0
    %4671 = vperm.xlu0 %4670, %v4401
    %v4672 = vpop.permute.xlu0 %4671
    %4675 = vset.pattern.permute.xlu0 0
    %4676 = vperm.xlu0 %4675, %v4402
    %v4677 = vpop.permute.xlu0 %4676
    %4680 = vset.pattern.permute.xlu0 0
    %4681 = vperm.xlu0 %4680, %v4403
    %v4682 = vpop.permute.xlu0 %4681
    %4685 = vset.pattern.permute.xlu0 0
    %4686 = vperm.xlu0 %4685, %v4404
    %v4687 = vpop.permute.xlu0 %4686
    %4690 = vset.pattern.permute.xlu0 0
    %4691 = vperm.xlu0 %4690, %v4405
    %v4692 = vpop.permute.xlu0 %4691
    %4695 = vset.pattern.permute.xlu0 0
    %4696 = vperm.xlu0 %4695, %v4406
    %v4697 = vpop.permute.xlu0 %4696
    %4700 = vset.pattern.permute.xlu0 0
    %4701 = vperm.xlu0 %4700, %v4407
    %v4702 = vpop.permute.xlu0 %4701
    %4705 = vset.pattern.permute.xlu0 0
    %4706 = vperm.xlu0 %4705, %v4408
    %v4707 = vpop.permute.xlu0 %4706
    %4710 = vset.pattern.permute.xlu0 0
    %4711 = vperm.xlu0 %4710, %v4409
    %v4712 = vpop.permute.xlu0 %4711
    %4715 = vset.pattern.permute.xlu0 0
    %4716 = vperm.xlu0 %4715, %v4410
    %v4717 = vpop.permute.xlu0 %4716
    %4720 = vset.pattern.permute.xlu0 0
    %4721 = vperm.xlu0 %4720, %v4411
    %v4722 = vpop.permute.xlu0 %4721
    %4725 = vset.pattern.permute.xlu0 0
    %4726 = vperm.xlu0 %4725, %v4412
    %v4727 = vpop.permute.xlu0 %4726
    %4730 = vset.pattern.permute.xlu0 0
    %4731 = vperm.xlu0 %4730, %v4413
    %v4732 = vpop.permute.xlu0 %4731
    %v4734 = vmul.f32 %v661, %v4417
    %v4735 = vmul.f32 %v662, %v4422
    %v4736 = vmul.f32 %v663, %v4427
    %v4737 = vmul.f32 %v664, %v4432
    %v4738 = vmul.f32 %v665, %v4437
    %v4739 = vmul.f32 %v666, %v4442
    %v4740 = vmul.f32 %v667, %v4447
    %v4741 = vmul.f32 %v668, %v4452
    %v4742 = vmul.f32 %v669, %v4457
    %v4743 = vmul.f32 %v670, %v4462
    %v4744 = vmul.f32 %v671, %v4467
    %v4745 = vmul.f32 %v672, %v4472
    %v4746 = vmul.f32 %v673, %v4477
    %v4747 = vmul.f32 %v674, %v4482
    %v4748 = vmul.f32 %v675, %v4487
    %v4749 = vmul.f32 %v676, %v4492
    %v4750 = vmul.f32 %v677, %v4497
    %v4751 = vmul.f32 %v678, %v4502
    %v4752 = vmul.f32 %v679, %v4507
    %v4753 = vmul.f32 %v680, %v4512
    %v4754 = vmul.f32 %v681, %v4517
    %v4755 = vmul.f32 %v682, %v4522
    %v4756 = vmul.f32 %v683, %v4527
    %v4757 = vmul.f32 %v684, %v4532
    %v4758 = vmul.f32 %v685, %v4537
    %v4759 = vmul.f32 %v686, %v4542
    %v4760 = vmul.f32 %v687, %v4547
    %v4761 = vmul.f32 %v688, %v4552
    %v4762 = vmul.f32 %v689, %v4557
    %v4763 = vmul.f32 %v690, %v4562
    %v4764 = vmul.f32 %v691, %v4567
    %v4765 = vmul.f32 %v692, %v4572
    %v4766 = vmul.f32 %v693, %v4577
    %v4767 = vmul.f32 %v694, %v4582
    %v4768 = vmul.f32 %v695, %v4587
    %v4769 = vmul.f32 %v696, %v4592
    %v4770 = vmul.f32 %v697, %v4597
    %v4771 = vmul.f32 %v698, %v4602
    %v4772 = vmul.f32 %v699, %v4607
    %v4773 = vmul.f32 %v700, %v4612
    %v4774 = vmul.f32 %v701, %v4617
    %v4775 = vmul.f32 %v702, %v4622
    %v4776 = vmul.f32 %v703, %v4627
    %v4777 = vmul.f32 %v704, %v4632
    %v4778 = vmul.f32 %v705, %v4637
    %v4779 = vmul.f32 %v706, %v4642
    %v4780 = vmul.f32 %v707, %v4647
    %v4781 = vmul.f32 %v708, %v4652
    %v4782 = vmul.f32 %v709, %v4657
    %v4783 = vmul.f32 %v710, %v4662
    %v4784 = vmul.f32 %v711, %v4667
    %v4785 = vmul.f32 %v712, %v4672
    %v4786 = vmul.f32 %v713, %v4677
    %v4787 = vmul.f32 %v714, %v4682
    %v4788 = vmul.f32 %v715, %v4687
    %v4789 = vmul.f32 %v716, %v4692
    %v4790 = vmul.f32 %v717, %v4697
    %v4791 = vmul.f32 %v718, %v4702
    %v4792 = vmul.f32 %v719, %v4707
    %v4793 = vmul.f32 %v720, %v4712
    %v4794 = vmul.f32 %v721, %v4717
    %v4795 = vmul.f32 %v722, %v4722
    %v4796 = vmul.f32 %v659, %v4727
    %v4797 = vmul.f32 %v660, %v4732
    %v4798 = vpack.c.bf16 %v4735, %v4734
    %v4799 = vpack.c.bf16 %v4737, %v4736
    %v4800 = vpack.c.bf16 %v4739, %v4738
    %v4801 = vpack.c.bf16 %v4741, %v4740
    %v4802 = vpack.c.bf16 %v4743, %v4742
    %v4803 = vpack.c.bf16 %v4745, %v4744
    %v4804 = vpack.c.bf16 %v4747, %v4746
    %v4805 = vpack.c.bf16 %v4749, %v4748
    %v4806 = vpack.c.bf16 %v4751, %v4750
    %v4807 = vpack.c.bf16 %v4753, %v4752
    %v4808 = vpack.c.bf16 %v4755, %v4754
    %v4809 = vpack.c.bf16 %v4757, %v4756
    %v4810 = vpack.c.bf16 %v4759, %v4758
    %v4811 = vpack.c.bf16 %v4761, %v4760
    %v4812 = vpack.c.bf16 %v4763, %v4762
    %v4813 = vpack.c.bf16 %v4765, %v4764
    %v4814 = vpack.c.bf16 %v4767, %v4766
    %v4815 = vpack.c.bf16 %v4769, %v4768
    %v4816 = vpack.c.bf16 %v4771, %v4770
    %v4817 = vpack.c.bf16 %v4773, %v4772
    %v4818 = vpack.c.bf16 %v4775, %v4774
    %v4819 = vpack.c.bf16 %v4777, %v4776
    %v4820 = vpack.c.bf16 %v4779, %v4778
    %v4821 = vpack.c.bf16 %v4781, %v4780
    %v4822 = vpack.c.bf16 %v4783, %v4782
    %v4823 = vpack.c.bf16 %v4785, %v4784
    %v4824 = vpack.c.bf16 %v4787, %v4786
    %v4825 = vpack.c.bf16 %v4789, %v4788
    %v4826 = vpack.c.bf16 %v4791, %v4790
    %v4827 = vpack.c.bf16 %v4793, %v4792
    %v4828 = vpack.c.bf16 %v4795, %v4794
    %v4829 = vpack.c.bf16 %v4797, %v4796
    %s4830 = scalar_lea.vmem %s1, 4096
    %v4831 = vld [vmem:[%s4830] sm:$0xff]
    %v4832 = vld [vmem:[%s4830 + $0x8] sm:$0xff]
    %v4833 = vld [vmem:[%s4830 + $0x10] sm:$0xff]
    %v4834 = vld [vmem:[%s4830 + $0x18] sm:$0xff]
    %v4835 = vld [vmem:[%s4830 + $0x20] sm:$0xff]
    %v4836 = vld [vmem:[%s4830 + $0x28] sm:$0xff]
    %v4837 = vld [vmem:[%s4830 + $0x30] sm:$0xff]
    %v4838 = vld [vmem:[%s4830 + $0x38] sm:$0xff]
    %v4839 = vld [vmem:[%s4830 + $0x40] sm:$0xff]
    %v4840 = vld [vmem:[%s4830 + $0x48] sm:$0xff]
    %v4841 = vld [vmem:[%s4830 + $0x50] sm:$0xff]
    %v4842 = vld [vmem:[%s4830 + $0x58] sm:$0xff]
    %v4843 = vld [vmem:[%s4830 + $0x60] sm:$0xff]
    %v4844 = vld [vmem:[%s4830 + $0x68] sm:$0xff]
    %v4845 = vld [vmem:[%s4830 + $0x70] sm:$0xff]
    %v4846 = vld [vmem:[%s4830 + $0x78] sm:$0xff]
    %v4847 = vld [vmem:[%s4830 + $0x80] sm:$0xff]
    %v4848 = vld [vmem:[%s4830 + $0x88] sm:$0xff]
    %v4849 = vld [vmem:[%s4830 + $0x90] sm:$0xff]
    %v4850 = vld [vmem:[%s4830 + $0x98] sm:$0xff]
    %v4851 = vld [vmem:[%s4830 + $0xa0] sm:$0xff]
    %v4852 = vld [vmem:[%s4830 + $0xa8] sm:$0xff]
    %v4853 = vld [vmem:[%s4830 + $0xb0] sm:$0xff]
    %v4854 = vld [vmem:[%s4830 + $0xb8] sm:$0xff]
    %v4855 = vld [vmem:[%s4830 + $0xc0] sm:$0xff]
    %v4856 = vld [vmem:[%s4830 + $0xc8] sm:$0xff]
    %v4857 = vld [vmem:[%s4830 + $0xd0] sm:$0xff]
    %v4858 = vld [vmem:[%s4830 + $0xd8] sm:$0xff]
    %v4859 = vld [vmem:[%s4830 + $0xe0] sm:$0xff]
    %v4860 = vld [vmem:[%s4830 + $0xe8] sm:$0xff]
    %v4861 = vld [vmem:[%s4830 + $0xf0] sm:$0xff]
    %v4862 = vld [vmem:[%s4830 + $0xf8] sm:$0xff]
    %v4863 = vld [vmem:[%s4830 + $0x100] sm:$0xff]
    %v4864 = vld [vmem:[%s4830 + $0x108] sm:$0xff]
    %v4865 = vld [vmem:[%s4830 + $0x110] sm:$0xff]
    %v4866 = vld [vmem:[%s4830 + $0x118] sm:$0xff]
    %v4867 = vld [vmem:[%s4830 + $0x120] sm:$0xff]
    %v4868 = vld [vmem:[%s4830 + $0x128] sm:$0xff]
    %v4869 = vld [vmem:[%s4830 + $0x130] sm:$0xff]
    %v4870 = vld [vmem:[%s4830 + $0x138] sm:$0xff]
    %v4871 = vld [vmem:[%s4830 + $0x140] sm:$0xff]
    %v4872 = vld [vmem:[%s4830 + $0x148] sm:$0xff]
    %v4873 = vld [vmem:[%s4830 + $0x150] sm:$0xff]
    %v4874 = vld [vmem:[%s4830 + $0x158] sm:$0xff]
    %v4875 = vld [vmem:[%s4830 + $0x160] sm:$0xff]
    %v4876 = vld [vmem:[%s4830 + $0x168] sm:$0xff]
    %v4877 = vld [vmem:[%s4830 + $0x170] sm:$0xff]
    %v4878 = vld [vmem:[%s4830 + $0x178] sm:$0xff]
    %v4879 = vld [vmem:[%s4830 + $0x180] sm:$0xff]
    %v4880 = vld [vmem:[%s4830 + $0x188] sm:$0xff]
    %v4881 = vld [vmem:[%s4830 + $0x190] sm:$0xff]
    %v4882 = vld [vmem:[%s4830 + $0x198] sm:$0xff]
    %v4883 = vld [vmem:[%s4830 + $0x1a0] sm:$0xff]
    %v4884 = vld [vmem:[%s4830 + $0x1a8] sm:$0xff]
    %v4885 = vld [vmem:[%s4830 + $0x1b0] sm:$0xff]
    %v4886 = vld [vmem:[%s4830 + $0x1b8] sm:$0xff]
    %v4887 = vld [vmem:[%s4830 + $0x1c0] sm:$0xff]
    %v4888 = vld [vmem:[%s4830 + $0x1c8] sm:$0xff]
    %v4889 = vld [vmem:[%s4830 + $0x1d0] sm:$0xff]
    %v4890 = vld [vmem:[%s4830 + $0x1d8] sm:$0xff]
    %v4891 = vld [vmem:[%s4830 + $0x1e0] sm:$0xff]
    %v4892 = vld [vmem:[%s4830 + $0x1e8] sm:$0xff]
    %v4893 = vld [vmem:[%s4830 + $0x1f0] sm:$0xff]
    %v4894 = vld [vmem:[%s4830 + $0x1f8] sm:$0xff]
    %4896 = vset.pattern.permute.xlu0 0
    %4897 = vperm.xlu0 %4896, %v4831
    %v4898 = vpop.permute.xlu0 %4897
    %4901 = vset.pattern.permute.xlu0 0
    %4902 = vperm.xlu0 %4901, %v4832
    %v4903 = vpop.permute.xlu0 %4902
    %4906 = vset.pattern.permute.xlu0 0
    %4907 = vperm.xlu0 %4906, %v4833
    %v4908 = vpop.permute.xlu0 %4907
    %4911 = vset.pattern.permute.xlu0 0
    %4912 = vperm.xlu0 %4911, %v4834
    %v4913 = vpop.permute.xlu0 %4912
    %4916 = vset.pattern.permute.xlu0 0
    %4917 = vperm.xlu0 %4916, %v4835
    %v4918 = vpop.permute.xlu0 %4917
    %4921 = vset.pattern.permute.xlu0 0
    %4922 = vperm.xlu0 %4921, %v4836
    %v4923 = vpop.permute.xlu0 %4922
    %4926 = vset.pattern.permute.xlu0 0
    %4927 = vperm.xlu0 %4926, %v4837
    %v4928 = vpop.permute.xlu0 %4927
    %4931 = vset.pattern.permute.xlu0 0
    %4932 = vperm.xlu0 %4931, %v4838
    %v4933 = vpop.permute.xlu0 %4932
    %4936 = vset.pattern.permute.xlu0 0
    %4937 = vperm.xlu0 %4936, %v4839
    %v4938 = vpop.permute.xlu0 %4937
    %4941 = vset.pattern.permute.xlu0 0
    %4942 = vperm.xlu0 %4941, %v4840
    %v4943 = vpop.permute.xlu0 %4942
    %4946 = vset.pattern.permute.xlu0 0
    %4947 = vperm.xlu0 %4946, %v4841
    %v4948 = vpop.permute.xlu0 %4947
    %4951 = vset.pattern.permute.xlu0 0
    %4952 = vperm.xlu0 %4951, %v4842
    %v4953 = vpop.permute.xlu0 %4952
    %4956 = vset.pattern.permute.xlu0 0
    %4957 = vperm.xlu0 %4956, %v4843
    %v4958 = vpop.permute.xlu0 %4957
    %4961 = vset.pattern.permute.xlu0 0
    %4962 = vperm.xlu0 %4961, %v4844
    %v4963 = vpop.permute.xlu0 %4962
    %4966 = vset.pattern.permute.xlu0 0
    %4967 = vperm.xlu0 %4966, %v4845
    %v4968 = vpop.permute.xlu0 %4967
    %4971 = vset.pattern.permute.xlu0 0
    %4972 = vperm.xlu0 %4971, %v4846
    %v4973 = vpop.permute.xlu0 %4972
    %4976 = vset.pattern.permute.xlu0 0
    %4977 = vperm.xlu0 %4976, %v4847
    %v4978 = vpop.permute.xlu0 %4977
    %4981 = vset.pattern.permute.xlu0 0
    %4982 = vperm.xlu0 %4981, %v4848
    %v4983 = vpop.permute.xlu0 %4982
    %4986 = vset.pattern.permute.xlu0 0
    %4987 = vperm.xlu0 %4986, %v4849
    %v4988 = vpop.permute.xlu0 %4987
    %4991 = vset.pattern.permute.xlu0 0
    %4992 = vperm.xlu0 %4991, %v4850
    %v4993 = vpop.permute.xlu0 %4992
    %4996 = vset.pattern.permute.xlu0 0
    %4997 = vperm.xlu0 %4996, %v4851
    %v4998 = vpop.permute.xlu0 %4997
    %5001 = vset.pattern.permute.xlu0 0
    %5002 = vperm.xlu0 %5001, %v4852
    %v5003 = vpop.permute.xlu0 %5002
    %5006 = vset.pattern.permute.xlu0 0
    %5007 = vperm.xlu0 %5006, %v4853
    %v5008 = vpop.permute.xlu0 %5007
    %5011 = vset.pattern.permute.xlu0 0
    %5012 = vperm.xlu0 %5011, %v4854
    %v5013 = vpop.permute.xlu0 %5012
    %5016 = vset.pattern.permute.xlu0 0
    %5017 = vperm.xlu0 %5016, %v4855
    %v5018 = vpop.permute.xlu0 %5017
    %5021 = vset.pattern.permute.xlu0 0
    %5022 = vperm.xlu0 %5021, %v4856
    %v5023 = vpop.permute.xlu0 %5022
    %5026 = vset.pattern.permute.xlu0 0
    %5027 = vperm.xlu0 %5026, %v4857
    %v5028 = vpop.permute.xlu0 %5027
    %5031 = vset.pattern.permute.xlu0 0
    %5032 = vperm.xlu0 %5031, %v4858
    %v5033 = vpop.permute.xlu0 %5032
    %5036 = vset.pattern.permute.xlu0 0
    %5037 = vperm.xlu0 %5036, %v4859
    %v5038 = vpop.permute.xlu0 %5037
    %5041 = vset.pattern.permute.xlu0 0
    %5042 = vperm.xlu0 %5041, %v4860
    %v5043 = vpop.permute.xlu0 %5042
    %5046 = vset.pattern.permute.xlu0 0
    %5047 = vperm.xlu0 %5046, %v4861
    %v5048 = vpop.permute.xlu0 %5047
    %5051 = vset.pattern.permute.xlu0 0
    %5052 = vperm.xlu0 %5051, %v4862
    %v5053 = vpop.permute.xlu0 %5052
    %5056 = vset.pattern.permute.xlu0 0
    %5057 = vperm.xlu0 %5056, %v4863
    %v5058 = vpop.permute.xlu0 %5057
    %5061 = vset.pattern.permute.xlu0 0
    %5062 = vperm.xlu0 %5061, %v4864
    %v5063 = vpop.permute.xlu0 %5062
    %5066 = vset.pattern.permute.xlu0 0
    %5067 = vperm.xlu0 %5066, %v4865
    %v5068 = vpop.permute.xlu0 %5067
    %5071 = vset.pattern.permute.xlu0 0
    %5072 = vperm.xlu0 %5071, %v4866
    %v5073 = vpop.permute.xlu0 %5072
    %5076 = vset.pattern.permute.xlu0 0
    %5077 = vperm.xlu0 %5076, %v4867
    %v5078 = vpop.permute.xlu0 %5077
    %5081 = vset.pattern.permute.xlu0 0
    %5082 = vperm.xlu0 %5081, %v4868
    %v5083 = vpop.permute.xlu0 %5082
    %5086 = vset.pattern.permute.xlu0 0
    %5087 = vperm.xlu0 %5086, %v4869
    %v5088 = vpop.permute.xlu0 %5087
    %5091 = vset.pattern.permute.xlu0 0
    %5092 = vperm.xlu0 %5091, %v4870
    %v5093 = vpop.permute.xlu0 %5092
    %5096 = vset.pattern.permute.xlu0 0
    %5097 = vperm.xlu0 %5096, %v4871
    %v5098 = vpop.permute.xlu0 %5097
    %5101 = vset.pattern.permute.xlu0 0
    %5102 = vperm.xlu0 %5101, %v4872
    %v5103 = vpop.permute.xlu0 %5102
    %5106 = vset.pattern.permute.xlu0 0
    %5107 = vperm.xlu0 %5106, %v4873
    %v5108 = vpop.permute.xlu0 %5107
    %5111 = vset.pattern.permute.xlu0 0
    %5112 = vperm.xlu0 %5111, %v4874
    %v5113 = vpop.permute.xlu0 %5112
    %5116 = vset.pattern.permute.xlu0 0
    %5117 = vperm.xlu0 %5116, %v4875
    %v5118 = vpop.permute.xlu0 %5117
    %5121 = vset.pattern.permute.xlu0 0
    %5122 = vperm.xlu0 %5121, %v4876
    %v5123 = vpop.permute.xlu0 %5122
    %5126 = vset.pattern.permute.xlu0 0
    %5127 = vperm.xlu0 %5126, %v4877
    %v5128 = vpop.permute.xlu0 %5127
    %5131 = vset.pattern.permute.xlu0 0
    %5132 = vperm.xlu0 %5131, %v4878
    %v5133 = vpop.permute.xlu0 %5132
    %5136 = vset.pattern.permute.xlu0 0
    %5137 = vperm.xlu0 %5136, %v4879
    %v5138 = vpop.permute.xlu0 %5137
    %5141 = vset.pattern.permute.xlu0 0
    %5142 = vperm.xlu0 %5141, %v4880
    %v5143 = vpop.permute.xlu0 %5142
    %5146 = vset.pattern.permute.xlu0 0
    %5147 = vperm.xlu0 %5146, %v4881
    %v5148 = vpop.permute.xlu0 %5147
    %5151 = vset.pattern.permute.xlu0 0
    %5152 = vperm.xlu0 %5151, %v4882
    %v5153 = vpop.permute.xlu0 %5152
    %5156 = vset.pattern.permute.xlu0 0
    %5157 = vperm.xlu0 %5156, %v4883
    %v5158 = vpop.permute.xlu0 %5157
    %5161 = vset.pattern.permute.xlu0 0
    %5162 = vperm.xlu0 %5161, %v4884
    %v5163 = vpop.permute.xlu0 %5162
    %5166 = vset.pattern.permute.xlu0 0
    %5167 = vperm.xlu0 %5166, %v4885
    %v5168 = vpop.permute.xlu0 %5167
    %5171 = vset.pattern.permute.xlu0 0
    %5172 = vperm.xlu0 %5171, %v4886
    %v5173 = vpop.permute.xlu0 %5172
    %5176 = vset.pattern.permute.xlu0 0
    %5177 = vperm.xlu0 %5176, %v4887
    %v5178 = vpop.permute.xlu0 %5177
    %5181 = vset.pattern.permute.xlu0 0
    %5182 = vperm.xlu0 %5181, %v4888
    %v5183 = vpop.permute.xlu0 %5182
    %5186 = vset.pattern.permute.xlu0 0
    %5187 = vperm.xlu0 %5186, %v4889
    %v5188 = vpop.permute.xlu0 %5187
    %5191 = vset.pattern.permute.xlu0 0
    %5192 = vperm.xlu0 %5191, %v4890
    %v5193 = vpop.permute.xlu0 %5192
    %5196 = vset.pattern.permute.xlu0 0
    %5197 = vperm.xlu0 %5196, %v4891
    %v5198 = vpop.permute.xlu0 %5197
    %5201 = vset.pattern.permute.xlu0 0
    %5202 = vperm.xlu0 %5201, %v4892
    %v5203 = vpop.permute.xlu0 %5202
    %5206 = vset.pattern.permute.xlu0 0
    %5207 = vperm.xlu0 %5206, %v4893
    %v5208 = vpop.permute.xlu0 %5207
    %5211 = vset.pattern.permute.xlu0 0
    %5212 = vperm.xlu0 %5211, %v4894
    %v5213 = vpop.permute.xlu0 %5212
    %v5215 = vmul.f32 %v1940, %v4898
    %v5216 = vmul.f32 %v1939, %v4903
    %v5217 = vmul.f32 %v1938, %v4908
    %v5218 = vmul.f32 %v1937, %v4913
    %v5219 = vmul.f32 %v1936, %v4918
    %v5220 = vmul.f32 %v1935, %v4923
    %v5221 = vmul.f32 %v1934, %v4928
    %v5222 = vmul.f32 %v1933, %v4933
    %v5223 = vmul.f32 %v1932, %v4938
    %v5224 = vmul.f32 %v1931, %v4943
    %v5225 = vmul.f32 %v1930, %v4948
    %v5226 = vmul.f32 %v1929, %v4953
    %v5227 = vmul.f32 %v1928, %v4958
    %v5228 = vmul.f32 %v1927, %v4963
    %v5229 = vmul.f32 %v1926, %v4968
    %v5230 = vmul.f32 %v1925, %v4973
    %v5231 = vmul.f32 %v1924, %v4978
    %v5232 = vmul.f32 %v1923, %v4983
    %v5233 = vmul.f32 %v1922, %v4988
    %v5234 = vmul.f32 %v1921, %v4993
    %v5235 = vmul.f32 %v1920, %v4998
    %v5236 = vmul.f32 %v1919, %v5003
    %v5237 = vmul.f32 %v1918, %v5008
    %v5238 = vmul.f32 %v1917, %v5013
    %v5239 = vmul.f32 %v1916, %v5018
    %v5240 = vmul.f32 %v1915, %v5023
    %v5241 = vmul.f32 %v1914, %v5028
    %v5242 = vmul.f32 %v1913, %v5033
    %v5243 = vmul.f32 %v1912, %v5038
    %v5244 = vmul.f32 %v1911, %v5043
    %v5245 = vmul.f32 %v1910, %v5048
    %v5246 = vmul.f32 %v1909, %v5053
    %v5247 = vmul.f32 %v1908, %v5058
    %v5248 = vmul.f32 %v1907, %v5063
    %v5249 = vmul.f32 %v1906, %v5068
    %v5250 = vmul.f32 %v1905, %v5073
    %v5251 = vmul.f32 %v1904, %v5078
    %v5252 = vmul.f32 %v1903, %v5083
    %v5253 = vmul.f32 %v1902, %v5088
    %v5254 = vmul.f32 %v1901, %v5093
    %v5255 = vmul.f32 %v1900, %v5098
    %v5256 = vmul.f32 %v1899, %v5103
    %v5257 = vmul.f32 %v1898, %v5108
    %v5258 = vmul.f32 %v1897, %v5113
    %v5259 = vmul.f32 %v1896, %v5118
    %v5260 = vmul.f32 %v1895, %v5123
    %v5261 = vmul.f32 %v1894, %v5128
    %v5262 = vmul.f32 %v1893, %v5133
    %v5263 = vmul.f32 %v1892, %v5138
    %v5264 = vmul.f32 %v1891, %v5143
    %v5265 = vmul.f32 %v1890, %v5148
    %v5266 = vmul.f32 %v1889, %v5153
    %v5267 = vmul.f32 %v1888, %v5158
    %v5268 = vmul.f32 %v1887, %v5163
    %v5269 = vmul.f32 %v1886, %v5168
    %v5270 = vmul.f32 %v1885, %v5173
    %v5271 = vmul.f32 %v1884, %v5178
    %v5272 = vmul.f32 %v1883, %v5183
    %v5273 = vmul.f32 %v1882, %v5188
    %v5274 = vmul.f32 %v1881, %v5193
    %v5275 = vmul.f32 %v1880, %v5198
    %v5276 = vmul.f32 %v1943, %v5203
    %v5277 = vmul.f32 %v1942, %v5208
    %v5278 = vmul.f32 %v1941, %v5213
    %v5279 = vpack.c.bf16 %v5216, %v5215
    %v5280 = vpack.c.bf16 %v5218, %v5217
    %v5281 = vpack.c.bf16 %v5220, %v5219
    %v5282 = vpack.c.bf16 %v5222, %v5221
    %v5283 = vpack.c.bf16 %v5224, %v5223
    %v5284 = vpack.c.bf16 %v5226, %v5225
    %v5285 = vpack.c.bf16 %v5228, %v5227
    %v5286 = vpack.c.bf16 %v5230, %v5229
    %v5287 = vpack.c.bf16 %v5232, %v5231
    %v5288 = vpack.c.bf16 %v5234, %v5233
    %v5289 = vpack.c.bf16 %v5236, %v5235
    %v5290 = vpack.c.bf16 %v5238, %v5237
    %v5291 = vpack.c.bf16 %v5240, %v5239
    %v5292 = vpack.c.bf16 %v5242, %v5241
    %v5293 = vpack.c.bf16 %v5244, %v5243
    %v5294 = vpack.c.bf16 %v5246, %v5245
    %v5295 = vpack.c.bf16 %v5248, %v5247
    %v5296 = vpack.c.bf16 %v5250, %v5249
    %v5297 = vpack.c.bf16 %v5252, %v5251
    %v5298 = vpack.c.bf16 %v5254, %v5253
    %v5299 = vpack.c.bf16 %v5256, %v5255
    %v5300 = vpack.c.bf16 %v5258, %v5257
    %v5301 = vpack.c.bf16 %v5260, %v5259
    %v5302 = vpack.c.bf16 %v5262, %v5261
    %v5303 = vpack.c.bf16 %v5264, %v5263
    %v5304 = vpack.c.bf16 %v5266, %v5265
    %v5305 = vpack.c.bf16 %v5268, %v5267
    %v5306 = vpack.c.bf16 %v5270, %v5269
    %v5307 = vpack.c.bf16 %v5272, %v5271
    %v5308 = vpack.c.bf16 %v5274, %v5273
    %v5309 = vpack.c.bf16 %v5276, %v5275
    %v5310 = vpack.c.bf16 %v5278, %v5277
    %v5311 = vld [vmem:[%s4] sm:$0xf]
    %v5312 = vld [vmem:[%s4 + $0x4] sm:$0xf]
    %v5313 = vld [vmem:[%s4 + $0x8] sm:$0xf]
    %v5314 = vld [vmem:[%s4 + $0xc] sm:$0xf]
    %v5315 = vld [vmem:[%s4 + $0x10] sm:$0xf]
    %v5316 = vld [vmem:[%s4 + $0x14] sm:$0xf]
    %v5317 = vld [vmem:[%s4 + $0x18] sm:$0xf]
    %v5318 = vld [vmem:[%s4 + $0x1c] sm:$0xf]
    %v5319 = vld [vmem:[%s4 + $0x20] sm:$0xf]
    %v5320 = vld [vmem:[%s4 + $0x24] sm:$0xf]
    %v5321 = vld [vmem:[%s4 + $0x28] sm:$0xf]
    %v5322 = vld [vmem:[%s4 + $0x2c] sm:$0xf]
    %v5323 = vld [vmem:[%s4 + $0x30] sm:$0xf]
    %v5324 = vld [vmem:[%s4 + $0x34] sm:$0xf]
    %v5325 = vld [vmem:[%s4 + $0x38] sm:$0xf]
    %v5326 = vld [vmem:[%s4 + $0x3c] sm:$0xf]
    %v5327 = vld [vmem:[%s4 + $0x40] sm:$0xf]
    %v5328 = vld [vmem:[%s4 + $0x44] sm:$0xf]
    %v5329 = vld [vmem:[%s4 + $0x48] sm:$0xf]
    %v5330 = vld [vmem:[%s4 + $0x4c] sm:$0xf]
    %v5331 = vld [vmem:[%s4 + $0x50] sm:$0xf]
    %v5332 = vld [vmem:[%s4 + $0x54] sm:$0xf]
    %v5333 = vld [vmem:[%s4 + $0x58] sm:$0xf]
    %v5334 = vld [vmem:[%s4 + $0x5c] sm:$0xf]
    %v5335 = vld [vmem:[%s4 + $0x60] sm:$0xf]
    %v5336 = vld [vmem:[%s4 + $0x64] sm:$0xf]
    %v5337 = vld [vmem:[%s4 + $0x68] sm:$0xf]
    %v5338 = vld [vmem:[%s4 + $0x6c] sm:$0xf]
    %v5339 = vld [vmem:[%s4 + $0x70] sm:$0xf]
    %v5340 = vld [vmem:[%s4 + $0x74] sm:$0xf]
    %v5341 = vld [vmem:[%s4 + $0x78] sm:$0xf]
    %v5342 = vld [vmem:[%s4 + $0x7c] sm:$0xf]
    %v5343 = vld [vmem:[%s4 + $0x80] sm:$0xf]
    %v5344 = vld [vmem:[%s4 + $0x84] sm:$0xf]
    %v5345 = vld [vmem:[%s4 + $0x88] sm:$0xf]
    %v5346 = vld [vmem:[%s4 + $0x8c] sm:$0xf]
    %v5347 = vld [vmem:[%s4 + $0x90] sm:$0xf]
    %v5348 = vld [vmem:[%s4 + $0x94] sm:$0xf]
    %v5349 = vld [vmem:[%s4 + $0x98] sm:$0xf]
    %v5350 = vld [vmem:[%s4 + $0x9c] sm:$0xf]
    %v5351 = vld [vmem:[%s4 + $0xa0] sm:$0xf]
    %v5352 = vld [vmem:[%s4 + $0xa4] sm:$0xf]
    %v5353 = vld [vmem:[%s4 + $0xa8] sm:$0xf]
    %v5354 = vld [vmem:[%s4 + $0xac] sm:$0xf]
    %v5355 = vld [vmem:[%s4 + $0xb0] sm:$0xf]
    %v5356 = vld [vmem:[%s4 + $0xb4] sm:$0xf]
    %v5357 = vld [vmem:[%s4 + $0xb8] sm:$0xf]
    %v5358 = vld [vmem:[%s4 + $0xbc] sm:$0xf]
    %v5359 = vld [vmem:[%s4 + $0xc0] sm:$0xf]
    %v5360 = vld [vmem:[%s4 + $0xc4] sm:$0xf]
    %v5361 = vld [vmem:[%s4 + $0xc8] sm:$0xf]
    %v5362 = vld [vmem:[%s4 + $0xcc] sm:$0xf]
    %v5363 = vld [vmem:[%s4 + $0xd0] sm:$0xf]
    %v5364 = vld [vmem:[%s4 + $0xd4] sm:$0xf]
    %v5365 = vld [vmem:[%s4 + $0xd8] sm:$0xf]
    %v5366 = vld [vmem:[%s4 + $0xdc] sm:$0xf]
    %v5367 = vld [vmem:[%s4 + $0xe0] sm:$0xf]
    %v5368 = vld [vmem:[%s4 + $0xe4] sm:$0xf]
    %v5369 = vld [vmem:[%s4 + $0xe8] sm:$0xf]
    %v5370 = vld [vmem:[%s4 + $0xec] sm:$0xf]
    %v5371 = vld [vmem:[%s4 + $0xf0] sm:$0xf]
    %v5372 = vld [vmem:[%s4 + $0xf4] sm:$0xf]
    %v5373 = vld [vmem:[%s4 + $0xf8] sm:$0xf]
    %v5374 = vld [vmem:[%s4 + $0xfc] sm:$0xf]
    %v5375 = vld [vmem:[%s4 + $0x100] sm:$0xf]
    %v5376 = vld [vmem:[%s4 + $0x104] sm:$0xf]
    %v5377 = vld [vmem:[%s4 + $0x108] sm:$0xf]
    %v5378 = vld [vmem:[%s4 + $0x10c] sm:$0xf]
    %v5379 = vld [vmem:[%s4 + $0x110] sm:$0xf]
    %v5380 = vld [vmem:[%s4 + $0x114] sm:$0xf]
    %v5381 = vld [vmem:[%s4 + $0x118] sm:$0xf]
    %v5382 = vld [vmem:[%s4 + $0x11c] sm:$0xf]
    %v5383 = vld [vmem:[%s4 + $0x120] sm:$0xf]
    %v5384 = vld [vmem:[%s4 + $0x124] sm:$0xf]
    %v5385 = vld [vmem:[%s4 + $0x128] sm:$0xf]
    %v5386 = vld [vmem:[%s4 + $0x12c] sm:$0xf]
    %v5387 = vld [vmem:[%s4 + $0x130] sm:$0xf]
    %v5388 = vld [vmem:[%s4 + $0x134] sm:$0xf]
    %v5389 = vld [vmem:[%s4 + $0x138] sm:$0xf]
    %v5390 = vld [vmem:[%s4 + $0x13c] sm:$0xf]
    %v5391 = vld [vmem:[%s4 + $0x140] sm:$0xf]
    %v5392 = vld [vmem:[%s4 + $0x144] sm:$0xf]
    %v5393 = vld [vmem:[%s4 + $0x148] sm:$0xf]
    %v5394 = vld [vmem:[%s4 + $0x14c] sm:$0xf]
    %v5395 = vld [vmem:[%s4 + $0x150] sm:$0xf]
    %v5396 = vld [vmem:[%s4 + $0x154] sm:$0xf]
    %v5397 = vld [vmem:[%s4 + $0x158] sm:$0xf]
    %v5398 = vld [vmem:[%s4 + $0x15c] sm:$0xf]
    %v5399 = vld [vmem:[%s4 + $0x160] sm:$0xf]
    %v5400 = vld [vmem:[%s4 + $0x164] sm:$0xf]
    %v5401 = vld [vmem:[%s4 + $0x168] sm:$0xf]
    %v5402 = vld [vmem:[%s4 + $0x16c] sm:$0xf]
    %v5403 = vld [vmem:[%s4 + $0x170] sm:$0xf]
    %v5404 = vld [vmem:[%s4 + $0x174] sm:$0xf]
    %v5405 = vld [vmem:[%s4 + $0x178] sm:$0xf]
    %v5406 = vld [vmem:[%s4 + $0x17c] sm:$0xf]
    %v5407 = vld [vmem:[%s4 + $0x180] sm:$0xf]
    %v5408 = vld [vmem:[%s4 + $0x184] sm:$0xf]
    %v5409 = vld [vmem:[%s4 + $0x188] sm:$0xf]
    %v5410 = vld [vmem:[%s4 + $0x18c] sm:$0xf]
    %v5411 = vld [vmem:[%s4 + $0x190] sm:$0xf]
    %v5412 = vld [vmem:[%s4 + $0x194] sm:$0xf]
    %v5413 = vld [vmem:[%s4 + $0x198] sm:$0xf]
    %v5414 = vld [vmem:[%s4 + $0x19c] sm:$0xf]
    %v5415 = vld [vmem:[%s4 + $0x1a0] sm:$0xf]
    %v5416 = vld [vmem:[%s4 + $0x1a4] sm:$0xf]
    %v5417 = vld [vmem:[%s4 + $0x1a8] sm:$0xf]
    %v5418 = vld [vmem:[%s4 + $0x1ac] sm:$0xf]
    %v5419 = vld [vmem:[%s4 + $0x1b0] sm:$0xf]
    %v5420 = vld [vmem:[%s4 + $0x1b4] sm:$0xf]
    %v5421 = vld [vmem:[%s4 + $0x1b8] sm:$0xf]
    %v5422 = vld [vmem:[%s4 + $0x1bc] sm:$0xf]
    %v5423 = vld [vmem:[%s4 + $0x1c0] sm:$0xf]
    %v5424 = vld [vmem:[%s4 + $0x1c4] sm:$0xf]
    %v5425 = vld [vmem:[%s4 + $0x1c8] sm:$0xf]
    %v5426 = vld [vmem:[%s4 + $0x1cc] sm:$0xf]
    %v5427 = vld [vmem:[%s4 + $0x1d0] sm:$0xf]
    %v5428 = vld [vmem:[%s4 + $0x1d4] sm:$0xf]
    %v5429 = vld [vmem:[%s4 + $0x1d8] sm:$0xf]
    %v5430 = vld [vmem:[%s4 + $0x1dc] sm:$0xf]
    %v5431 = vld [vmem:[%s4 + $0x1e0] sm:$0xf]
    %v5432 = vld [vmem:[%s4 + $0x1e4] sm:$0xf]
    %v5433 = vld [vmem:[%s4 + $0x1e8] sm:$0xf]
    %v5434 = vld [vmem:[%s4 + $0x1ec] sm:$0xf]
    %v5435 = vld [vmem:[%s4 + $0x1f0] sm:$0xf]
    %v5436 = vld [vmem:[%s4 + $0x1f4] sm:$0xf]
    %v5437 = vld [vmem:[%s4 + $0x1f8] sm:$0xf]
    %v5438 = vld [vmem:[%s4 + $0x1fc] sm:$0xf]
    %v5439 = vld [vmem:[%s4 + $0x200] sm:$0xf]
    %v5440 = vld [vmem:[%s4 + $0x204] sm:$0xf]
    %v5441 = vld [vmem:[%s4 + $0x208] sm:$0xf]
    %v5442 = vld [vmem:[%s4 + $0x20c] sm:$0xf]
    %v5443 = vld [vmem:[%s4 + $0x210] sm:$0xf]
    %v5444 = vld [vmem:[%s4 + $0x214] sm:$0xf]
    %v5445 = vld [vmem:[%s4 + $0x218] sm:$0xf]
    %v5446 = vld [vmem:[%s4 + $0x21c] sm:$0xf]
    %v5447 = vld [vmem:[%s4 + $0x220] sm:$0xf]
    %v5448 = vld [vmem:[%s4 + $0x224] sm:$0xf]
    %v5449 = vld [vmem:[%s4 + $0x228] sm:$0xf]
    %v5450 = vld [vmem:[%s4 + $0x22c] sm:$0xf]
    %v5451 = vld [vmem:[%s4 + $0x230] sm:$0xf]
    %v5452 = vld [vmem:[%s4 + $0x234] sm:$0xf]
    %v5453 = vld [vmem:[%s4 + $0x238] sm:$0xf]
    %v5454 = vld [vmem:[%s4 + $0x23c] sm:$0xf]
    %v5455 = vld [vmem:[%s5] sm:$0x1]
    %v5457 = vlaneseq
    %v5458 = vshrl.u32 %v5457, 7
    %v5459 = vsub.s32 0, %v5458
    %v5460 = vrot.slane %v5455, %v5459
    %v5606 = vunpack.c.l.b16 %v5311
    %v5607 = vunpack.c.l.b16 %v5312
    %v5608 = vunpack.c.l.b16 %v5313
    %v5609 = vunpack.c.l.b16 %v5314
    %v5610 = vunpack.c.l.b16 %v5315
    %v5611 = vunpack.c.l.b16 %v5316
    %v5612 = vunpack.c.l.b16 %v5317
    %v5613 = vunpack.c.l.b16 %v5318
    %v5614 = vunpack.c.l.b16 %v5319
    %v5615 = vunpack.c.l.b16 %v5320
    %v5616 = vunpack.c.l.b16 %v5321
    %v5617 = vunpack.c.l.b16 %v5322
    %v5618 = vunpack.c.l.b16 %v5323
    %v5619 = vunpack.c.l.b16 %v5324
    %v5620 = vunpack.c.l.b16 %v5325
    %v5621 = vunpack.c.l.b16 %v5326
    %v5622 = vunpack.c.l.b16 %v5327
    %v5623 = vunpack.c.l.b16 %v5328
    %v5624 = vunpack.c.l.b16 %v5329
    %v5625 = vunpack.c.l.b16 %v5330
    %v5626 = vunpack.c.l.b16 %v5331
    %v5627 = vunpack.c.l.b16 %v5332
    %v5628 = vunpack.c.l.b16 %v5333
    %v5629 = vunpack.c.l.b16 %v5334
    %v5630 = vunpack.c.l.b16 %v5335
    %v5631 = vunpack.c.l.b16 %v5336
    %v5632 = vunpack.c.l.b16 %v5337
    %v5633 = vunpack.c.l.b16 %v5338
    %v5634 = vunpack.c.l.b16 %v5339
    %v5635 = vunpack.c.l.b16 %v5340
    %v5636 = vunpack.c.l.b16 %v5341
    %v5637 = vunpack.c.l.b16 %v5342
    %v5638 = vunpack.c.l.b16 %v5343
    %v5639 = vunpack.c.l.b16 %v5344
    %v5640 = vunpack.c.l.b16 %v5345
    %v5641 = vunpack.c.l.b16 %v5346
    %v5642 = vunpack.c.l.b16 %v5347
    %v5643 = vunpack.c.l.b16 %v5348
    %v5644 = vunpack.c.l.b16 %v5349
    %v5645 = vunpack.c.l.b16 %v5350
    %v5646 = vunpack.c.l.b16 %v5351
    %v5647 = vunpack.c.l.b16 %v5352
    %v5648 = vunpack.c.l.b16 %v5353
    %v5649 = vunpack.c.l.b16 %v5354
    %v5650 = vunpack.c.l.b16 %v5355
    %v5651 = vunpack.c.l.b16 %v5356
    %v5652 = vunpack.c.l.b16 %v5357
    %v5653 = vunpack.c.l.b16 %v5358
    %v5654 = vunpack.c.l.b16 %v5359
    %v5655 = vunpack.c.l.b16 %v5360
    %v5656 = vunpack.c.l.b16 %v5361
    %v5657 = vunpack.c.l.b16 %v5362
    %v5658 = vunpack.c.l.b16 %v5363
    %v5659 = vunpack.c.l.b16 %v5364
    %v5660 = vunpack.c.l.b16 %v5365
    %v5661 = vunpack.c.l.b16 %v5366
    %v5662 = vunpack.c.l.b16 %v5367
    %v5663 = vunpack.c.l.b16 %v5368
    %v5664 = vunpack.c.l.b16 %v5369
    %v5665 = vunpack.c.l.b16 %v5370
    %v5666 = vunpack.c.l.b16 %v5371
    %v5667 = vunpack.c.l.b16 %v5372
    %v5668 = vunpack.c.l.b16 %v5373
    %v5669 = vunpack.c.l.b16 %v5374
    %v5670 = vunpack.c.l.b16 %v5375
    %v5671 = vunpack.c.l.b16 %v5376
    %v5672 = vunpack.c.l.b16 %v5377
    %v5673 = vunpack.c.l.b16 %v5378
    %v5674 = vunpack.c.l.b16 %v5379
    %v5675 = vunpack.c.l.b16 %v5380
    %v5676 = vunpack.c.l.b16 %v5381
    %v5677 = vunpack.c.l.b16 %v5382
    %v5678 = vunpack.c.l.b16 %v5383
    %v5679 = vunpack.c.l.b16 %v5384
    %v5680 = vunpack.c.l.b16 %v5385
    %v5681 = vunpack.c.l.b16 %v5386
    %v5682 = vunpack.c.l.b16 %v5387
    %v5683 = vunpack.c.l.b16 %v5388
    %v5684 = vunpack.c.l.b16 %v5389
    %v5685 = vunpack.c.l.b16 %v5390
    %v5686 = vunpack.c.l.b16 %v5391
    %v5687 = vunpack.c.l.b16 %v5392
    %v5688 = vunpack.c.l.b16 %v5393
    %v5689 = vunpack.c.l.b16 %v5394
    %v5690 = vunpack.c.l.b16 %v5395
    %v5691 = vunpack.c.l.b16 %v5396
    %v5692 = vunpack.c.l.b16 %v5397
    %v5693 = vunpack.c.l.b16 %v5398
    %v5694 = vunpack.c.l.b16 %v5399
    %v5695 = vunpack.c.l.b16 %v5400
    %v5696 = vunpack.c.l.b16 %v5401
    %v5697 = vunpack.c.l.b16 %v5402
    %v5698 = vunpack.c.l.b16 %v5403
    %v5699 = vunpack.c.l.b16 %v5404
    %v5700 = vunpack.c.l.b16 %v5405
    %v5701 = vunpack.c.l.b16 %v5406
    %v5702 = vunpack.c.l.b16 %v5407
    %v5703 = vunpack.c.l.b16 %v5408
    %v5704 = vunpack.c.l.b16 %v5409
    %v5705 = vunpack.c.l.b16 %v5410
    %v5706 = vunpack.c.l.b16 %v5411
    %v5707 = vunpack.c.l.b16 %v5412
    %v5708 = vunpack.c.l.b16 %v5413
    %v5709 = vunpack.c.l.b16 %v5414
    %v5710 = vunpack.c.l.b16 %v5415
    %v5711 = vunpack.c.l.b16 %v5416
    %v5712 = vunpack.c.l.b16 %v5417
    %v5713 = vunpack.c.l.b16 %v5418
    %v5714 = vunpack.c.l.b16 %v5419
    %v5715 = vunpack.c.l.b16 %v5420
    %v5716 = vunpack.c.l.b16 %v5421
    %v5717 = vunpack.c.l.b16 %v5422
    %v5718 = vunpack.c.l.b16 %v5423
    %v5719 = vunpack.c.l.b16 %v5424
    %v5720 = vunpack.c.l.b16 %v5425
    %v5721 = vunpack.c.l.b16 %v5426
    %v5722 = vunpack.c.l.b16 %v5427
    %v5723 = vunpack.c.l.b16 %v5428
    %v5724 = vunpack.c.l.b16 %v5429
    %v5725 = vunpack.c.l.b16 %v5430
    %v5726 = vunpack.c.l.b16 %v5431
    %v5727 = vunpack.c.l.b16 %v5432
    %v5728 = vunpack.c.l.b16 %v5433
    %v5729 = vunpack.c.l.b16 %v5434
    %v5730 = vunpack.c.l.b16 %v5435
    %v5731 = vunpack.c.l.b16 %v5436
    %v5732 = vunpack.c.l.b16 %v5437
    %v5733 = vunpack.c.l.b16 %v5438
    %v5734 = vunpack.c.l.b16 %v5439
    %v5735 = vunpack.c.l.b16 %v5440
    %v5736 = vunpack.c.l.b16 %v5441
    %v5737 = vunpack.c.l.b16 %v5442
    %v5738 = vunpack.c.l.b16 %v5443
    %v5739 = vunpack.c.l.b16 %v5444
    %v5740 = vunpack.c.l.b16 %v5445
    %v5741 = vunpack.c.l.b16 %v5446
    %v5742 = vunpack.c.l.b16 %v5447
    %v5743 = vunpack.c.l.b16 %v5448
    %v5744 = vunpack.c.l.b16 %v5449
    %v5745 = vunpack.c.l.b16 %v5450
    %v5746 = vunpack.c.l.b16 %v5451
    %v5747 = vunpack.c.l.b16 %v5452
    %v5748 = vunpack.c.l.b16 %v5453
    %v5749 = vunpack.c.l.b16 %v5454
    %v5750 = vpack.c.b16 %v5607, %v5606
    %v5751 = vpack.c.b16 %v5609, %v5608
    %v5752 = vpack.c.b16 %v5611, %v5610
    %v5753 = vpack.c.b16 %v5613, %v5612
    %v5754 = vpack.c.b16 %v5615, %v5614
    %v5755 = vpack.c.b16 %v5617, %v5616
    %v5756 = vpack.c.b16 %v5619, %v5618
    %v5757 = vpack.c.b16 %v5621, %v5620
    %v5758 = vpack.c.b16 %v5623, %v5622
    %v5759 = vpack.c.b16 %v5625, %v5624
    %v5760 = vpack.c.b16 %v5627, %v5626
    %v5761 = vpack.c.b16 %v5629, %v5628
    %v5762 = vpack.c.b16 %v5631, %v5630
    %v5763 = vpack.c.b16 %v5633, %v5632
    %v5764 = vpack.c.b16 %v5635, %v5634
    %v5765 = vpack.c.b16 %v5637, %v5636
    %v5766 = vpack.c.b16 %v5639, %v5638
    %v5767 = vpack.c.b16 %v5641, %v5640
    %v5768 = vpack.c.b16 %v5643, %v5642
    %v5769 = vpack.c.b16 %v5645, %v5644
    %v5770 = vpack.c.b16 %v5647, %v5646
    %v5771 = vpack.c.b16 %v5649, %v5648
    %v5772 = vpack.c.b16 %v5651, %v5650
    %v5773 = vpack.c.b16 %v5653, %v5652
    %v5774 = vpack.c.b16 %v5655, %v5654
    %v5775 = vpack.c.b16 %v5657, %v5656
    %v5776 = vpack.c.b16 %v5659, %v5658
    %v5777 = vpack.c.b16 %v5661, %v5660
    %v5778 = vpack.c.b16 %v5663, %v5662
    %v5779 = vpack.c.b16 %v5665, %v5664
    %v5780 = vpack.c.b16 %v5667, %v5666
    %v5781 = vpack.c.b16 %v5669, %v5668
    %v5782 = vpack.c.b16 %v5671, %v5670
    %v5783 = vpack.c.b16 %v5673, %v5672
    %v5784 = vpack.c.b16 %v5675, %v5674
    %v5785 = vpack.c.b16 %v5677, %v5676
    %v5786 = vpack.c.b16 %v5679, %v5678
    %v5787 = vpack.c.b16 %v5681, %v5680
    %v5788 = vpack.c.b16 %v5683, %v5682
    %v5789 = vpack.c.b16 %v5685, %v5684
    %v5790 = vpack.c.b16 %v5687, %v5686
    %v5791 = vpack.c.b16 %v5689, %v5688
    %v5792 = vpack.c.b16 %v5691, %v5690
    %v5793 = vpack.c.b16 %v5693, %v5692
    %v5794 = vpack.c.b16 %v5695, %v5694
    %v5795 = vpack.c.b16 %v5697, %v5696
    %v5796 = vpack.c.b16 %v5699, %v5698
    %v5797 = vpack.c.b16 %v5701, %v5700
    %v5798 = vpack.c.b16 %v5703, %v5702
    %v5799 = vpack.c.b16 %v5705, %v5704
    %v5800 = vpack.c.b16 %v5707, %v5706
    %v5801 = vpack.c.b16 %v5709, %v5708
    %v5802 = vpack.c.b16 %v5711, %v5710
    %v5803 = vpack.c.b16 %v5713, %v5712
    %v5804 = vpack.c.b16 %v5715, %v5714
    %v5805 = vpack.c.b16 %v5717, %v5716
    %v5806 = vpack.c.b16 %v5719, %v5718
    %v5807 = vpack.c.b16 %v5721, %v5720
    %v5808 = vpack.c.b16 %v5723, %v5722
    %v5809 = vpack.c.b16 %v5725, %v5724
    %v5810 = vpack.c.b16 %v5727, %v5726
    %v5811 = vpack.c.b16 %v5729, %v5728
    %v5812 = vpack.c.b16 %v5731, %v5730
    %v5813 = vpack.c.b16 %v5733, %v5732
    %v5814 = vpack.c.b16 %v5735, %v5734
    %v5815 = vpack.c.b16 %v5737, %v5736
    %v5816 = vpack.c.b16 %v5739, %v5738
    %v5817 = vpack.c.b16 %v5741, %v5740
    %v5818 = vpack.c.b16 %v5743, %v5742
    %v5819 = vpack.c.b16 %v5745, %v5744
    %v5820 = vpack.c.b16 %v5747, %v5746
    %v5821 = vpack.c.b16 %v5749, %v5748
    %5894 = vmatprep.subr.bf16.mxu0 0
    %5895 = vmatpush1.bf16.msra.mxu0 %v5757
    %5896 = vmatprep.subr.bf16.mxu0 0
    %5897 = vmatpush1.bf16.msra.mxu0 %v5756
    %5898 = vmatprep.subr.bf16.mxu0 0
    %5899 = vmatpush1.bf16.msra.mxu0 %v5755
    %5900 = vmatprep.subr.bf16.mxu0 0
    %5901 = vmatpush1.bf16.msra.mxu0 %v5754
    %5902 = vmatprep.subr.bf16.mxu0 0
    %5903 = vmatpush1.bf16.msra.mxu0 %v5753
    %5904 = vmatprep.subr.bf16.mxu0 0
    %5905 = vmatpush1.bf16.msra.mxu0 %v5752
    %5906 = vmatprep.subr.bf16.mxu0 0
    %5907 = vmatpush1.bf16.msra.mxu0 %v5751
    %5908 = vmatprep.subr.bf16.mxu0 0
    %5909 = vmatpush1.bf16.msra.mxu0 %v5750
    %5910 = vmatprep.subr.bf16.mxu0 0
    %5911 = vmatpush2.bf16.msra.mxu0 %v5765
    %5912 = vmatprep.subr.bf16.mxu0 0
    %5913 = vmatpush2.bf16.msra.mxu0 %v5764
    %5914 = vmatprep.subr.bf16.mxu0 0
    %5915 = vmatpush2.bf16.msra.mxu0 %v5763
    %5916 = vmatprep.subr.bf16.mxu0 0
    %5917 = vmatpush2.bf16.msra.mxu0 %v5762
    %5918 = vmatprep.subr.bf16.mxu0 0
    %5919 = vmatpush2.bf16.msra.mxu0 %v5761
    %5920 = vmatprep.subr.bf16.mxu0 0
    %5921 = vmatpush2.bf16.msra.mxu0 %v5760
    %5922 = vmatprep.subr.bf16.mxu0 0
    %5923 = vmatpush2.bf16.msra.mxu0 %v5759
    %5924 = vmatprep.subr.bf16.mxu0 0
    %5925 = vmatpush2.bf16.msra.mxu0 %v5758
    %5926 = vmatprep.mubr.bf16.mxu0 %v1783
    %5927 = vmatmul.mubr.bf16.gmra.mxu0 %v1302
    %v5928 = vpop.f32.mrf.mxu0
    %v5929 = vadd.f32 %v5460, %v5928
    %v5930 = vpop.f32.mrf.mxu0
    %v5931 = vpop.f32.mrf.mxu0
    %v5932 = vadd.f32 %v5460, %v5931
    %v5933 = vpop.f32.mrf.mxu0
    %5934 = vmatprep.mubr.bf16.mxu0 %v1784
    %5935 = vmatmul.mubr.bf16.gmra.mxu0 %v1303
    %v5936 = vpop.f32.mrf.mxu0
    %v5937 = vadd.f32 %v5460, %v5936
    %v5938 = vpop.f32.mrf.mxu0
    %v5939 = vpop.f32.mrf.mxu0
    %v5940 = vadd.f32 %v5460, %v5939
    %v5941 = vpop.f32.mrf.mxu0
    %5942 = vmatprep.mubr.bf16.mxu0 %v1785
    %5943 = vmatmul.mubr.bf16.gmra.mxu0 %v1304
    %v5944 = vpop.f32.mrf.mxu0
    %v5945 = vadd.f32 %v5460, %v5944
    %v5946 = vpop.f32.mrf.mxu0
    %v5947 = vpop.f32.mrf.mxu0
    %v5948 = vadd.f32 %v5460, %v5947
    %v5949 = vpop.f32.mrf.mxu0
    %5950 = vmatprep.mubr.bf16.mxu0 %v1786
    %5951 = vmatmul.mubr.bf16.gmra.mxu0 %v1305
    %v5952 = vpop.f32.mrf.mxu0
    %v5953 = vadd.f32 %v5460, %v5952
    %v5954 = vpop.f32.mrf.mxu0
    %v5955 = vpop.f32.mrf.mxu0
    %v5956 = vadd.f32 %v5460, %v5955
    %v5957 = vpop.f32.mrf.mxu0
    %5958 = vmatprep.mubr.bf16.mxu0 %v1787
    %5959 = vmatmul.mubr.bf16.gmra.mxu0 %v1306
    %v5960 = vpop.f32.mrf.mxu0
    %v5961 = vadd.f32 %v5460, %v5960
    %v5962 = vpop.f32.mrf.mxu0
    %v5963 = vpop.f32.mrf.mxu0
    %v5964 = vadd.f32 %v5460, %v5963
    %v5965 = vpop.f32.mrf.mxu0
    %5966 = vmatprep.mubr.bf16.mxu0 %v1788
    %5967 = vmatmul.mubr.bf16.gmra.mxu0 %v1307
    %v5968 = vpop.f32.mrf.mxu0
    %v5969 = vadd.f32 %v5460, %v5968
    %v5970 = vpop.f32.mrf.mxu0
    %v5971 = vpop.f32.mrf.mxu0
    %v5972 = vadd.f32 %v5460, %v5971
    %v5973 = vpop.f32.mrf.mxu0
    %5974 = vmatprep.mubr.bf16.mxu0 %v1789
    %5975 = vmatmul.mubr.bf16.gmra.mxu0 %v1308
    %v5976 = vpop.f32.mrf.mxu0
    %v5977 = vadd.f32 %v5460, %v5976
    %v5978 = vpop.f32.mrf.mxu0
    %v5979 = vpop.f32.mrf.mxu0
    %v5980 = vadd.f32 %v5460, %v5979
    %v5981 = vpop.f32.mrf.mxu0
    %5982 = vmatprep.mubr.bf16.mxu0 %v1790
    %5983 = vmatmul.mubr.bf16.gmra.mxu0 %v1309
    %v5984 = vpop.f32.mrf.mxu0
    %v5985 = vadd.f32 %v5460, %v5984
    %v5986 = vpop.f32.mrf.mxu0
    %v5987 = vpop.f32.mrf.mxu0
    %v5988 = vadd.f32 %v5460, %v5987
    %v5989 = vpop.f32.mrf.mxu0
    %5990 = vmatprep.mubr.bf16.mxu0 %v1791
    %5991 = vmatmul.mubr.bf16.gmra.mxu0 %v1310
    %v5992 = vpop.f32.mrf.mxu0
    %v5993 = vadd.f32 %v5460, %v5992
    %v5994 = vpop.f32.mrf.mxu0
    %v5995 = vpop.f32.mrf.mxu0
    %v5996 = vadd.f32 %v5460, %v5995
    %v5997 = vpop.f32.mrf.mxu0
    %5998 = vmatprep.mubr.bf16.mxu0 %v1792
    %5999 = vmatmul.mubr.bf16.gmra.mxu0 %v1311
    %v6000 = vpop.f32.mrf.mxu0
    %v6001 = vadd.f32 %v5460, %v6000
    %v6002 = vpop.f32.mrf.mxu0
    %v6003 = vpop.f32.mrf.mxu0
    %v6004 = vadd.f32 %v5460, %v6003
    %v6005 = vpop.f32.mrf.mxu0
    %6006 = vmatprep.mubr.bf16.mxu0 %v1793
    %6007 = vmatmul.mubr.bf16.gmra.mxu0 %v1312
    %v6008 = vpop.f32.mrf.mxu0
    %v6009 = vadd.f32 %v5460, %v6008
    %v6010 = vpop.f32.mrf.mxu0
    %v6011 = vpop.f32.mrf.mxu0
    %v6012 = vadd.f32 %v5460, %v6011
    %v6013 = vpop.f32.mrf.mxu0
    %6014 = vmatprep.mubr.bf16.mxu0 %v1794
    %6015 = vmatmul.mubr.bf16.gmra.mxu0 %v1313
    %v6016 = vpop.f32.mrf.mxu0
    %v6017 = vadd.f32 %v5460, %v6016
    %v6018 = vpop.f32.mrf.mxu0
    %v6019 = vpop.f32.mrf.mxu0
    %v6020 = vadd.f32 %v5460, %v6019
    %v6021 = vpop.f32.mrf.mxu0
    %6022 = vmatprep.mubr.bf16.mxu0 %v1795
    %6023 = vmatmul.mubr.bf16.gmra.mxu0 %v1314
    %v6024 = vpop.f32.mrf.mxu0
    %v6025 = vadd.f32 %v5460, %v6024
    %v6026 = vpop.f32.mrf.mxu0
    %v6027 = vpop.f32.mrf.mxu0
    %v6028 = vadd.f32 %v5460, %v6027
    %v6029 = vpop.f32.mrf.mxu0
    %6030 = vmatprep.mubr.bf16.mxu0 %v1796
    %6031 = vmatmul.mubr.bf16.gmra.mxu0 %v1315
    %v6032 = vpop.f32.mrf.mxu0
    %v6033 = vadd.f32 %v5460, %v6032
    %v6034 = vpop.f32.mrf.mxu0
    %v6035 = vpop.f32.mrf.mxu0
    %v6036 = vadd.f32 %v5460, %v6035
    %v6037 = vpop.f32.mrf.mxu0
    %6038 = vmatprep.mubr.bf16.mxu0 %v1797
    %6039 = vmatmul.mubr.bf16.gmra.mxu0 %v1316
    %v6040 = vpop.f32.mrf.mxu0
    %v6041 = vadd.f32 %v5460, %v6040
    %v6042 = vpop.f32.mrf.mxu0
    %v6043 = vpop.f32.mrf.mxu0
    %v6044 = vadd.f32 %v5460, %v6043
    %v6045 = vpop.f32.mrf.mxu0
    %6046 = vmatprep.mubr.bf16.mxu0 %v1798
    %6047 = vmatmul.mubr.bf16.gmra.mxu0 %v1317
    %v6048 = vpop.f32.mrf.mxu0
    %v6049 = vadd.f32 %v5460, %v6048
    %v6050 = vpop.f32.mrf.mxu0
    %v6051 = vpop.f32.mrf.mxu0
    %v6052 = vadd.f32 %v5460, %v6051
    %v6053 = vpop.f32.mrf.mxu0
    %6054 = vmatprep.mubr.bf16.mxu0 %v1799
    %6055 = vmatmul.mubr.bf16.gmra.mxu0 %v1318
    %v6056 = vpop.f32.mrf.mxu0
    %v6057 = vadd.f32 %v5460, %v6056
    %v6058 = vpop.f32.mrf.mxu0
    %v6059 = vpop.f32.mrf.mxu0
    %v6060 = vadd.f32 %v5460, %v6059
    %v6061 = vpop.f32.mrf.mxu0
    %6062 = vmatprep.mubr.bf16.mxu0 %v1800
    %6063 = vmatmul.mubr.bf16.gmra.mxu0 %v1319
    %v6064 = vpop.f32.mrf.mxu0
    %v6065 = vadd.f32 %v5460, %v6064
    %v6066 = vpop.f32.mrf.mxu0
    %v6067 = vpop.f32.mrf.mxu0
    %v6068 = vadd.f32 %v5460, %v6067
    %v6069 = vpop.f32.mrf.mxu0
    %6070 = vmatprep.mubr.bf16.mxu0 %v1801
    %6071 = vmatmul.mubr.bf16.gmra.mxu0 %v1320
    %v6072 = vpop.f32.mrf.mxu0
    %v6073 = vadd.f32 %v5460, %v6072
    %v6074 = vpop.f32.mrf.mxu0
    %v6075 = vpop.f32.mrf.mxu0
    %v6076 = vadd.f32 %v5460, %v6075
    %v6077 = vpop.f32.mrf.mxu0
    %6078 = vmatprep.mubr.bf16.mxu0 %v1802
    %6079 = vmatmul.mubr.bf16.gmra.mxu0 %v1321
    %v6080 = vpop.f32.mrf.mxu0
    %v6081 = vadd.f32 %v5460, %v6080
    %v6082 = vpop.f32.mrf.mxu0
    %v6083 = vpop.f32.mrf.mxu0
    %v6084 = vadd.f32 %v5460, %v6083
    %v6085 = vpop.f32.mrf.mxu0
    %6086 = vmatprep.mubr.bf16.mxu0 %v1803
    %6087 = vmatmul.mubr.bf16.gmra.mxu0 %v1322
    %v6088 = vpop.f32.mrf.mxu0
    %v6089 = vadd.f32 %v5460, %v6088
    %v6090 = vpop.f32.mrf.mxu0
    %v6091 = vpop.f32.mrf.mxu0
    %v6092 = vadd.f32 %v5460, %v6091
    %v6093 = vpop.f32.mrf.mxu0
    %6094 = vmatprep.mubr.bf16.mxu0 %v1804
    %6095 = vmatmul.mubr.bf16.gmra.mxu0 %v1323
    %v6096 = vpop.f32.mrf.mxu0
    %v6097 = vadd.f32 %v5460, %v6096
    %v6098 = vpop.f32.mrf.mxu0
    %v6099 = vpop.f32.mrf.mxu0
    %v6100 = vadd.f32 %v5460, %v6099
    %v6101 = vpop.f32.mrf.mxu0
    %6102 = vmatprep.mubr.bf16.mxu0 %v1805
    %6103 = vmatmul.mubr.bf16.gmra.mxu0 %v1324
    %v6104 = vpop.f32.mrf.mxu0
    %v6105 = vadd.f32 %v5460, %v6104
    %v6106 = vpop.f32.mrf.mxu0
    %v6107 = vpop.f32.mrf.mxu0
    %v6108 = vadd.f32 %v5460, %v6107
    %v6109 = vpop.f32.mrf.mxu0
    %6110 = vmatprep.mubr.bf16.mxu0 %v1806
    %6111 = vmatmul.mubr.bf16.gmra.mxu0 %v1325
    %v6112 = vpop.f32.mrf.mxu0
    %v6113 = vadd.f32 %v5460, %v6112
    %v6114 = vpop.f32.mrf.mxu0
    %v6115 = vpop.f32.mrf.mxu0
    %v6116 = vadd.f32 %v5460, %v6115
    %v6117 = vpop.f32.mrf.mxu0
    %6118 = vmatprep.mubr.bf16.mxu0 %v1807
    %6119 = vmatmul.mubr.bf16.gmra.mxu0 %v1326
    %v6120 = vpop.f32.mrf.mxu0
    %v6121 = vadd.f32 %v5460, %v6120
    %v6122 = vpop.f32.mrf.mxu0
    %v6123 = vpop.f32.mrf.mxu0
    %v6124 = vadd.f32 %v5460, %v6123
    %v6125 = vpop.f32.mrf.mxu0
    %6126 = vmatprep.mubr.bf16.mxu0 %v1808
    %6127 = vmatmul.mubr.bf16.gmra.mxu0 %v1327
    %v6128 = vpop.f32.mrf.mxu0
    %v6129 = vadd.f32 %v5460, %v6128
    %v6130 = vpop.f32.mrf.mxu0
    %v6131 = vpop.f32.mrf.mxu0
    %v6132 = vadd.f32 %v5460, %v6131
    %v6133 = vpop.f32.mrf.mxu0
    %6134 = vmatprep.mubr.bf16.mxu0 %v1809
    %6135 = vmatmul.mubr.bf16.gmra.mxu0 %v1328
    %v6136 = vpop.f32.mrf.mxu0
    %v6137 = vadd.f32 %v5460, %v6136
    %v6138 = vpop.f32.mrf.mxu0
    %v6139 = vpop.f32.mrf.mxu0
    %v6140 = vadd.f32 %v5460, %v6139
    %v6141 = vpop.f32.mrf.mxu0
    %6142 = vmatprep.mubr.bf16.mxu0 %v1810
    %6143 = vmatmul.mubr.bf16.gmra.mxu0 %v1329
    %v6144 = vpop.f32.mrf.mxu0
    %v6145 = vadd.f32 %v5460, %v6144
    %v6146 = vpop.f32.mrf.mxu0
    %v6147 = vpop.f32.mrf.mxu0
    %v6148 = vadd.f32 %v5460, %v6147
    %v6149 = vpop.f32.mrf.mxu0
    %6150 = vmatprep.mubr.bf16.mxu0 %v1811
    %6151 = vmatmul.mubr.bf16.gmra.mxu0 %v1330
    %v6152 = vpop.f32.mrf.mxu0
    %v6153 = vadd.f32 %v5460, %v6152
    %v6154 = vpop.f32.mrf.mxu0
    %v6155 = vpop.f32.mrf.mxu0
    %v6156 = vadd.f32 %v5460, %v6155
    %v6157 = vpop.f32.mrf.mxu0
    %6158 = vmatprep.mubr.bf16.mxu0 %v1812
    %6159 = vmatmul.mubr.bf16.gmra.mxu0 %v1331
    %v6160 = vpop.f32.mrf.mxu0
    %v6161 = vadd.f32 %v5460, %v6160
    %v6162 = vpop.f32.mrf.mxu0
    %v6163 = vpop.f32.mrf.mxu0
    %v6164 = vadd.f32 %v5460, %v6163
    %v6165 = vpop.f32.mrf.mxu0
    %6166 = vmatprep.mubr.bf16.mxu0 %v1813
    %6167 = vmatmul.mubr.bf16.gmra.mxu0 %v1332
    %v6168 = vpop.f32.mrf.mxu0
    %v6169 = vadd.f32 %v5460, %v6168
    %v6170 = vpop.f32.mrf.mxu0
    %v6171 = vpop.f32.mrf.mxu0
    %v6172 = vadd.f32 %v5460, %v6171
    %v6173 = vpop.f32.mrf.mxu0
    %6174 = vmatprep.mubr.bf16.mxu0 %v1814
    %6175 = vmatmul.mubr.bf16.gmra.mxu0 %v1333
    %v6176 = vpop.f32.mrf.mxu0
    %v6177 = vadd.f32 %v5460, %v6176
    %v6178 = vpop.f32.mrf.mxu0
    %v6179 = vpop.f32.mrf.mxu0
    %v6180 = vadd.f32 %v5460, %v6179
    %v6181 = vpop.f32.mrf.mxu0
    %6182 = vdwg.mxu0
    %6183 = vmatprep.subr.bf16.mxu0 0
    %6184 = vmatpush1.bf16.msra.mxu0 %v5773
    %6185 = vmatprep.subr.bf16.mxu0 0
    %6186 = vmatpush1.bf16.msra.mxu0 %v5772
    %6187 = vmatprep.subr.bf16.mxu0 0
    %6188 = vmatpush1.bf16.msra.mxu0 %v5771
    %6189 = vmatprep.subr.bf16.mxu0 0
    %6190 = vmatpush1.bf16.msra.mxu0 %v5770
    %6191 = vmatprep.subr.bf16.mxu0 0
    %6192 = vmatpush1.bf16.msra.mxu0 %v5769
    %6193 = vmatprep.subr.bf16.mxu0 0
    %6194 = vmatpush1.bf16.msra.mxu0 %v5768
    %6195 = vmatprep.subr.bf16.mxu0 0
    %6196 = vmatpush1.bf16.msra.mxu0 %v5767
    %6197 = vmatprep.subr.bf16.mxu0 0
    %6198 = vmatpush1.bf16.msra.mxu0 %v5766
    %6199 = vmatprep.subr.bf16.mxu0 0
    %6200 = vmatpush2.bf16.msra.mxu0 %v5781
    %6201 = vmatprep.subr.bf16.mxu0 0
    %6202 = vmatpush2.bf16.msra.mxu0 %v5780
    %6203 = vmatprep.subr.bf16.mxu0 0
    %6204 = vmatpush2.bf16.msra.mxu0 %v5779
    %6205 = vmatprep.subr.bf16.mxu0 0
    %6206 = vmatpush2.bf16.msra.mxu0 %v5778
    %6207 = vmatprep.subr.bf16.mxu0 0
    %6208 = vmatpush2.bf16.msra.mxu0 %v5777
    %6209 = vmatprep.subr.bf16.mxu0 0
    %6210 = vmatpush2.bf16.msra.mxu0 %v5776
    %6211 = vmatprep.subr.bf16.mxu0 0
    %6212 = vmatpush2.bf16.msra.mxu0 %v5775
    %6213 = vmatprep.subr.bf16.mxu0 0
    %6214 = vmatpush2.bf16.msra.mxu0 %v5774
    %6215 = vmatprep.mubr.bf16.mxu0 %v2874
    %6216 = vmatmul.mubr.bf16.gmra.mxu0 %v2393
    %v6217 = vpop.f32.mrf.mxu0
    %v6218 = vadd.f32 %v5929, %v6217
    %v6219 = vpop.f32.mrf.mxu0
    %v6220 = vpop.f32.mrf.mxu0
    %v6221 = vadd.f32 %v5932, %v6220
    %v6222 = vpop.f32.mrf.mxu0
    %6223 = vmatprep.mubr.bf16.mxu0 %v2875
    %6224 = vmatmul.mubr.bf16.gmra.mxu0 %v2394
    %v6225 = vpop.f32.mrf.mxu0
    %v6226 = vadd.f32 %v5937, %v6225
    %v6227 = vpop.f32.mrf.mxu0
    %v6228 = vpop.f32.mrf.mxu0
    %v6229 = vadd.f32 %v5940, %v6228
    %v6230 = vpop.f32.mrf.mxu0
    %6231 = vmatprep.mubr.bf16.mxu0 %v2876
    %6232 = vmatmul.mubr.bf16.gmra.mxu0 %v2395
    %v6233 = vpop.f32.mrf.mxu0
    %v6234 = vadd.f32 %v5945, %v6233
    %v6235 = vpop.f32.mrf.mxu0
    %v6236 = vpop.f32.mrf.mxu0
    %v6237 = vadd.f32 %v5948, %v6236
    %v6238 = vpop.f32.mrf.mxu0
    %6239 = vmatprep.mubr.bf16.mxu0 %v2877
    %6240 = vmatmul.mubr.bf16.gmra.mxu0 %v2396
    %v6241 = vpop.f32.mrf.mxu0
    %v6242 = vadd.f32 %v5953, %v6241
    %v6243 = vpop.f32.mrf.mxu0
    %v6244 = vpop.f32.mrf.mxu0
    %v6245 = vadd.f32 %v5956, %v6244
    %v6246 = vpop.f32.mrf.mxu0
    %6247 = vmatprep.mubr.bf16.mxu0 %v2878
    %6248 = vmatmul.mubr.bf16.gmra.mxu0 %v2397
    %v6249 = vpop.f32.mrf.mxu0
    %v6250 = vadd.f32 %v5961, %v6249
    %v6251 = vpop.f32.mrf.mxu0
    %v6252 = vpop.f32.mrf.mxu0
    %v6253 = vadd.f32 %v5964, %v6252
    %v6254 = vpop.f32.mrf.mxu0
    %6255 = vmatprep.mubr.bf16.mxu0 %v2879
    %6256 = vmatmul.mubr.bf16.gmra.mxu0 %v2398
    %v6257 = vpop.f32.mrf.mxu0
    %v6258 = vadd.f32 %v5969, %v6257
    %v6259 = vpop.f32.mrf.mxu0
    %v6260 = vpop.f32.mrf.mxu0
    %v6261 = vadd.f32 %v5972, %v6260
    %v6262 = vpop.f32.mrf.mxu0
    %6263 = vmatprep.mubr.bf16.mxu0 %v2880
    %6264 = vmatmul.mubr.bf16.gmra.mxu0 %v2399
    %v6265 = vpop.f32.mrf.mxu0
    %v6266 = vadd.f32 %v5977, %v6265
    %v6267 = vpop.f32.mrf.mxu0
    %v6268 = vpop.f32.mrf.mxu0
    %v6269 = vadd.f32 %v5980, %v6268
    %v6270 = vpop.f32.mrf.mxu0
    %6271 = vmatprep.mubr.bf16.mxu0 %v2881
    %6272 = vmatmul.mubr.bf16.gmra.mxu0 %v2400
    %v6273 = vpop.f32.mrf.mxu0
    %v6274 = vadd.f32 %v5985, %v6273
    %v6275 = vpop.f32.mrf.mxu0
    %v6276 = vpop.f32.mrf.mxu0
    %v6277 = vadd.f32 %v5988, %v6276
    %v6278 = vpop.f32.mrf.mxu0
    %6279 = vmatprep.mubr.bf16.mxu0 %v2882
    %6280 = vmatmul.mubr.bf16.gmra.mxu0 %v2401
    %v6281 = vpop.f32.mrf.mxu0
    %v6282 = vadd.f32 %v5993, %v6281
    %v6283 = vpop.f32.mrf.mxu0
    %v6284 = vpop.f32.mrf.mxu0
    %v6285 = vadd.f32 %v5996, %v6284
    %v6286 = vpop.f32.mrf.mxu0
    %6287 = vmatprep.mubr.bf16.mxu0 %v2883
    %6288 = vmatmul.mubr.bf16.gmra.mxu0 %v2402
    %v6289 = vpop.f32.mrf.mxu0
    %v6290 = vadd.f32 %v6001, %v6289
    %v6291 = vpop.f32.mrf.mxu0
    %v6292 = vpop.f32.mrf.mxu0
    %v6293 = vadd.f32 %v6004, %v6292
    %v6294 = vpop.f32.mrf.mxu0
    %6295 = vmatprep.mubr.bf16.mxu0 %v2884
    %6296 = vmatmul.mubr.bf16.gmra.mxu0 %v2403
    %v6297 = vpop.f32.mrf.mxu0
    %v6298 = vadd.f32 %v6009, %v6297
    %v6299 = vpop.f32.mrf.mxu0
    %v6300 = vpop.f32.mrf.mxu0
    %v6301 = vadd.f32 %v6012, %v6300
    %v6302 = vpop.f32.mrf.mxu0
    %6303 = vmatprep.mubr.bf16.mxu0 %v2885
    %6304 = vmatmul.mubr.bf16.gmra.mxu0 %v2404
    %v6305 = vpop.f32.mrf.mxu0
    %v6306 = vadd.f32 %v6017, %v6305
    %v6307 = vpop.f32.mrf.mxu0
    %v6308 = vpop.f32.mrf.mxu0
    %v6309 = vadd.f32 %v6020, %v6308
    %v6310 = vpop.f32.mrf.mxu0
    %6311 = vmatprep.mubr.bf16.mxu0 %v2886
    %6312 = vmatmul.mubr.bf16.gmra.mxu0 %v2405
    %v6313 = vpop.f32.mrf.mxu0
    %v6314 = vadd.f32 %v6025, %v6313
    %v6315 = vpop.f32.mrf.mxu0
    %v6316 = vpop.f32.mrf.mxu0
    %v6317 = vadd.f32 %v6028, %v6316
    %v6318 = vpop.f32.mrf.mxu0
    %6319 = vmatprep.mubr.bf16.mxu0 %v2887
    %6320 = vmatmul.mubr.bf16.gmra.mxu0 %v2406
    %v6321 = vpop.f32.mrf.mxu0
    %v6322 = vadd.f32 %v6033, %v6321
    %v6323 = vpop.f32.mrf.mxu0
    %v6324 = vpop.f32.mrf.mxu0
    %v6325 = vadd.f32 %v6036, %v6324
    %v6326 = vpop.f32.mrf.mxu0
    %6327 = vmatprep.mubr.bf16.mxu0 %v2888
    %6328 = vmatmul.mubr.bf16.gmra.mxu0 %v2407
    %v6329 = vpop.f32.mrf.mxu0
    %v6330 = vadd.f32 %v6041, %v6329
    %v6331 = vpop.f32.mrf.mxu0
    %v6332 = vpop.f32.mrf.mxu0
    %v6333 = vadd.f32 %v6044, %v6332
    %v6334 = vpop.f32.mrf.mxu0
    %6335 = vmatprep.mubr.bf16.mxu0 %v2889
    %6336 = vmatmul.mubr.bf16.gmra.mxu0 %v2408
    %v6337 = vpop.f32.mrf.mxu0
    %v6338 = vadd.f32 %v6049, %v6337
    %v6339 = vpop.f32.mrf.mxu0
    %v6340 = vpop.f32.mrf.mxu0
    %v6341 = vadd.f32 %v6052, %v6340
    %v6342 = vpop.f32.mrf.mxu0
    %6343 = vmatprep.mubr.bf16.mxu0 %v2890
    %6344 = vmatmul.mubr.bf16.gmra.mxu0 %v2409
    %v6345 = vpop.f32.mrf.mxu0
    %v6346 = vadd.f32 %v6057, %v6345
    %v6347 = vpop.f32.mrf.mxu0
    %v6348 = vpop.f32.mrf.mxu0
    %v6349 = vadd.f32 %v6060, %v6348
    %v6350 = vpop.f32.mrf.mxu0
    %6351 = vmatprep.mubr.bf16.mxu0 %v2891
    %6352 = vmatmul.mubr.bf16.gmra.mxu0 %v2410
    %v6353 = vpop.f32.mrf.mxu0
    %v6354 = vadd.f32 %v6065, %v6353
    %v6355 = vpop.f32.mrf.mxu0
    %v6356 = vpop.f32.mrf.mxu0
    %v6357 = vadd.f32 %v6068, %v6356
    %v6358 = vpop.f32.mrf.mxu0
    %6359 = vmatprep.mubr.bf16.mxu0 %v2892
    %6360 = vmatmul.mubr.bf16.gmra.mxu0 %v2411
    %v6361 = vpop.f32.mrf.mxu0
    %v6362 = vadd.f32 %v6073, %v6361
    %v6363 = vpop.f32.mrf.mxu0
    %v6364 = vpop.f32.mrf.mxu0
    %v6365 = vadd.f32 %v6076, %v6364
    %v6366 = vpop.f32.mrf.mxu0
    %6367 = vmatprep.mubr.bf16.mxu0 %v2893
    %6368 = vmatmul.mubr.bf16.gmra.mxu0 %v2412
    %v6369 = vpop.f32.mrf.mxu0
    %v6370 = vadd.f32 %v6081, %v6369
    %v6371 = vpop.f32.mrf.mxu0
    %v6372 = vpop.f32.mrf.mxu0
    %v6373 = vadd.f32 %v6084, %v6372
    %v6374 = vpop.f32.mrf.mxu0
    %6375 = vmatprep.mubr.bf16.mxu0 %v2894
    %6376 = vmatmul.mubr.bf16.gmra.mxu0 %v2413
    %v6377 = vpop.f32.mrf.mxu0
    %v6378 = vadd.f32 %v6089, %v6377
    %v6379 = vpop.f32.mrf.mxu0
    %v6380 = vpop.f32.mrf.mxu0
    %v6381 = vadd.f32 %v6092, %v6380
    %v6382 = vpop.f32.mrf.mxu0
    %6383 = vmatprep.mubr.bf16.mxu0 %v2895
    %6384 = vmatmul.mubr.bf16.gmra.mxu0 %v2414
    %v6385 = vpop.f32.mrf.mxu0
    %v6386 = vadd.f32 %v6097, %v6385
    %v6387 = vpop.f32.mrf.mxu0
    %v6388 = vpop.f32.mrf.mxu0
    %v6389 = vadd.f32 %v6100, %v6388
    %v6390 = vpop.f32.mrf.mxu0
    %6391 = vmatprep.mubr.bf16.mxu0 %v2896
    %6392 = vmatmul.mubr.bf16.gmra.mxu0 %v2415
    %v6393 = vpop.f32.mrf.mxu0
    %v6394 = vadd.f32 %v6105, %v6393
    %v6395 = vpop.f32.mrf.mxu0
    %v6396 = vpop.f32.mrf.mxu0
    %v6397 = vadd.f32 %v6108, %v6396
    %v6398 = vpop.f32.mrf.mxu0
    %6399 = vmatprep.mubr.bf16.mxu0 %v2897
    %6400 = vmatmul.mubr.bf16.gmra.mxu0 %v2416
    %v6401 = vpop.f32.mrf.mxu0
    %v6402 = vadd.f32 %v6113, %v6401
    %v6403 = vpop.f32.mrf.mxu0
    %v6404 = vpop.f32.mrf.mxu0
    %v6405 = vadd.f32 %v6116, %v6404
    %v6406 = vpop.f32.mrf.mxu0
    %6407 = vmatprep.mubr.bf16.mxu0 %v2898
    %6408 = vmatmul.mubr.bf16.gmra.mxu0 %v2417
    %v6409 = vpop.f32.mrf.mxu0
    %v6410 = vadd.f32 %v6121, %v6409
    %v6411 = vpop.f32.mrf.mxu0
    %v6412 = vpop.f32.mrf.mxu0
    %v6413 = vadd.f32 %v6124, %v6412
    %v6414 = vpop.f32.mrf.mxu0
    %6415 = vmatprep.mubr.bf16.mxu0 %v2899
    %6416 = vmatmul.mubr.bf16.gmra.mxu0 %v2418
    %v6417 = vpop.f32.mrf.mxu0
    %v6418 = vadd.f32 %v6129, %v6417
    %v6419 = vpop.f32.mrf.mxu0
    %v6420 = vpop.f32.mrf.mxu0
    %v6421 = vadd.f32 %v6132, %v6420
    %v6422 = vpop.f32.mrf.mxu0
    %6423 = vmatprep.mubr.bf16.mxu0 %v2900
    %6424 = vmatmul.mubr.bf16.gmra.mxu0 %v2419
    %v6425 = vpop.f32.mrf.mxu0
    %v6426 = vadd.f32 %v6137, %v6425
    %v6427 = vpop.f32.mrf.mxu0
    %v6428 = vpop.f32.mrf.mxu0
    %v6429 = vadd.f32 %v6140, %v6428
    %v6430 = vpop.f32.mrf.mxu0
    %6431 = vmatprep.mubr.bf16.mxu0 %v2901
    %6432 = vmatmul.mubr.bf16.gmra.mxu0 %v2420
    %v6433 = vpop.f32.mrf.mxu0
    %v6434 = vadd.f32 %v6145, %v6433
    %v6435 = vpop.f32.mrf.mxu0
    %v6436 = vpop.f32.mrf.mxu0
    %v6437 = vadd.f32 %v6148, %v6436
    %v6438 = vpop.f32.mrf.mxu0
    %6439 = vmatprep.mubr.bf16.mxu0 %v2902
    %6440 = vmatmul.mubr.bf16.gmra.mxu0 %v2421
    %v6441 = vpop.f32.mrf.mxu0
    %v6442 = vadd.f32 %v6153, %v6441
    %v6443 = vpop.f32.mrf.mxu0
    %v6444 = vpop.f32.mrf.mxu0
    %v6445 = vadd.f32 %v6156, %v6444
    %v6446 = vpop.f32.mrf.mxu0
    %6447 = vmatprep.mubr.bf16.mxu0 %v2903
    %6448 = vmatmul.mubr.bf16.gmra.mxu0 %v2422
    %v6449 = vpop.f32.mrf.mxu0
    %v6450 = vadd.f32 %v6161, %v6449
    %v6451 = vpop.f32.mrf.mxu0
    %v6452 = vpop.f32.mrf.mxu0
    %v6453 = vadd.f32 %v6164, %v6452
    %v6454 = vpop.f32.mrf.mxu0
    %6455 = vmatprep.mubr.bf16.mxu0 %v2904
    %6456 = vmatmul.mubr.bf16.gmra.mxu0 %v2423
    %v6457 = vpop.f32.mrf.mxu0
    %v6458 = vadd.f32 %v6169, %v6457
    %v6459 = vpop.f32.mrf.mxu0
    %v6460 = vpop.f32.mrf.mxu0
    %v6461 = vadd.f32 %v6172, %v6460
    %v6462 = vpop.f32.mrf.mxu0
    %6463 = vmatprep.mubr.bf16.mxu0 %v2905
    %6464 = vmatmul.mubr.bf16.gmra.mxu0 %v2424
    %v6465 = vpop.f32.mrf.mxu0
    %v6466 = vadd.f32 %v6177, %v6465
    %v6467 = vpop.f32.mrf.mxu0
    %v6468 = vpop.f32.mrf.mxu0
    %v6469 = vadd.f32 %v6180, %v6468
    %v6470 = vpop.f32.mrf.mxu0
    %6471 = vdwg.mxu0
    %6472 = vmatprep.subr.bf16.mxu0 0
    %6473 = vmatpush1.bf16.msra.mxu0 %v5789
    %6474 = vmatprep.subr.bf16.mxu0 0
    %6475 = vmatpush1.bf16.msra.mxu0 %v5788
    %6476 = vmatprep.subr.bf16.mxu0 0
    %6477 = vmatpush1.bf16.msra.mxu0 %v5787
    %6478 = vmatprep.subr.bf16.mxu0 0
    %6479 = vmatpush1.bf16.msra.mxu0 %v5786
    %6480 = vmatprep.subr.bf16.mxu0 0
    %6481 = vmatpush1.bf16.msra.mxu0 %v5785
    %6482 = vmatprep.subr.bf16.mxu0 0
    %6483 = vmatpush1.bf16.msra.mxu0 %v5784
    %6484 = vmatprep.subr.bf16.mxu0 0
    %6485 = vmatpush1.bf16.msra.mxu0 %v5783
    %6486 = vmatprep.subr.bf16.mxu0 0
    %6487 = vmatpush1.bf16.msra.mxu0 %v5782
    %6488 = vmatprep.subr.bf16.mxu0 0
    %6489 = vmatpush2.bf16.msra.mxu0 %v5797
    %6490 = vmatprep.subr.bf16.mxu0 0
    %6491 = vmatpush2.bf16.msra.mxu0 %v5796
    %6492 = vmatprep.subr.bf16.mxu0 0
    %6493 = vmatpush2.bf16.msra.mxu0 %v5795
    %6494 = vmatprep.subr.bf16.mxu0 0
    %6495 = vmatpush2.bf16.msra.mxu0 %v5794
    %6496 = vmatprep.subr.bf16.mxu0 0
    %6497 = vmatpush2.bf16.msra.mxu0 %v5793
    %6498 = vmatprep.subr.bf16.mxu0 0
    %6499 = vmatpush2.bf16.msra.mxu0 %v5792
    %6500 = vmatprep.subr.bf16.mxu0 0
    %6501 = vmatpush2.bf16.msra.mxu0 %v5791
    %6502 = vmatprep.subr.bf16.mxu0 0
    %6503 = vmatpush2.bf16.msra.mxu0 %v5790
    %6504 = vmatprep.mubr.bf16.mxu0 %v3836
    %6505 = vmatmul.mubr.bf16.gmra.mxu0 %v3355
    %v6506 = vpop.f32.mrf.mxu0
    %v6507 = vadd.f32 %v6218, %v6506
    %v6508 = vpop.f32.mrf.mxu0
    %v6509 = vpop.f32.mrf.mxu0
    %v6510 = vadd.f32 %v6221, %v6509
    %v6511 = vpop.f32.mrf.mxu0
    %6512 = vmatprep.mubr.bf16.mxu0 %v3837
    %6513 = vmatmul.mubr.bf16.gmra.mxu0 %v3356
    %v6514 = vpop.f32.mrf.mxu0
    %v6515 = vadd.f32 %v6226, %v6514
    %v6516 = vpop.f32.mrf.mxu0
    %v6517 = vpop.f32.mrf.mxu0
    %v6518 = vadd.f32 %v6229, %v6517
    %v6519 = vpop.f32.mrf.mxu0
    %6520 = vmatprep.mubr.bf16.mxu0 %v3838
    %6521 = vmatmul.mubr.bf16.gmra.mxu0 %v3357
    %v6522 = vpop.f32.mrf.mxu0
    %v6523 = vadd.f32 %v6234, %v6522
    %v6524 = vpop.f32.mrf.mxu0
    %v6525 = vpop.f32.mrf.mxu0
    %v6526 = vadd.f32 %v6237, %v6525
    %v6527 = vpop.f32.mrf.mxu0
    %6528 = vmatprep.mubr.bf16.mxu0 %v3839
    %6529 = vmatmul.mubr.bf16.gmra.mxu0 %v3358
    %v6530 = vpop.f32.mrf.mxu0
    %v6531 = vadd.f32 %v6242, %v6530
    %v6532 = vpop.f32.mrf.mxu0
    %v6533 = vpop.f32.mrf.mxu0
    %v6534 = vadd.f32 %v6245, %v6533
    %v6535 = vpop.f32.mrf.mxu0
    %6536 = vmatprep.mubr.bf16.mxu0 %v3840
    %6537 = vmatmul.mubr.bf16.gmra.mxu0 %v3359
    %v6538 = vpop.f32.mrf.mxu0
    %v6539 = vadd.f32 %v6250, %v6538
    %v6540 = vpop.f32.mrf.mxu0
    %v6541 = vpop.f32.mrf.mxu0
    %v6542 = vadd.f32 %v6253, %v6541
    %v6543 = vpop.f32.mrf.mxu0
    %6544 = vmatprep.mubr.bf16.mxu0 %v3841
    %6545 = vmatmul.mubr.bf16.gmra.mxu0 %v3360
    %v6546 = vpop.f32.mrf.mxu0
    %v6547 = vadd.f32 %v6258, %v6546
    %v6548 = vpop.f32.mrf.mxu0
    %v6549 = vpop.f32.mrf.mxu0
    %v6550 = vadd.f32 %v6261, %v6549
    %v6551 = vpop.f32.mrf.mxu0
    %6552 = vmatprep.mubr.bf16.mxu0 %v3842
    %6553 = vmatmul.mubr.bf16.gmra.mxu0 %v3361
    %v6554 = vpop.f32.mrf.mxu0
    %v6555 = vadd.f32 %v6266, %v6554
    %v6556 = vpop.f32.mrf.mxu0
    %v6557 = vpop.f32.mrf.mxu0
    %v6558 = vadd.f32 %v6269, %v6557
    %v6559 = vpop.f32.mrf.mxu0
    %6560 = vmatprep.mubr.bf16.mxu0 %v3843
    %6561 = vmatmul.mubr.bf16.gmra.mxu0 %v3362
    %v6562 = vpop.f32.mrf.mxu0
    %v6563 = vadd.f32 %v6274, %v6562
    %v6564 = vpop.f32.mrf.mxu0
    %v6565 = vpop.f32.mrf.mxu0
    %v6566 = vadd.f32 %v6277, %v6565
    %v6567 = vpop.f32.mrf.mxu0
    %6568 = vmatprep.mubr.bf16.mxu0 %v3844
    %6569 = vmatmul.mubr.bf16.gmra.mxu0 %v3363
    %v6570 = vpop.f32.mrf.mxu0
    %v6571 = vadd.f32 %v6282, %v6570
    %v6572 = vpop.f32.mrf.mxu0
    %v6573 = vpop.f32.mrf.mxu0
    %v6574 = vadd.f32 %v6285, %v6573
    %v6575 = vpop.f32.mrf.mxu0
    %6576 = vmatprep.mubr.bf16.mxu0 %v3845
    %6577 = vmatmul.mubr.bf16.gmra.mxu0 %v3364
    %v6578 = vpop.f32.mrf.mxu0
    %v6579 = vadd.f32 %v6290, %v6578
    %v6580 = vpop.f32.mrf.mxu0
    %v6581 = vpop.f32.mrf.mxu0
    %v6582 = vadd.f32 %v6293, %v6581
    %v6583 = vpop.f32.mrf.mxu0
    %6584 = vmatprep.mubr.bf16.mxu0 %v3846
    %6585 = vmatmul.mubr.bf16.gmra.mxu0 %v3365
    %v6586 = vpop.f32.mrf.mxu0
    %v6587 = vadd.f32 %v6298, %v6586
    %v6588 = vpop.f32.mrf.mxu0
    %v6589 = vpop.f32.mrf.mxu0
    %v6590 = vadd.f32 %v6301, %v6589
    %v6591 = vpop.f32.mrf.mxu0
    %6592 = vmatprep.mubr.bf16.mxu0 %v3847
    %6593 = vmatmul.mubr.bf16.gmra.mxu0 %v3366
    %v6594 = vpop.f32.mrf.mxu0
    %v6595 = vadd.f32 %v6306, %v6594
    %v6596 = vpop.f32.mrf.mxu0
    %v6597 = vpop.f32.mrf.mxu0
    %v6598 = vadd.f32 %v6309, %v6597
    %v6599 = vpop.f32.mrf.mxu0
    %6600 = vmatprep.mubr.bf16.mxu0 %v3848
    %6601 = vmatmul.mubr.bf16.gmra.mxu0 %v3367
    %v6602 = vpop.f32.mrf.mxu0
    %v6603 = vadd.f32 %v6314, %v6602
    %v6604 = vpop.f32.mrf.mxu0
    %v6605 = vpop.f32.mrf.mxu0
    %v6606 = vadd.f32 %v6317, %v6605
    %v6607 = vpop.f32.mrf.mxu0
    %6608 = vmatprep.mubr.bf16.mxu0 %v3849
    %6609 = vmatmul.mubr.bf16.gmra.mxu0 %v3368
    %v6610 = vpop.f32.mrf.mxu0
    %v6611 = vadd.f32 %v6322, %v6610
    %v6612 = vpop.f32.mrf.mxu0
    %v6613 = vpop.f32.mrf.mxu0
    %v6614 = vadd.f32 %v6325, %v6613
    %v6615 = vpop.f32.mrf.mxu0
    %6616 = vmatprep.mubr.bf16.mxu0 %v3850
    %6617 = vmatmul.mubr.bf16.gmra.mxu0 %v3369
    %v6618 = vpop.f32.mrf.mxu0
    %v6619 = vadd.f32 %v6330, %v6618
    %v6620 = vpop.f32.mrf.mxu0
    %v6621 = vpop.f32.mrf.mxu0
    %v6622 = vadd.f32 %v6333, %v6621
    %v6623 = vpop.f32.mrf.mxu0
    %6624 = vmatprep.mubr.bf16.mxu0 %v3851
    %6625 = vmatmul.mubr.bf16.gmra.mxu0 %v3370
    %v6626 = vpop.f32.mrf.mxu0
    %v6627 = vadd.f32 %v6338, %v6626
    %v6628 = vpop.f32.mrf.mxu0
    %v6629 = vpop.f32.mrf.mxu0
    %v6630 = vadd.f32 %v6341, %v6629
    %v6631 = vpop.f32.mrf.mxu0
    %6632 = vmatprep.mubr.bf16.mxu0 %v3852
    %6633 = vmatmul.mubr.bf16.gmra.mxu0 %v3371
    %v6634 = vpop.f32.mrf.mxu0
    %v6635 = vadd.f32 %v6346, %v6634
    %v6636 = vpop.f32.mrf.mxu0
    %v6637 = vpop.f32.mrf.mxu0
    %v6638 = vadd.f32 %v6349, %v6637
    %v6639 = vpop.f32.mrf.mxu0
    %6640 = vmatprep.mubr.bf16.mxu0 %v3853
    %6641 = vmatmul.mubr.bf16.gmra.mxu0 %v3372
    %v6642 = vpop.f32.mrf.mxu0
    %v6643 = vadd.f32 %v6354, %v6642
    %v6644 = vpop.f32.mrf.mxu0
    %v6645 = vpop.f32.mrf.mxu0
    %v6646 = vadd.f32 %v6357, %v6645
    %v6647 = vpop.f32.mrf.mxu0
    %6648 = vmatprep.mubr.bf16.mxu0 %v3854
    %6649 = vmatmul.mubr.bf16.gmra.mxu0 %v3373
    %v6650 = vpop.f32.mrf.mxu0
    %v6651 = vadd.f32 %v6362, %v6650
    %v6652 = vpop.f32.mrf.mxu0
    %v6653 = vpop.f32.mrf.mxu0
    %v6654 = vadd.f32 %v6365, %v6653
    %v6655 = vpop.f32.mrf.mxu0
    %6656 = vmatprep.mubr.bf16.mxu0 %v3855
    %6657 = vmatmul.mubr.bf16.gmra.mxu0 %v3374
    %v6658 = vpop.f32.mrf.mxu0
    %v6659 = vadd.f32 %v6370, %v6658
    %v6660 = vpop.f32.mrf.mxu0
    %v6661 = vpop.f32.mrf.mxu0
    %v6662 = vadd.f32 %v6373, %v6661
    %v6663 = vpop.f32.mrf.mxu0
    %6664 = vmatprep.mubr.bf16.mxu0 %v3856
    %6665 = vmatmul.mubr.bf16.gmra.mxu0 %v3375
    %v6666 = vpop.f32.mrf.mxu0
    %v6667 = vadd.f32 %v6378, %v6666
    %v6668 = vpop.f32.mrf.mxu0
    %v6669 = vpop.f32.mrf.mxu0
    %v6670 = vadd.f32 %v6381, %v6669
    %v6671 = vpop.f32.mrf.mxu0
    %6672 = vmatprep.mubr.bf16.mxu0 %v3857
    %6673 = vmatmul.mubr.bf16.gmra.mxu0 %v3376
    %v6674 = vpop.f32.mrf.mxu0
    %v6675 = vadd.f32 %v6386, %v6674
    %v6676 = vpop.f32.mrf.mxu0
    %v6677 = vpop.f32.mrf.mxu0
    %v6678 = vadd.f32 %v6389, %v6677
    %v6679 = vpop.f32.mrf.mxu0
    %6680 = vmatprep.mubr.bf16.mxu0 %v3858
    %6681 = vmatmul.mubr.bf16.gmra.mxu0 %v3377
    %v6682 = vpop.f32.mrf.mxu0
    %v6683 = vadd.f32 %v6394, %v6682
    %v6684 = vpop.f32.mrf.mxu0
    %v6685 = vpop.f32.mrf.mxu0
    %v6686 = vadd.f32 %v6397, %v6685
    %v6687 = vpop.f32.mrf.mxu0
    %6688 = vmatprep.mubr.bf16.mxu0 %v3859
    %6689 = vmatmul.mubr.bf16.gmra.mxu0 %v3378
    %v6690 = vpop.f32.mrf.mxu0
    %v6691 = vadd.f32 %v6402, %v6690
    %v6692 = vpop.f32.mrf.mxu0
    %v6693 = vpop.f32.mrf.mxu0
    %v6694 = vadd.f32 %v6405, %v6693
    %v6695 = vpop.f32.mrf.mxu0
    %6696 = vmatprep.mubr.bf16.mxu0 %v3860
    %6697 = vmatmul.mubr.bf16.gmra.mxu0 %v3379
    %v6698 = vpop.f32.mrf.mxu0
    %v6699 = vadd.f32 %v6410, %v6698
    %v6700 = vpop.f32.mrf.mxu0
    %v6701 = vpop.f32.mrf.mxu0
    %v6702 = vadd.f32 %v6413, %v6701
    %v6703 = vpop.f32.mrf.mxu0
    %6704 = vmatprep.mubr.bf16.mxu0 %v3861
    %6705 = vmatmul.mubr.bf16.gmra.mxu0 %v3380
    %v6706 = vpop.f32.mrf.mxu0
    %v6707 = vadd.f32 %v6418, %v6706
    %v6708 = vpop.f32.mrf.mxu0
    %v6709 = vpop.f32.mrf.mxu0
    %v6710 = vadd.f32 %v6421, %v6709
    %v6711 = vpop.f32.mrf.mxu0
    %6712 = vmatprep.mubr.bf16.mxu0 %v3862
    %6713 = vmatmul.mubr.bf16.gmra.mxu0 %v3381
    %v6714 = vpop.f32.mrf.mxu0
    %v6715 = vadd.f32 %v6426, %v6714
    %v6716 = vpop.f32.mrf.mxu0
    %v6717 = vpop.f32.mrf.mxu0
    %v6718 = vadd.f32 %v6429, %v6717
    %v6719 = vpop.f32.mrf.mxu0
    %6720 = vmatprep.mubr.bf16.mxu0 %v3863
    %6721 = vmatmul.mubr.bf16.gmra.mxu0 %v3382
    %v6722 = vpop.f32.mrf.mxu0
    %v6723 = vadd.f32 %v6434, %v6722
    %v6724 = vpop.f32.mrf.mxu0
    %v6725 = vpop.f32.mrf.mxu0
    %v6726 = vadd.f32 %v6437, %v6725
    %v6727 = vpop.f32.mrf.mxu0
    %6728 = vmatprep.mubr.bf16.mxu0 %v3864
    %6729 = vmatmul.mubr.bf16.gmra.mxu0 %v3383
    %v6730 = vpop.f32.mrf.mxu0
    %v6731 = vadd.f32 %v6442, %v6730
    %v6732 = vpop.f32.mrf.mxu0
    %v6733 = vpop.f32.mrf.mxu0
    %v6734 = vadd.f32 %v6445, %v6733
    %v6735 = vpop.f32.mrf.mxu0
    %6736 = vmatprep.mubr.bf16.mxu0 %v3865
    %6737 = vmatmul.mubr.bf16.gmra.mxu0 %v3384
    %v6738 = vpop.f32.mrf.mxu0
    %v6739 = vadd.f32 %v6450, %v6738
    %v6740 = vpop.f32.mrf.mxu0
    %v6741 = vpop.f32.mrf.mxu0
    %v6742 = vadd.f32 %v6453, %v6741
    %v6743 = vpop.f32.mrf.mxu0
    %6744 = vmatprep.mubr.bf16.mxu0 %v3866
    %6745 = vmatmul.mubr.bf16.gmra.mxu0 %v3385
    %v6746 = vpop.f32.mrf.mxu0
    %v6747 = vadd.f32 %v6458, %v6746
    %v6748 = vpop.f32.mrf.mxu0
    %v6749 = vpop.f32.mrf.mxu0
    %v6750 = vadd.f32 %v6461, %v6749
    %v6751 = vpop.f32.mrf.mxu0
    %6752 = vmatprep.mubr.bf16.mxu0 %v3867
    %6753 = vmatmul.mubr.bf16.gmra.mxu0 %v3386
    %v6754 = vpop.f32.mrf.mxu0
    %v6755 = vadd.f32 %v6466, %v6754
    %v6756 = vpop.f32.mrf.mxu0
    %v6757 = vpop.f32.mrf.mxu0
    %v6758 = vadd.f32 %v6469, %v6757
    %v6759 = vpop.f32.mrf.mxu0
    %6760 = vdwg.mxu0
    %6761 = vmatprep.subr.bf16.mxu0 0
    %6762 = vmatpush1.bf16.msra.mxu0 %v5805
    %6763 = vmatprep.subr.bf16.mxu0 0
    %6764 = vmatpush1.bf16.msra.mxu0 %v5804
    %6765 = vmatprep.subr.bf16.mxu0 0
    %6766 = vmatpush1.bf16.msra.mxu0 %v5803
    %6767 = vmatprep.subr.bf16.mxu0 0
    %6768 = vmatpush1.bf16.msra.mxu0 %v5802
    %6769 = vmatprep.subr.bf16.mxu0 0
    %6770 = vmatpush1.bf16.msra.mxu0 %v5801
    %6771 = vmatprep.subr.bf16.mxu0 0
    %6772 = vmatpush1.bf16.msra.mxu0 %v5800
    %6773 = vmatprep.subr.bf16.mxu0 0
    %6774 = vmatpush1.bf16.msra.mxu0 %v5799
    %6775 = vmatprep.subr.bf16.mxu0 0
    %6776 = vmatpush1.bf16.msra.mxu0 %v5798
    %6777 = vmatprep.subr.bf16.mxu0 0
    %6778 = vmatpush2.bf16.msra.mxu0 %v5813
    %6779 = vmatprep.subr.bf16.mxu0 0
    %6780 = vmatpush2.bf16.msra.mxu0 %v5812
    %6781 = vmatprep.subr.bf16.mxu0 0
    %6782 = vmatpush2.bf16.msra.mxu0 %v5811
    %6783 = vmatprep.subr.bf16.mxu0 0
    %6784 = vmatpush2.bf16.msra.mxu0 %v5810
    %6785 = vmatprep.subr.bf16.mxu0 0
    %6786 = vmatpush2.bf16.msra.mxu0 %v5809
    %6787 = vmatprep.subr.bf16.mxu0 0
    %6788 = vmatpush2.bf16.msra.mxu0 %v5808
    %6789 = vmatprep.subr.bf16.mxu0 0
    %6790 = vmatpush2.bf16.msra.mxu0 %v5807
    %6791 = vmatprep.subr.bf16.mxu0 0
    %6792 = vmatpush2.bf16.msra.mxu0 %v5806
    %6793 = vmatprep.mubr.bf16.mxu0 %v4798
    %6794 = vmatmul.mubr.bf16.gmra.mxu0 %v4317
    %v6795 = vpop.f32.mrf.mxu0
    %v6796 = vadd.f32 %v6507, %v6795
    %v6797 = vpop.f32.mrf.mxu0
    %v6798 = vpop.f32.mrf.mxu0
    %v6799 = vadd.f32 %v6510, %v6798
    %v6800 = vpop.f32.mrf.mxu0
    %6801 = vmatprep.mubr.bf16.mxu0 %v4799
    %6802 = vmatmul.mubr.bf16.gmra.mxu0 %v4318
    %v6803 = vpop.f32.mrf.mxu0
    %v6804 = vadd.f32 %v6515, %v6803
    %v6805 = vpop.f32.mrf.mxu0
    %v6806 = vpop.f32.mrf.mxu0
    %v6807 = vadd.f32 %v6518, %v6806
    %v6808 = vpop.f32.mrf.mxu0
    %6809 = vmatprep.mubr.bf16.mxu0 %v4800
    %6810 = vmatmul.mubr.bf16.gmra.mxu0 %v4319
    %v6811 = vpop.f32.mrf.mxu0
    %v6812 = vadd.f32 %v6523, %v6811
    %v6813 = vpop.f32.mrf.mxu0
    %v6814 = vpop.f32.mrf.mxu0
    %v6815 = vadd.f32 %v6526, %v6814
    %v6816 = vpop.f32.mrf.mxu0
    %6817 = vmatprep.mubr.bf16.mxu0 %v4801
    %6818 = vmatmul.mubr.bf16.gmra.mxu0 %v4320
    %v6819 = vpop.f32.mrf.mxu0
    %v6820 = vadd.f32 %v6531, %v6819
    %v6821 = vpop.f32.mrf.mxu0
    %v6822 = vpop.f32.mrf.mxu0
    %v6823 = vadd.f32 %v6534, %v6822
    %v6824 = vpop.f32.mrf.mxu0
    %6825 = vmatprep.mubr.bf16.mxu0 %v4802
    %6826 = vmatmul.mubr.bf16.gmra.mxu0 %v4321
    %v6827 = vpop.f32.mrf.mxu0
    %v6828 = vadd.f32 %v6539, %v6827
    %v6829 = vpop.f32.mrf.mxu0
    %v6830 = vpop.f32.mrf.mxu0
    %v6831 = vadd.f32 %v6542, %v6830
    %v6832 = vpop.f32.mrf.mxu0
    %6833 = vmatprep.mubr.bf16.mxu0 %v4803
    %6834 = vmatmul.mubr.bf16.gmra.mxu0 %v4322
    %v6835 = vpop.f32.mrf.mxu0
    %v6836 = vadd.f32 %v6547, %v6835
    %v6837 = vpop.f32.mrf.mxu0
    %v6838 = vpop.f32.mrf.mxu0
    %v6839 = vadd.f32 %v6550, %v6838
    %v6840 = vpop.f32.mrf.mxu0
    %6841 = vmatprep.mubr.bf16.mxu0 %v4804
    %6842 = vmatmul.mubr.bf16.gmra.mxu0 %v4323
    %v6843 = vpop.f32.mrf.mxu0
    %v6844 = vadd.f32 %v6555, %v6843
    %v6845 = vpop.f32.mrf.mxu0
    %v6846 = vpop.f32.mrf.mxu0
    %v6847 = vadd.f32 %v6558, %v6846
    %v6848 = vpop.f32.mrf.mxu0
    %6849 = vmatprep.mubr.bf16.mxu0 %v4805
    %6850 = vmatmul.mubr.bf16.gmra.mxu0 %v4324
    %v6851 = vpop.f32.mrf.mxu0
    %v6852 = vadd.f32 %v6563, %v6851
    %v6853 = vpop.f32.mrf.mxu0
    %v6854 = vpop.f32.mrf.mxu0
    %v6855 = vadd.f32 %v6566, %v6854
    %v6856 = vpop.f32.mrf.mxu0
    %6857 = vmatprep.mubr.bf16.mxu0 %v4806
    %6858 = vmatmul.mubr.bf16.gmra.mxu0 %v4325
    %v6859 = vpop.f32.mrf.mxu0
    %v6860 = vadd.f32 %v6571, %v6859
    %v6861 = vpop.f32.mrf.mxu0
    %v6862 = vpop.f32.mrf.mxu0
    %v6863 = vadd.f32 %v6574, %v6862
    %v6864 = vpop.f32.mrf.mxu0
    %6865 = vmatprep.mubr.bf16.mxu0 %v4807
    %6866 = vmatmul.mubr.bf16.gmra.mxu0 %v4326
    %v6867 = vpop.f32.mrf.mxu0
    %v6868 = vadd.f32 %v6579, %v6867
    %v6869 = vpop.f32.mrf.mxu0
    %v6870 = vpop.f32.mrf.mxu0
    %v6871 = vadd.f32 %v6582, %v6870
    %v6872 = vpop.f32.mrf.mxu0
    %6873 = vmatprep.mubr.bf16.mxu0 %v4808
    %6874 = vmatmul.mubr.bf16.gmra.mxu0 %v4327
    %v6875 = vpop.f32.mrf.mxu0
    %v6876 = vadd.f32 %v6587, %v6875
    %v6877 = vpop.f32.mrf.mxu0
    %v6878 = vpop.f32.mrf.mxu0
    %v6879 = vadd.f32 %v6590, %v6878
    %v6880 = vpop.f32.mrf.mxu0
    %6881 = vmatprep.mubr.bf16.mxu0 %v4809
    %6882 = vmatmul.mubr.bf16.gmra.mxu0 %v4328
    %v6883 = vpop.f32.mrf.mxu0
    %v6884 = vadd.f32 %v6595, %v6883
    %v6885 = vpop.f32.mrf.mxu0
    %v6886 = vpop.f32.mrf.mxu0
    %v6887 = vadd.f32 %v6598, %v6886
    %v6888 = vpop.f32.mrf.mxu0
    %6889 = vmatprep.mubr.bf16.mxu0 %v4810
    %6890 = vmatmul.mubr.bf16.gmra.mxu0 %v4329
    %v6891 = vpop.f32.mrf.mxu0
    %v6892 = vadd.f32 %v6603, %v6891
    %v6893 = vpop.f32.mrf.mxu0
    %v6894 = vpop.f32.mrf.mxu0
    %v6895 = vadd.f32 %v6606, %v6894
    %v6896 = vpop.f32.mrf.mxu0
    %6897 = vmatprep.mubr.bf16.mxu0 %v4811
    %6898 = vmatmul.mubr.bf16.gmra.mxu0 %v4330
    %v6899 = vpop.f32.mrf.mxu0
    %v6900 = vadd.f32 %v6611, %v6899
    %v6901 = vpop.f32.mrf.mxu0
    %v6902 = vpop.f32.mrf.mxu0
    %v6903 = vadd.f32 %v6614, %v6902
    %v6904 = vpop.f32.mrf.mxu0
    %6905 = vmatprep.mubr.bf16.mxu0 %v4812
    %6906 = vmatmul.mubr.bf16.gmra.mxu0 %v4331
    %v6907 = vpop.f32.mrf.mxu0
    %v6908 = vadd.f32 %v6619, %v6907
    %v6909 = vpop.f32.mrf.mxu0
    %v6910 = vpop.f32.mrf.mxu0
    %v6911 = vadd.f32 %v6622, %v6910
    %v6912 = vpop.f32.mrf.mxu0
    %6913 = vmatprep.mubr.bf16.mxu0 %v4813
    %6914 = vmatmul.mubr.bf16.gmra.mxu0 %v4332
    %v6915 = vpop.f32.mrf.mxu0
    %v6916 = vadd.f32 %v6627, %v6915
    %v6917 = vpop.f32.mrf.mxu0
    %v6918 = vpop.f32.mrf.mxu0
    %v6919 = vadd.f32 %v6630, %v6918
    %v6920 = vpop.f32.mrf.mxu0
    %6921 = vmatprep.mubr.bf16.mxu0 %v4814
    %6922 = vmatmul.mubr.bf16.gmra.mxu0 %v4333
    %v6923 = vpop.f32.mrf.mxu0
    %v6924 = vadd.f32 %v6635, %v6923
    %v6925 = vpop.f32.mrf.mxu0
    %v6926 = vpop.f32.mrf.mxu0
    %v6927 = vadd.f32 %v6638, %v6926
    %v6928 = vpop.f32.mrf.mxu0
    %6929 = vmatprep.mubr.bf16.mxu0 %v4815
    %6930 = vmatmul.mubr.bf16.gmra.mxu0 %v4334
    %v6931 = vpop.f32.mrf.mxu0
    %v6932 = vadd.f32 %v6643, %v6931
    %v6933 = vpop.f32.mrf.mxu0
    %v6934 = vpop.f32.mrf.mxu0
    %v6935 = vadd.f32 %v6646, %v6934
    %v6936 = vpop.f32.mrf.mxu0
    %6937 = vmatprep.mubr.bf16.mxu0 %v4816
    %6938 = vmatmul.mubr.bf16.gmra.mxu0 %v4335
    %v6939 = vpop.f32.mrf.mxu0
    %v6940 = vadd.f32 %v6651, %v6939
    %v6941 = vpop.f32.mrf.mxu0
    %v6942 = vpop.f32.mrf.mxu0
    %v6943 = vadd.f32 %v6654, %v6942
    %v6944 = vpop.f32.mrf.mxu0
    %6945 = vmatprep.mubr.bf16.mxu0 %v4817
    %6946 = vmatmul.mubr.bf16.gmra.mxu0 %v4336
    %v6947 = vpop.f32.mrf.mxu0
    %v6948 = vadd.f32 %v6659, %v6947
    %v6949 = vpop.f32.mrf.mxu0
    %v6950 = vpop.f32.mrf.mxu0
    %v6951 = vadd.f32 %v6662, %v6950
    %v6952 = vpop.f32.mrf.mxu0
    %6953 = vmatprep.mubr.bf16.mxu0 %v4818
    %6954 = vmatmul.mubr.bf16.gmra.mxu0 %v4337
    %v6955 = vpop.f32.mrf.mxu0
    %v6956 = vadd.f32 %v6667, %v6955
    %v6957 = vpop.f32.mrf.mxu0
    %v6958 = vpop.f32.mrf.mxu0
    %v6959 = vadd.f32 %v6670, %v6958
    %v6960 = vpop.f32.mrf.mxu0
    %6961 = vmatprep.mubr.bf16.mxu0 %v4819
    %6962 = vmatmul.mubr.bf16.gmra.mxu0 %v4338
    %v6963 = vpop.f32.mrf.mxu0
    %v6964 = vadd.f32 %v6675, %v6963
    %v6965 = vpop.f32.mrf.mxu0
    %v6966 = vpop.f32.mrf.mxu0
    %v6967 = vadd.f32 %v6678, %v6966
    %v6968 = vpop.f32.mrf.mxu0
    %6969 = vmatprep.mubr.bf16.mxu0 %v4820
    %6970 = vmatmul.mubr.bf16.gmra.mxu0 %v4339
    %v6971 = vpop.f32.mrf.mxu0
    %v6972 = vadd.f32 %v6683, %v6971
    %v6973 = vpop.f32.mrf.mxu0
    %v6974 = vpop.f32.mrf.mxu0
    %v6975 = vadd.f32 %v6686, %v6974
    %v6976 = vpop.f32.mrf.mxu0
    %6977 = vmatprep.mubr.bf16.mxu0 %v4821
    %6978 = vmatmul.mubr.bf16.gmra.mxu0 %v4340
    %v6979 = vpop.f32.mrf.mxu0
    %v6980 = vadd.f32 %v6691, %v6979
    %v6981 = vpop.f32.mrf.mxu0
    %v6982 = vpop.f32.mrf.mxu0
    %v6983 = vadd.f32 %v6694, %v6982
    %v6984 = vpop.f32.mrf.mxu0
    %6985 = vmatprep.mubr.bf16.mxu0 %v4822
    %6986 = vmatmul.mubr.bf16.gmra.mxu0 %v4341
    %v6987 = vpop.f32.mrf.mxu0
    %v6988 = vadd.f32 %v6699, %v6987
    %v6989 = vpop.f32.mrf.mxu0
    %v6990 = vpop.f32.mrf.mxu0
    %v6991 = vadd.f32 %v6702, %v6990
    %v6992 = vpop.f32.mrf.mxu0
    %6993 = vmatprep.mubr.bf16.mxu0 %v4823
    %6994 = vmatmul.mubr.bf16.gmra.mxu0 %v4342
    %v6995 = vpop.f32.mrf.mxu0
    %v6996 = vadd.f32 %v6707, %v6995
    %v6997 = vpop.f32.mrf.mxu0
    %v6998 = vpop.f32.mrf.mxu0
    %v6999 = vadd.f32 %v6710, %v6998
    %v7000 = vpop.f32.mrf.mxu0
    %7001 = vmatprep.mubr.bf16.mxu0 %v4824
    %7002 = vmatmul.mubr.bf16.gmra.mxu0 %v4343
    %v7003 = vpop.f32.mrf.mxu0
    %v7004 = vadd.f32 %v6715, %v7003
    %v7005 = vpop.f32.mrf.mxu0
    %v7006 = vpop.f32.mrf.mxu0
    %v7007 = vadd.f32 %v6718, %v7006
    %v7008 = vpop.f32.mrf.mxu0
    %7009 = vmatprep.mubr.bf16.mxu0 %v4825
    %7010 = vmatmul.mubr.bf16.gmra.mxu0 %v4344
    %v7011 = vpop.f32.mrf.mxu0
    %v7012 = vadd.f32 %v6723, %v7011
    %v7013 = vpop.f32.mrf.mxu0
    %v7014 = vpop.f32.mrf.mxu0
    %v7015 = vadd.f32 %v6726, %v7014
    %v7016 = vpop.f32.mrf.mxu0
    %7017 = vmatprep.mubr.bf16.mxu0 %v4826
    %7018 = vmatmul.mubr.bf16.gmra.mxu0 %v4345
    %v7019 = vpop.f32.mrf.mxu0
    %v7020 = vadd.f32 %v6731, %v7019
    %v7021 = vpop.f32.mrf.mxu0
    %v7022 = vpop.f32.mrf.mxu0
    %v7023 = vadd.f32 %v6734, %v7022
    %v7024 = vpop.f32.mrf.mxu0
    %7025 = vmatprep.mubr.bf16.mxu0 %v4827
    %7026 = vmatmul.mubr.bf16.gmra.mxu0 %v4346
    %v7027 = vpop.f32.mrf.mxu0
    %v7028 = vadd.f32 %v6739, %v7027
    %v7029 = vpop.f32.mrf.mxu0
    %v7030 = vpop.f32.mrf.mxu0
    %v7031 = vadd.f32 %v6742, %v7030
    %v7032 = vpop.f32.mrf.mxu0
    %7033 = vmatprep.mubr.bf16.mxu0 %v4828
    %7034 = vmatmul.mubr.bf16.gmra.mxu0 %v4347
    %v7035 = vpop.f32.mrf.mxu0
    %v7036 = vadd.f32 %v6747, %v7035
    %v7037 = vpop.f32.mrf.mxu0
    %v7038 = vpop.f32.mrf.mxu0
    %v7039 = vadd.f32 %v6750, %v7038
    %v7040 = vpop.f32.mrf.mxu0
    %7041 = vmatprep.mubr.bf16.mxu0 %v4829
    %7042 = vmatmul.mubr.bf16.gmra.mxu0 %v4348
    %v7043 = vpop.f32.mrf.mxu0
    %v7044 = vadd.f32 %v6755, %v7043
    %v7045 = vpop.f32.mrf.mxu0
    %v7046 = vpop.f32.mrf.mxu0
    %v7047 = vadd.f32 %v6758, %v7046
    %v7048 = vpop.f32.mrf.mxu0
    %7049 = vdwg.mxu0
    %7050 = vmatprep.subr.bf16.mxu0 0
    %7051 = vmatpush1.bf16.msra.mxu0 %v5821
    %7052 = vmatprep.subr.bf16.mxu0 0
    %7053 = vmatpush1.bf16.msra.mxu0 %v5820
    %7054 = vmatprep.subr.bf16.mxu0 0
    %7055 = vmatpush1.bf16.msra.mxu0 %v5819
    %7056 = vmatprep.subr.bf16.mxu0 0
    %7057 = vmatpush1.bf16.msra.mxu0 %v5818
    %7058 = vmatprep.subr.bf16.mxu0 0
    %7059 = vmatpush1.bf16.msra.mxu0 %v5817
    %7060 = vmatprep.subr.bf16.mxu0 0
    %7061 = vmatpush1.bf16.msra.mxu0 %v5816
    %7062 = vmatprep.subr.bf16.mxu0 0
    %7063 = vmatpush1.bf16.msra.mxu0 %v5815
    %7064 = vmatprep.subr.bf16.mxu0 0
    %7065 = vmatpush1.bf16.msra.mxu0 %v5814
    %7066 = vmatprep.subr.bf16.mxu0 0
    %7067 = vmatpush2.bf16.msra.mxu0 0
    %7068 = vmatprep.subr.bf16.mxu0 0
    %7069 = vmatpush2.bf16.msra.mxu0 0
    %7070 = vmatprep.subr.bf16.mxu0 0
    %7071 = vmatpush2.bf16.msra.mxu0 0
    %7072 = vmatprep.subr.bf16.mxu0 0
    %7073 = vmatpush2.bf16.msra.mxu0 0
    %7074 = vmatprep.subr.bf16.mxu0 0
    %7075 = vmatpush2.bf16.msra.mxu0 0
    %7076 = vmatprep.subr.bf16.mxu0 0
    %7077 = vmatpush2.bf16.msra.mxu0 0
    %7078 = vmatprep.subr.bf16.mxu0 0
    %7079 = vmatpush2.bf16.msra.mxu0 0
    %7080 = vmatprep.subr.bf16.mxu0 0
    %7081 = vmatpush2.bf16.msra.mxu0 0
    %7082 = vmatprep.mubr.bf16.mxu0 0
    %7083 = vmatmul.mubr.bf16.gmra.mxu0 %v5279
    %v7084 = vpop.f32.mrf.mxu0
    %v7085 = vadd.f32 %v6796, %v7084
    %v7086 = vpop.f32.mrf.mxu0
    %v7087 = vpop.f32.mrf.mxu0
    %v7088 = vadd.f32 %v6799, %v7087
    %v7089 = vpop.f32.mrf.mxu0
    %7090 = vmatprep.mubr.bf16.mxu0 0
    %7091 = vmatmul.mubr.bf16.gmra.mxu0 %v5280
    %v7092 = vpop.f32.mrf.mxu0
    %v7093 = vadd.f32 %v6804, %v7092
    %v7094 = vpop.f32.mrf.mxu0
    %v7095 = vpop.f32.mrf.mxu0
    %v7096 = vadd.f32 %v6807, %v7095
    %v7097 = vpop.f32.mrf.mxu0
    %7098 = vmatprep.mubr.bf16.mxu0 0
    %7099 = vmatmul.mubr.bf16.gmra.mxu0 %v5281
    %v7100 = vpop.f32.mrf.mxu0
    %v7101 = vadd.f32 %v6812, %v7100
    %v7102 = vpop.f32.mrf.mxu0
    %v7103 = vpop.f32.mrf.mxu0
    %v7104 = vadd.f32 %v6815, %v7103
    %v7105 = vpop.f32.mrf.mxu0
    %7106 = vmatprep.mubr.bf16.mxu0 0
    %7107 = vmatmul.mubr.bf16.gmra.mxu0 %v5282
    %v7108 = vpop.f32.mrf.mxu0
    %v7109 = vadd.f32 %v6820, %v7108
    %v7110 = vpop.f32.mrf.mxu0
    %v7111 = vpop.f32.mrf.mxu0
    %v7112 = vadd.f32 %v6823, %v7111
    %v7113 = vpop.f32.mrf.mxu0
    %7114 = vmatprep.mubr.bf16.mxu0 0
    %7115 = vmatmul.mubr.bf16.gmra.mxu0 %v5283
    %v7116 = vpop.f32.mrf.mxu0
    %v7117 = vadd.f32 %v6828, %v7116
    %v7118 = vpop.f32.mrf.mxu0
    %v7119 = vpop.f32.mrf.mxu0
    %v7120 = vadd.f32 %v6831, %v7119
    %v7121 = vpop.f32.mrf.mxu0
    %7122 = vmatprep.mubr.bf16.mxu0 0
    %7123 = vmatmul.mubr.bf16.gmra.mxu0 %v5284
    %v7124 = vpop.f32.mrf.mxu0
    %v7125 = vadd.f32 %v6836, %v7124
    %v7126 = vpop.f32.mrf.mxu0
    %v7127 = vpop.f32.mrf.mxu0
    %v7128 = vadd.f32 %v6839, %v7127
    %v7129 = vpop.f32.mrf.mxu0
    %7130 = vmatprep.mubr.bf16.mxu0 0
    %7131 = vmatmul.mubr.bf16.gmra.mxu0 %v5285
    %v7132 = vpop.f32.mrf.mxu0
    %v7133 = vadd.f32 %v6844, %v7132
    %v7134 = vpop.f32.mrf.mxu0
    %v7135 = vpop.f32.mrf.mxu0
    %v7136 = vadd.f32 %v6847, %v7135
    %v7137 = vpop.f32.mrf.mxu0
    %7138 = vmatprep.mubr.bf16.mxu0 0
    %7139 = vmatmul.mubr.bf16.gmra.mxu0 %v5286
    %v7140 = vpop.f32.mrf.mxu0
    %v7141 = vadd.f32 %v6852, %v7140
    %v7142 = vpop.f32.mrf.mxu0
    %v7143 = vpop.f32.mrf.mxu0
    %v7144 = vadd.f32 %v6855, %v7143
    %v7145 = vpop.f32.mrf.mxu0
    %7146 = vmatprep.mubr.bf16.mxu0 0
    %7147 = vmatmul.mubr.bf16.gmra.mxu0 %v5287
    %v7148 = vpop.f32.mrf.mxu0
    %v7149 = vadd.f32 %v6860, %v7148
    %v7150 = vpop.f32.mrf.mxu0
    %v7151 = vpop.f32.mrf.mxu0
    %v7152 = vadd.f32 %v6863, %v7151
    %v7153 = vpop.f32.mrf.mxu0
    %7154 = vmatprep.mubr.bf16.mxu0 0
    %7155 = vmatmul.mubr.bf16.gmra.mxu0 %v5288
    %v7156 = vpop.f32.mrf.mxu0
    %v7157 = vadd.f32 %v6868, %v7156
    %v7158 = vpop.f32.mrf.mxu0
    %v7159 = vpop.f32.mrf.mxu0
    %v7160 = vadd.f32 %v6871, %v7159
    %v7161 = vpop.f32.mrf.mxu0
    %7162 = vmatprep.mubr.bf16.mxu0 0
    %7163 = vmatmul.mubr.bf16.gmra.mxu0 %v5289
    %v7164 = vpop.f32.mrf.mxu0
    %v7165 = vadd.f32 %v6876, %v7164
    %v7166 = vpop.f32.mrf.mxu0
    %v7167 = vpop.f32.mrf.mxu0
    %v7168 = vadd.f32 %v6879, %v7167
    %v7169 = vpop.f32.mrf.mxu0
    %7170 = vmatprep.mubr.bf16.mxu0 0
    %7171 = vmatmul.mubr.bf16.gmra.mxu0 %v5290
    %v7172 = vpop.f32.mrf.mxu0
    %v7173 = vadd.f32 %v6884, %v7172
    %v7174 = vpop.f32.mrf.mxu0
    %v7175 = vpop.f32.mrf.mxu0
    %v7176 = vadd.f32 %v6887, %v7175
    %v7177 = vpop.f32.mrf.mxu0
    %7178 = vmatprep.mubr.bf16.mxu0 0
    %7179 = vmatmul.mubr.bf16.gmra.mxu0 %v5291
    %v7180 = vpop.f32.mrf.mxu0
    %v7181 = vadd.f32 %v6892, %v7180
    %v7182 = vpop.f32.mrf.mxu0
    %v7183 = vpop.f32.mrf.mxu0
    %v7184 = vadd.f32 %v6895, %v7183
    %v7185 = vpop.f32.mrf.mxu0
    %7186 = vmatprep.mubr.bf16.mxu0 0
    %7187 = vmatmul.mubr.bf16.gmra.mxu0 %v5292
    %v7188 = vpop.f32.mrf.mxu0
    %v7189 = vadd.f32 %v6900, %v7188
    %v7190 = vpop.f32.mrf.mxu0
    %v7191 = vpop.f32.mrf.mxu0
    %v7192 = vadd.f32 %v6903, %v7191
    %v7193 = vpop.f32.mrf.mxu0
    %7194 = vmatprep.mubr.bf16.mxu0 0
    %7195 = vmatmul.mubr.bf16.gmra.mxu0 %v5293
    %v7196 = vpop.f32.mrf.mxu0
    %v7197 = vadd.f32 %v6908, %v7196
    %v7198 = vpop.f32.mrf.mxu0
    %v7199 = vpop.f32.mrf.mxu0
    %v7200 = vadd.f32 %v6911, %v7199
    %v7201 = vpop.f32.mrf.mxu0
    %7202 = vmatprep.mubr.bf16.mxu0 0
    %7203 = vmatmul.mubr.bf16.gmra.mxu0 %v5294
    %v7204 = vpop.f32.mrf.mxu0
    %v7205 = vadd.f32 %v6916, %v7204
    %v7206 = vpop.f32.mrf.mxu0
    %v7207 = vpop.f32.mrf.mxu0
    %v7208 = vadd.f32 %v6919, %v7207
    %v7209 = vpop.f32.mrf.mxu0
    %7210 = vmatprep.mubr.bf16.mxu0 0
    %7211 = vmatmul.mubr.bf16.gmra.mxu0 %v5295
    %v7212 = vpop.f32.mrf.mxu0
    %v7213 = vadd.f32 %v6924, %v7212
    %v7214 = vpop.f32.mrf.mxu0
    %v7215 = vpop.f32.mrf.mxu0
    %v7216 = vadd.f32 %v6927, %v7215
    %v7217 = vpop.f32.mrf.mxu0
    %7218 = vmatprep.mubr.bf16.mxu0 0
    %7219 = vmatmul.mubr.bf16.gmra.mxu0 %v5296
    %v7220 = vpop.f32.mrf.mxu0
    %v7221 = vadd.f32 %v6932, %v7220
    %v7222 = vpop.f32.mrf.mxu0
    %v7223 = vpop.f32.mrf.mxu0
    %v7224 = vadd.f32 %v6935, %v7223
    %v7225 = vpop.f32.mrf.mxu0
    %7226 = vmatprep.mubr.bf16.mxu0 0
    %7227 = vmatmul.mubr.bf16.gmra.mxu0 %v5297
    %v7228 = vpop.f32.mrf.mxu0
    %v7229 = vadd.f32 %v6940, %v7228
    %v7230 = vpop.f32.mrf.mxu0
    %v7231 = vpop.f32.mrf.mxu0
    %v7232 = vadd.f32 %v6943, %v7231
    %v7233 = vpop.f32.mrf.mxu0
    %7234 = vmatprep.mubr.bf16.mxu0 0
    %7235 = vmatmul.mubr.bf16.gmra.mxu0 %v5298
    %v7236 = vpop.f32.mrf.mxu0
    %v7237 = vadd.f32 %v6948, %v7236
    %v7238 = vpop.f32.mrf.mxu0
    %v7239 = vpop.f32.mrf.mxu0
    %v7240 = vadd.f32 %v6951, %v7239
    %v7241 = vpop.f32.mrf.mxu0
    %7242 = vmatprep.mubr.bf16.mxu0 0
    %7243 = vmatmul.mubr.bf16.gmra.mxu0 %v5299
    %v7244 = vpop.f32.mrf.mxu0
    %v7245 = vadd.f32 %v6956, %v7244
    %v7246 = vpop.f32.mrf.mxu0
    %v7247 = vpop.f32.mrf.mxu0
    %v7248 = vadd.f32 %v6959, %v7247
    %v7249 = vpop.f32.mrf.mxu0
    %7250 = vmatprep.mubr.bf16.mxu0 0
    %7251 = vmatmul.mubr.bf16.gmra.mxu0 %v5300
    %v7252 = vpop.f32.mrf.mxu0
    %v7253 = vadd.f32 %v6964, %v7252
    %v7254 = vpop.f32.mrf.mxu0
    %v7255 = vpop.f32.mrf.mxu0
    %v7256 = vadd.f32 %v6967, %v7255
    %v7257 = vpop.f32.mrf.mxu0
    %7258 = vmatprep.mubr.bf16.mxu0 0
    %7259 = vmatmul.mubr.bf16.gmra.mxu0 %v5301
    %v7260 = vpop.f32.mrf.mxu0
    %v7261 = vadd.f32 %v6972, %v7260
    %v7262 = vpop.f32.mrf.mxu0
    %v7263 = vpop.f32.mrf.mxu0
    %v7264 = vadd.f32 %v6975, %v7263
    %v7265 = vpop.f32.mrf.mxu0
    %7266 = vmatprep.mubr.bf16.mxu0 0
    %7267 = vmatmul.mubr.bf16.gmra.mxu0 %v5302
    %v7268 = vpop.f32.mrf.mxu0
    %v7269 = vadd.f32 %v6980, %v7268
    %v7270 = vpop.f32.mrf.mxu0
    %v7271 = vpop.f32.mrf.mxu0
    %v7272 = vadd.f32 %v6983, %v7271
    %v7273 = vpop.f32.mrf.mxu0
    %7274 = vmatprep.mubr.bf16.mxu0 0
    %7275 = vmatmul.mubr.bf16.gmra.mxu0 %v5303
    %v7276 = vpop.f32.mrf.mxu0
    %v7277 = vadd.f32 %v6988, %v7276
    %v7278 = vpop.f32.mrf.mxu0
    %v7279 = vpop.f32.mrf.mxu0
    %v7280 = vadd.f32 %v6991, %v7279
    %v7281 = vpop.f32.mrf.mxu0
    %7282 = vmatprep.mubr.bf16.mxu0 0
    %7283 = vmatmul.mubr.bf16.gmra.mxu0 %v5304
    %v7284 = vpop.f32.mrf.mxu0
    %v7285 = vadd.f32 %v6996, %v7284
    %v7286 = vpop.f32.mrf.mxu0
    %v7287 = vpop.f32.mrf.mxu0
    %v7288 = vadd.f32 %v6999, %v7287
    %v7289 = vpop.f32.mrf.mxu0
    %7290 = vmatprep.mubr.bf16.mxu0 0
    %7291 = vmatmul.mubr.bf16.gmra.mxu0 %v5305
    %v7292 = vpop.f32.mrf.mxu0
    %v7293 = vadd.f32 %v7004, %v7292
    %v7294 = vpop.f32.mrf.mxu0
    %v7295 = vpop.f32.mrf.mxu0
    %v7296 = vadd.f32 %v7007, %v7295
    %v7297 = vpop.f32.mrf.mxu0
    %7298 = vmatprep.mubr.bf16.mxu0 0
    %7299 = vmatmul.mubr.bf16.gmra.mxu0 %v5306
    %v7300 = vpop.f32.mrf.mxu0
    %v7301 = vadd.f32 %v7012, %v7300
    %v7302 = vpop.f32.mrf.mxu0
    %v7303 = vpop.f32.mrf.mxu0
    %v7304 = vadd.f32 %v7015, %v7303
    %v7305 = vpop.f32.mrf.mxu0
    %7306 = vmatprep.mubr.bf16.mxu0 0
    %7307 = vmatmul.mubr.bf16.gmra.mxu0 %v5307
    %v7308 = vpop.f32.mrf.mxu0
    %v7309 = vadd.f32 %v7020, %v7308
    %v7310 = vpop.f32.mrf.mxu0
    %v7311 = vpop.f32.mrf.mxu0
    %v7312 = vadd.f32 %v7023, %v7311
    %v7313 = vpop.f32.mrf.mxu0
    %7314 = vmatprep.mubr.bf16.mxu0 0
    %7315 = vmatmul.mubr.bf16.gmra.mxu0 %v5308
    %v7316 = vpop.f32.mrf.mxu0
    %v7317 = vadd.f32 %v7028, %v7316
    %v7318 = vpop.f32.mrf.mxu0
    %v7319 = vpop.f32.mrf.mxu0
    %v7320 = vadd.f32 %v7031, %v7319
    %v7321 = vpop.f32.mrf.mxu0
    %7322 = vmatprep.mubr.bf16.mxu0 0
    %7323 = vmatmul.mubr.bf16.gmra.mxu0 %v5309
    %v7324 = vpop.f32.mrf.mxu0
    %v7325 = vadd.f32 %v7036, %v7324
    %v7326 = vpop.f32.mrf.mxu0
    %v7327 = vpop.f32.mrf.mxu0
    %v7328 = vadd.f32 %v7039, %v7327
    %v7329 = vpop.f32.mrf.mxu0
    %7330 = vmatprep.mubr.bf16.mxu0 0
    %7331 = vmatmul.mubr.bf16.gmra.mxu0 %v5310
    %v7332 = vpop.f32.mrf.mxu0
    %v7333 = vadd.f32 %v7044, %v7332
    %v7334 = vpop.f32.mrf.mxu0
    %v7335 = vpop.f32.mrf.mxu0
    %v7336 = vadd.f32 %v7047, %v7335
    %v7337 = vpop.f32.mrf.mxu0
    %7338 = vdwg.mxu0
    %v7339 = vmax.f32 %v7085, 0.0
    %v7340 = vmax.f32 %v7088, 0.0
    %v7341 = vmax.f32 %v7093, 0.0
    %v7342 = vmax.f32 %v7096, 0.0
    %v7343 = vmax.f32 %v7101, 0.0
    %v7344 = vmax.f32 %v7104, 0.0
    %v7345 = vmax.f32 %v7109, 0.0
    %v7346 = vmax.f32 %v7112, 0.0
    %v7347 = vmax.f32 %v7117, 0.0
    %v7348 = vmax.f32 %v7120, 0.0
    %v7349 = vmax.f32 %v7125, 0.0
    %v7350 = vmax.f32 %v7128, 0.0
    %v7351 = vmax.f32 %v7133, 0.0
    %v7352 = vmax.f32 %v7136, 0.0
    %v7353 = vmax.f32 %v7141, 0.0
    %v7354 = vmax.f32 %v7144, 0.0
    %v7355 = vmax.f32 %v7149, 0.0
    %v7356 = vmax.f32 %v7152, 0.0
    %v7357 = vmax.f32 %v7157, 0.0
    %v7358 = vmax.f32 %v7160, 0.0
    %v7359 = vmax.f32 %v7165, 0.0
    %v7360 = vmax.f32 %v7168, 0.0
    %v7361 = vmax.f32 %v7173, 0.0
    %v7362 = vmax.f32 %v7176, 0.0
    %v7363 = vmax.f32 %v7181, 0.0
    %v7364 = vmax.f32 %v7184, 0.0
    %v7365 = vmax.f32 %v7189, 0.0
    %v7366 = vmax.f32 %v7192, 0.0
    %v7367 = vmax.f32 %v7197, 0.0
    %v7368 = vmax.f32 %v7200, 0.0
    %v7369 = vmax.f32 %v7205, 0.0
    %v7370 = vmax.f32 %v7208, 0.0
    %v7371 = vmax.f32 %v7213, 0.0
    %v7372 = vmax.f32 %v7216, 0.0
    %v7373 = vmax.f32 %v7221, 0.0
    %v7374 = vmax.f32 %v7224, 0.0
    %v7375 = vmax.f32 %v7229, 0.0
    %v7376 = vmax.f32 %v7232, 0.0
    %v7377 = vmax.f32 %v7237, 0.0
    %v7378 = vmax.f32 %v7240, 0.0
    %v7379 = vmax.f32 %v7245, 0.0
    %v7380 = vmax.f32 %v7248, 0.0
    %v7381 = vmax.f32 %v7253, 0.0
    %v7382 = vmax.f32 %v7256, 0.0
    %v7383 = vmax.f32 %v7261, 0.0
    %v7384 = vmax.f32 %v7264, 0.0
    %v7385 = vmax.f32 %v7269, 0.0
    %v7386 = vmax.f32 %v7272, 0.0
    %v7387 = vmax.f32 %v7277, 0.0
    %v7388 = vmax.f32 %v7280, 0.0
    %v7389 = vmax.f32 %v7285, 0.0
    %v7390 = vmax.f32 %v7288, 0.0
    %v7391 = vmax.f32 %v7293, 0.0
    %v7392 = vmax.f32 %v7296, 0.0
    %v7393 = vmax.f32 %v7301, 0.0
    %v7394 = vmax.f32 %v7304, 0.0
    %v7395 = vmax.f32 %v7309, 0.0
    %v7396 = vmax.f32 %v7312, 0.0
    %v7397 = vmax.f32 %v7317, 0.0
    %v7398 = vmax.f32 %v7320, 0.0
    %v7399 = vmax.f32 %v7325, 0.0
    %v7400 = vmax.f32 %v7328, 0.0
    %v7401 = vmax.f32 %v7333, 0.0
    %v7402 = vmax.f32 %v7336, 0.0
    %v7403 = vrot.slane %v7339, 7
    %v7404 = vrot.slane %v7340, 7
    %v7405 = vrot.slane %v7341, 7
    %v7406 = vrot.slane %v7342, 7
    %v7407 = vrot.slane %v7343, 7
    %v7408 = vrot.slane %v7344, 7
    %v7409 = vrot.slane %v7345, 7
    %v7410 = vrot.slane %v7346, 7
    %v7411 = vrot.slane %v7347, 7
    %v7412 = vrot.slane %v7348, 7
    %v7413 = vrot.slane %v7349, 7
    %v7414 = vrot.slane %v7350, 7
    %v7415 = vrot.slane %v7351, 7
    %v7416 = vrot.slane %v7352, 7
    %v7417 = vrot.slane %v7353, 7
    %v7418 = vrot.slane %v7354, 7
    %v7419 = vrot.slane %v7355, 7
    %v7420 = vrot.slane %v7356, 7
    %v7421 = vrot.slane %v7357, 7
    %v7422 = vrot.slane %v7358, 7
    %v7423 = vrot.slane %v7359, 7
    %v7424 = vrot.slane %v7360, 7
    %v7425 = vrot.slane %v7361, 7
    %v7426 = vrot.slane %v7362, 7
    %v7427 = vrot.slane %v7363, 7
    %v7428 = vrot.slane %v7364, 7
    %v7429 = vrot.slane %v7365, 7
    %v7430 = vrot.slane %v7366, 7
    %v7431 = vrot.slane %v7367, 7
    %v7432 = vrot.slane %v7368, 7
    %v7433 = vrot.slane %v7369, 7
    %v7434 = vrot.slane %v7370, 7
    %v7435 = vrot.slane %v7371, 7
    %v7436 = vrot.slane %v7372, 7
    %v7437 = vrot.slane %v7373, 7
    %v7438 = vrot.slane %v7374, 7
    %v7439 = vrot.slane %v7375, 7
    %v7440 = vrot.slane %v7376, 7
    %v7441 = vrot.slane %v7377, 7
    %v7442 = vrot.slane %v7378, 7
    %v7443 = vrot.slane %v7379, 7
    %v7444 = vrot.slane %v7380, 7
    %v7445 = vrot.slane %v7381, 7
    %v7446 = vrot.slane %v7382, 7
    %v7447 = vrot.slane %v7383, 7
    %v7448 = vrot.slane %v7384, 7
    %v7449 = vrot.slane %v7385, 7
    %v7450 = vrot.slane %v7386, 7
    %v7451 = vrot.slane %v7387, 7
    %v7452 = vrot.slane %v7388, 7
    %v7453 = vrot.slane %v7389, 7
    %v7454 = vrot.slane %v7390, 7
    %v7455 = vrot.slane %v7391, 7
    %v7456 = vrot.slane %v7392, 7
    %v7457 = vrot.slane %v7393, 7
    %v7458 = vrot.slane %v7394, 7
    %v7459 = vrot.slane %v7395, 7
    %v7460 = vrot.slane %v7396, 7
    %v7461 = vrot.slane %v7397, 7
    %v7462 = vrot.slane %v7398, 7
    %v7463 = vrot.slane %v7399, 7
    %v7464 = vrot.slane %v7400, 7
    %v7465 = vrot.slane %v7401, 7
    %v7466 = vrot.slane %v7402, 7
    %v7467 = vsel %vm789, %v7465, %v7466
    %v7468 = vsel %vm789, %v7464, %v7465
    %v7469 = vsel %vm789, %v7463, %v7464
    %v7470 = vsel %vm789, %v7462, %v7463
    %v7471 = vsel %vm789, %v7461, %v7462
    %v7472 = vsel %vm789, %v7460, %v7461
    %v7473 = vsel %vm789, %v7459, %v7460
    %v7474 = vsel %vm789, %v7458, %v7459
    %v7475 = vsel %vm789, %v7457, %v7458
    %v7476 = vsel %vm789, %v7456, %v7457
    %v7477 = vsel %vm789, %v7455, %v7456
    %v7478 = vsel %vm789, %v7454, %v7455
    %v7479 = vsel %vm789, %v7453, %v7454
    %v7480 = vsel %vm789, %v7452, %v7453
    %v7481 = vsel %vm789, %v7451, %v7452
    %v7482 = vsel %vm789, %v7450, %v7451
    %v7483 = vsel %vm789, %v7449, %v7450
    %v7484 = vsel %vm789, %v7448, %v7449
    %v7485 = vsel %vm789, %v7447, %v7448
    %v7486 = vsel %vm789, %v7446, %v7447
    %v7487 = vsel %vm789, %v7445, %v7446
    %v7488 = vsel %vm789, %v7444, %v7445
    %v7489 = vsel %vm789, %v7443, %v7444
    %v7490 = vsel %vm789, %v7442, %v7443
    %v7491 = vsel %vm789, %v7441, %v7442
    %v7492 = vsel %vm789, %v7440, %v7441
    %v7493 = vsel %vm789, %v7439, %v7440
    %v7494 = vsel %vm789, %v7438, %v7439
    %v7495 = vsel %vm789, %v7437, %v7438
    %v7496 = vsel %vm789, %v7436, %v7437
    %v7497 = vsel %vm789, %v7435, %v7436
    %v7498 = vsel %vm789, %v7434, %v7435
    %v7499 = vsel %vm789, %v7433, %v7434
    %v7500 = vsel %vm789, %v7432, %v7433
    %v7501 = vsel %vm789, %v7431, %v7432
    %v7502 = vsel %vm789, %v7430, %v7431
    %v7503 = vsel %vm789, %v7429, %v7430
    %v7504 = vsel %vm789, %v7428, %v7429
    %v7505 = vsel %vm789, %v7427, %v7428
    %v7506 = vsel %vm789, %v7426, %v7427
    %v7507 = vsel %vm789, %v7425, %v7426
    %v7508 = vsel %vm789, %v7424, %v7425
    %v7509 = vsel %vm789, %v7423, %v7424
    %v7510 = vsel %vm789, %v7422, %v7423
    %v7511 = vsel %vm789, %v7421, %v7422
    %v7512 = vsel %vm789, %v7420, %v7421
    %v7513 = vsel %vm789, %v7419, %v7420
    %v7514 = vsel %vm789, %v7418, %v7419
    %v7515 = vsel %vm789, %v7417, %v7418
    %v7516 = vsel %vm789, %v7416, %v7417
    %v7517 = vsel %vm789, %v7415, %v7416
    %v7518 = vsel %vm789, %v7414, %v7415
    %v7519 = vsel %vm789, %v7413, %v7414
    %v7520 = vsel %vm789, %v7412, %v7413
    %v7521 = vsel %vm789, %v7411, %v7412
    %v7522 = vsel %vm789, %v7410, %v7411
    %v7523 = vsel %vm789, %v7409, %v7410
    %v7524 = vsel %vm789, %v7408, %v7409
    %v7525 = vsel %vm789, %v7407, %v7408
    %v7526 = vsel %vm789, %v7406, %v7407
    %v7527 = vsel %vm789, %v7405, %v7406
    %v7528 = vsel %vm789, %v7404, %v7405
    %v7529 = vsel %vm789, %v7403, %v7404
    %v7530 = vsel %vm789, %v7466, %v7403
    %v7531 = vmul.f32 %v7468, %v921
    %v7532 = vmul.f32 %v7467, %v926
    %v7533 = vmul.f32 %v7530, %v931
    %v7534 = vmul.f32 %v7529, %v936
    %v7535 = vmul.f32 %v7528, %v941
    %v7536 = vmul.f32 %v7527, %v946
    %v7537 = vmul.f32 %v7526, %v951
    %v7538 = vmul.f32 %v7525, %v956
    %v7539 = vmul.f32 %v7524, %v961
    %v7540 = vmul.f32 %v7523, %v966
    %v7541 = vmul.f32 %v7522, %v971
    %v7542 = vmul.f32 %v7521, %v976
    %v7543 = vmul.f32 %v7520, %v981
    %v7544 = vmul.f32 %v7519, %v986
    %v7545 = vmul.f32 %v7518, %v991
    %v7546 = vmul.f32 %v7517, %v996
    %v7547 = vmul.f32 %v7516, %v1001
    %v7548 = vmul.f32 %v7515, %v1006
    %v7549 = vmul.f32 %v7514, %v1011
    %v7550 = vmul.f32 %v7513, %v1016
    %v7551 = vmul.f32 %v7512, %v1021
    %v7552 = vmul.f32 %v7511, %v1026
    %v7553 = vmul.f32 %v7510, %v1031
    %v7554 = vmul.f32 %v7509, %v1036
    %v7555 = vmul.f32 %v7508, %v1041
    %v7556 = vmul.f32 %v7507, %v1046
    %v7557 = vmul.f32 %v7506, %v1051
    %v7558 = vmul.f32 %v7505, %v1056
    %v7559 = vmul.f32 %v7504, %v1061
    %v7560 = vmul.f32 %v7503, %v1066
    %v7561 = vmul.f32 %v7502, %v1071
    %v7562 = vmul.f32 %v7501, %v1076
    %v7563 = vmul.f32 %v7500, %v1081
    %v7564 = vmul.f32 %v7499, %v1086
    %v7565 = vmul.f32 %v7498, %v1091
    %v7566 = vmul.f32 %v7497, %v1096
    %v7567 = vmul.f32 %v7496, %v1101
    %v7568 = vmul.f32 %v7495, %v1106
    %v7569 = vmul.f32 %v7494, %v1111
    %v7570 = vmul.f32 %v7493, %v1116
    %v7571 = vmul.f32 %v7492, %v1121
    %v7572 = vmul.f32 %v7491, %v1126
    %v7573 = vmul.f32 %v7490, %v1131
    %v7574 = vmul.f32 %v7489, %v1136
    %v7575 = vmul.f32 %v7488, %v1141
    %v7576 = vmul.f32 %v7487, %v1146
    %v7577 = vmul.f32 %v7486, %v1151
    %v7578 = vmul.f32 %v7485, %v1156
    %v7579 = vmul.f32 %v7484, %v1161
    %v7580 = vmul.f32 %v7483, %v1166
    %v7581 = vmul.f32 %v7482, %v1171
    %v7582 = vmul.f32 %v7481, %v1176
    %v7583 = vmul.f32 %v7480, %v1181
    %v7584 = vmul.f32 %v7479, %v1186
    %v7585 = vmul.f32 %v7478, %v1191
    %v7586 = vmul.f32 %v7477, %v1196
    %v7587 = vmul.f32 %v7476, %v1201
    %v7588 = vmul.f32 %v7475, %v1206
    %v7589 = vmul.f32 %v7474, %v1211
    %v7590 = vmul.f32 %v7473, %v1216
    %v7591 = vmul.f32 %v7472, %v1221
    %v7592 = vmul.f32 %v7471, %v1226
    %v7593 = vmul.f32 %v7470, %v1231
    %v7594 = vmul.f32 %v7469, %v1236
    %v7595 = vpack.c.bf16 %v7532, %v7531
    %v7596 = vpack.c.bf16 %v7534, %v7533
    %v7597 = vpack.c.bf16 %v7536, %v7535
    %v7598 = vpack.c.bf16 %v7538, %v7537
    %v7599 = vpack.c.bf16 %v7540, %v7539
    %v7600 = vpack.c.bf16 %v7542, %v7541
    %v7601 = vpack.c.bf16 %v7544, %v7543
    %v7602 = vpack.c.bf16 %v7546, %v7545
    %v7603 = vpack.c.bf16 %v7548, %v7547
    %v7604 = vpack.c.bf16 %v7550, %v7549
    %v7605 = vpack.c.bf16 %v7552, %v7551
    %v7606 = vpack.c.bf16 %v7554, %v7553
    %v7607 = vpack.c.bf16 %v7556, %v7555
    %v7608 = vpack.c.bf16 %v7558, %v7557
    %v7609 = vpack.c.bf16 %v7560, %v7559
    %v7610 = vpack.c.bf16 %v7562, %v7561
    %v7611 = vpack.c.bf16 %v7564, %v7563
    %v7612 = vpack.c.bf16 %v7566, %v7565
    %v7613 = vpack.c.bf16 %v7568, %v7567
    %v7614 = vpack.c.bf16 %v7570, %v7569
    %v7615 = vpack.c.bf16 %v7572, %v7571
    %v7616 = vpack.c.bf16 %v7574, %v7573
    %v7617 = vpack.c.bf16 %v7576, %v7575
    %v7618 = vpack.c.bf16 %v7578, %v7577
    %v7619 = vpack.c.bf16 %v7580, %v7579
    %v7620 = vpack.c.bf16 %v7582, %v7581
    %v7621 = vpack.c.bf16 %v7584, %v7583
    %v7622 = vpack.c.bf16 %v7586, %v7585
    %v7623 = vpack.c.bf16 %v7588, %v7587
    %v7624 = vpack.c.bf16 %v7590, %v7589
    %v7625 = vpack.c.bf16 %v7592, %v7591
    %v7626 = vpack.c.bf16 %v7594, %v7593
    %v7627 = vmul.f32 %v7401, %v1402
    %v7628 = vmul.f32 %v7402, %v1407
    %v7629 = vmul.f32 %v7339, %v1412
    %v7630 = vmul.f32 %v7340, %v1417
    %v7631 = vmul.f32 %v7341, %v1422
    %v7632 = vmul.f32 %v7342, %v1427
    %v7633 = vmul.f32 %v7343, %v1432
    %v7634 = vmul.f32 %v7344, %v1437
    %v7635 = vmul.f32 %v7345, %v1442
    %v7636 = vmul.f32 %v7346, %v1447
    %v7637 = vmul.f32 %v7347, %v1452
    %v7638 = vmul.f32 %v7348, %v1457
    %v7639 = vmul.f32 %v7349, %v1462
    %v7640 = vmul.f32 %v7350, %v1467
    %v7641 = vmul.f32 %v7351, %v1472
    %v7642 = vmul.f32 %v7352, %v1477
    %v7643 = vmul.f32 %v7353, %v1482
    %v7644 = vmul.f32 %v7354, %v1487
    %v7645 = vmul.f32 %v7355, %v1492
    %v7646 = vmul.f32 %v7356, %v1497
    %v7647 = vmul.f32 %v7357, %v1502
    %v7648 = vmul.f32 %v7358, %v1507
    %v7649 = vmul.f32 %v7359, %v1512
    %v7650 = vmul.f32 %v7360, %v1517
    %v7651 = vmul.f32 %v7361, %v1522
    %v7652 = vmul.f32 %v7362, %v1527
    %v7653 = vmul.f32 %v7363, %v1532
    %v7654 = vmul.f32 %v7364, %v1537
    %v7655 = vmul.f32 %v7365, %v1542
    %v7656 = vmul.f32 %v7366, %v1547
    %v7657 = vmul.f32 %v7367, %v1552
    %v7658 = vmul.f32 %v7368, %v1557
    %v7659 = vmul.f32 %v7369, %v1562
    %v7660 = vmul.f32 %v7370, %v1567
    %v7661 = vmul.f32 %v7371, %v1572
    %v7662 = vmul.f32 %v7372, %v1577
    %v7663 = vmul.f32 %v7373, %v1582
    %v7664 = vmul.f32 %v7374, %v1587
    %v7665 = vmul.f32 %v7375, %v1592
    %v7666 = vmul.f32 %v7376, %v1597
    %v7667 = vmul.f32 %v7377, %v1602
    %v7668 = vmul.f32 %v7378, %v1607
    %v7669 = vmul.f32 %v7379, %v1612
    %v7670 = vmul.f32 %v7380, %v1617
    %v7671 = vmul.f32 %v7381, %v1622
    %v7672 = vmul.f32 %v7382, %v1627
    %v7673 = vmul.f32 %v7383, %v1632
    %v7674 = vmul.f32 %v7384, %v1637
    %v7675 = vmul.f32 %v7385, %v1642
    %v7676 = vmul.f32 %v7386, %v1647
    %v7677 = vmul.f32 %v7387, %v1652
    %v7678 = vmul.f32 %v7388, %v1657
    %v7679 = vmul.f32 %v7389, %v1662
    %v7680 = vmul.f32 %v7390, %v1667
    %v7681 = vmul.f32 %v7391, %v1672
    %v7682 = vmul.f32 %v7392, %v1677
    %v7683 = vmul.f32 %v7393, %v1682
    %v7684 = vmul.f32 %v7394, %v1687
    %v7685 = vmul.f32 %v7395, %v1692
    %v7686 = vmul.f32 %v7396, %v1697
    %v7687 = vmul.f32 %v7397, %v1702
    %v7688 = vmul.f32 %v7398, %v1707
    %v7689 = vmul.f32 %v7399, %v1712
    %v7690 = vmul.f32 %v7400, %v1717
    %v7691 = vpack.c.bf16 %v7628, %v7627
    %v7692 = vpack.c.bf16 %v7630, %v7629
    %v7693 = vpack.c.bf16 %v7632, %v7631
    %v7694 = vpack.c.bf16 %v7634, %v7633
    %v7695 = vpack.c.bf16 %v7636, %v7635
    %v7696 = vpack.c.bf16 %v7638, %v7637
    %v7697 = vpack.c.bf16 %v7640, %v7639
    %v7698 = vpack.c.bf16 %v7642, %v7641
    %v7699 = vpack.c.bf16 %v7644, %v7643
    %v7700 = vpack.c.bf16 %v7646, %v7645
    %v7701 = vpack.c.bf16 %v7648, %v7647
    %v7702 = vpack.c.bf16 %v7650, %v7649
    %v7703 = vpack.c.bf16 %v7652, %v7651
    %v7704 = vpack.c.bf16 %v7654, %v7653
    %v7705 = vpack.c.bf16 %v7656, %v7655
    %v7706 = vpack.c.bf16 %v7658, %v7657
    %v7707 = vpack.c.bf16 %v7660, %v7659
    %v7708 = vpack.c.bf16 %v7662, %v7661
    %v7709 = vpack.c.bf16 %v7664, %v7663
    %v7710 = vpack.c.bf16 %v7666, %v7665
    %v7711 = vpack.c.bf16 %v7668, %v7667
    %v7712 = vpack.c.bf16 %v7670, %v7669
    %v7713 = vpack.c.bf16 %v7672, %v7671
    %v7714 = vpack.c.bf16 %v7674, %v7673
    %v7715 = vpack.c.bf16 %v7676, %v7675
    %v7716 = vpack.c.bf16 %v7678, %v7677
    %v7717 = vpack.c.bf16 %v7680, %v7679
    %v7718 = vpack.c.bf16 %v7682, %v7681
    %v7719 = vpack.c.bf16 %v7684, %v7683
    %v7720 = vpack.c.bf16 %v7686, %v7685
    %v7721 = vpack.c.bf16 %v7688, %v7687
    %v7722 = vpack.c.bf16 %v7690, %v7689
    %v7723 = vrot.slane %v7339, 1
    %v7724 = vrot.slane %v7340, 1
    %v7725 = vrot.slane %v7341, 1
    %v7726 = vrot.slane %v7342, 1
    %v7727 = vrot.slane %v7343, 1
    %v7728 = vrot.slane %v7344, 1
    %v7729 = vrot.slane %v7345, 1
    %v7730 = vrot.slane %v7346, 1
    %v7731 = vrot.slane %v7347, 1
    %v7732 = vrot.slane %v7348, 1
    %v7733 = vrot.slane %v7349, 1
    %v7734 = vrot.slane %v7350, 1
    %v7735 = vrot.slane %v7351, 1
    %v7736 = vrot.slane %v7352, 1
    %v7737 = vrot.slane %v7353, 1
    %v7738 = vrot.slane %v7354, 1
    %v7739 = vrot.slane %v7355, 1
    %v7740 = vrot.slane %v7356, 1
    %v7741 = vrot.slane %v7357, 1
    %v7742 = vrot.slane %v7358, 1
    %v7743 = vrot.slane %v7359, 1
    %v7744 = vrot.slane %v7360, 1
    %v7745 = vrot.slane %v7361, 1
    %v7746 = vrot.slane %v7362, 1
    %v7747 = vrot.slane %v7363, 1
    %v7748 = vrot.slane %v7364, 1
    %v7749 = vrot.slane %v7365, 1
    %v7750 = vrot.slane %v7366, 1
    %v7751 = vrot.slane %v7367, 1
    %v7752 = vrot.slane %v7368, 1
    %v7753 = vrot.slane %v7369, 1
    %v7754 = vrot.slane %v7370, 1
    %v7755 = vrot.slane %v7371, 1
    %v7756 = vrot.slane %v7372, 1
    %v7757 = vrot.slane %v7373, 1
    %v7758 = vrot.slane %v7374, 1
    %v7759 = vrot.slane %v7375, 1
    %v7760 = vrot.slane %v7376, 1
    %v7761 = vrot.slane %v7377, 1
    %v7762 = vrot.slane %v7378, 1
    %v7763 = vrot.slane %v7379, 1
    %v7764 = vrot.slane %v7380, 1
    %v7765 = vrot.slane %v7381, 1
    %v7766 = vrot.slane %v7382, 1
    %v7767 = vrot.slane %v7383, 1
    %v7768 = vrot.slane %v7384, 1
    %v7769 = vrot.slane %v7385, 1
    %v7770 = vrot.slane %v7386, 1
    %v7771 = vrot.slane %v7387, 1
    %v7772 = vrot.slane %v7388, 1
    %v7773 = vrot.slane %v7389, 1
    %v7774 = vrot.slane %v7390, 1
    %v7775 = vrot.slane %v7391, 1
    %v7776 = vrot.slane %v7392, 1
    %v7777 = vrot.slane %v7393, 1
    %v7778 = vrot.slane %v7394, 1
    %v7779 = vrot.slane %v7395, 1
    %v7780 = vrot.slane %v7396, 1
    %v7781 = vrot.slane %v7397, 1
    %v7782 = vrot.slane %v7398, 1
    %v7783 = vrot.slane %v7399, 1
    %v7784 = vrot.slane %v7400, 1
    %v7785 = vrot.slane %v7401, 1
    %v7786 = vrot.slane %v7402, 1
    %v7787 = vsel %vm1879, %v7785, %v7786
    %v7788 = vsel %vm1879, %v7784, %v7785
    %v7789 = vsel %vm1879, %v7783, %v7784
    %v7790 = vsel %vm1879, %v7782, %v7783
    %v7791 = vsel %vm1879, %v7781, %v7782
    %v7792 = vsel %vm1879, %v7780, %v7781
    %v7793 = vsel %vm1879, %v7779, %v7780
    %v7794 = vsel %vm1879, %v7778, %v7779
    %v7795 = vsel %vm1879, %v7777, %v7778
    %v7796 = vsel %vm1879, %v7776, %v7777
    %v7797 = vsel %vm1879, %v7775, %v7776
    %v7798 = vsel %vm1879, %v7774, %v7775
    %v7799 = vsel %vm1879, %v7773, %v7774
    %v7800 = vsel %vm1879, %v7772, %v7773
    %v7801 = vsel %vm1879, %v7771, %v7772
    %v7802 = vsel %vm1879, %v7770, %v7771
    %v7803 = vsel %vm1879, %v7769, %v7770
    %v7804 = vsel %vm1879, %v7768, %v7769
    %v7805 = vsel %vm1879, %v7767, %v7768
    %v7806 = vsel %vm1879, %v7766, %v7767
    %v7807 = vsel %vm1879, %v7765, %v7766
    %v7808 = vsel %vm1879, %v7764, %v7765
    %v7809 = vsel %vm1879, %v7763, %v7764
    %v7810 = vsel %vm1879, %v7762, %v7763
    %v7811 = vsel %vm1879, %v7761, %v7762
    %v7812 = vsel %vm1879, %v7760, %v7761
    %v7813 = vsel %vm1879, %v7759, %v7760
    %v7814 = vsel %vm1879, %v7758, %v7759
    %v7815 = vsel %vm1879, %v7757, %v7758
    %v7816 = vsel %vm1879, %v7756, %v7757
    %v7817 = vsel %vm1879, %v7755, %v7756
    %v7818 = vsel %vm1879, %v7754, %v7755
    %v7819 = vsel %vm1879, %v7753, %v7754
    %v7820 = vsel %vm1879, %v7752, %v7753
    %v7821 = vsel %vm1879, %v7751, %v7752
    %v7822 = vsel %vm1879, %v7750, %v7751
    %v7823 = vsel %vm1879, %v7749, %v7750
    %v7824 = vsel %vm1879, %v7748, %v7749
    %v7825 = vsel %vm1879, %v7747, %v7748
    %v7826 = vsel %vm1879, %v7746, %v7747
    %v7827 = vsel %vm1879, %v7745, %v7746
    %v7828 = vsel %vm1879, %v7744, %v7745
    %v7829 = vsel %vm1879, %v7743, %v7744
    %v7830 = vsel %vm1879, %v7742, %v7743
    %v7831 = vsel %vm1879, %v7741, %v7742
    %v7832 = vsel %vm1879, %v7740, %v7741
    %v7833 = vsel %vm1879, %v7739, %v7740
    %v7834 = vsel %vm1879, %v7738, %v7739
    %v7835 = vsel %vm1879, %v7737, %v7738
    %v7836 = vsel %vm1879, %v7736, %v7737
    %v7837 = vsel %vm1879, %v7735, %v7736
    %v7838 = vsel %vm1879, %v7734, %v7735
    %v7839 = vsel %vm1879, %v7733, %v7734
    %v7840 = vsel %vm1879, %v7732, %v7733
    %v7841 = vsel %vm1879, %v7731, %v7732
    %v7842 = vsel %vm1879, %v7730, %v7731
    %v7843 = vsel %vm1879, %v7729, %v7730
    %v7844 = vsel %vm1879, %v7728, %v7729
    %v7845 = vsel %vm1879, %v7727, %v7728
    %v7846 = vsel %vm1879, %v7726, %v7727
    %v7847 = vsel %vm1879, %v7725, %v7726
    %v7848 = vsel %vm1879, %v7724, %v7725
    %v7849 = vsel %vm1879, %v7723, %v7724
    %v7850 = vsel %vm1879, %v7786, %v7723
    %v7851 = vmul.f32 %v7787, %v2012
    %v7852 = vmul.f32 %v7850, %v2017
    %v7853 = vmul.f32 %v7849, %v2022
    %v7854 = vmul.f32 %v7848, %v2027
    %v7855 = vmul.f32 %v7847, %v2032
    %v7856 = vmul.f32 %v7846, %v2037
    %v7857 = vmul.f32 %v7845, %v2042
    %v7858 = vmul.f32 %v7844, %v2047
    %v7859 = vmul.f32 %v7843, %v2052
    %v7860 = vmul.f32 %v7842, %v2057
    %v7861 = vmul.f32 %v7841, %v2062
    %v7862 = vmul.f32 %v7840, %v2067
    %v7863 = vmul.f32 %v7839, %v2072
    %v7864 = vmul.f32 %v7838, %v2077
    %v7865 = vmul.f32 %v7837, %v2082
    %v7866 = vmul.f32 %v7836, %v2087
    %v7867 = vmul.f32 %v7835, %v2092
    %v7868 = vmul.f32 %v7834, %v2097
    %v7869 = vmul.f32 %v7833, %v2102
    %v7870 = vmul.f32 %v7832, %v2107
    %v7871 = vmul.f32 %v7831, %v2112
    %v7872 = vmul.f32 %v7830, %v2117
    %v7873 = vmul.f32 %v7829, %v2122
    %v7874 = vmul.f32 %v7828, %v2127
    %v7875 = vmul.f32 %v7827, %v2132
    %v7876 = vmul.f32 %v7826, %v2137
    %v7877 = vmul.f32 %v7825, %v2142
    %v7878 = vmul.f32 %v7824, %v2147
    %v7879 = vmul.f32 %v7823, %v2152
    %v7880 = vmul.f32 %v7822, %v2157
    %v7881 = vmul.f32 %v7821, %v2162
    %v7882 = vmul.f32 %v7820, %v2167
    %v7883 = vmul.f32 %v7819, %v2172
    %v7884 = vmul.f32 %v7818, %v2177
    %v7885 = vmul.f32 %v7817, %v2182
    %v7886 = vmul.f32 %v7816, %v2187
    %v7887 = vmul.f32 %v7815, %v2192
    %v7888 = vmul.f32 %v7814, %v2197
    %v7889 = vmul.f32 %v7813, %v2202
    %v7890 = vmul.f32 %v7812, %v2207
    %v7891 = vmul.f32 %v7811, %v2212
    %v7892 = vmul.f32 %v7810, %v2217
    %v7893 = vmul.f32 %v7809, %v2222
    %v7894 = vmul.f32 %v7808, %v2227
    %v7895 = vmul.f32 %v7807, %v2232
    %v7896 = vmul.f32 %v7806, %v2237
    %v7897 = vmul.f32 %v7805, %v2242
    %v7898 = vmul.f32 %v7804, %v2247
    %v7899 = vmul.f32 %v7803, %v2252
    %v7900 = vmul.f32 %v7802, %v2257
    %v7901 = vmul.f32 %v7801, %v2262
    %v7902 = vmul.f32 %v7800, %v2267
    %v7903 = vmul.f32 %v7799, %v2272
    %v7904 = vmul.f32 %v7798, %v2277
    %v7905 = vmul.f32 %v7797, %v2282
    %v7906 = vmul.f32 %v7796, %v2287
    %v7907 = vmul.f32 %v7795, %v2292
    %v7908 = vmul.f32 %v7794, %v2297
    %v7909 = vmul.f32 %v7793, %v2302
    %v7910 = vmul.f32 %v7792, %v2307
    %v7911 = vmul.f32 %v7791, %v2312
    %v7912 = vmul.f32 %v7790, %v2317
    %v7913 = vmul.f32 %v7789, %v2322
    %v7914 = vmul.f32 %v7788, %v2327
    %v7915 = vpack.c.bf16 %v7852, %v7851
    %v7916 = vpack.c.bf16 %v7854, %v7853
    %v7917 = vpack.c.bf16 %v7856, %v7855
    %v7918 = vpack.c.bf16 %v7858, %v7857
    %v7919 = vpack.c.bf16 %v7860, %v7859
    %v7920 = vpack.c.bf16 %v7862, %v7861
    %v7921 = vpack.c.bf16 %v7864, %v7863
    %v7922 = vpack.c.bf16 %v7866, %v7865
    %v7923 = vpack.c.bf16 %v7868, %v7867
    %v7924 = vpack.c.bf16 %v7870, %v7869
    %v7925 = vpack.c.bf16 %v7872, %v7871
    %v7926 = vpack.c.bf16 %v7874, %v7873
    %v7927 = vpack.c.bf16 %v7876, %v7875
    %v7928 = vpack.c.bf16 %v7878, %v7877
    %v7929 = vpack.c.bf16 %v7880, %v7879
    %v7930 = vpack.c.bf16 %v7882, %v7881
    %v7931 = vpack.c.bf16 %v7884, %v7883
    %v7932 = vpack.c.bf16 %v7886, %v7885
    %v7933 = vpack.c.bf16 %v7888, %v7887
    %v7934 = vpack.c.bf16 %v7890, %v7889
    %v7935 = vpack.c.bf16 %v7892, %v7891
    %v7936 = vpack.c.bf16 %v7894, %v7893
    %v7937 = vpack.c.bf16 %v7896, %v7895
    %v7938 = vpack.c.bf16 %v7898, %v7897
    %v7939 = vpack.c.bf16 %v7900, %v7899
    %v7940 = vpack.c.bf16 %v7902, %v7901
    %v7941 = vpack.c.bf16 %v7904, %v7903
    %v7942 = vpack.c.bf16 %v7906, %v7905
    %v7943 = vpack.c.bf16 %v7908, %v7907
    %v7944 = vpack.c.bf16 %v7910, %v7909
    %v7945 = vpack.c.bf16 %v7912, %v7911
    %v7946 = vpack.c.bf16 %v7914, %v7913
    %v7947 = vmul.f32 %v7530, %v2493
    %v7948 = vmul.f32 %v7529, %v2498
    %v7949 = vmul.f32 %v7528, %v2503
    %v7950 = vmul.f32 %v7527, %v2508
    %v7951 = vmul.f32 %v7526, %v2513
    %v7952 = vmul.f32 %v7525, %v2518
    %v7953 = vmul.f32 %v7524, %v2523
    %v7954 = vmul.f32 %v7523, %v2528
    %v7955 = vmul.f32 %v7522, %v2533
    %v7956 = vmul.f32 %v7521, %v2538
    %v7957 = vmul.f32 %v7520, %v2543
    %v7958 = vmul.f32 %v7519, %v2548
    %v7959 = vmul.f32 %v7518, %v2553
    %v7960 = vmul.f32 %v7517, %v2558
    %v7961 = vmul.f32 %v7516, %v2563
    %v7962 = vmul.f32 %v7515, %v2568
    %v7963 = vmul.f32 %v7514, %v2573
    %v7964 = vmul.f32 %v7513, %v2578
    %v7965 = vmul.f32 %v7512, %v2583
    %v7966 = vmul.f32 %v7511, %v2588
    %v7967 = vmul.f32 %v7510, %v2593
    %v7968 = vmul.f32 %v7509, %v2598
    %v7969 = vmul.f32 %v7508, %v2603
    %v7970 = vmul.f32 %v7507, %v2608
    %v7971 = vmul.f32 %v7506, %v2613
    %v7972 = vmul.f32 %v7505, %v2618
    %v7973 = vmul.f32 %v7504, %v2623
    %v7974 = vmul.f32 %v7503, %v2628
    %v7975 = vmul.f32 %v7502, %v2633
    %v7976 = vmul.f32 %v7501, %v2638
    %v7977 = vmul.f32 %v7500, %v2643
    %v7978 = vmul.f32 %v7499, %v2648
    %v7979 = vmul.f32 %v7498, %v2653
    %v7980 = vmul.f32 %v7497, %v2658
    %v7981 = vmul.f32 %v7496, %v2663
    %v7982 = vmul.f32 %v7495, %v2668
    %v7983 = vmul.f32 %v7494, %v2673
    %v7984 = vmul.f32 %v7493, %v2678
    %v7985 = vmul.f32 %v7492, %v2683
    %v7986 = vmul.f32 %v7491, %v2688
    %v7987 = vmul.f32 %v7490, %v2693
    %v7988 = vmul.f32 %v7489, %v2698
    %v7989 = vmul.f32 %v7488, %v2703
    %v7990 = vmul.f32 %v7487, %v2708
    %v7991 = vmul.f32 %v7486, %v2713
    %v7992 = vmul.f32 %v7485, %v2718
    %v7993 = vmul.f32 %v7484, %v2723
    %v7994 = vmul.f32 %v7483, %v2728
    %v7995 = vmul.f32 %v7482, %v2733
    %v7996 = vmul.f32 %v7481, %v2738
    %v7997 = vmul.f32 %v7480, %v2743
    %v7998 = vmul.f32 %v7479, %v2748
    %v7999 = vmul.f32 %v7478, %v2753
    %v8000 = vmul.f32 %v7477, %v2758
    %v8001 = vmul.f32 %v7476, %v2763
    %v8002 = vmul.f32 %v7475, %v2768
    %v8003 = vmul.f32 %v7474, %v2773
    %v8004 = vmul.f32 %v7473, %v2778
    %v8005 = vmul.f32 %v7472, %v2783
    %v8006 = vmul.f32 %v7471, %v2788
    %v8007 = vmul.f32 %v7470, %v2793
    %v8008 = vmul.f32 %v7469, %v2798
    %v8009 = vmul.f32 %v7468, %v2803
    %v8010 = vmul.f32 %v7467, %v2808
    %v8011 = vpack.c.bf16 %v7948, %v7947
    %v8012 = vpack.c.bf16 %v7950, %v7949
    %v8013 = vpack.c.bf16 %v7952, %v7951
    %v8014 = vpack.c.bf16 %v7954, %v7953
    %v8015 = vpack.c.bf16 %v7956, %v7955
    %v8016 = vpack.c.bf16 %v7958, %v7957
    %v8017 = vpack.c.bf16 %v7960, %v7959
    %v8018 = vpack.c.bf16 %v7962, %v7961
    %v8019 = vpack.c.bf16 %v7964, %v7963
    %v8020 = vpack.c.bf16 %v7966, %v7965
    %v8021 = vpack.c.bf16 %v7968, %v7967
    %v8022 = vpack.c.bf16 %v7970, %v7969
    %v8023 = vpack.c.bf16 %v7972, %v7971
    %v8024 = vpack.c.bf16 %v7974, %v7973
    %v8025 = vpack.c.bf16 %v7976, %v7975
    %v8026 = vpack.c.bf16 %v7978, %v7977
    %v8027 = vpack.c.bf16 %v7980, %v7979
    %v8028 = vpack.c.bf16 %v7982, %v7981
    %v8029 = vpack.c.bf16 %v7984, %v7983
    %v8030 = vpack.c.bf16 %v7986, %v7985
    %v8031 = vpack.c.bf16 %v7988, %v7987
    %v8032 = vpack.c.bf16 %v7990, %v7989
    %v8033 = vpack.c.bf16 %v7992, %v7991
    %v8034 = vpack.c.bf16 %v7994, %v7993
    %v8035 = vpack.c.bf16 %v7996, %v7995
    %v8036 = vpack.c.bf16 %v7998, %v7997
    %v8037 = vpack.c.bf16 %v8000, %v7999
    %v8038 = vpack.c.bf16 %v8002, %v8001
    %v8039 = vpack.c.bf16 %v8004, %v8003
    %v8040 = vpack.c.bf16 %v8006, %v8005
    %v8041 = vpack.c.bf16 %v8008, %v8007
    %v8042 = vpack.c.bf16 %v8010, %v8009
    %v8043 = vmul.f32 %v7339, %v2974
    %v8044 = vmul.f32 %v7340, %v2979
    %v8045 = vmul.f32 %v7341, %v2984
    %v8046 = vmul.f32 %v7342, %v2989
    %v8047 = vmul.f32 %v7343, %v2994
    %v8048 = vmul.f32 %v7344, %v2999
    %v8049 = vmul.f32 %v7345, %v3004
    %v8050 = vmul.f32 %v7346, %v3009
    %v8051 = vmul.f32 %v7347, %v3014
    %v8052 = vmul.f32 %v7348, %v3019
    %v8053 = vmul.f32 %v7349, %v3024
    %v8054 = vmul.f32 %v7350, %v3029
    %v8055 = vmul.f32 %v7351, %v3034
    %v8056 = vmul.f32 %v7352, %v3039
    %v8057 = vmul.f32 %v7353, %v3044
    %v8058 = vmul.f32 %v7354, %v3049
    %v8059 = vmul.f32 %v7355, %v3054
    %v8060 = vmul.f32 %v7356, %v3059
    %v8061 = vmul.f32 %v7357, %v3064
    %v8062 = vmul.f32 %v7358, %v3069
    %v8063 = vmul.f32 %v7359, %v3074
    %v8064 = vmul.f32 %v7360, %v3079
    %v8065 = vmul.f32 %v7361, %v3084
    %v8066 = vmul.f32 %v7362, %v3089
    %v8067 = vmul.f32 %v7363, %v3094
    %v8068 = vmul.f32 %v7364, %v3099
    %v8069 = vmul.f32 %v7365, %v3104
    %v8070 = vmul.f32 %v7366, %v3109
    %v8071 = vmul.f32 %v7367, %v3114
    %v8072 = vmul.f32 %v7368, %v3119
    %v8073 = vmul.f32 %v7369, %v3124
    %v8074 = vmul.f32 %v7370, %v3129
    %v8075 = vmul.f32 %v7371, %v3134
    %v8076 = vmul.f32 %v7372, %v3139
    %v8077 = vmul.f32 %v7373, %v3144
    %v8078 = vmul.f32 %v7374, %v3149
    %v8079 = vmul.f32 %v7375, %v3154
    %v8080 = vmul.f32 %v7376, %v3159
    %v8081 = vmul.f32 %v7377, %v3164
    %v8082 = vmul.f32 %v7378, %v3169
    %v8083 = vmul.f32 %v7379, %v3174
    %v8084 = vmul.f32 %v7380, %v3179
    %v8085 = vmul.f32 %v7381, %v3184
    %v8086 = vmul.f32 %v7382, %v3189
    %v8087 = vmul.f32 %v7383, %v3194
    %v8088 = vmul.f32 %v7384, %v3199
    %v8089 = vmul.f32 %v7385, %v3204
    %v8090 = vmul.f32 %v7386, %v3209
    %v8091 = vmul.f32 %v7387, %v3214
    %v8092 = vmul.f32 %v7388, %v3219
    %v8093 = vmul.f32 %v7389, %v3224
    %v8094 = vmul.f32 %v7390, %v3229
    %v8095 = vmul.f32 %v7391, %v3234
    %v8096 = vmul.f32 %v7392, %v3239
    %v8097 = vmul.f32 %v7393, %v3244
    %v8098 = vmul.f32 %v7394, %v3249
    %v8099 = vmul.f32 %v7395, %v3254
    %v8100 = vmul.f32 %v7396, %v3259
    %v8101 = vmul.f32 %v7397, %v3264
    %v8102 = vmul.f32 %v7398, %v3269
    %v8103 = vmul.f32 %v7399, %v3274
    %v8104 = vmul.f32 %v7400, %v3279
    %v8105 = vmul.f32 %v7401, %v3284
    %v8106 = vmul.f32 %v7402, %v3289
    %v8107 = vpack.c.bf16 %v8044, %v8043
    %v8108 = vpack.c.bf16 %v8046, %v8045
    %v8109 = vpack.c.bf16 %v8048, %v8047
    %v8110 = vpack.c.bf16 %v8050, %v8049
    %v8111 = vpack.c.bf16 %v8052, %v8051
    %v8112 = vpack.c.bf16 %v8054, %v8053
    %v8113 = vpack.c.bf16 %v8056, %v8055
    %v8114 = vpack.c.bf16 %v8058, %v8057
    %v8115 = vpack.c.bf16 %v8060, %v8059
    %v8116 = vpack.c.bf16 %v8062, %v8061
    %v8117 = vpack.c.bf16 %v8064, %v8063
    %v8118 = vpack.c.bf16 %v8066, %v8065
    %v8119 = vpack.c.bf16 %v8068, %v8067
    %v8120 = vpack.c.bf16 %v8070, %v8069
    %v8121 = vpack.c.bf16 %v8072, %v8071
    %v8122 = vpack.c.bf16 %v8074, %v8073
    %v8123 = vpack.c.bf16 %v8076, %v8075
    %v8124 = vpack.c.bf16 %v8078, %v8077
    %v8125 = vpack.c.bf16 %v8080, %v8079
    %v8126 = vpack.c.bf16 %v8082, %v8081
    %v8127 = vpack.c.bf16 %v8084, %v8083
    %v8128 = vpack.c.bf16 %v8086, %v8085
    %v8129 = vpack.c.bf16 %v8088, %v8087
    %v8130 = vpack.c.bf16 %v8090, %v8089
    %v8131 = vpack.c.bf16 %v8092, %v8091
    %v8132 = vpack.c.bf16 %v8094, %v8093
    %v8133 = vpack.c.bf16 %v8096, %v8095
    %v8134 = vpack.c.bf16 %v8098, %v8097
    %v8135 = vpack.c.bf16 %v8100, %v8099
    %v8136 = vpack.c.bf16 %v8102, %v8101
    %v8137 = vpack.c.bf16 %v8104, %v8103
    %v8138 = vpack.c.bf16 %v8106, %v8105
    %v8139 = vmul.f32 %v7849, %v3455
    %v8140 = vmul.f32 %v7848, %v3460
    %v8141 = vmul.f32 %v7847, %v3465
    %v8142 = vmul.f32 %v7846, %v3470
    %v8143 = vmul.f32 %v7845, %v3475
    %v8144 = vmul.f32 %v7844, %v3480
    %v8145 = vmul.f32 %v7843, %v3485
    %v8146 = vmul.f32 %v7842, %v3490
    %v8147 = vmul.f32 %v7841, %v3495
    %v8148 = vmul.f32 %v7840, %v3500
    %v8149 = vmul.f32 %v7839, %v3505
    %v8150 = vmul.f32 %v7838, %v3510
    %v8151 = vmul.f32 %v7837, %v3515
    %v8152 = vmul.f32 %v7836, %v3520
    %v8153 = vmul.f32 %v7835, %v3525
    %v8154 = vmul.f32 %v7834, %v3530
    %v8155 = vmul.f32 %v7833, %v3535
    %v8156 = vmul.f32 %v7832, %v3540
    %v8157 = vmul.f32 %v7831, %v3545
    %v8158 = vmul.f32 %v7830, %v3550
    %v8159 = vmul.f32 %v7829, %v3555
    %v8160 = vmul.f32 %v7828, %v3560
    %v8161 = vmul.f32 %v7827, %v3565
    %v8162 = vmul.f32 %v7826, %v3570
    %v8163 = vmul.f32 %v7825, %v3575
    %v8164 = vmul.f32 %v7824, %v3580
    %v8165 = vmul.f32 %v7823, %v3585
    %v8166 = vmul.f32 %v7822, %v3590
    %v8167 = vmul.f32 %v7821, %v3595
    %v8168 = vmul.f32 %v7820, %v3600
    %v8169 = vmul.f32 %v7819, %v3605
    %v8170 = vmul.f32 %v7818, %v3610
    %v8171 = vmul.f32 %v7817, %v3615
    %v8172 = vmul.f32 %v7816, %v3620
    %v8173 = vmul.f32 %v7815, %v3625
    %v8174 = vmul.f32 %v7814, %v3630
    %v8175 = vmul.f32 %v7813, %v3635
    %v8176 = vmul.f32 %v7812, %v3640
    %v8177 = vmul.f32 %v7811, %v3645
    %v8178 = vmul.f32 %v7810, %v3650
    %v8179 = vmul.f32 %v7809, %v3655
    %v8180 = vmul.f32 %v7808, %v3660
    %v8181 = vmul.f32 %v7807, %v3665
    %v8182 = vmul.f32 %v7806, %v3670
    %v8183 = vmul.f32 %v7805, %v3675
    %v8184 = vmul.f32 %v7804, %v3680
    %v8185 = vmul.f32 %v7803, %v3685
    %v8186 = vmul.f32 %v7802, %v3690
    %v8187 = vmul.f32 %v7801, %v3695
    %v8188 = vmul.f32 %v7800, %v3700
    %v8189 = vmul.f32 %v7799, %v3705
    %v8190 = vmul.f32 %v7798, %v3710
    %v8191 = vmul.f32 %v7797, %v3715
    %v8192 = vmul.f32 %v7796, %v3720
    %v8193 = vmul.f32 %v7795, %v3725
    %v8194 = vmul.f32 %v7794, %v3730
    %v8195 = vmul.f32 %v7793, %v3735
    %v8196 = vmul.f32 %v7792, %v3740
    %v8197 = vmul.f32 %v7791, %v3745
    %v8198 = vmul.f32 %v7790, %v3750
    %v8199 = vmul.f32 %v7789, %v3755
    %v8200 = vmul.f32 %v7788, %v3760
    %v8201 = vmul.f32 %v7787, %v3765
    %v8202 = vmul.f32 %v7850, %v3770
    %v8203 = vpack.c.bf16 %v8140, %v8139
    %v8204 = vpack.c.bf16 %v8142, %v8141
    %v8205 = vpack.c.bf16 %v8144, %v8143
    %v8206 = vpack.c.bf16 %v8146, %v8145
    %v8207 = vpack.c.bf16 %v8148, %v8147
    %v8208 = vpack.c.bf16 %v8150, %v8149
    %v8209 = vpack.c.bf16 %v8152, %v8151
    %v8210 = vpack.c.bf16 %v8154, %v8153
    %v8211 = vpack.c.bf16 %v8156, %v8155
    %v8212 = vpack.c.bf16 %v8158, %v8157
    %v8213 = vpack.c.bf16 %v8160, %v8159
    %v8214 = vpack.c.bf16 %v8162, %v8161
    %v8215 = vpack.c.bf16 %v8164, %v8163
    %v8216 = vpack.c.bf16 %v8166, %v8165
    %v8217 = vpack.c.bf16 %v8168, %v8167
    %v8218 = vpack.c.bf16 %v8170, %v8169
    %v8219 = vpack.c.bf16 %v8172, %v8171
    %v8220 = vpack.c.bf16 %v8174, %v8173
    %v8221 = vpack.c.bf16 %v8176, %v8175
    %v8222 = vpack.c.bf16 %v8178, %v8177
    %v8223 = vpack.c.bf16 %v8180, %v8179
    %v8224 = vpack.c.bf16 %v8182, %v8181
    %v8225 = vpack.c.bf16 %v8184, %v8183
    %v8226 = vpack.c.bf16 %v8186, %v8185
    %v8227 = vpack.c.bf16 %v8188, %v8187
    %v8228 = vpack.c.bf16 %v8190, %v8189
    %v8229 = vpack.c.bf16 %v8192, %v8191
    %v8230 = vpack.c.bf16 %v8194, %v8193
    %v8231 = vpack.c.bf16 %v8196, %v8195
    %v8232 = vpack.c.bf16 %v8198, %v8197
    %v8233 = vpack.c.bf16 %v8200, %v8199
    %v8234 = vpack.c.bf16 %v8202, %v8201
    %v8235 = vmul.f32 %v7528, %v3936
    %v8236 = vmul.f32 %v7527, %v3941
    %v8237 = vmul.f32 %v7526, %v3946
    %v8238 = vmul.f32 %v7525, %v3951
    %v8239 = vmul.f32 %v7524, %v3956
    %v8240 = vmul.f32 %v7523, %v3961
    %v8241 = vmul.f32 %v7522, %v3966
    %v8242 = vmul.f32 %v7521, %v3971
    %v8243 = vmul.f32 %v7520, %v3976
    %v8244 = vmul.f32 %v7519, %v3981
    %v8245 = vmul.f32 %v7518, %v3986
    %v8246 = vmul.f32 %v7517, %v3991
    %v8247 = vmul.f32 %v7516, %v3996
    %v8248 = vmul.f32 %v7515, %v4001
    %v8249 = vmul.f32 %v7514, %v4006
    %v8250 = vmul.f32 %v7513, %v4011
    %v8251 = vmul.f32 %v7512, %v4016
    %v8252 = vmul.f32 %v7511, %v4021
    %v8253 = vmul.f32 %v7510, %v4026
    %v8254 = vmul.f32 %v7509, %v4031
    %v8255 = vmul.f32 %v7508, %v4036
    %v8256 = vmul.f32 %v7507, %v4041
    %v8257 = vmul.f32 %v7506, %v4046
    %v8258 = vmul.f32 %v7505, %v4051
    %v8259 = vmul.f32 %v7504, %v4056
    %v8260 = vmul.f32 %v7503, %v4061
    %v8261 = vmul.f32 %v7502, %v4066
    %v8262 = vmul.f32 %v7501, %v4071
    %v8263 = vmul.f32 %v7500, %v4076
    %v8264 = vmul.f32 %v7499, %v4081
    %v8265 = vmul.f32 %v7498, %v4086
    %v8266 = vmul.f32 %v7497, %v4091
    %v8267 = vmul.f32 %v7496, %v4096
    %v8268 = vmul.f32 %v7495, %v4101
    %v8269 = vmul.f32 %v7494, %v4106
    %v8270 = vmul.f32 %v7493, %v4111
    %v8271 = vmul.f32 %v7492, %v4116
    %v8272 = vmul.f32 %v7491, %v4121
    %v8273 = vmul.f32 %v7490, %v4126
    %v8274 = vmul.f32 %v7489, %v4131
    %v8275 = vmul.f32 %v7488, %v4136
    %v8276 = vmul.f32 %v7487, %v4141
    %v8277 = vmul.f32 %v7486, %v4146
    %v8278 = vmul.f32 %v7485, %v4151
    %v8279 = vmul.f32 %v7484, %v4156
    %v8280 = vmul.f32 %v7483, %v4161
    %v8281 = vmul.f32 %v7482, %v4166
    %v8282 = vmul.f32 %v7481, %v4171
    %v8283 = vmul.f32 %v7480, %v4176
    %v8284 = vmul.f32 %v7479, %v4181
    %v8285 = vmul.f32 %v7478, %v4186
    %v8286 = vmul.f32 %v7477, %v4191
    %v8287 = vmul.f32 %v7476, %v4196
    %v8288 = vmul.f32 %v7475, %v4201
    %v8289 = vmul.f32 %v7474, %v4206
    %v8290 = vmul.f32 %v7473, %v4211
    %v8291 = vmul.f32 %v7472, %v4216
    %v8292 = vmul.f32 %v7471, %v4221
    %v8293 = vmul.f32 %v7470, %v4226
    %v8294 = vmul.f32 %v7469, %v4231
    %v8295 = vmul.f32 %v7468, %v4236
    %v8296 = vmul.f32 %v7467, %v4241
    %v8297 = vmul.f32 %v7530, %v4246
    %v8298 = vmul.f32 %v7529, %v4251
    %v8299 = vpack.c.bf16 %v8236, %v8235
    %v8300 = vpack.c.bf16 %v8238, %v8237
    %v8301 = vpack.c.bf16 %v8240, %v8239
    %v8302 = vpack.c.bf16 %v8242, %v8241
    %v8303 = vpack.c.bf16 %v8244, %v8243
    %v8304 = vpack.c.bf16 %v8246, %v8245
    %v8305 = vpack.c.bf16 %v8248, %v8247
    %v8306 = vpack.c.bf16 %v8250, %v8249
    %v8307 = vpack.c.bf16 %v8252, %v8251
    %v8308 = vpack.c.bf16 %v8254, %v8253
    %v8309 = vpack.c.bf16 %v8256, %v8255
    %v8310 = vpack.c.bf16 %v8258, %v8257
    %v8311 = vpack.c.bf16 %v8260, %v8259
    %v8312 = vpack.c.bf16 %v8262, %v8261
    %v8313 = vpack.c.bf16 %v8264, %v8263
    %v8314 = vpack.c.bf16 %v8266, %v8265
    %v8315 = vpack.c.bf16 %v8268, %v8267
    %v8316 = vpack.c.bf16 %v8270, %v8269
    %v8317 = vpack.c.bf16 %v8272, %v8271
    %v8318 = vpack.c.bf16 %v8274, %v8273
    %v8319 = vpack.c.bf16 %v8276, %v8275
    %v8320 = vpack.c.bf16 %v8278, %v8277
    %v8321 = vpack.c.bf16 %v8280, %v8279
    %v8322 = vpack.c.bf16 %v8282, %v8281
    %v8323 = vpack.c.bf16 %v8284, %v8283
    %v8324 = vpack.c.bf16 %v8286, %v8285
    %v8325 = vpack.c.bf16 %v8288, %v8287
    %v8326 = vpack.c.bf16 %v8290, %v8289
    %v8327 = vpack.c.bf16 %v8292, %v8291
    %v8328 = vpack.c.bf16 %v8294, %v8293
    %v8329 = vpack.c.bf16 %v8296, %v8295
    %v8330 = vpack.c.bf16 %v8298, %v8297
    %v8331 = vmul.f32 %v7341, %v4417
    %v8332 = vmul.f32 %v7342, %v4422
    %v8333 = vmul.f32 %v7343, %v4427
    %v8334 = vmul.f32 %v7344, %v4432
    %v8335 = vmul.f32 %v7345, %v4437
    %v8336 = vmul.f32 %v7346, %v4442
    %v8337 = vmul.f32 %v7347, %v4447
    %v8338 = vmul.f32 %v7348, %v4452
    %v8339 = vmul.f32 %v7349, %v4457
    %v8340 = vmul.f32 %v7350, %v4462
    %v8341 = vmul.f32 %v7351, %v4467
    %v8342 = vmul.f32 %v7352, %v4472
    %v8343 = vmul.f32 %v7353, %v4477
    %v8344 = vmul.f32 %v7354, %v4482
    %v8345 = vmul.f32 %v7355, %v4487
    %v8346 = vmul.f32 %v7356, %v4492
    %v8347 = vmul.f32 %v7357, %v4497
    %v8348 = vmul.f32 %v7358, %v4502
    %v8349 = vmul.f32 %v7359, %v4507
    %v8350 = vmul.f32 %v7360, %v4512
    %v8351 = vmul.f32 %v7361, %v4517
    %v8352 = vmul.f32 %v7362, %v4522
    %v8353 = vmul.f32 %v7363, %v4527
    %v8354 = vmul.f32 %v7364, %v4532
    %v8355 = vmul.f32 %v7365, %v4537
    %v8356 = vmul.f32 %v7366, %v4542
    %v8357 = vmul.f32 %v7367, %v4547
    %v8358 = vmul.f32 %v7368, %v4552
    %v8359 = vmul.f32 %v7369, %v4557
    %v8360 = vmul.f32 %v7370, %v4562
    %v8361 = vmul.f32 %v7371, %v4567
    %v8362 = vmul.f32 %v7372, %v4572
    %v8363 = vmul.f32 %v7373, %v4577
    %v8364 = vmul.f32 %v7374, %v4582
    %v8365 = vmul.f32 %v7375, %v4587
    %v8366 = vmul.f32 %v7376, %v4592
    %v8367 = vmul.f32 %v7377, %v4597
    %v8368 = vmul.f32 %v7378, %v4602
    %v8369 = vmul.f32 %v7379, %v4607
    %v8370 = vmul.f32 %v7380, %v4612
    %v8371 = vmul.f32 %v7381, %v4617
    %v8372 = vmul.f32 %v7382, %v4622
    %v8373 = vmul.f32 %v7383, %v4627
    %v8374 = vmul.f32 %v7384, %v4632
    %v8375 = vmul.f32 %v7385, %v4637
    %v8376 = vmul.f32 %v7386, %v4642
    %v8377 = vmul.f32 %v7387, %v4647
    %v8378 = vmul.f32 %v7388, %v4652
    %v8379 = vmul.f32 %v7389, %v4657
    %v8380 = vmul.f32 %v7390, %v4662
    %v8381 = vmul.f32 %v7391, %v4667
    %v8382 = vmul.f32 %v7392, %v4672
    %v8383 = vmul.f32 %v7393, %v4677
    %v8384 = vmul.f32 %v7394, %v4682
    %v8385 = vmul.f32 %v7395, %v4687
    %v8386 = vmul.f32 %v7396, %v4692
    %v8387 = vmul.f32 %v7397, %v4697
    %v8388 = vmul.f32 %v7398, %v4702
    %v8389 = vmul.f32 %v7399, %v4707
    %v8390 = vmul.f32 %v7400, %v4712
    %v8391 = vmul.f32 %v7401, %v4717
    %v8392 = vmul.f32 %v7402, %v4722
    %v8393 = vmul.f32 %v7339, %v4727
    %v8394 = vmul.f32 %v7340, %v4732
    %v8395 = vpack.c.bf16 %v8332, %v8331
    %v8396 = vpack.c.bf16 %v8334, %v8333
    %v8397 = vpack.c.bf16 %v8336, %v8335
    %v8398 = vpack.c.bf16 %v8338, %v8337
    %v8399 = vpack.c.bf16 %v8340, %v8339
    %v8400 = vpack.c.bf16 %v8342, %v8341
    %v8401 = vpack.c.bf16 %v8344, %v8343
    %v8402 = vpack.c.bf16 %v8346, %v8345
    %v8403 = vpack.c.bf16 %v8348, %v8347
    %v8404 = vpack.c.bf16 %v8350, %v8349
    %v8405 = vpack.c.bf16 %v8352, %v8351
    %v8406 = vpack.c.bf16 %v8354, %v8353
    %v8407 = vpack.c.bf16 %v8356, %v8355
    %v8408 = vpack.c.bf16 %v8358, %v8357
    %v8409 = vpack.c.bf16 %v8360, %v8359
    %v8410 = vpack.c.bf16 %v8362, %v8361
    %v8411 = vpack.c.bf16 %v8364, %v8363
    %v8412 = vpack.c.bf16 %v8366, %v8365
    %v8413 = vpack.c.bf16 %v8368, %v8367
    %v8414 = vpack.c.bf16 %v8370, %v8369
    %v8415 = vpack.c.bf16 %v8372, %v8371
    %v8416 = vpack.c.bf16 %v8374, %v8373
    %v8417 = vpack.c.bf16 %v8376, %v8375
    %v8418 = vpack.c.bf16 %v8378, %v8377
    %v8419 = vpack.c.bf16 %v8380, %v8379
    %v8420 = vpack.c.bf16 %v8382, %v8381
    %v8421 = vpack.c.bf16 %v8384, %v8383
    %v8422 = vpack.c.bf16 %v8386, %v8385
    %v8423 = vpack.c.bf16 %v8388, %v8387
    %v8424 = vpack.c.bf16 %v8390, %v8389
    %v8425 = vpack.c.bf16 %v8392, %v8391
    %v8426 = vpack.c.bf16 %v8394, %v8393
    %v8427 = vmul.f32 %v7847, %v4898
    %v8428 = vmul.f32 %v7846, %v4903
    %v8429 = vmul.f32 %v7845, %v4908
    %v8430 = vmul.f32 %v7844, %v4913
    %v8431 = vmul.f32 %v7843, %v4918
    %v8432 = vmul.f32 %v7842, %v4923
    %v8433 = vmul.f32 %v7841, %v4928
    %v8434 = vmul.f32 %v7840, %v4933
    %v8435 = vmul.f32 %v7839, %v4938
    %v8436 = vmul.f32 %v7838, %v4943
    %v8437 = vmul.f32 %v7837, %v4948
    %v8438 = vmul.f32 %v7836, %v4953
    %v8439 = vmul.f32 %v7835, %v4958
    %v8440 = vmul.f32 %v7834, %v4963
    %v8441 = vmul.f32 %v7833, %v4968
    %v8442 = vmul.f32 %v7832, %v4973
    %v8443 = vmul.f32 %v7831, %v4978
    %v8444 = vmul.f32 %v7830, %v4983
    %v8445 = vmul.f32 %v7829, %v4988
    %v8446 = vmul.f32 %v7828, %v4993
    %v8447 = vmul.f32 %v7827, %v4998
    %v8448 = vmul.f32 %v7826, %v5003
    %v8449 = vmul.f32 %v7825, %v5008
    %v8450 = vmul.f32 %v7824, %v5013
    %v8451 = vmul.f32 %v7823, %v5018
    %v8452 = vmul.f32 %v7822, %v5023
    %v8453 = vmul.f32 %v7821, %v5028
    %v8454 = vmul.f32 %v7820, %v5033
    %v8455 = vmul.f32 %v7819, %v5038
    %v8456 = vmul.f32 %v7818, %v5043
    %v8457 = vmul.f32 %v7817, %v5048
    %v8458 = vmul.f32 %v7816, %v5053
    %v8459 = vmul.f32 %v7815, %v5058
    %v8460 = vmul.f32 %v7814, %v5063
    %v8461 = vmul.f32 %v7813, %v5068
    %v8462 = vmul.f32 %v7812, %v5073
    %v8463 = vmul.f32 %v7811, %v5078
    %v8464 = vmul.f32 %v7810, %v5083
    %v8465 = vmul.f32 %v7809, %v5088
    %v8466 = vmul.f32 %v7808, %v5093
    %v8467 = vmul.f32 %v7807, %v5098
    %v8468 = vmul.f32 %v7806, %v5103
    %v8469 = vmul.f32 %v7805, %v5108
    %v8470 = vmul.f32 %v7804, %v5113
    %v8471 = vmul.f32 %v7803, %v5118
    %v8472 = vmul.f32 %v7802, %v5123
    %v8473 = vmul.f32 %v7801, %v5128
    %v8474 = vmul.f32 %v7800, %v5133
    %v8475 = vmul.f32 %v7799, %v5138
    %v8476 = vmul.f32 %v7798, %v5143
    %v8477 = vmul.f32 %v7797, %v5148
    %v8478 = vmul.f32 %v7796, %v5153
    %v8479 = vmul.f32 %v7795, %v5158
    %v8480 = vmul.f32 %v7794, %v5163
    %v8481 = vmul.f32 %v7793, %v5168
    %v8482 = vmul.f32 %v7792, %v5173
    %v8483 = vmul.f32 %v7791, %v5178
    %v8484 = vmul.f32 %v7790, %v5183
    %v8485 = vmul.f32 %v7789, %v5188
    %v8486 = vmul.f32 %v7788, %v5193
    %v8487 = vmul.f32 %v7787, %v5198
    %v8488 = vmul.f32 %v7850, %v5203
    %v8489 = vmul.f32 %v7849, %v5208
    %v8490 = vmul.f32 %v7848, %v5213
    %v8491 = vpack.c.bf16 %v8428, %v8427
    %v8492 = vpack.c.bf16 %v8430, %v8429
    %v8493 = vpack.c.bf16 %v8432, %v8431
    %v8494 = vpack.c.bf16 %v8434, %v8433
    %v8495 = vpack.c.bf16 %v8436, %v8435
    %v8496 = vpack.c.bf16 %v8438, %v8437
    %v8497 = vpack.c.bf16 %v8440, %v8439
    %v8498 = vpack.c.bf16 %v8442, %v8441
    %v8499 = vpack.c.bf16 %v8444, %v8443
    %v8500 = vpack.c.bf16 %v8446, %v8445
    %v8501 = vpack.c.bf16 %v8448, %v8447
    %v8502 = vpack.c.bf16 %v8450, %v8449
    %v8503 = vpack.c.bf16 %v8452, %v8451
    %v8504 = vpack.c.bf16 %v8454, %v8453
    %v8505 = vpack.c.bf16 %v8456, %v8455
    %v8506 = vpack.c.bf16 %v8458, %v8457
    %v8507 = vpack.c.bf16 %v8460, %v8459
    %v8508 = vpack.c.bf16 %v8462, %v8461
    %v8509 = vpack.c.bf16 %v8464, %v8463
    %v8510 = vpack.c.bf16 %v8466, %v8465
    %v8511 = vpack.c.bf16 %v8468, %v8467
    %v8512 = vpack.c.bf16 %v8470, %v8469
    %v8513 = vpack.c.bf16 %v8472, %v8471
    %v8514 = vpack.c.bf16 %v8474, %v8473
    %v8515 = vpack.c.bf16 %v8476, %v8475
    %v8516 = vpack.c.bf16 %v8478, %v8477
    %v8517 = vpack.c.bf16 %v8480, %v8479
    %v8518 = vpack.c.bf16 %v8482, %v8481
    %v8519 = vpack.c.bf16 %v8484, %v8483
    %v8520 = vpack.c.bf16 %v8486, %v8485
    %v8521 = vpack.c.bf16 %v8488, %v8487
    %v8522 = vpack.c.bf16 %v8490, %v8489
    %v8523 = vld [vmem:[%s6] sm:$0xf]
    %v8524 = vld [vmem:[%s6 + $0x4] sm:$0xf]
    %v8525 = vld [vmem:[%s6 + $0x8] sm:$0xf]
    %v8526 = vld [vmem:[%s6 + $0xc] sm:$0xf]
    %v8527 = vld [vmem:[%s6 + $0x10] sm:$0xf]
    %v8528 = vld [vmem:[%s6 + $0x14] sm:$0xf]
    %v8529 = vld [vmem:[%s6 + $0x18] sm:$0xf]
    %v8530 = vld [vmem:[%s6 + $0x1c] sm:$0xf]
    %v8531 = vld [vmem:[%s6 + $0x20] sm:$0xf]
    %v8532 = vld [vmem:[%s6 + $0x24] sm:$0xf]
    %v8533 = vld [vmem:[%s6 + $0x28] sm:$0xf]
    %v8534 = vld [vmem:[%s6 + $0x2c] sm:$0xf]
    %v8535 = vld [vmem:[%s6 + $0x30] sm:$0xf]
    %v8536 = vld [vmem:[%s6 + $0x34] sm:$0xf]
    %v8537 = vld [vmem:[%s6 + $0x38] sm:$0xf]
    %v8538 = vld [vmem:[%s6 + $0x3c] sm:$0xf]
    %v8539 = vld [vmem:[%s6 + $0x40] sm:$0xf]
    %v8540 = vld [vmem:[%s6 + $0x44] sm:$0xf]
    %v8541 = vld [vmem:[%s6 + $0x48] sm:$0xf]
    %v8542 = vld [vmem:[%s6 + $0x4c] sm:$0xf]
    %v8543 = vld [vmem:[%s6 + $0x50] sm:$0xf]
    %v8544 = vld [vmem:[%s6 + $0x54] sm:$0xf]
    %v8545 = vld [vmem:[%s6 + $0x58] sm:$0xf]
    %v8546 = vld [vmem:[%s6 + $0x5c] sm:$0xf]
    %v8547 = vld [vmem:[%s6 + $0x60] sm:$0xf]
    %v8548 = vld [vmem:[%s6 + $0x64] sm:$0xf]
    %v8549 = vld [vmem:[%s6 + $0x68] sm:$0xf]
    %v8550 = vld [vmem:[%s6 + $0x6c] sm:$0xf]
    %v8551 = vld [vmem:[%s6 + $0x70] sm:$0xf]
    %v8552 = vld [vmem:[%s6 + $0x74] sm:$0xf]
    %v8553 = vld [vmem:[%s6 + $0x78] sm:$0xf]
    %v8554 = vld [vmem:[%s6 + $0x7c] sm:$0xf]
    %v8555 = vld [vmem:[%s6 + $0x80] sm:$0xf]
    %v8556 = vld [vmem:[%s6 + $0x84] sm:$0xf]
    %v8557 = vld [vmem:[%s6 + $0x88] sm:$0xf]
    %v8558 = vld [vmem:[%s6 + $0x8c] sm:$0xf]
    %v8559 = vld [vmem:[%s6 + $0x90] sm:$0xf]
    %v8560 = vld [vmem:[%s6 + $0x94] sm:$0xf]
    %v8561 = vld [vmem:[%s6 + $0x98] sm:$0xf]
    %v8562 = vld [vmem:[%s6 + $0x9c] sm:$0xf]
    %v8563 = vld [vmem:[%s6 + $0xa0] sm:$0xf]
    %v8564 = vld [vmem:[%s6 + $0xa4] sm:$0xf]
    %v8565 = vld [vmem:[%s6 + $0xa8] sm:$0xf]
    %v8566 = vld [vmem:[%s6 + $0xac] sm:$0xf]
    %v8567 = vld [vmem:[%s6 + $0xb0] sm:$0xf]
    %v8568 = vld [vmem:[%s6 + $0xb4] sm:$0xf]
    %v8569 = vld [vmem:[%s6 + $0xb8] sm:$0xf]
    %v8570 = vld [vmem:[%s6 + $0xbc] sm:$0xf]
    %v8571 = vld [vmem:[%s6 + $0xc0] sm:$0xf]
    %v8572 = vld [vmem:[%s6 + $0xc4] sm:$0xf]
    %v8573 = vld [vmem:[%s6 + $0xc8] sm:$0xf]
    %v8574 = vld [vmem:[%s6 + $0xcc] sm:$0xf]
    %v8575 = vld [vmem:[%s6 + $0xd0] sm:$0xf]
    %v8576 = vld [vmem:[%s6 + $0xd4] sm:$0xf]
    %v8577 = vld [vmem:[%s6 + $0xd8] sm:$0xf]
    %v8578 = vld [vmem:[%s6 + $0xdc] sm:$0xf]
    %v8579 = vld [vmem:[%s6 + $0xe0] sm:$0xf]
    %v8580 = vld [vmem:[%s6 + $0xe4] sm:$0xf]
    %v8581 = vld [vmem:[%s6 + $0xe8] sm:$0xf]
    %v8582 = vld [vmem:[%s6 + $0xec] sm:$0xf]
    %v8583 = vld [vmem:[%s6 + $0xf0] sm:$0xf]
    %v8584 = vld [vmem:[%s6 + $0xf4] sm:$0xf]
    %v8585 = vld [vmem:[%s6 + $0xf8] sm:$0xf]
    %v8586 = vld [vmem:[%s6 + $0xfc] sm:$0xf]
    %v8587 = vld [vmem:[%s6 + $0x100] sm:$0xf]
    %v8588 = vld [vmem:[%s6 + $0x104] sm:$0xf]
    %v8589 = vld [vmem:[%s6 + $0x108] sm:$0xf]
    %v8590 = vld [vmem:[%s6 + $0x10c] sm:$0xf]
    %v8591 = vld [vmem:[%s6 + $0x110] sm:$0xf]
    %v8592 = vld [vmem:[%s6 + $0x114] sm:$0xf]
    %v8593 = vld [vmem:[%s6 + $0x118] sm:$0xf]
    %v8594 = vld [vmem:[%s6 + $0x11c] sm:$0xf]
    %v8595 = vld [vmem:[%s6 + $0x120] sm:$0xf]
    %v8596 = vld [vmem:[%s6 + $0x124] sm:$0xf]
    %v8597 = vld [vmem:[%s6 + $0x128] sm:$0xf]
    %v8598 = vld [vmem:[%s6 + $0x12c] sm:$0xf]
    %v8599 = vld [vmem:[%s6 + $0x130] sm:$0xf]
    %v8600 = vld [vmem:[%s6 + $0x134] sm:$0xf]
    %v8601 = vld [vmem:[%s6 + $0x138] sm:$0xf]
    %v8602 = vld [vmem:[%s6 + $0x13c] sm:$0xf]
    %v8603 = vld [vmem:[%s6 + $0x140] sm:$0xf]
    %v8604 = vld [vmem:[%s6 + $0x144] sm:$0xf]
    %v8605 = vld [vmem:[%s6 + $0x148] sm:$0xf]
    %v8606 = vld [vmem:[%s6 + $0x14c] sm:$0xf]
    %v8607 = vld [vmem:[%s6 + $0x150] sm:$0xf]
    %v8608 = vld [vmem:[%s6 + $0x154] sm:$0xf]
    %v8609 = vld [vmem:[%s6 + $0x158] sm:$0xf]
    %v8610 = vld [vmem:[%s6 + $0x15c] sm:$0xf]
    %v8611 = vld [vmem:[%s6 + $0x160] sm:$0xf]
    %v8612 = vld [vmem:[%s6 + $0x164] sm:$0xf]
    %v8613 = vld [vmem:[%s6 + $0x168] sm:$0xf]
    %v8614 = vld [vmem:[%s6 + $0x16c] sm:$0xf]
    %v8615 = vld [vmem:[%s6 + $0x170] sm:$0xf]
    %v8616 = vld [vmem:[%s6 + $0x174] sm:$0xf]
    %v8617 = vld [vmem:[%s6 + $0x178] sm:$0xf]
    %v8618 = vld [vmem:[%s6 + $0x17c] sm:$0xf]
    %v8619 = vld [vmem:[%s6 + $0x180] sm:$0xf]
    %v8620 = vld [vmem:[%s6 + $0x184] sm:$0xf]
    %v8621 = vld [vmem:[%s6 + $0x188] sm:$0xf]
    %v8622 = vld [vmem:[%s6 + $0x18c] sm:$0xf]
    %v8623 = vld [vmem:[%s6 + $0x190] sm:$0xf]
    %v8624 = vld [vmem:[%s6 + $0x194] sm:$0xf]
    %v8625 = vld [vmem:[%s6 + $0x198] sm:$0xf]
    %v8626 = vld [vmem:[%s6 + $0x19c] sm:$0xf]
    %v8627 = vld [vmem:[%s6 + $0x1a0] sm:$0xf]
    %v8628 = vld [vmem:[%s6 + $0x1a4] sm:$0xf]
    %v8629 = vld [vmem:[%s6 + $0x1a8] sm:$0xf]
    %v8630 = vld [vmem:[%s6 + $0x1ac] sm:$0xf]
    %v8631 = vld [vmem:[%s6 + $0x1b0] sm:$0xf]
    %v8632 = vld [vmem:[%s6 + $0x1b4] sm:$0xf]
    %v8633 = vld [vmem:[%s6 + $0x1b8] sm:$0xf]
    %v8634 = vld [vmem:[%s6 + $0x1bc] sm:$0xf]
    %v8635 = vld [vmem:[%s6 + $0x1c0] sm:$0xf]
    %v8636 = vld [vmem:[%s6 + $0x1c4] sm:$0xf]
    %v8637 = vld [vmem:[%s6 + $0x1c8] sm:$0xf]
    %v8638 = vld [vmem:[%s6 + $0x1cc] sm:$0xf]
    %v8639 = vld [vmem:[%s6 + $0x1d0] sm:$0xf]
    %v8640 = vld [vmem:[%s6 + $0x1d4] sm:$0xf]
    %v8641 = vld [vmem:[%s6 + $0x1d8] sm:$0xf]
    %v8642 = vld [vmem:[%s6 + $0x1dc] sm:$0xf]
    %v8643 = vld [vmem:[%s6 + $0x1e0] sm:$0xf]
    %v8644 = vld [vmem:[%s6 + $0x1e4] sm:$0xf]
    %v8645 = vld [vmem:[%s6 + $0x1e8] sm:$0xf]
    %v8646 = vld [vmem:[%s6 + $0x1ec] sm:$0xf]
    %v8647 = vld [vmem:[%s6 + $0x1f0] sm:$0xf]
    %v8648 = vld [vmem:[%s6 + $0x1f4] sm:$0xf]
    %v8649 = vld [vmem:[%s6 + $0x1f8] sm:$0xf]
    %v8650 = vld [vmem:[%s6 + $0x1fc] sm:$0xf]
    %v8651 = vld [vmem:[%s6 + $0x200] sm:$0xf]
    %v8652 = vld [vmem:[%s6 + $0x204] sm:$0xf]
    %v8653 = vld [vmem:[%s6 + $0x208] sm:$0xf]
    %v8654 = vld [vmem:[%s6 + $0x20c] sm:$0xf]
    %v8655 = vld [vmem:[%s6 + $0x210] sm:$0xf]
    %v8656 = vld [vmem:[%s6 + $0x214] sm:$0xf]
    %v8657 = vld [vmem:[%s6 + $0x218] sm:$0xf]
    %v8658 = vld [vmem:[%s6 + $0x21c] sm:$0xf]
    %v8659 = vld [vmem:[%s6 + $0x220] sm:$0xf]
    %v8660 = vld [vmem:[%s6 + $0x224] sm:$0xf]
    %v8661 = vld [vmem:[%s6 + $0x228] sm:$0xf]
    %v8662 = vld [vmem:[%s6 + $0x22c] sm:$0xf]
    %v8663 = vld [vmem:[%s6 + $0x230] sm:$0xf]
    %v8664 = vld [vmem:[%s6 + $0x234] sm:$0xf]
    %v8665 = vld [vmem:[%s6 + $0x238] sm:$0xf]
    %v8666 = vld [vmem:[%s6 + $0x23c] sm:$0xf]
    %v8667 = vld [vmem:[%s7] sm:$0x1]
    %v8669 = vlaneseq
    %v8670 = vshrl.u32 %v8669, 7
    %v8671 = vsub.s32 0, %v8670
    %v8672 = vrot.slane %v8667, %v8671
    %v8818 = vunpack.c.l.b16 %v8523
    %v8819 = vunpack.c.l.b16 %v8524
    %v8820 = vunpack.c.l.b16 %v8525
    %v8821 = vunpack.c.l.b16 %v8526
    %v8822 = vunpack.c.l.b16 %v8527
    %v8823 = vunpack.c.l.b16 %v8528
    %v8824 = vunpack.c.l.b16 %v8529
    %v8825 = vunpack.c.l.b16 %v8530
    %v8826 = vunpack.c.l.b16 %v8531
    %v8827 = vunpack.c.l.b16 %v8532
    %v8828 = vunpack.c.l.b16 %v8533
    %v8829 = vunpack.c.l.b16 %v8534
    %v8830 = vunpack.c.l.b16 %v8535
    %v8831 = vunpack.c.l.b16 %v8536
    %v8832 = vunpack.c.l.b16 %v8537
    %v8833 = vunpack.c.l.b16 %v8538
    %v8834 = vunpack.c.l.b16 %v8539
    %v8835 = vunpack.c.l.b16 %v8540
    %v8836 = vunpack.c.l.b16 %v8541
    %v8837 = vunpack.c.l.b16 %v8542
    %v8838 = vunpack.c.l.b16 %v8543
    %v8839 = vunpack.c.l.b16 %v8544
    %v8840 = vunpack.c.l.b16 %v8545
    %v8841 = vunpack.c.l.b16 %v8546
    %v8842 = vunpack.c.l.b16 %v8547
    %v8843 = vunpack.c.l.b16 %v8548
    %v8844 = vunpack.c.l.b16 %v8549
    %v8845 = vunpack.c.l.b16 %v8550
    %v8846 = vunpack.c.l.b16 %v8551
    %v8847 = vunpack.c.l.b16 %v8552
    %v8848 = vunpack.c.l.b16 %v8553
    %v8849 = vunpack.c.l.b16 %v8554
    %v8850 = vunpack.c.l.b16 %v8555
    %v8851 = vunpack.c.l.b16 %v8556
    %v8852 = vunpack.c.l.b16 %v8557
    %v8853 = vunpack.c.l.b16 %v8558
    %v8854 = vunpack.c.l.b16 %v8559
    %v8855 = vunpack.c.l.b16 %v8560
    %v8856 = vunpack.c.l.b16 %v8561
    %v8857 = vunpack.c.l.b16 %v8562
    %v8858 = vunpack.c.l.b16 %v8563
    %v8859 = vunpack.c.l.b16 %v8564
    %v8860 = vunpack.c.l.b16 %v8565
    %v8861 = vunpack.c.l.b16 %v8566
    %v8862 = vunpack.c.l.b16 %v8567
    %v8863 = vunpack.c.l.b16 %v8568
    %v8864 = vunpack.c.l.b16 %v8569
    %v8865 = vunpack.c.l.b16 %v8570
    %v8866 = vunpack.c.l.b16 %v8571
    %v8867 = vunpack.c.l.b16 %v8572
    %v8868 = vunpack.c.l.b16 %v8573
    %v8869 = vunpack.c.l.b16 %v8574
    %v8870 = vunpack.c.l.b16 %v8575
    %v8871 = vunpack.c.l.b16 %v8576
    %v8872 = vunpack.c.l.b16 %v8577
    %v8873 = vunpack.c.l.b16 %v8578
    %v8874 = vunpack.c.l.b16 %v8579
    %v8875 = vunpack.c.l.b16 %v8580
    %v8876 = vunpack.c.l.b16 %v8581
    %v8877 = vunpack.c.l.b16 %v8582
    %v8878 = vunpack.c.l.b16 %v8583
    %v8879 = vunpack.c.l.b16 %v8584
    %v8880 = vunpack.c.l.b16 %v8585
    %v8881 = vunpack.c.l.b16 %v8586
    %v8882 = vunpack.c.l.b16 %v8587
    %v8883 = vunpack.c.l.b16 %v8588
    %v8884 = vunpack.c.l.b16 %v8589
    %v8885 = vunpack.c.l.b16 %v8590
    %v8886 = vunpack.c.l.b16 %v8591
    %v8887 = vunpack.c.l.b16 %v8592
    %v8888 = vunpack.c.l.b16 %v8593
    %v8889 = vunpack.c.l.b16 %v8594
    %v8890 = vunpack.c.l.b16 %v8595
    %v8891 = vunpack.c.l.b16 %v8596
    %v8892 = vunpack.c.l.b16 %v8597
    %v8893 = vunpack.c.l.b16 %v8598
    %v8894 = vunpack.c.l.b16 %v8599
    %v8895 = vunpack.c.l.b16 %v8600
    %v8896 = vunpack.c.l.b16 %v8601
    %v8897 = vunpack.c.l.b16 %v8602
    %v8898 = vunpack.c.l.b16 %v8603
    %v8899 = vunpack.c.l.b16 %v8604
    %v8900 = vunpack.c.l.b16 %v8605
    %v8901 = vunpack.c.l.b16 %v8606
    %v8902 = vunpack.c.l.b16 %v8607
    %v8903 = vunpack.c.l.b16 %v8608
    %v8904 = vunpack.c.l.b16 %v8609
    %v8905 = vunpack.c.l.b16 %v8610
    %v8906 = vunpack.c.l.b16 %v8611
    %v8907 = vunpack.c.l.b16 %v8612
    %v8908 = vunpack.c.l.b16 %v8613
    %v8909 = vunpack.c.l.b16 %v8614
    %v8910 = vunpack.c.l.b16 %v8615
    %v8911 = vunpack.c.l.b16 %v8616
    %v8912 = vunpack.c.l.b16 %v8617
    %v8913 = vunpack.c.l.b16 %v8618
    %v8914 = vunpack.c.l.b16 %v8619
    %v8915 = vunpack.c.l.b16 %v8620
    %v8916 = vunpack.c.l.b16 %v8621
    %v8917 = vunpack.c.l.b16 %v8622
    %v8918 = vunpack.c.l.b16 %v8623
    %v8919 = vunpack.c.l.b16 %v8624
    %v8920 = vunpack.c.l.b16 %v8625
    %v8921 = vunpack.c.l.b16 %v8626
    %v8922 = vunpack.c.l.b16 %v8627
    %v8923 = vunpack.c.l.b16 %v8628
    %v8924 = vunpack.c.l.b16 %v8629
    %v8925 = vunpack.c.l.b16 %v8630
    %v8926 = vunpack.c.l.b16 %v8631
    %v8927 = vunpack.c.l.b16 %v8632
    %v8928 = vunpack.c.l.b16 %v8633
    %v8929 = vunpack.c.l.b16 %v8634
    %v8930 = vunpack.c.l.b16 %v8635
    %v8931 = vunpack.c.l.b16 %v8636
    %v8932 = vunpack.c.l.b16 %v8637
    %v8933 = vunpack.c.l.b16 %v8638
    %v8934 = vunpack.c.l.b16 %v8639
    %v8935 = vunpack.c.l.b16 %v8640
    %v8936 = vunpack.c.l.b16 %v8641
    %v8937 = vunpack.c.l.b16 %v8642
    %v8938 = vunpack.c.l.b16 %v8643
    %v8939 = vunpack.c.l.b16 %v8644
    %v8940 = vunpack.c.l.b16 %v8645
    %v8941 = vunpack.c.l.b16 %v8646
    %v8942 = vunpack.c.l.b16 %v8647
    %v8943 = vunpack.c.l.b16 %v8648
    %v8944 = vunpack.c.l.b16 %v8649
    %v8945 = vunpack.c.l.b16 %v8650
    %v8946 = vunpack.c.l.b16 %v8651
    %v8947 = vunpack.c.l.b16 %v8652
    %v8948 = vunpack.c.l.b16 %v8653
    %v8949 = vunpack.c.l.b16 %v8654
    %v8950 = vunpack.c.l.b16 %v8655
    %v8951 = vunpack.c.l.b16 %v8656
    %v8952 = vunpack.c.l.b16 %v8657
    %v8953 = vunpack.c.l.b16 %v8658
    %v8954 = vunpack.c.l.b16 %v8659
    %v8955 = vunpack.c.l.b16 %v8660
    %v8956 = vunpack.c.l.b16 %v8661
    %v8957 = vunpack.c.l.b16 %v8662
    %v8958 = vunpack.c.l.b16 %v8663
    %v8959 = vunpack.c.l.b16 %v8664
    %v8960 = vunpack.c.l.b16 %v8665
    %v8961 = vunpack.c.l.b16 %v8666
    %v8962 = vpack.c.b16 %v8819, %v8818
    %v8963 = vpack.c.b16 %v8821, %v8820
    %v8964 = vpack.c.b16 %v8823, %v8822
    %v8965 = vpack.c.b16 %v8825, %v8824
    %v8966 = vpack.c.b16 %v8827, %v8826
    %v8967 = vpack.c.b16 %v8829, %v8828
    %v8968 = vpack.c.b16 %v8831, %v8830
    %v8969 = vpack.c.b16 %v8833, %v8832
    %v8970 = vpack.c.b16 %v8835, %v8834
    %v8971 = vpack.c.b16 %v8837, %v8836
    %v8972 = vpack.c.b16 %v8839, %v8838
    %v8973 = vpack.c.b16 %v8841, %v8840
    %v8974 = vpack.c.b16 %v8843, %v8842
    %v8975 = vpack.c.b16 %v8845, %v8844
    %v8976 = vpack.c.b16 %v8847, %v8846
    %v8977 = vpack.c.b16 %v8849, %v8848
    %v8978 = vpack.c.b16 %v8851, %v8850
    %v8979 = vpack.c.b16 %v8853, %v8852
    %v8980 = vpack.c.b16 %v8855, %v8854
    %v8981 = vpack.c.b16 %v8857, %v8856
    %v8982 = vpack.c.b16 %v8859, %v8858
    %v8983 = vpack.c.b16 %v8861, %v8860
    %v8984 = vpack.c.b16 %v8863, %v8862
    %v8985 = vpack.c.b16 %v8865, %v8864
    %v8986 = vpack.c.b16 %v8867, %v8866
    %v8987 = vpack.c.b16 %v8869, %v8868
    %v8988 = vpack.c.b16 %v8871, %v8870
    %v8989 = vpack.c.b16 %v8873, %v8872
    %v8990 = vpack.c.b16 %v8875, %v8874
    %v8991 = vpack.c.b16 %v8877, %v8876
    %v8992 = vpack.c.b16 %v8879, %v8878
    %v8993 = vpack.c.b16 %v8881, %v8880
    %v8994 = vpack.c.b16 %v8883, %v8882
    %v8995 = vpack.c.b16 %v8885, %v8884
    %v8996 = vpack.c.b16 %v8887, %v8886
    %v8997 = vpack.c.b16 %v8889, %v8888
    %v8998 = vpack.c.b16 %v8891, %v8890
    %v8999 = vpack.c.b16 %v8893, %v8892
    %v9000 = vpack.c.b16 %v8895, %v8894
    %v9001 = vpack.c.b16 %v8897, %v8896
    %v9002 = vpack.c.b16 %v8899, %v8898
    %v9003 = vpack.c.b16 %v8901, %v8900
    %v9004 = vpack.c.b16 %v8903, %v8902
    %v9005 = vpack.c.b16 %v8905, %v8904
    %v9006 = vpack.c.b16 %v8907, %v8906
    %v9007 = vpack.c.b16 %v8909, %v8908
    %v9008 = vpack.c.b16 %v8911, %v8910
    %v9009 = vpack.c.b16 %v8913, %v8912
    %v9010 = vpack.c.b16 %v8915, %v8914
    %v9011 = vpack.c.b16 %v8917, %v8916
    %v9012 = vpack.c.b16 %v8919, %v8918
    %v9013 = vpack.c.b16 %v8921, %v8920
    %v9014 = vpack.c.b16 %v8923, %v8922
    %v9015 = vpack.c.b16 %v8925, %v8924
    %v9016 = vpack.c.b16 %v8927, %v8926
    %v9017 = vpack.c.b16 %v8929, %v8928
    %v9018 = vpack.c.b16 %v8931, %v8930
    %v9019 = vpack.c.b16 %v8933, %v8932
    %v9020 = vpack.c.b16 %v8935, %v8934
    %v9021 = vpack.c.b16 %v8937, %v8936
    %v9022 = vpack.c.b16 %v8939, %v8938
    %v9023 = vpack.c.b16 %v8941, %v8940
    %v9024 = vpack.c.b16 %v8943, %v8942
    %v9025 = vpack.c.b16 %v8945, %v8944
    %v9026 = vpack.c.b16 %v8947, %v8946
    %v9027 = vpack.c.b16 %v8949, %v8948
    %v9028 = vpack.c.b16 %v8951, %v8950
    %v9029 = vpack.c.b16 %v8953, %v8952
    %v9030 = vpack.c.b16 %v8955, %v8954
    %v9031 = vpack.c.b16 %v8957, %v8956
    %v9032 = vpack.c.b16 %v8959, %v8958
    %v9033 = vpack.c.b16 %v8961, %v8960
    %9106 = vmatprep.subr.bf16.mxu0 0
    %9107 = vmatpush1.bf16.msra.mxu0 %v8969
    %9108 = vmatprep.subr.bf16.mxu0 0
    %9109 = vmatpush1.bf16.msra.mxu0 %v8968
    %9110 = vmatprep.subr.bf16.mxu0 0
    %9111 = vmatpush1.bf16.msra.mxu0 %v8967
    %9112 = vmatprep.subr.bf16.mxu0 0
    %9113 = vmatpush1.bf16.msra.mxu0 %v8966
    %9114 = vmatprep.subr.bf16.mxu0 0
    %9115 = vmatpush1.bf16.msra.mxu0 %v8965
    %9116 = vmatprep.subr.bf16.mxu0 0
    %9117 = vmatpush1.bf16.msra.mxu0 %v8964
    %9118 = vmatprep.subr.bf16.mxu0 0
    %9119 = vmatpush1.bf16.msra.mxu0 %v8963
    %9120 = vmatprep.subr.bf16.mxu0 0
    %9121 = vmatpush1.bf16.msra.mxu0 %v8962
    %9122 = vmatprep.subr.bf16.mxu0 0
    %9123 = vmatpush2.bf16.msra.mxu0 %v8977
    %9124 = vmatprep.subr.bf16.mxu0 0
    %9125 = vmatpush2.bf16.msra.mxu0 %v8976
    %9126 = vmatprep.subr.bf16.mxu0 0
    %9127 = vmatpush2.bf16.msra.mxu0 %v8975
    %9128 = vmatprep.subr.bf16.mxu0 0
    %9129 = vmatpush2.bf16.msra.mxu0 %v8974
    %9130 = vmatprep.subr.bf16.mxu0 0
    %9131 = vmatpush2.bf16.msra.mxu0 %v8973
    %9132 = vmatprep.subr.bf16.mxu0 0
    %9133 = vmatpush2.bf16.msra.mxu0 %v8972
    %9134 = vmatprep.subr.bf16.mxu0 0
    %9135 = vmatpush2.bf16.msra.mxu0 %v8971
    %9136 = vmatprep.subr.bf16.mxu0 0
    %9137 = vmatpush2.bf16.msra.mxu0 %v8970
    %9138 = vmatprep.mubr.bf16.mxu0 %v7691
    %9139 = vmatmul.mubr.bf16.gmra.mxu0 %v7595
    %v9140 = vpop.f32.mrf.mxu0
    %v9141 = vadd.f32 %v8672, %v9140
    %v9142 = vpop.f32.mrf.mxu0
    %v9143 = vpop.f32.mrf.mxu0
    %v9144 = vadd.f32 %v8672, %v9143
    %v9145 = vpop.f32.mrf.mxu0
    %9146 = vmatprep.mubr.bf16.mxu0 %v7692
    %9147 = vmatmul.mubr.bf16.gmra.mxu0 %v7596
    %v9148 = vpop.f32.mrf.mxu0
    %v9149 = vadd.f32 %v8672, %v9148
    %v9150 = vpop.f32.mrf.mxu0
    %v9151 = vpop.f32.mrf.mxu0
    %v9152 = vadd.f32 %v8672, %v9151
    %v9153 = vpop.f32.mrf.mxu0
    %9154 = vmatprep.mubr.bf16.mxu0 %v7693
    %9155 = vmatmul.mubr.bf16.gmra.mxu0 %v7597
    %v9156 = vpop.f32.mrf.mxu0
    %v9157 = vadd.f32 %v8672, %v9156
    %v9158 = vpop.f32.mrf.mxu0
    %v9159 = vpop.f32.mrf.mxu0
    %v9160 = vadd.f32 %v8672, %v9159
    %v9161 = vpop.f32.mrf.mxu0
    %9162 = vmatprep.mubr.bf16.mxu0 %v7694
    %9163 = vmatmul.mubr.bf16.gmra.mxu0 %v7598
    %v9164 = vpop.f32.mrf.mxu0
    %v9165 = vadd.f32 %v8672, %v9164
    %v9166 = vpop.f32.mrf.mxu0
    %v9167 = vpop.f32.mrf.mxu0
    %v9168 = vadd.f32 %v8672, %v9167
    %v9169 = vpop.f32.mrf.mxu0
    %9170 = vmatprep.mubr.bf16.mxu0 %v7695
    %9171 = vmatmul.mubr.bf16.gmra.mxu0 %v7599
    %v9172 = vpop.f32.mrf.mxu0
    %v9173 = vadd.f32 %v8672, %v9172
    %v9174 = vpop.f32.mrf.mxu0
    %v9175 = vpop.f32.mrf.mxu0
    %v9176 = vadd.f32 %v8672, %v9175
    %v9177 = vpop.f32.mrf.mxu0
    %9178 = vmatprep.mubr.bf16.mxu0 %v7696
    %9179 = vmatmul.mubr.bf16.gmra.mxu0 %v7600
    %v9180 = vpop.f32.mrf.mxu0
    %v9181 = vadd.f32 %v8672, %v9180
    %v9182 = vpop.f32.mrf.mxu0
    %v9183 = vpop.f32.mrf.mxu0
    %v9184 = vadd.f32 %v8672, %v9183
    %v9185 = vpop.f32.mrf.mxu0
    %9186 = vmatprep.mubr.bf16.mxu0 %v7697
    %9187 = vmatmul.mubr.bf16.gmra.mxu0 %v7601
    %v9188 = vpop.f32.mrf.mxu0
    %v9189 = vadd.f32 %v8672, %v9188
    %v9190 = vpop.f32.mrf.mxu0
    %v9191 = vpop.f32.mrf.mxu0
    %v9192 = vadd.f32 %v8672, %v9191
    %v9193 = vpop.f32.mrf.mxu0
    %9194 = vmatprep.mubr.bf16.mxu0 %v7698
    %9195 = vmatmul.mubr.bf16.gmra.mxu0 %v7602
    %v9196 = vpop.f32.mrf.mxu0
    %v9197 = vadd.f32 %v8672, %v9196
    %v9198 = vpop.f32.mrf.mxu0
    %v9199 = vpop.f32.mrf.mxu0
    %v9200 = vadd.f32 %v8672, %v9199
    %v9201 = vpop.f32.mrf.mxu0
    %9202 = vmatprep.mubr.bf16.mxu0 %v7699
    %9203 = vmatmul.mubr.bf16.gmra.mxu0 %v7603
    %v9204 = vpop.f32.mrf.mxu0
    %v9205 = vadd.f32 %v8672, %v9204
    %v9206 = vpop.f32.mrf.mxu0
    %v9207 = vpop.f32.mrf.mxu0
    %v9208 = vadd.f32 %v8672, %v9207
    %v9209 = vpop.f32.mrf.mxu0
    %9210 = vmatprep.mubr.bf16.mxu0 %v7700
    %9211 = vmatmul.mubr.bf16.gmra.mxu0 %v7604
    %v9212 = vpop.f32.mrf.mxu0
    %v9213 = vadd.f32 %v8672, %v9212
    %v9214 = vpop.f32.mrf.mxu0
    %v9215 = vpop.f32.mrf.mxu0
    %v9216 = vadd.f32 %v8672, %v9215
    %v9217 = vpop.f32.mrf.mxu0
    %9218 = vmatprep.mubr.bf16.mxu0 %v7701
    %9219 = vmatmul.mubr.bf16.gmra.mxu0 %v7605
    %v9220 = vpop.f32.mrf.mxu0
    %v9221 = vadd.f32 %v8672, %v9220
    %v9222 = vpop.f32.mrf.mxu0
    %v9223 = vpop.f32.mrf.mxu0
    %v9224 = vadd.f32 %v8672, %v9223
    %v9225 = vpop.f32.mrf.mxu0
    %9226 = vmatprep.mubr.bf16.mxu0 %v7702
    %9227 = vmatmul.mubr.bf16.gmra.mxu0 %v7606
    %v9228 = vpop.f32.mrf.mxu0
    %v9229 = vadd.f32 %v8672, %v9228
    %v9230 = vpop.f32.mrf.mxu0
    %v9231 = vpop.f32.mrf.mxu0
    %v9232 = vadd.f32 %v8672, %v9231
    %v9233 = vpop.f32.mrf.mxu0
    %9234 = vmatprep.mubr.bf16.mxu0 %v7703
    %9235 = vmatmul.mubr.bf16.gmra.mxu0 %v7607
    %v9236 = vpop.f32.mrf.mxu0
    %v9237 = vadd.f32 %v8672, %v9236
    %v9238 = vpop.f32.mrf.mxu0
    %v9239 = vpop.f32.mrf.mxu0
    %v9240 = vadd.f32 %v8672, %v9239
    %v9241 = vpop.f32.mrf.mxu0
    %9242 = vmatprep.mubr.bf16.mxu0 %v7704
    %9243 = vmatmul.mubr.bf16.gmra.mxu0 %v7608
    %v9244 = vpop.f32.mrf.mxu0
    %v9245 = vadd.f32 %v8672, %v9244
    %v9246 = vpop.f32.mrf.mxu0
    %v9247 = vpop.f32.mrf.mxu0
    %v9248 = vadd.f32 %v8672, %v9247
    %v9249 = vpop.f32.mrf.mxu0
    %9250 = vmatprep.mubr.bf16.mxu0 %v7705
    %9251 = vmatmul.mubr.bf16.gmra.mxu0 %v7609
    %v9252 = vpop.f32.mrf.mxu0
    %v9253 = vadd.f32 %v8672, %v9252
    %v9254 = vpop.f32.mrf.mxu0
    %v9255 = vpop.f32.mrf.mxu0
    %v9256 = vadd.f32 %v8672, %v9255
    %v9257 = vpop.f32.mrf.mxu0
    %9258 = vmatprep.mubr.bf16.mxu0 %v7706
    %9259 = vmatmul.mubr.bf16.gmra.mxu0 %v7610
    %v9260 = vpop.f32.mrf.mxu0
    %v9261 = vadd.f32 %v8672, %v9260
    %v9262 = vpop.f32.mrf.mxu0
    %v9263 = vpop.f32.mrf.mxu0
    %v9264 = vadd.f32 %v8672, %v9263
    %v9265 = vpop.f32.mrf.mxu0
    %9266 = vmatprep.mubr.bf16.mxu0 %v7707
    %9267 = vmatmul.mubr.bf16.gmra.mxu0 %v7611
    %v9268 = vpop.f32.mrf.mxu0
    %v9269 = vadd.f32 %v8672, %v9268
    %v9270 = vpop.f32.mrf.mxu0
    %v9271 = vpop.f32.mrf.mxu0
    %v9272 = vadd.f32 %v8672, %v9271
    %v9273 = vpop.f32.mrf.mxu0
    %9274 = vmatprep.mubr.bf16.mxu0 %v7708
    %9275 = vmatmul.mubr.bf16.gmra.mxu0 %v7612
    %v9276 = vpop.f32.mrf.mxu0
    %v9277 = vadd.f32 %v8672, %v9276
    %v9278 = vpop.f32.mrf.mxu0
    %v9279 = vpop.f32.mrf.mxu0
    %v9280 = vadd.f32 %v8672, %v9279
    %v9281 = vpop.f32.mrf.mxu0
    %9282 = vmatprep.mubr.bf16.mxu0 %v7709
    %9283 = vmatmul.mubr.bf16.gmra.mxu0 %v7613
    %v9284 = vpop.f32.mrf.mxu0
    %v9285 = vadd.f32 %v8672, %v9284
    %v9286 = vpop.f32.mrf.mxu0
    %v9287 = vpop.f32.mrf.mxu0
    %v9288 = vadd.f32 %v8672, %v9287
    %v9289 = vpop.f32.mrf.mxu0
    %9290 = vmatprep.mubr.bf16.mxu0 %v7710
    %9291 = vmatmul.mubr.bf16.gmra.mxu0 %v7614
    %v9292 = vpop.f32.mrf.mxu0
    %v9293 = vadd.f32 %v8672, %v9292
    %v9294 = vpop.f32.mrf.mxu0
    %v9295 = vpop.f32.mrf.mxu0
    %v9296 = vadd.f32 %v8672, %v9295
    %v9297 = vpop.f32.mrf.mxu0
    %9298 = vmatprep.mubr.bf16.mxu0 %v7711
    %9299 = vmatmul.mubr.bf16.gmra.mxu0 %v7615
    %v9300 = vpop.f32.mrf.mxu0
    %v9301 = vadd.f32 %v8672, %v9300
    %v9302 = vpop.f32.mrf.mxu0
    %v9303 = vpop.f32.mrf.mxu0
    %v9304 = vadd.f32 %v8672, %v9303
    %v9305 = vpop.f32.mrf.mxu0
    %9306 = vmatprep.mubr.bf16.mxu0 %v7712
    %9307 = vmatmul.mubr.bf16.gmra.mxu0 %v7616
    %v9308 = vpop.f32.mrf.mxu0
    %v9309 = vadd.f32 %v8672, %v9308
    %v9310 = vpop.f32.mrf.mxu0
    %v9311 = vpop.f32.mrf.mxu0
    %v9312 = vadd.f32 %v8672, %v9311
    %v9313 = vpop.f32.mrf.mxu0
    %9314 = vmatprep.mubr.bf16.mxu0 %v7713
    %9315 = vmatmul.mubr.bf16.gmra.mxu0 %v7617
    %v9316 = vpop.f32.mrf.mxu0
    %v9317 = vadd.f32 %v8672, %v9316
    %v9318 = vpop.f32.mrf.mxu0
    %v9319 = vpop.f32.mrf.mxu0
    %v9320 = vadd.f32 %v8672, %v9319
    %v9321 = vpop.f32.mrf.mxu0
    %9322 = vmatprep.mubr.bf16.mxu0 %v7714
    %9323 = vmatmul.mubr.bf16.gmra.mxu0 %v7618
    %v9324 = vpop.f32.mrf.mxu0
    %v9325 = vadd.f32 %v8672, %v9324
    %v9326 = vpop.f32.mrf.mxu0
    %v9327 = vpop.f32.mrf.mxu0
    %v9328 = vadd.f32 %v8672, %v9327
    %v9329 = vpop.f32.mrf.mxu0
    %9330 = vmatprep.mubr.bf16.mxu0 %v7715
    %9331 = vmatmul.mubr.bf16.gmra.mxu0 %v7619
    %v9332 = vpop.f32.mrf.mxu0
    %v9333 = vadd.f32 %v8672, %v9332
    %v9334 = vpop.f32.mrf.mxu0
    %v9335 = vpop.f32.mrf.mxu0
    %v9336 = vadd.f32 %v8672, %v9335
    %v9337 = vpop.f32.mrf.mxu0
    %9338 = vmatprep.mubr.bf16.mxu0 %v7716
    %9339 = vmatmul.mubr.bf16.gmra.mxu0 %v7620
    %v9340 = vpop.f32.mrf.mxu0
    %v9341 = vadd.f32 %v8672, %v9340
    %v9342 = vpop.f32.mrf.mxu0
    %v9343 = vpop.f32.mrf.mxu0
    %v9344 = vadd.f32 %v8672, %v9343
    %v9345 = vpop.f32.mrf.mxu0
    %9346 = vmatprep.mubr.bf16.mxu0 %v7717
    %9347 = vmatmul.mubr.bf16.gmra.mxu0 %v7621
    %v9348 = vpop.f32.mrf.mxu0
    %v9349 = vadd.f32 %v8672, %v9348
    %v9350 = vpop.f32.mrf.mxu0
    %v9351 = vpop.f32.mrf.mxu0
    %v9352 = vadd.f32 %v8672, %v9351
    %v9353 = vpop.f32.mrf.mxu0
    %9354 = vmatprep.mubr.bf16.mxu0 %v7718
    %9355 = vmatmul.mubr.bf16.gmra.mxu0 %v7622
    %v9356 = vpop.f32.mrf.mxu0
    %v9357 = vadd.f32 %v8672, %v9356
    %v9358 = vpop.f32.mrf.mxu0
    %v9359 = vpop.f32.mrf.mxu0
    %v9360 = vadd.f32 %v8672, %v9359
    %v9361 = vpop.f32.mrf.mxu0
    %9362 = vmatprep.mubr.bf16.mxu0 %v7719
    %9363 = vmatmul.mubr.bf16.gmra.mxu0 %v7623
    %v9364 = vpop.f32.mrf.mxu0
    %v9365 = vadd.f32 %v8672, %v9364
    %v9366 = vpop.f32.mrf.mxu0
    %v9367 = vpop.f32.mrf.mxu0
    %v9368 = vadd.f32 %v8672, %v9367
    %v9369 = vpop.f32.mrf.mxu0
    %9370 = vmatprep.mubr.bf16.mxu0 %v7720
    %9371 = vmatmul.mubr.bf16.gmra.mxu0 %v7624
    %v9372 = vpop.f32.mrf.mxu0
    %v9373 = vadd.f32 %v8672, %v9372
    %v9374 = vpop.f32.mrf.mxu0
    %v9375 = vpop.f32.mrf.mxu0
    %v9376 = vadd.f32 %v8672, %v9375
    %v9377 = vpop.f32.mrf.mxu0
    %9378 = vmatprep.mubr.bf16.mxu0 %v7721
    %9379 = vmatmul.mubr.bf16.gmra.mxu0 %v7625
    %v9380 = vpop.f32.mrf.mxu0
    %v9381 = vadd.f32 %v8672, %v9380
    %v9382 = vpop.f32.mrf.mxu0
    %v9383 = vpop.f32.mrf.mxu0
    %v9384 = vadd.f32 %v8672, %v9383
    %v9385 = vpop.f32.mrf.mxu0
    %9386 = vmatprep.mubr.bf16.mxu0 %v7722
    %9387 = vmatmul.mubr.bf16.gmra.mxu0 %v7626
    %v9388 = vpop.f32.mrf.mxu0
    %v9389 = vadd.f32 %v8672, %v9388
    %v9390 = vpop.f32.mrf.mxu0
    %v9391 = vpop.f32.mrf.mxu0
    %v9392 = vadd.f32 %v8672, %v9391
    %v9393 = vpop.f32.mrf.mxu0
    %9394 = vdwg.mxu0
    %9395 = vmatprep.subr.bf16.mxu0 0
    %9396 = vmatpush1.bf16.msra.mxu0 %v8985
    %9397 = vmatprep.subr.bf16.mxu0 0
    %9398 = vmatpush1.bf16.msra.mxu0 %v8984
    %9399 = vmatprep.subr.bf16.mxu0 0
    %9400 = vmatpush1.bf16.msra.mxu0 %v8983
    %9401 = vmatprep.subr.bf16.mxu0 0
    %9402 = vmatpush1.bf16.msra.mxu0 %v8982
    %9403 = vmatprep.subr.bf16.mxu0 0
    %9404 = vmatpush1.bf16.msra.mxu0 %v8981
    %9405 = vmatprep.subr.bf16.mxu0 0
    %9406 = vmatpush1.bf16.msra.mxu0 %v8980
    %9407 = vmatprep.subr.bf16.mxu0 0
    %9408 = vmatpush1.bf16.msra.mxu0 %v8979
    %9409 = vmatprep.subr.bf16.mxu0 0
    %9410 = vmatpush1.bf16.msra.mxu0 %v8978
    %9411 = vmatprep.subr.bf16.mxu0 0
    %9412 = vmatpush2.bf16.msra.mxu0 %v8993
    %9413 = vmatprep.subr.bf16.mxu0 0
    %9414 = vmatpush2.bf16.msra.mxu0 %v8992
    %9415 = vmatprep.subr.bf16.mxu0 0
    %9416 = vmatpush2.bf16.msra.mxu0 %v8991
    %9417 = vmatprep.subr.bf16.mxu0 0
    %9418 = vmatpush2.bf16.msra.mxu0 %v8990
    %9419 = vmatprep.subr.bf16.mxu0 0
    %9420 = vmatpush2.bf16.msra.mxu0 %v8989
    %9421 = vmatprep.subr.bf16.mxu0 0
    %9422 = vmatpush2.bf16.msra.mxu0 %v8988
    %9423 = vmatprep.subr.bf16.mxu0 0
    %9424 = vmatpush2.bf16.msra.mxu0 %v8987
    %9425 = vmatprep.subr.bf16.mxu0 0
    %9426 = vmatpush2.bf16.msra.mxu0 %v8986
    %9427 = vmatprep.mubr.bf16.mxu0 %v8011
    %9428 = vmatmul.mubr.bf16.gmra.mxu0 %v7915
    %v9429 = vpop.f32.mrf.mxu0
    %v9430 = vadd.f32 %v9141, %v9429
    %v9431 = vpop.f32.mrf.mxu0
    %v9432 = vpop.f32.mrf.mxu0
    %v9433 = vadd.f32 %v9144, %v9432
    %v9434 = vpop.f32.mrf.mxu0
    %9435 = vmatprep.mubr.bf16.mxu0 %v8012
    %9436 = vmatmul.mubr.bf16.gmra.mxu0 %v7916
    %v9437 = vpop.f32.mrf.mxu0
    %v9438 = vadd.f32 %v9149, %v9437
    %v9439 = vpop.f32.mrf.mxu0
    %v9440 = vpop.f32.mrf.mxu0
    %v9441 = vadd.f32 %v9152, %v9440
    %v9442 = vpop.f32.mrf.mxu0
    %9443 = vmatprep.mubr.bf16.mxu0 %v8013
    %9444 = vmatmul.mubr.bf16.gmra.mxu0 %v7917
    %v9445 = vpop.f32.mrf.mxu0
    %v9446 = vadd.f32 %v9157, %v9445
    %v9447 = vpop.f32.mrf.mxu0
    %v9448 = vpop.f32.mrf.mxu0
    %v9449 = vadd.f32 %v9160, %v9448
    %v9450 = vpop.f32.mrf.mxu0
    %9451 = vmatprep.mubr.bf16.mxu0 %v8014
    %9452 = vmatmul.mubr.bf16.gmra.mxu0 %v7918
    %v9453 = vpop.f32.mrf.mxu0
    %v9454 = vadd.f32 %v9165, %v9453
    %v9455 = vpop.f32.mrf.mxu0
    %v9456 = vpop.f32.mrf.mxu0
    %v9457 = vadd.f32 %v9168, %v9456
    %v9458 = vpop.f32.mrf.mxu0
    %9459 = vmatprep.mubr.bf16.mxu0 %v8015
    %9460 = vmatmul.mubr.bf16.gmra.mxu0 %v7919
    %v9461 = vpop.f32.mrf.mxu0
    %v9462 = vadd.f32 %v9173, %v9461
    %v9463 = vpop.f32.mrf.mxu0
    %v9464 = vpop.f32.mrf.mxu0
    %v9465 = vadd.f32 %v9176, %v9464
    %v9466 = vpop.f32.mrf.mxu0
    %9467 = vmatprep.mubr.bf16.mxu0 %v8016
    %9468 = vmatmul.mubr.bf16.gmra.mxu0 %v7920
    %v9469 = vpop.f32.mrf.mxu0
    %v9470 = vadd.f32 %v9181, %v9469
    %v9471 = vpop.f32.mrf.mxu0
    %v9472 = vpop.f32.mrf.mxu0
    %v9473 = vadd.f32 %v9184, %v9472
    %v9474 = vpop.f32.mrf.mxu0
    %9475 = vmatprep.mubr.bf16.mxu0 %v8017
    %9476 = vmatmul.mubr.bf16.gmra.mxu0 %v7921
    %v9477 = vpop.f32.mrf.mxu0
    %v9478 = vadd.f32 %v9189, %v9477
    %v9479 = vpop.f32.mrf.mxu0
    %v9480 = vpop.f32.mrf.mxu0
    %v9481 = vadd.f32 %v9192, %v9480
    %v9482 = vpop.f32.mrf.mxu0
    %9483 = vmatprep.mubr.bf16.mxu0 %v8018
    %9484 = vmatmul.mubr.bf16.gmra.mxu0 %v7922
    %v9485 = vpop.f32.mrf.mxu0
    %v9486 = vadd.f32 %v9197, %v9485
    %v9487 = vpop.f32.mrf.mxu0
    %v9488 = vpop.f32.mrf.mxu0
    %v9489 = vadd.f32 %v9200, %v9488
    %v9490 = vpop.f32.mrf.mxu0
    %9491 = vmatprep.mubr.bf16.mxu0 %v8019
    %9492 = vmatmul.mubr.bf16.gmra.mxu0 %v7923
    %v9493 = vpop.f32.mrf.mxu0
    %v9494 = vadd.f32 %v9205, %v9493
    %v9495 = vpop.f32.mrf.mxu0
    %v9496 = vpop.f32.mrf.mxu0
    %v9497 = vadd.f32 %v9208, %v9496
    %v9498 = vpop.f32.mrf.mxu0
    %9499 = vmatprep.mubr.bf16.mxu0 %v8020
    %9500 = vmatmul.mubr.bf16.gmra.mxu0 %v7924
    %v9501 = vpop.f32.mrf.mxu0
    %v9502 = vadd.f32 %v9213, %v9501
    %v9503 = vpop.f32.mrf.mxu0
    %v9504 = vpop.f32.mrf.mxu0
    %v9505 = vadd.f32 %v9216, %v9504
    %v9506 = vpop.f32.mrf.mxu0
    %9507 = vmatprep.mubr.bf16.mxu0 %v8021
    %9508 = vmatmul.mubr.bf16.gmra.mxu0 %v7925
    %v9509 = vpop.f32.mrf.mxu0
    %v9510 = vadd.f32 %v9221, %v9509
    %v9511 = vpop.f32.mrf.mxu0
    %v9512 = vpop.f32.mrf.mxu0
    %v9513 = vadd.f32 %v9224, %v9512
    %v9514 = vpop.f32.mrf.mxu0
    %9515 = vmatprep.mubr.bf16.mxu0 %v8022
    %9516 = vmatmul.mubr.bf16.gmra.mxu0 %v7926
    %v9517 = vpop.f32.mrf.mxu0
    %v9518 = vadd.f32 %v9229, %v9517
    %v9519 = vpop.f32.mrf.mxu0
    %v9520 = vpop.f32.mrf.mxu0
    %v9521 = vadd.f32 %v9232, %v9520
    %v9522 = vpop.f32.mrf.mxu0
    %9523 = vmatprep.mubr.bf16.mxu0 %v8023
    %9524 = vmatmul.mubr.bf16.gmra.mxu0 %v7927
    %v9525 = vpop.f32.mrf.mxu0
    %v9526 = vadd.f32 %v9237, %v9525
    %v9527 = vpop.f32.mrf.mxu0
    %v9528 = vpop.f32.mrf.mxu0
    %v9529 = vadd.f32 %v9240, %v9528
    %v9530 = vpop.f32.mrf.mxu0
    %9531 = vmatprep.mubr.bf16.mxu0 %v8024
    %9532 = vmatmul.mubr.bf16.gmra.mxu0 %v7928
    %v9533 = vpop.f32.mrf.mxu0
    %v9534 = vadd.f32 %v9245, %v9533
    %v9535 = vpop.f32.mrf.mxu0
    %v9536 = vpop.f32.mrf.mxu0
    %v9537 = vadd.f32 %v9248, %v9536
    %v9538 = vpop.f32.mrf.mxu0
    %9539 = vmatprep.mubr.bf16.mxu0 %v8025
    %9540 = vmatmul.mubr.bf16.gmra.mxu0 %v7929
    %v9541 = vpop.f32.mrf.mxu0
    %v9542 = vadd.f32 %v9253, %v9541
    %v9543 = vpop.f32.mrf.mxu0
    %v9544 = vpop.f32.mrf.mxu0
    %v9545 = vadd.f32 %v9256, %v9544
    %v9546 = vpop.f32.mrf.mxu0
    %9547 = vmatprep.mubr.bf16.mxu0 %v8026
    %9548 = vmatmul.mubr.bf16.gmra.mxu0 %v7930
    %v9549 = vpop.f32.mrf.mxu0
    %v9550 = vadd.f32 %v9261, %v9549
    %v9551 = vpop.f32.mrf.mxu0
    %v9552 = vpop.f32.mrf.mxu0
    %v9553 = vadd.f32 %v9264, %v9552
    %v9554 = vpop.f32.mrf.mxu0
    %9555 = vmatprep.mubr.bf16.mxu0 %v8027
    %9556 = vmatmul.mubr.bf16.gmra.mxu0 %v7931
    %v9557 = vpop.f32.mrf.mxu0
    %v9558 = vadd.f32 %v9269, %v9557
    %v9559 = vpop.f32.mrf.mxu0
    %v9560 = vpop.f32.mrf.mxu0
    %v9561 = vadd.f32 %v9272, %v9560
    %v9562 = vpop.f32.mrf.mxu0
    %9563 = vmatprep.mubr.bf16.mxu0 %v8028
    %9564 = vmatmul.mubr.bf16.gmra.mxu0 %v7932
    %v9565 = vpop.f32.mrf.mxu0
    %v9566 = vadd.f32 %v9277, %v9565
    %v9567 = vpop.f32.mrf.mxu0
    %v9568 = vpop.f32.mrf.mxu0
    %v9569 = vadd.f32 %v9280, %v9568
    %v9570 = vpop.f32.mrf.mxu0
    %9571 = vmatprep.mubr.bf16.mxu0 %v8029
    %9572 = vmatmul.mubr.bf16.gmra.mxu0 %v7933
    %v9573 = vpop.f32.mrf.mxu0
    %v9574 = vadd.f32 %v9285, %v9573
    %v9575 = vpop.f32.mrf.mxu0
    %v9576 = vpop.f32.mrf.mxu0
    %v9577 = vadd.f32 %v9288, %v9576
    %v9578 = vpop.f32.mrf.mxu0
    %9579 = vmatprep.mubr.bf16.mxu0 %v8030
    %9580 = vmatmul.mubr.bf16.gmra.mxu0 %v7934
    %v9581 = vpop.f32.mrf.mxu0
    %v9582 = vadd.f32 %v9293, %v9581
    %v9583 = vpop.f32.mrf.mxu0
    %v9584 = vpop.f32.mrf.mxu0
    %v9585 = vadd.f32 %v9296, %v9584
    %v9586 = vpop.f32.mrf.mxu0
    %9587 = vmatprep.mubr.bf16.mxu0 %v8031
    %9588 = vmatmul.mubr.bf16.gmra.mxu0 %v7935
    %v9589 = vpop.f32.mrf.mxu0
    %v9590 = vadd.f32 %v9301, %v9589
    %v9591 = vpop.f32.mrf.mxu0
    %v9592 = vpop.f32.mrf.mxu0
    %v9593 = vadd.f32 %v9304, %v9592
    %v9594 = vpop.f32.mrf.mxu0
    %9595 = vmatprep.mubr.bf16.mxu0 %v8032
    %9596 = vmatmul.mubr.bf16.gmra.mxu0 %v7936
    %v9597 = vpop.f32.mrf.mxu0
    %v9598 = vadd.f32 %v9309, %v9597
    %v9599 = vpop.f32.mrf.mxu0
    %v9600 = vpop.f32.mrf.mxu0
    %v9601 = vadd.f32 %v9312, %v9600
    %v9602 = vpop.f32.mrf.mxu0
    %9603 = vmatprep.mubr.bf16.mxu0 %v8033
    %9604 = vmatmul.mubr.bf16.gmra.mxu0 %v7937
    %v9605 = vpop.f32.mrf.mxu0
    %v9606 = vadd.f32 %v9317, %v9605
    %v9607 = vpop.f32.mrf.mxu0
    %v9608 = vpop.f32.mrf.mxu0
    %v9609 = vadd.f32 %v9320, %v9608
    %v9610 = vpop.f32.mrf.mxu0
    %9611 = vmatprep.mubr.bf16.mxu0 %v8034
    %9612 = vmatmul.mubr.bf16.gmra.mxu0 %v7938
    %v9613 = vpop.f32.mrf.mxu0
    %v9614 = vadd.f32 %v9325, %v9613
    %v9615 = vpop.f32.mrf.mxu0
    %v9616 = vpop.f32.mrf.mxu0
    %v9617 = vadd.f32 %v9328, %v9616
    %v9618 = vpop.f32.mrf.mxu0
    %9619 = vmatprep.mubr.bf16.mxu0 %v8035
    %9620 = vmatmul.mubr.bf16.gmra.mxu0 %v7939
    %v9621 = vpop.f32.mrf.mxu0
    %v9622 = vadd.f32 %v9333, %v9621
    %v9623 = vpop.f32.mrf.mxu0
    %v9624 = vpop.f32.mrf.mxu0
    %v9625 = vadd.f32 %v9336, %v9624
    %v9626 = vpop.f32.mrf.mxu0
    %9627 = vmatprep.mubr.bf16.mxu0 %v8036
    %9628 = vmatmul.mubr.bf16.gmra.mxu0 %v7940
    %v9629 = vpop.f32.mrf.mxu0
    %v9630 = vadd.f32 %v9341, %v9629
    %v9631 = vpop.f32.mrf.mxu0
    %v9632 = vpop.f32.mrf.mxu0
    %v9633 = vadd.f32 %v9344, %v9632
    %v9634 = vpop.f32.mrf.mxu0
    %9635 = vmatprep.mubr.bf16.mxu0 %v8037
    %9636 = vmatmul.mubr.bf16.gmra.mxu0 %v7941
    %v9637 = vpop.f32.mrf.mxu0
    %v9638 = vadd.f32 %v9349, %v9637
    %v9639 = vpop.f32.mrf.mxu0
    %v9640 = vpop.f32.mrf.mxu0
    %v9641 = vadd.f32 %v9352, %v9640
    %v9642 = vpop.f32.mrf.mxu0
    %9643 = vmatprep.mubr.bf16.mxu0 %v8038
    %9644 = vmatmul.mubr.bf16.gmra.mxu0 %v7942
    %v9645 = vpop.f32.mrf.mxu0
    %v9646 = vadd.f32 %v9357, %v9645
    %v9647 = vpop.f32.mrf.mxu0
    %v9648 = vpop.f32.mrf.mxu0
    %v9649 = vadd.f32 %v9360, %v9648
    %v9650 = vpop.f32.mrf.mxu0
    %9651 = vmatprep.mubr.bf16.mxu0 %v8039
    %9652 = vmatmul.mubr.bf16.gmra.mxu0 %v7943
    %v9653 = vpop.f32.mrf.mxu0
    %v9654 = vadd.f32 %v9365, %v9653
    %v9655 = vpop.f32.mrf.mxu0
    %v9656 = vpop.f32.mrf.mxu0
    %v9657 = vadd.f32 %v9368, %v9656
    %v9658 = vpop.f32.mrf.mxu0
    %9659 = vmatprep.mubr.bf16.mxu0 %v8040
    %9660 = vmatmul.mubr.bf16.gmra.mxu0 %v7944
    %v9661 = vpop.f32.mrf.mxu0
    %v9662 = vadd.f32 %v9373, %v9661
    %v9663 = vpop.f32.mrf.mxu0
    %v9664 = vpop.f32.mrf.mxu0
    %v9665 = vadd.f32 %v9376, %v9664
    %v9666 = vpop.f32.mrf.mxu0
    %9667 = vmatprep.mubr.bf16.mxu0 %v8041
    %9668 = vmatmul.mubr.bf16.gmra.mxu0 %v7945
    %v9669 = vpop.f32.mrf.mxu0
    %v9670 = vadd.f32 %v9381, %v9669
    %v9671 = vpop.f32.mrf.mxu0
    %v9672 = vpop.f32.mrf.mxu0
    %v9673 = vadd.f32 %v9384, %v9672
    %v9674 = vpop.f32.mrf.mxu0
    %9675 = vmatprep.mubr.bf16.mxu0 %v8042
    %9676 = vmatmul.mubr.bf16.gmra.mxu0 %v7946
    %v9677 = vpop.f32.mrf.mxu0
    %v9678 = vadd.f32 %v9389, %v9677
    %v9679 = vpop.f32.mrf.mxu0
    %v9680 = vpop.f32.mrf.mxu0
    %v9681 = vadd.f32 %v9392, %v9680
    %v9682 = vpop.f32.mrf.mxu0
    %9683 = vdwg.mxu0
    %9684 = vmatprep.subr.bf16.mxu0 0
    %9685 = vmatpush1.bf16.msra.mxu0 %v9001
    %9686 = vmatprep.subr.bf16.mxu0 0
    %9687 = vmatpush1.bf16.msra.mxu0 %v9000
    %9688 = vmatprep.subr.bf16.mxu0 0
    %9689 = vmatpush1.bf16.msra.mxu0 %v8999
    %9690 = vmatprep.subr.bf16.mxu0 0
    %9691 = vmatpush1.bf16.msra.mxu0 %v8998
    %9692 = vmatprep.subr.bf16.mxu0 0
    %9693 = vmatpush1.bf16.msra.mxu0 %v8997
    %9694 = vmatprep.subr.bf16.mxu0 0
    %9695 = vmatpush1.bf16.msra.mxu0 %v8996
    %9696 = vmatprep.subr.bf16.mxu0 0
    %9697 = vmatpush1.bf16.msra.mxu0 %v8995
    %9698 = vmatprep.subr.bf16.mxu0 0
    %9699 = vmatpush1.bf16.msra.mxu0 %v8994
    %9700 = vmatprep.subr.bf16.mxu0 0
    %9701 = vmatpush2.bf16.msra.mxu0 %v9009
    %9702 = vmatprep.subr.bf16.mxu0 0
    %9703 = vmatpush2.bf16.msra.mxu0 %v9008
    %9704 = vmatprep.subr.bf16.mxu0 0
    %9705 = vmatpush2.bf16.msra.mxu0 %v9007
    %9706 = vmatprep.subr.bf16.mxu0 0
    %9707 = vmatpush2.bf16.msra.mxu0 %v9006
    %9708 = vmatprep.subr.bf16.mxu0 0
    %9709 = vmatpush2.bf16.msra.mxu0 %v9005
    %9710 = vmatprep.subr.bf16.mxu0 0
    %9711 = vmatpush2.bf16.msra.mxu0 %v9004
    %9712 = vmatprep.subr.bf16.mxu0 0
    %9713 = vmatpush2.bf16.msra.mxu0 %v9003
    %9714 = vmatprep.subr.bf16.mxu0 0
    %9715 = vmatpush2.bf16.msra.mxu0 %v9002
    %9716 = vmatprep.mubr.bf16.mxu0 %v8203
    %9717 = vmatmul.mubr.bf16.gmra.mxu0 %v8107
    %v9718 = vpop.f32.mrf.mxu0
    %v9719 = vadd.f32 %v9430, %v9718
    %v9720 = vpop.f32.mrf.mxu0
    %v9721 = vpop.f32.mrf.mxu0
    %v9722 = vadd.f32 %v9433, %v9721
    %v9723 = vpop.f32.mrf.mxu0
    %9724 = vmatprep.mubr.bf16.mxu0 %v8204
    %9725 = vmatmul.mubr.bf16.gmra.mxu0 %v8108
    %v9726 = vpop.f32.mrf.mxu0
    %v9727 = vadd.f32 %v9438, %v9726
    %v9728 = vpop.f32.mrf.mxu0
    %v9729 = vpop.f32.mrf.mxu0
    %v9730 = vadd.f32 %v9441, %v9729
    %v9731 = vpop.f32.mrf.mxu0
    %9732 = vmatprep.mubr.bf16.mxu0 %v8205
    %9733 = vmatmul.mubr.bf16.gmra.mxu0 %v8109
    %v9734 = vpop.f32.mrf.mxu0
    %v9735 = vadd.f32 %v9446, %v9734
    %v9736 = vpop.f32.mrf.mxu0
    %v9737 = vpop.f32.mrf.mxu0
    %v9738 = vadd.f32 %v9449, %v9737
    %v9739 = vpop.f32.mrf.mxu0
    %9740 = vmatprep.mubr.bf16.mxu0 %v8206
    %9741 = vmatmul.mubr.bf16.gmra.mxu0 %v8110
    %v9742 = vpop.f32.mrf.mxu0
    %v9743 = vadd.f32 %v9454, %v9742
    %v9744 = vpop.f32.mrf.mxu0
    %v9745 = vpop.f32.mrf.mxu0
    %v9746 = vadd.f32 %v9457, %v9745
    %v9747 = vpop.f32.mrf.mxu0
    %9748 = vmatprep.mubr.bf16.mxu0 %v8207
    %9749 = vmatmul.mubr.bf16.gmra.mxu0 %v8111
    %v9750 = vpop.f32.mrf.mxu0
    %v9751 = vadd.f32 %v9462, %v9750
    %v9752 = vpop.f32.mrf.mxu0
    %v9753 = vpop.f32.mrf.mxu0
    %v9754 = vadd.f32 %v9465, %v9753
    %v9755 = vpop.f32.mrf.mxu0
    %9756 = vmatprep.mubr.bf16.mxu0 %v8208
    %9757 = vmatmul.mubr.bf16.gmra.mxu0 %v8112
    %v9758 = vpop.f32.mrf.mxu0
    %v9759 = vadd.f32 %v9470, %v9758
    %v9760 = vpop.f32.mrf.mxu0
    %v9761 = vpop.f32.mrf.mxu0
    %v9762 = vadd.f32 %v9473, %v9761
    %v9763 = vpop.f32.mrf.mxu0
    %9764 = vmatprep.mubr.bf16.mxu0 %v8209
    %9765 = vmatmul.mubr.bf16.gmra.mxu0 %v8113
    %v9766 = vpop.f32.mrf.mxu0
    %v9767 = vadd.f32 %v9478, %v9766
    %v9768 = vpop.f32.mrf.mxu0
    %v9769 = vpop.f32.mrf.mxu0
    %v9770 = vadd.f32 %v9481, %v9769
    %v9771 = vpop.f32.mrf.mxu0
    %9772 = vmatprep.mubr.bf16.mxu0 %v8210
    %9773 = vmatmul.mubr.bf16.gmra.mxu0 %v8114
    %v9774 = vpop.f32.mrf.mxu0
    %v9775 = vadd.f32 %v9486, %v9774
    %v9776 = vpop.f32.mrf.mxu0
    %v9777 = vpop.f32.mrf.mxu0
    %v9778 = vadd.f32 %v9489, %v9777
    %v9779 = vpop.f32.mrf.mxu0
    %9780 = vmatprep.mubr.bf16.mxu0 %v8211
    %9781 = vmatmul.mubr.bf16.gmra.mxu0 %v8115
    %v9782 = vpop.f32.mrf.mxu0
    %v9783 = vadd.f32 %v9494, %v9782
    %v9784 = vpop.f32.mrf.mxu0
    %v9785 = vpop.f32.mrf.mxu0
    %v9786 = vadd.f32 %v9497, %v9785
    %v9787 = vpop.f32.mrf.mxu0
    %9788 = vmatprep.mubr.bf16.mxu0 %v8212
    %9789 = vmatmul.mubr.bf16.gmra.mxu0 %v8116
    %v9790 = vpop.f32.mrf.mxu0
    %v9791 = vadd.f32 %v9502, %v9790
    %v9792 = vpop.f32.mrf.mxu0
    %v9793 = vpop.f32.mrf.mxu0
    %v9794 = vadd.f32 %v9505, %v9793
    %v9795 = vpop.f32.mrf.mxu0
    %9796 = vmatprep.mubr.bf16.mxu0 %v8213
    %9797 = vmatmul.mubr.bf16.gmra.mxu0 %v8117
    %v9798 = vpop.f32.mrf.mxu0
    %v9799 = vadd.f32 %v9510, %v9798
    %v9800 = vpop.f32.mrf.mxu0
    %v9801 = vpop.f32.mrf.mxu0
    %v9802 = vadd.f32 %v9513, %v9801
    %v9803 = vpop.f32.mrf.mxu0
    %9804 = vmatprep.mubr.bf16.mxu0 %v8214
    %9805 = vmatmul.mubr.bf16.gmra.mxu0 %v8118
    %v9806 = vpop.f32.mrf.mxu0
    %v9807 = vadd.f32 %v9518, %v9806
    %v9808 = vpop.f32.mrf.mxu0
    %v9809 = vpop.f32.mrf.mxu0
    %v9810 = vadd.f32 %v9521, %v9809
    %v9811 = vpop.f32.mrf.mxu0
    %9812 = vmatprep.mubr.bf16.mxu0 %v8215
    %9813 = vmatmul.mubr.bf16.gmra.mxu0 %v8119
    %v9814 = vpop.f32.mrf.mxu0
    %v9815 = vadd.f32 %v9526, %v9814
    %v9816 = vpop.f32.mrf.mxu0
    %v9817 = vpop.f32.mrf.mxu0
    %v9818 = vadd.f32 %v9529, %v9817
    %v9819 = vpop.f32.mrf.mxu0
    %9820 = vmatprep.mubr.bf16.mxu0 %v8216
    %9821 = vmatmul.mubr.bf16.gmra.mxu0 %v8120
    %v9822 = vpop.f32.mrf.mxu0
    %v9823 = vadd.f32 %v9534, %v9822
    %v9824 = vpop.f32.mrf.mxu0
    %v9825 = vpop.f32.mrf.mxu0
    %v9826 = vadd.f32 %v9537, %v9825
    %v9827 = vpop.f32.mrf.mxu0
    %9828 = vmatprep.mubr.bf16.mxu0 %v8217
    %9829 = vmatmul.mubr.bf16.gmra.mxu0 %v8121
    %v9830 = vpop.f32.mrf.mxu0
    %v9831 = vadd.f32 %v9542, %v9830
    %v9832 = vpop.f32.mrf.mxu0
    %v9833 = vpop.f32.mrf.mxu0
    %v9834 = vadd.f32 %v9545, %v9833
    %v9835 = vpop.f32.mrf.mxu0
    %9836 = vmatprep.mubr.bf16.mxu0 %v8218
    %9837 = vmatmul.mubr.bf16.gmra.mxu0 %v8122
    %v9838 = vpop.f32.mrf.mxu0
    %v9839 = vadd.f32 %v9550, %v9838
    %v9840 = vpop.f32.mrf.mxu0
    %v9841 = vpop.f32.mrf.mxu0
    %v9842 = vadd.f32 %v9553, %v9841
    %v9843 = vpop.f32.mrf.mxu0
    %9844 = vmatprep.mubr.bf16.mxu0 %v8219
    %9845 = vmatmul.mubr.bf16.gmra.mxu0 %v8123
    %v9846 = vpop.f32.mrf.mxu0
    %v9847 = vadd.f32 %v9558, %v9846
    %v9848 = vpop.f32.mrf.mxu0
    %v9849 = vpop.f32.mrf.mxu0
    %v9850 = vadd.f32 %v9561, %v9849
    %v9851 = vpop.f32.mrf.mxu0
    %9852 = vmatprep.mubr.bf16.mxu0 %v8220
    %9853 = vmatmul.mubr.bf16.gmra.mxu0 %v8124
    %v9854 = vpop.f32.mrf.mxu0
    %v9855 = vadd.f32 %v9566, %v9854
    %v9856 = vpop.f32.mrf.mxu0
    %v9857 = vpop.f32.mrf.mxu0
    %v9858 = vadd.f32 %v9569, %v9857
    %v9859 = vpop.f32.mrf.mxu0
    %9860 = vmatprep.mubr.bf16.mxu0 %v8221
    %9861 = vmatmul.mubr.bf16.gmra.mxu0 %v8125
    %v9862 = vpop.f32.mrf.mxu0
    %v9863 = vadd.f32 %v9574, %v9862
    %v9864 = vpop.f32.mrf.mxu0
    %v9865 = vpop.f32.mrf.mxu0
    %v9866 = vadd.f32 %v9577, %v9865
    %v9867 = vpop.f32.mrf.mxu0
    %9868 = vmatprep.mubr.bf16.mxu0 %v8222
    %9869 = vmatmul.mubr.bf16.gmra.mxu0 %v8126
    %v9870 = vpop.f32.mrf.mxu0
    %v9871 = vadd.f32 %v9582, %v9870
    %v9872 = vpop.f32.mrf.mxu0
    %v9873 = vpop.f32.mrf.mxu0
    %v9874 = vadd.f32 %v9585, %v9873
    %v9875 = vpop.f32.mrf.mxu0
    %9876 = vmatprep.mubr.bf16.mxu0 %v8223
    %9877 = vmatmul.mubr.bf16.gmra.mxu0 %v8127
    %v9878 = vpop.f32.mrf.mxu0
    %v9879 = vadd.f32 %v9590, %v9878
    %v9880 = vpop.f32.mrf.mxu0
    %v9881 = vpop.f32.mrf.mxu0
    %v9882 = vadd.f32 %v9593, %v9881
    %v9883 = vpop.f32.mrf.mxu0
    %9884 = vmatprep.mubr.bf16.mxu0 %v8224
    %9885 = vmatmul.mubr.bf16.gmra.mxu0 %v8128
    %v9886 = vpop.f32.mrf.mxu0
    %v9887 = vadd.f32 %v9598, %v9886
    %v9888 = vpop.f32.mrf.mxu0
    %v9889 = vpop.f32.mrf.mxu0
    %v9890 = vadd.f32 %v9601, %v9889
    %v9891 = vpop.f32.mrf.mxu0
    %9892 = vmatprep.mubr.bf16.mxu0 %v8225
    %9893 = vmatmul.mubr.bf16.gmra.mxu0 %v8129
    %v9894 = vpop.f32.mrf.mxu0
    %v9895 = vadd.f32 %v9606, %v9894
    %v9896 = vpop.f32.mrf.mxu0
    %v9897 = vpop.f32.mrf.mxu0
    %v9898 = vadd.f32 %v9609, %v9897
    %v9899 = vpop.f32.mrf.mxu0
    %9900 = vmatprep.mubr.bf16.mxu0 %v8226
    %9901 = vmatmul.mubr.bf16.gmra.mxu0 %v8130
    %v9902 = vpop.f32.mrf.mxu0
    %v9903 = vadd.f32 %v9614, %v9902
    %v9904 = vpop.f32.mrf.mxu0
    %v9905 = vpop.f32.mrf.mxu0
    %v9906 = vadd.f32 %v9617, %v9905
    %v9907 = vpop.f32.mrf.mxu0
    %9908 = vmatprep.mubr.bf16.mxu0 %v8227
    %9909 = vmatmul.mubr.bf16.gmra.mxu0 %v8131
    %v9910 = vpop.f32.mrf.mxu0
    %v9911 = vadd.f32 %v9622, %v9910
    %v9912 = vpop.f32.mrf.mxu0
    %v9913 = vpop.f32.mrf.mxu0
    %v9914 = vadd.f32 %v9625, %v9913
    %v9915 = vpop.f32.mrf.mxu0
    %9916 = vmatprep.mubr.bf16.mxu0 %v8228
    %9917 = vmatmul.mubr.bf16.gmra.mxu0 %v8132
    %v9918 = vpop.f32.mrf.mxu0
    %v9919 = vadd.f32 %v9630, %v9918
    %v9920 = vpop.f32.mrf.mxu0
    %v9921 = vpop.f32.mrf.mxu0
    %v9922 = vadd.f32 %v9633, %v9921
    %v9923 = vpop.f32.mrf.mxu0
    %9924 = vmatprep.mubr.bf16.mxu0 %v8229
    %9925 = vmatmul.mubr.bf16.gmra.mxu0 %v8133
    %v9926 = vpop.f32.mrf.mxu0
    %v9927 = vadd.f32 %v9638, %v9926
    %v9928 = vpop.f32.mrf.mxu0
    %v9929 = vpop.f32.mrf.mxu0
    %v9930 = vadd.f32 %v9641, %v9929
    %v9931 = vpop.f32.mrf.mxu0
    %9932 = vmatprep.mubr.bf16.mxu0 %v8230
    %9933 = vmatmul.mubr.bf16.gmra.mxu0 %v8134
    %v9934 = vpop.f32.mrf.mxu0
    %v9935 = vadd.f32 %v9646, %v9934
    %v9936 = vpop.f32.mrf.mxu0
    %v9937 = vpop.f32.mrf.mxu0
    %v9938 = vadd.f32 %v9649, %v9937
    %v9939 = vpop.f32.mrf.mxu0
    %9940 = vmatprep.mubr.bf16.mxu0 %v8231
    %9941 = vmatmul.mubr.bf16.gmra.mxu0 %v8135
    %v9942 = vpop.f32.mrf.mxu0
    %v9943 = vadd.f32 %v9654, %v9942
    %v9944 = vpop.f32.mrf.mxu0
    %v9945 = vpop.f32.mrf.mxu0
    %v9946 = vadd.f32 %v9657, %v9945
    %v9947 = vpop.f32.mrf.mxu0
    %9948 = vmatprep.mubr.bf16.mxu0 %v8232
    %9949 = vmatmul.mubr.bf16.gmra.mxu0 %v8136
    %v9950 = vpop.f32.mrf.mxu0
    %v9951 = vadd.f32 %v9662, %v9950
    %v9952 = vpop.f32.mrf.mxu0
    %v9953 = vpop.f32.mrf.mxu0
    %v9954 = vadd.f32 %v9665, %v9953
    %v9955 = vpop.f32.mrf.mxu0
    %9956 = vmatprep.mubr.bf16.mxu0 %v8233
    %9957 = vmatmul.mubr.bf16.gmra.mxu0 %v8137
    %v9958 = vpop.f32.mrf.mxu0
    %v9959 = vadd.f32 %v9670, %v9958
    %v9960 = vpop.f32.mrf.mxu0
    %v9961 = vpop.f32.mrf.mxu0
    %v9962 = vadd.f32 %v9673, %v9961
    %v9963 = vpop.f32.mrf.mxu0
    %9964 = vmatprep.mubr.bf16.mxu0 %v8234
    %9965 = vmatmul.mubr.bf16.gmra.mxu0 %v8138
    %v9966 = vpop.f32.mrf.mxu0
    %v9967 = vadd.f32 %v9678, %v9966
    %v9968 = vpop.f32.mrf.mxu0
    %v9969 = vpop.f32.mrf.mxu0
    %v9970 = vadd.f32 %v9681, %v9969
    %v9971 = vpop.f32.mrf.mxu0
    %9972 = vdwg.mxu0
    %9973 = vmatprep.subr.bf16.mxu0 0
    %9974 = vmatpush1.bf16.msra.mxu0 %v9017
    %9975 = vmatprep.subr.bf16.mxu0 0
    %9976 = vmatpush1.bf16.msra.mxu0 %v9016
    %9977 = vmatprep.subr.bf16.mxu0 0
    %9978 = vmatpush1.bf16.msra.mxu0 %v9015
    %9979 = vmatprep.subr.bf16.mxu0 0
    %9980 = vmatpush1.bf16.msra.mxu0 %v9014
    %9981 = vmatprep.subr.bf16.mxu0 0
    %9982 = vmatpush1.bf16.msra.mxu0 %v9013
    %9983 = vmatprep.subr.bf16.mxu0 0
    %9984 = vmatpush1.bf16.msra.mxu0 %v9012
    %9985 = vmatprep.subr.bf16.mxu0 0
    %9986 = vmatpush1.bf16.msra.mxu0 %v9011
    %9987 = vmatprep.subr.bf16.mxu0 0
    %9988 = vmatpush1.bf16.msra.mxu0 %v9010
    %9989 = vmatprep.subr.bf16.mxu0 0
    %9990 = vmatpush2.bf16.msra.mxu0 %v9025
    %9991 = vmatprep.subr.bf16.mxu0 0
    %9992 = vmatpush2.bf16.msra.mxu0 %v9024
    %9993 = vmatprep.subr.bf16.mxu0 0
    %9994 = vmatpush2.bf16.msra.mxu0 %v9023
    %9995 = vmatprep.subr.bf16.mxu0 0
    %9996 = vmatpush2.bf16.msra.mxu0 %v9022
    %9997 = vmatprep.subr.bf16.mxu0 0
    %9998 = vmatpush2.bf16.msra.mxu0 %v9021
    %9999 = vmatprep.subr.bf16.mxu0 0
    %10000 = vmatpush2.bf16.msra.mxu0 %v9020
    %10001 = vmatprep.subr.bf16.mxu0 0
    %10002 = vmatpush2.bf16.msra.mxu0 %v9019
    %10003 = vmatprep.subr.bf16.mxu0 0
    %10004 = vmatpush2.bf16.msra.mxu0 %v9018
    %10005 = vmatprep.mubr.bf16.mxu0 %v8395
    %10006 = vmatmul.mubr.bf16.gmra.mxu0 %v8299
    %v10007 = vpop.f32.mrf.mxu0
    %v10008 = vadd.f32 %v9719, %v10007
    %v10009 = vpop.f32.mrf.mxu0
    %v10010 = vpop.f32.mrf.mxu0
    %v10011 = vadd.f32 %v9722, %v10010
    %v10012 = vpop.f32.mrf.mxu0
    %10013 = vmatprep.mubr.bf16.mxu0 %v8396
    %10014 = vmatmul.mubr.bf16.gmra.mxu0 %v8300
    %v10015 = vpop.f32.mrf.mxu0
    %v10016 = vadd.f32 %v9727, %v10015
    %v10017 = vpop.f32.mrf.mxu0
    %v10018 = vpop.f32.mrf.mxu0
    %v10019 = vadd.f32 %v9730, %v10018
    %v10020 = vpop.f32.mrf.mxu0
    %10021 = vmatprep.mubr.bf16.mxu0 %v8397
    %10022 = vmatmul.mubr.bf16.gmra.mxu0 %v8301
    %v10023 = vpop.f32.mrf.mxu0
    %v10024 = vadd.f32 %v9735, %v10023
    %v10025 = vpop.f32.mrf.mxu0
    %v10026 = vpop.f32.mrf.mxu0
    %v10027 = vadd.f32 %v9738, %v10026
    %v10028 = vpop.f32.mrf.mxu0
    %10029 = vmatprep.mubr.bf16.mxu0 %v8398
    %10030 = vmatmul.mubr.bf16.gmra.mxu0 %v8302
    %v10031 = vpop.f32.mrf.mxu0
    %v10032 = vadd.f32 %v9743, %v10031
    %v10033 = vpop.f32.mrf.mxu0
    %v10034 = vpop.f32.mrf.mxu0
    %v10035 = vadd.f32 %v9746, %v10034
    %v10036 = vpop.f32.mrf.mxu0
    %10037 = vmatprep.mubr.bf16.mxu0 %v8399
    %10038 = vmatmul.mubr.bf16.gmra.mxu0 %v8303
    %v10039 = vpop.f32.mrf.mxu0
    %v10040 = vadd.f32 %v9751, %v10039
    %v10041 = vpop.f32.mrf.mxu0
    %v10042 = vpop.f32.mrf.mxu0
    %v10043 = vadd.f32 %v9754, %v10042
    %v10044 = vpop.f32.mrf.mxu0
    %10045 = vmatprep.mubr.bf16.mxu0 %v8400
    %10046 = vmatmul.mubr.bf16.gmra.mxu0 %v8304
    %v10047 = vpop.f32.mrf.mxu0
    %v10048 = vadd.f32 %v9759, %v10047
    %v10049 = vpop.f32.mrf.mxu0
    %v10050 = vpop.f32.mrf.mxu0
    %v10051 = vadd.f32 %v9762, %v10050
    %v10052 = vpop.f32.mrf.mxu0
    %10053 = vmatprep.mubr.bf16.mxu0 %v8401
    %10054 = vmatmul.mubr.bf16.gmra.mxu0 %v8305
    %v10055 = vpop.f32.mrf.mxu0
    %v10056 = vadd.f32 %v9767, %v10055
    %v10057 = vpop.f32.mrf.mxu0
    %v10058 = vpop.f32.mrf.mxu0
    %v10059 = vadd.f32 %v9770, %v10058
    %v10060 = vpop.f32.mrf.mxu0
    %10061 = vmatprep.mubr.bf16.mxu0 %v8402
    %10062 = vmatmul.mubr.bf16.gmra.mxu0 %v8306
    %v10063 = vpop.f32.mrf.mxu0
    %v10064 = vadd.f32 %v9775, %v10063
    %v10065 = vpop.f32.mrf.mxu0
    %v10066 = vpop.f32.mrf.mxu0
    %v10067 = vadd.f32 %v9778, %v10066
    %v10068 = vpop.f32.mrf.mxu0
    %10069 = vmatprep.mubr.bf16.mxu0 %v8403
    %10070 = vmatmul.mubr.bf16.gmra.mxu0 %v8307
    %v10071 = vpop.f32.mrf.mxu0
    %v10072 = vadd.f32 %v9783, %v10071
    %v10073 = vpop.f32.mrf.mxu0
    %v10074 = vpop.f32.mrf.mxu0
    %v10075 = vadd.f32 %v9786, %v10074
    %v10076 = vpop.f32.mrf.mxu0
    %10077 = vmatprep.mubr.bf16.mxu0 %v8404
    %10078 = vmatmul.mubr.bf16.gmra.mxu0 %v8308
    %v10079 = vpop.f32.mrf.mxu0
    %v10080 = vadd.f32 %v9791, %v10079
    %v10081 = vpop.f32.mrf.mxu0
    %v10082 = vpop.f32.mrf.mxu0
    %v10083 = vadd.f32 %v9794, %v10082
    %v10084 = vpop.f32.mrf.mxu0
    %10085 = vmatprep.mubr.bf16.mxu0 %v8405
    %10086 = vmatmul.mubr.bf16.gmra.mxu0 %v8309
    %v10087 = vpop.f32.mrf.mxu0
    %v10088 = vadd.f32 %v9799, %v10087
    %v10089 = vpop.f32.mrf.mxu0
    %v10090 = vpop.f32.mrf.mxu0
    %v10091 = vadd.f32 %v9802, %v10090
    %v10092 = vpop.f32.mrf.mxu0
    %10093 = vmatprep.mubr.bf16.mxu0 %v8406
    %10094 = vmatmul.mubr.bf16.gmra.mxu0 %v8310
    %v10095 = vpop.f32.mrf.mxu0
    %v10096 = vadd.f32 %v9807, %v10095
    %v10097 = vpop.f32.mrf.mxu0
    %v10098 = vpop.f32.mrf.mxu0
    %v10099 = vadd.f32 %v9810, %v10098
    %v10100 = vpop.f32.mrf.mxu0
    %10101 = vmatprep.mubr.bf16.mxu0 %v8407
    %10102 = vmatmul.mubr.bf16.gmra.mxu0 %v8311
    %v10103 = vpop.f32.mrf.mxu0
    %v10104 = vadd.f32 %v9815, %v10103
    %v10105 = vpop.f32.mrf.mxu0
    %v10106 = vpop.f32.mrf.mxu0
    %v10107 = vadd.f32 %v9818, %v10106
    %v10108 = vpop.f32.mrf.mxu0
    %10109 = vmatprep.mubr.bf16.mxu0 %v8408
    %10110 = vmatmul.mubr.bf16.gmra.mxu0 %v8312
    %v10111 = vpop.f32.mrf.mxu0
    %v10112 = vadd.f32 %v9823, %v10111
    %v10113 = vpop.f32.mrf.mxu0
    %v10114 = vpop.f32.mrf.mxu0
    %v10115 = vadd.f32 %v9826, %v10114
    %v10116 = vpop.f32.mrf.mxu0
    %10117 = vmatprep.mubr.bf16.mxu0 %v8409
    %10118 = vmatmul.mubr.bf16.gmra.mxu0 %v8313
    %v10119 = vpop.f32.mrf.mxu0
    %v10120 = vadd.f32 %v9831, %v10119
    %v10121 = vpop.f32.mrf.mxu0
    %v10122 = vpop.f32.mrf.mxu0
    %v10123 = vadd.f32 %v9834, %v10122
    %v10124 = vpop.f32.mrf.mxu0
    %10125 = vmatprep.mubr.bf16.mxu0 %v8410
    %10126 = vmatmul.mubr.bf16.gmra.mxu0 %v8314
    %v10127 = vpop.f32.mrf.mxu0
    %v10128 = vadd.f32 %v9839, %v10127
    %v10129 = vpop.f32.mrf.mxu0
    %v10130 = vpop.f32.mrf.mxu0
    %v10131 = vadd.f32 %v9842, %v10130
    %v10132 = vpop.f32.mrf.mxu0
    %10133 = vmatprep.mubr.bf16.mxu0 %v8411
    %10134 = vmatmul.mubr.bf16.gmra.mxu0 %v8315
    %v10135 = vpop.f32.mrf.mxu0
    %v10136 = vadd.f32 %v9847, %v10135
    %v10137 = vpop.f32.mrf.mxu0
    %v10138 = vpop.f32.mrf.mxu0
    %v10139 = vadd.f32 %v9850, %v10138
    %v10140 = vpop.f32.mrf.mxu0
    %10141 = vmatprep.mubr.bf16.mxu0 %v8412
    %10142 = vmatmul.mubr.bf16.gmra.mxu0 %v8316
    %v10143 = vpop.f32.mrf.mxu0
    %v10144 = vadd.f32 %v9855, %v10143
    %v10145 = vpop.f32.mrf.mxu0
    %v10146 = vpop.f32.mrf.mxu0
    %v10147 = vadd.f32 %v9858, %v10146
    %v10148 = vpop.f32.mrf.mxu0
    %10149 = vmatprep.mubr.bf16.mxu0 %v8413
    %10150 = vmatmul.mubr.bf16.gmra.mxu0 %v8317
    %v10151 = vpop.f32.mrf.mxu0
    %v10152 = vadd.f32 %v9863, %v10151
    %v10153 = vpop.f32.mrf.mxu0
    %v10154 = vpop.f32.mrf.mxu0
    %v10155 = vadd.f32 %v9866, %v10154
    %v10156 = vpop.f32.mrf.mxu0
    %10157 = vmatprep.mubr.bf16.mxu0 %v8414
    %10158 = vmatmul.mubr.bf16.gmra.mxu0 %v8318
    %v10159 = vpop.f32.mrf.mxu0
    %v10160 = vadd.f32 %v9871, %v10159
    %v10161 = vpop.f32.mrf.mxu0
    %v10162 = vpop.f32.mrf.mxu0
    %v10163 = vadd.f32 %v9874, %v10162
    %v10164 = vpop.f32.mrf.mxu0
    %10165 = vmatprep.mubr.bf16.mxu0 %v8415
    %10166 = vmatmul.mubr.bf16.gmra.mxu0 %v8319
    %v10167 = vpop.f32.mrf.mxu0
    %v10168 = vadd.f32 %v9879, %v10167
    %v10169 = vpop.f32.mrf.mxu0
    %v10170 = vpop.f32.mrf.mxu0
    %v10171 = vadd.f32 %v9882, %v10170
    %v10172 = vpop.f32.mrf.mxu0
    %10173 = vmatprep.mubr.bf16.mxu0 %v8416
    %10174 = vmatmul.mubr.bf16.gmra.mxu0 %v8320
    %v10175 = vpop.f32.mrf.mxu0
    %v10176 = vadd.f32 %v9887, %v10175
    %v10177 = vpop.f32.mrf.mxu0
    %v10178 = vpop.f32.mrf.mxu0
    %v10179 = vadd.f32 %v9890, %v10178
    %v10180 = vpop.f32.mrf.mxu0
    %10181 = vmatprep.mubr.bf16.mxu0 %v8417
    %10182 = vmatmul.mubr.bf16.gmra.mxu0 %v8321
    %v10183 = vpop.f32.mrf.mxu0
    %v10184 = vadd.f32 %v9895, %v10183
    %v10185 = vpop.f32.mrf.mxu0
    %v10186 = vpop.f32.mrf.mxu0
    %v10187 = vadd.f32 %v9898, %v10186
    %v10188 = vpop.f32.mrf.mxu0
    %10189 = vmatprep.mubr.bf16.mxu0 %v8418
    %10190 = vmatmul.mubr.bf16.gmra.mxu0 %v8322
    %v10191 = vpop.f32.mrf.mxu0
    %v10192 = vadd.f32 %v9903, %v10191
    %v10193 = vpop.f32.mrf.mxu0
    %v10194 = vpop.f32.mrf.mxu0
    %v10195 = vadd.f32 %v9906, %v10194
    %v10196 = vpop.f32.mrf.mxu0
    %10197 = vmatprep.mubr.bf16.mxu0 %v8419
    %10198 = vmatmul.mubr.bf16.gmra.mxu0 %v8323
    %v10199 = vpop.f32.mrf.mxu0
    %v10200 = vadd.f32 %v9911, %v10199
    %v10201 = vpop.f32.mrf.mxu0
    %v10202 = vpop.f32.mrf.mxu0
    %v10203 = vadd.f32 %v9914, %v10202
    %v10204 = vpop.f32.mrf.mxu0
    %10205 = vmatprep.mubr.bf16.mxu0 %v8420
    %10206 = vmatmul.mubr.bf16.gmra.mxu0 %v8324
    %v10207 = vpop.f32.mrf.mxu0
    %v10208 = vadd.f32 %v9919, %v10207
    %v10209 = vpop.f32.mrf.mxu0
    %v10210 = vpop.f32.mrf.mxu0
    %v10211 = vadd.f32 %v9922, %v10210
    %v10212 = vpop.f32.mrf.mxu0
    %10213 = vmatprep.mubr.bf16.mxu0 %v8421
    %10214 = vmatmul.mubr.bf16.gmra.mxu0 %v8325
    %v10215 = vpop.f32.mrf.mxu0
    %v10216 = vadd.f32 %v9927, %v10215
    %v10217 = vpop.f32.mrf.mxu0
    %v10218 = vpop.f32.mrf.mxu0
    %v10219 = vadd.f32 %v9930, %v10218
    %v10220 = vpop.f32.mrf.mxu0
    %10221 = vmatprep.mubr.bf16.mxu0 %v8422
    %10222 = vmatmul.mubr.bf16.gmra.mxu0 %v8326
    %v10223 = vpop.f32.mrf.mxu0
    %v10224 = vadd.f32 %v9935, %v10223
    %v10225 = vpop.f32.mrf.mxu0
    %v10226 = vpop.f32.mrf.mxu0
    %v10227 = vadd.f32 %v9938, %v10226
    %v10228 = vpop.f32.mrf.mxu0
    %10229 = vmatprep.mubr.bf16.mxu0 %v8423
    %10230 = vmatmul.mubr.bf16.gmra.mxu0 %v8327
    %v10231 = vpop.f32.mrf.mxu0
    %v10232 = vadd.f32 %v9943, %v10231
    %v10233 = vpop.f32.mrf.mxu0
    %v10234 = vpop.f32.mrf.mxu0
    %v10235 = vadd.f32 %v9946, %v10234
    %v10236 = vpop.f32.mrf.mxu0
    %10237 = vmatprep.mubr.bf16.mxu0 %v8424
    %10238 = vmatmul.mubr.bf16.gmra.mxu0 %v8328
    %v10239 = vpop.f32.mrf.mxu0
    %v10240 = vadd.f32 %v9951, %v10239
    %v10241 = vpop.f32.mrf.mxu0
    %v10242 = vpop.f32.mrf.mxu0
    %v10243 = vadd.f32 %v9954, %v10242
    %v10244 = vpop.f32.mrf.mxu0
    %10245 = vmatprep.mubr.bf16.mxu0 %v8425
    %10246 = vmatmul.mubr.bf16.gmra.mxu0 %v8329
    %v10247 = vpop.f32.mrf.mxu0
    %v10248 = vadd.f32 %v9959, %v10247
    %v10249 = vpop.f32.mrf.mxu0
    %v10250 = vpop.f32.mrf.mxu0
    %v10251 = vadd.f32 %v9962, %v10250
    %v10252 = vpop.f32.mrf.mxu0
    %10253 = vmatprep.mubr.bf16.mxu0 %v8426
    %10254 = vmatmul.mubr.bf16.gmra.mxu0 %v8330
    %v10255 = vpop.f32.mrf.mxu0
    %v10256 = vadd.f32 %v9967, %v10255
    %v10257 = vpop.f32.mrf.mxu0
    %v10258 = vpop.f32.mrf.mxu0
    %v10259 = vadd.f32 %v9970, %v10258
    %v10260 = vpop.f32.mrf.mxu0
    %10261 = vdwg.mxu0
    %10262 = vmatprep.subr.bf16.mxu0 0
    %10263 = vmatpush1.bf16.msra.mxu0 %v9033
    %10264 = vmatprep.subr.bf16.mxu0 0
    %10265 = vmatpush1.bf16.msra.mxu0 %v9032
    %10266 = vmatprep.subr.bf16.mxu0 0
    %10267 = vmatpush1.bf16.msra.mxu0 %v9031
    %10268 = vmatprep.subr.bf16.mxu0 0
    %10269 = vmatpush1.bf16.msra.mxu0 %v9030
    %10270 = vmatprep.subr.bf16.mxu0 0
    %10271 = vmatpush1.bf16.msra.mxu0 %v9029
    %10272 = vmatprep.subr.bf16.mxu0 0
    %10273 = vmatpush1.bf16.msra.mxu0 %v9028
    %10274 = vmatprep.subr.bf16.mxu0 0
    %10275 = vmatpush1.bf16.msra.mxu0 %v9027
    %10276 = vmatprep.subr.bf16.mxu0 0
    %10277 = vmatpush1.bf16.msra.mxu0 %v9026
    %10278 = vmatprep.subr.bf16.mxu0 0
    %10279 = vmatpush2.bf16.msra.mxu0 0
    %10280 = vmatprep.subr.bf16.mxu0 0
    %10281 = vmatpush2.bf16.msra.mxu0 0
    %10282 = vmatprep.subr.bf16.mxu0 0
    %10283 = vmatpush2.bf16.msra.mxu0 0
    %10284 = vmatprep.subr.bf16.mxu0 0
    %10285 = vmatpush2.bf16.msra.mxu0 0
    %10286 = vmatprep.subr.bf16.mxu0 0
    %10287 = vmatpush2.bf16.msra.mxu0 0
    %10288 = vmatprep.subr.bf16.mxu0 0
    %10289 = vmatpush2.bf16.msra.mxu0 0
    %10290 = vmatprep.subr.bf16.mxu0 0
    %10291 = vmatpush2.bf16.msra.mxu0 0
    %10292 = vmatprep.subr.bf16.mxu0 0
    %10293 = vmatpush2.bf16.msra.mxu0 0
    %10294 = vmatprep.mubr.bf16.mxu0 0
    %10295 = vmatmul.mubr.bf16.gmra.mxu0 %v8491
    %v10296 = vpop.f32.mrf.mxu0
    %v10297 = vadd.f32 %v10008, %v10296
    %v10298 = vpop.f32.mrf.mxu0
    %v10299 = vpop.f32.mrf.mxu0
    %v10300 = vadd.f32 %v10011, %v10299
    %v10301 = vpop.f32.mrf.mxu0
    %10302 = vmatprep.mubr.bf16.mxu0 0
    %10303 = vmatmul.mubr.bf16.gmra.mxu0 %v8492
    %v10304 = vpop.f32.mrf.mxu0
    %v10305 = vadd.f32 %v10016, %v10304
    %v10306 = vpop.f32.mrf.mxu0
    %v10307 = vpop.f32.mrf.mxu0
    %v10308 = vadd.f32 %v10019, %v10307
    %v10309 = vpop.f32.mrf.mxu0
    %10310 = vmatprep.mubr.bf16.mxu0 0
    %10311 = vmatmul.mubr.bf16.gmra.mxu0 %v8493
    %v10312 = vpop.f32.mrf.mxu0
    %v10313 = vadd.f32 %v10024, %v10312
    %v10314 = vpop.f32.mrf.mxu0
    %v10315 = vpop.f32.mrf.mxu0
    %v10316 = vadd.f32 %v10027, %v10315
    %v10317 = vpop.f32.mrf.mxu0
    %10318 = vmatprep.mubr.bf16.mxu0 0
    %10319 = vmatmul.mubr.bf16.gmra.mxu0 %v8494
    %v10320 = vpop.f32.mrf.mxu0
    %v10321 = vadd.f32 %v10032, %v10320
    %v10322 = vpop.f32.mrf.mxu0
    %v10323 = vpop.f32.mrf.mxu0
    %v10324 = vadd.f32 %v10035, %v10323
    %v10325 = vpop.f32.mrf.mxu0
    %10326 = vmatprep.mubr.bf16.mxu0 0
    %10327 = vmatmul.mubr.bf16.gmra.mxu0 %v8495
    %v10328 = vpop.f32.mrf.mxu0
    %v10329 = vadd.f32 %v10040, %v10328
    %v10330 = vpop.f32.mrf.mxu0
    %v10331 = vpop.f32.mrf.mxu0
    %v10332 = vadd.f32 %v10043, %v10331
    %v10333 = vpop.f32.mrf.mxu0
    %10334 = vmatprep.mubr.bf16.mxu0 0
    %10335 = vmatmul.mubr.bf16.gmra.mxu0 %v8496
    %v10336 = vpop.f32.mrf.mxu0
    %v10337 = vadd.f32 %v10048, %v10336
    %v10338 = vpop.f32.mrf.mxu0
    %v10339 = vpop.f32.mrf.mxu0
    %v10340 = vadd.f32 %v10051, %v10339
    %v10341 = vpop.f32.mrf.mxu0
    %10342 = vmatprep.mubr.bf16.mxu0 0
    %10343 = vmatmul.mubr.bf16.gmra.mxu0 %v8497
    %v10344 = vpop.f32.mrf.mxu0
    %v10345 = vadd.f32 %v10056, %v10344
    %v10346 = vpop.f32.mrf.mxu0
    %v10347 = vpop.f32.mrf.mxu0
    %v10348 = vadd.f32 %v10059, %v10347
    %v10349 = vpop.f32.mrf.mxu0
    %10350 = vmatprep.mubr.bf16.mxu0 0
    %10351 = vmatmul.mubr.bf16.gmra.mxu0 %v8498
    %v10352 = vpop.f32.mrf.mxu0
    %v10353 = vadd.f32 %v10064, %v10352
    %v10354 = vpop.f32.mrf.mxu0
    %v10355 = vpop.f32.mrf.mxu0
    %v10356 = vadd.f32 %v10067, %v10355
    %v10357 = vpop.f32.mrf.mxu0
    %10358 = vmatprep.mubr.bf16.mxu0 0
    %10359 = vmatmul.mubr.bf16.gmra.mxu0 %v8499
    %v10360 = vpop.f32.mrf.mxu0
    %v10361 = vadd.f32 %v10072, %v10360
    %v10362 = vpop.f32.mrf.mxu0
    %v10363 = vpop.f32.mrf.mxu0
    %v10364 = vadd.f32 %v10075, %v10363
    %v10365 = vpop.f32.mrf.mxu0
    %10366 = vmatprep.mubr.bf16.mxu0 0
    %10367 = vmatmul.mubr.bf16.gmra.mxu0 %v8500
    %v10368 = vpop.f32.mrf.mxu0
    %v10369 = vadd.f32 %v10080, %v10368
    %v10370 = vpop.f32.mrf.mxu0
    %v10371 = vpop.f32.mrf.mxu0
    %v10372 = vadd.f32 %v10083, %v10371
    %v10373 = vpop.f32.mrf.mxu0
    %10374 = vmatprep.mubr.bf16.mxu0 0
    %10375 = vmatmul.mubr.bf16.gmra.mxu0 %v8501
    %v10376 = vpop.f32.mrf.mxu0
    %v10377 = vadd.f32 %v10088, %v10376
    %v10378 = vpop.f32.mrf.mxu0
    %v10379 = vpop.f32.mrf.mxu0
    %v10380 = vadd.f32 %v10091, %v10379
    %v10381 = vpop.f32.mrf.mxu0
    %10382 = vmatprep.mubr.bf16.mxu0 0
    %10383 = vmatmul.mubr.bf16.gmra.mxu0 %v8502
    %v10384 = vpop.f32.mrf.mxu0
    %v10385 = vadd.f32 %v10096, %v10384
    %v10386 = vpop.f32.mrf.mxu0
    %v10387 = vpop.f32.mrf.mxu0
    %v10388 = vadd.f32 %v10099, %v10387
    %v10389 = vpop.f32.mrf.mxu0
    %10390 = vmatprep.mubr.bf16.mxu0 0
    %10391 = vmatmul.mubr.bf16.gmra.mxu0 %v8503
    %v10392 = vpop.f32.mrf.mxu0
    %v10393 = vadd.f32 %v10104, %v10392
    %v10394 = vpop.f32.mrf.mxu0
    %v10395 = vpop.f32.mrf.mxu0
    %v10396 = vadd.f32 %v10107, %v10395
    %v10397 = vpop.f32.mrf.mxu0
    %10398 = vmatprep.mubr.bf16.mxu0 0
    %10399 = vmatmul.mubr.bf16.gmra.mxu0 %v8504
    %v10400 = vpop.f32.mrf.mxu0
    %v10401 = vadd.f32 %v10112, %v10400
    %v10402 = vpop.f32.mrf.mxu0
    %v10403 = vpop.f32.mrf.mxu0
    %v10404 = vadd.f32 %v10115, %v10403
    %v10405 = vpop.f32.mrf.mxu0
    %10406 = vmatprep.mubr.bf16.mxu0 0
    %10407 = vmatmul.mubr.bf16.gmra.mxu0 %v8505
    %v10408 = vpop.f32.mrf.mxu0
    %v10409 = vadd.f32 %v10120, %v10408
    %v10410 = vpop.f32.mrf.mxu0
    %v10411 = vpop.f32.mrf.mxu0
    %v10412 = vadd.f32 %v10123, %v10411
    %v10413 = vpop.f32.mrf.mxu0
    %10414 = vmatprep.mubr.bf16.mxu0 0
    %10415 = vmatmul.mubr.bf16.gmra.mxu0 %v8506
    %v10416 = vpop.f32.mrf.mxu0
    %v10417 = vadd.f32 %v10128, %v10416
    %v10418 = vpop.f32.mrf.mxu0
    %v10419 = vpop.f32.mrf.mxu0
    %v10420 = vadd.f32 %v10131, %v10419
    %v10421 = vpop.f32.mrf.mxu0
    %10422 = vmatprep.mubr.bf16.mxu0 0
    %10423 = vmatmul.mubr.bf16.gmra.mxu0 %v8507
    %v10424 = vpop.f32.mrf.mxu0
    %v10425 = vadd.f32 %v10136, %v10424
    %v10426 = vpop.f32.mrf.mxu0
    %v10427 = vpop.f32.mrf.mxu0
    %v10428 = vadd.f32 %v10139, %v10427
    %v10429 = vpop.f32.mrf.mxu0
    %10430 = vmatprep.mubr.bf16.mxu0 0
    %10431 = vmatmul.mubr.bf16.gmra.mxu0 %v8508
    %v10432 = vpop.f32.mrf.mxu0
    %v10433 = vadd.f32 %v10144, %v10432
    %v10434 = vpop.f32.mrf.mxu0
    %v10435 = vpop.f32.mrf.mxu0
    %v10436 = vadd.f32 %v10147, %v10435
    %v10437 = vpop.f32.mrf.mxu0
    %10438 = vmatprep.mubr.bf16.mxu0 0
    %10439 = vmatmul.mubr.bf16.gmra.mxu0 %v8509
    %v10440 = vpop.f32.mrf.mxu0
    %v10441 = vadd.f32 %v10152, %v10440
    %v10442 = vpop.f32.mrf.mxu0
    %v10443 = vpop.f32.mrf.mxu0
    %v10444 = vadd.f32 %v10155, %v10443
    %v10445 = vpop.f32.mrf.mxu0
    %10446 = vmatprep.mubr.bf16.mxu0 0
    %10447 = vmatmul.mubr.bf16.gmra.mxu0 %v8510
    %v10448 = vpop.f32.mrf.mxu0
    %v10449 = vadd.f32 %v10160, %v10448
    %v10450 = vpop.f32.mrf.mxu0
    %v10451 = vpop.f32.mrf.mxu0
    %v10452 = vadd.f32 %v10163, %v10451
    %v10453 = vpop.f32.mrf.mxu0
    %10454 = vmatprep.mubr.bf16.mxu0 0
    %10455 = vmatmul.mubr.bf16.gmra.mxu0 %v8511
    %v10456 = vpop.f32.mrf.mxu0
    %v10457 = vadd.f32 %v10168, %v10456
    %v10458 = vpop.f32.mrf.mxu0
    %v10459 = vpop.f32.mrf.mxu0
    %v10460 = vadd.f32 %v10171, %v10459
    %v10461 = vpop.f32.mrf.mxu0
    %10462 = vmatprep.mubr.bf16.mxu0 0
    %10463 = vmatmul.mubr.bf16.gmra.mxu0 %v8512
    %v10464 = vpop.f32.mrf.mxu0
    %v10465 = vadd.f32 %v10176, %v10464
    %v10466 = vpop.f32.mrf.mxu0
    %v10467 = vpop.f32.mrf.mxu0
    %v10468 = vadd.f32 %v10179, %v10467
    %v10469 = vpop.f32.mrf.mxu0
    %10470 = vmatprep.mubr.bf16.mxu0 0
    %10471 = vmatmul.mubr.bf16.gmra.mxu0 %v8513
    %v10472 = vpop.f32.mrf.mxu0
    %v10473 = vadd.f32 %v10184, %v10472
    %v10474 = vpop.f32.mrf.mxu0
    %v10475 = vpop.f32.mrf.mxu0
    %v10476 = vadd.f32 %v10187, %v10475
    %v10477 = vpop.f32.mrf.mxu0
    %10478 = vmatprep.mubr.bf16.mxu0 0
    %10479 = vmatmul.mubr.bf16.gmra.mxu0 %v8514
    %v10480 = vpop.f32.mrf.mxu0
    %v10481 = vadd.f32 %v10192, %v10480
    %v10482 = vpop.f32.mrf.mxu0
    %v10483 = vpop.f32.mrf.mxu0
    %v10484 = vadd.f32 %v10195, %v10483
    %v10485 = vpop.f32.mrf.mxu0
    %10486 = vmatprep.mubr.bf16.mxu0 0
    %10487 = vmatmul.mubr.bf16.gmra.mxu0 %v8515
    %v10488 = vpop.f32.mrf.mxu0
    %v10489 = vadd.f32 %v10200, %v10488
    %v10490 = vpop.f32.mrf.mxu0
    %v10491 = vpop.f32.mrf.mxu0
    %v10492 = vadd.f32 %v10203, %v10491
    %v10493 = vpop.f32.mrf.mxu0
    %10494 = vmatprep.mubr.bf16.mxu0 0
    %10495 = vmatmul.mubr.bf16.gmra.mxu0 %v8516
    %v10496 = vpop.f32.mrf.mxu0
    %v10497 = vadd.f32 %v10208, %v10496
    %v10498 = vpop.f32.mrf.mxu0
    %v10499 = vpop.f32.mrf.mxu0
    %v10500 = vadd.f32 %v10211, %v10499
    %v10501 = vpop.f32.mrf.mxu0
    %10502 = vmatprep.mubr.bf16.mxu0 0
    %10503 = vmatmul.mubr.bf16.gmra.mxu0 %v8517
    %v10504 = vpop.f32.mrf.mxu0
    %v10505 = vadd.f32 %v10216, %v10504
    %v10506 = vpop.f32.mrf.mxu0
    %v10507 = vpop.f32.mrf.mxu0
    %v10508 = vadd.f32 %v10219, %v10507
    %v10509 = vpop.f32.mrf.mxu0
    %10510 = vmatprep.mubr.bf16.mxu0 0
    %10511 = vmatmul.mubr.bf16.gmra.mxu0 %v8518
    %v10512 = vpop.f32.mrf.mxu0
    %v10513 = vadd.f32 %v10224, %v10512
    %v10514 = vpop.f32.mrf.mxu0
    %v10515 = vpop.f32.mrf.mxu0
    %v10516 = vadd.f32 %v10227, %v10515
    %v10517 = vpop.f32.mrf.mxu0
    %10518 = vmatprep.mubr.bf16.mxu0 0
    %10519 = vmatmul.mubr.bf16.gmra.mxu0 %v8519
    %v10520 = vpop.f32.mrf.mxu0
    %v10521 = vadd.f32 %v10232, %v10520
    %v10522 = vpop.f32.mrf.mxu0
    %v10523 = vpop.f32.mrf.mxu0
    %v10524 = vadd.f32 %v10235, %v10523
    %v10525 = vpop.f32.mrf.mxu0
    %10526 = vmatprep.mubr.bf16.mxu0 0
    %10527 = vmatmul.mubr.bf16.gmra.mxu0 %v8520
    %v10528 = vpop.f32.mrf.mxu0
    %v10529 = vadd.f32 %v10240, %v10528
    %v10530 = vpop.f32.mrf.mxu0
    %v10531 = vpop.f32.mrf.mxu0
    %v10532 = vadd.f32 %v10243, %v10531
    %v10533 = vpop.f32.mrf.mxu0
    %10534 = vmatprep.mubr.bf16.mxu0 0
    %10535 = vmatmul.mubr.bf16.gmra.mxu0 %v8521
    %v10536 = vpop.f32.mrf.mxu0
    %v10537 = vadd.f32 %v10248, %v10536
    %v10538 = vpop.f32.mrf.mxu0
    %v10539 = vpop.f32.mrf.mxu0
    %v10540 = vadd.f32 %v10251, %v10539
    %v10541 = vpop.f32.mrf.mxu0
    %10542 = vmatprep.mubr.bf16.mxu0 0
    %10543 = vmatmul.mubr.bf16.gmra.mxu0 %v8522
    %v10544 = vpop.f32.mrf.mxu0
    %v10545 = vadd.f32 %v10256, %v10544
    %v10546 = vpop.f32.mrf.mxu0
    %v10547 = vpop.f32.mrf.mxu0
    %v10548 = vadd.f32 %v10259, %v10547
    %v10549 = vpop.f32.mrf.mxu0
    %10550 = vdwg.mxu0
    %v10551 = vadd.f32 %v10297, %v659
    %v10552 = vadd.f32 %v10300, %v660
    %v10553 = vadd.f32 %v10305, %v661
    %v10554 = vadd.f32 %v10308, %v662
    %v10555 = vadd.f32 %v10313, %v663
    %v10556 = vadd.f32 %v10316, %v664
    %v10557 = vadd.f32 %v10321, %v665
    %v10558 = vadd.f32 %v10324, %v666
    %v10559 = vadd.f32 %v10329, %v667
    %v10560 = vadd.f32 %v10332, %v668
    %v10561 = vadd.f32 %v10337, %v669
    %v10562 = vadd.f32 %v10340, %v670
    %v10563 = vadd.f32 %v10345, %v671
    %v10564 = vadd.f32 %v10348, %v672
    %v10565 = vadd.f32 %v10353, %v673
    %v10566 = vadd.f32 %v10356, %v674
    %v10567 = vadd.f32 %v10361, %v675
    %v10568 = vadd.f32 %v10364, %v676
    %v10569 = vadd.f32 %v10369, %v677
    %v10570 = vadd.f32 %v10372, %v678
    %v10571 = vadd.f32 %v10377, %v679
    %v10572 = vadd.f32 %v10380, %v680
    %v10573 = vadd.f32 %v10385, %v681
    %v10574 = vadd.f32 %v10388, %v682
    %v10575 = vadd.f32 %v10393, %v683
    %v10576 = vadd.f32 %v10396, %v684
    %v10577 = vadd.f32 %v10401, %v685
    %v10578 = vadd.f32 %v10404, %v686
    %v10579 = vadd.f32 %v10409, %v687
    %v10580 = vadd.f32 %v10412, %v688
    %v10581 = vadd.f32 %v10417, %v689
    %v10582 = vadd.f32 %v10420, %v690
    %v10583 = vadd.f32 %v10425, %v691
    %v10584 = vadd.f32 %v10428, %v692
    %v10585 = vadd.f32 %v10433, %v693
    %v10586 = vadd.f32 %v10436, %v694
    %v10587 = vadd.f32 %v10441, %v695
    %v10588 = vadd.f32 %v10444, %v696
    %v10589 = vadd.f32 %v10449, %v697
    %v10590 = vadd.f32 %v10452, %v698
    %v10591 = vadd.f32 %v10457, %v699
    %v10592 = vadd.f32 %v10460, %v700
    %v10593 = vadd.f32 %v10465, %v701
    %v10594 = vadd.f32 %v10468, %v702
    %v10595 = vadd.f32 %v10473, %v703
    %v10596 = vadd.f32 %v10476, %v704
    %v10597 = vadd.f32 %v10481, %v705
    %v10598 = vadd.f32 %v10484, %v706
    %v10599 = vadd.f32 %v10489, %v707
    %v10600 = vadd.f32 %v10492, %v708
    %v10601 = vadd.f32 %v10497, %v709
    %v10602 = vadd.f32 %v10500, %v710
    %v10603 = vadd.f32 %v10505, %v711
    %v10604 = vadd.f32 %v10508, %v712
    %v10605 = vadd.f32 %v10513, %v713
    %v10606 = vadd.f32 %v10516, %v714
    %v10607 = vadd.f32 %v10521, %v715
    %v10608 = vadd.f32 %v10524, %v716
    %v10609 = vadd.f32 %v10529, %v717
    %v10610 = vadd.f32 %v10532, %v718
    %v10611 = vadd.f32 %v10537, %v719
    %v10612 = vadd.f32 %v10540, %v720
    %v10613 = vadd.f32 %v10545, %v721
    %v10614 = vadd.f32 %v10548, %v722
    %v10615 = vmax.f32 %v10551, 0.0
    %v10616 = vmax.f32 %v10552, 0.0
    %v10617 = vmax.f32 %v10553, 0.0
    %v10618 = vmax.f32 %v10554, 0.0
    %v10619 = vmax.f32 %v10555, 0.0
    %v10620 = vmax.f32 %v10556, 0.0
    %v10621 = vmax.f32 %v10557, 0.0
    %v10622 = vmax.f32 %v10558, 0.0
    %v10623 = vmax.f32 %v10559, 0.0
    %v10624 = vmax.f32 %v10560, 0.0
    %v10625 = vmax.f32 %v10561, 0.0
    %v10626 = vmax.f32 %v10562, 0.0
    %v10627 = vmax.f32 %v10563, 0.0
    %v10628 = vmax.f32 %v10564, 0.0
    %v10629 = vmax.f32 %v10565, 0.0
    %v10630 = vmax.f32 %v10566, 0.0
    %v10631 = vmax.f32 %v10567, 0.0
    %v10632 = vmax.f32 %v10568, 0.0
    %v10633 = vmax.f32 %v10569, 0.0
    %v10634 = vmax.f32 %v10570, 0.0
    %v10635 = vmax.f32 %v10571, 0.0
    %v10636 = vmax.f32 %v10572, 0.0
    %v10637 = vmax.f32 %v10573, 0.0
    %v10638 = vmax.f32 %v10574, 0.0
    %v10639 = vmax.f32 %v10575, 0.0
    %v10640 = vmax.f32 %v10576, 0.0
    %v10641 = vmax.f32 %v10577, 0.0
    %v10642 = vmax.f32 %v10578, 0.0
    %v10643 = vmax.f32 %v10579, 0.0
    %v10644 = vmax.f32 %v10580, 0.0
    %v10645 = vmax.f32 %v10581, 0.0
    %v10646 = vmax.f32 %v10582, 0.0
    %v10647 = vmax.f32 %v10583, 0.0
    %v10648 = vmax.f32 %v10584, 0.0
    %v10649 = vmax.f32 %v10585, 0.0
    %v10650 = vmax.f32 %v10586, 0.0
    %v10651 = vmax.f32 %v10587, 0.0
    %v10652 = vmax.f32 %v10588, 0.0
    %v10653 = vmax.f32 %v10589, 0.0
    %v10654 = vmax.f32 %v10590, 0.0
    %v10655 = vmax.f32 %v10591, 0.0
    %v10656 = vmax.f32 %v10592, 0.0
    %v10657 = vmax.f32 %v10593, 0.0
    %v10658 = vmax.f32 %v10594, 0.0
    %v10659 = vmax.f32 %v10595, 0.0
    %v10660 = vmax.f32 %v10596, 0.0
    %v10661 = vmax.f32 %v10597, 0.0
    %v10662 = vmax.f32 %v10598, 0.0
    %v10663 = vmax.f32 %v10599, 0.0
    %v10664 = vmax.f32 %v10600, 0.0
    %v10665 = vmax.f32 %v10601, 0.0
    %v10666 = vmax.f32 %v10602, 0.0
    %v10667 = vmax.f32 %v10603, 0.0
    %v10668 = vmax.f32 %v10604, 0.0
    %v10669 = vmax.f32 %v10605, 0.0
    %v10670 = vmax.f32 %v10606, 0.0
    %v10671 = vmax.f32 %v10607, 0.0
    %v10672 = vmax.f32 %v10608, 0.0
    %v10673 = vmax.f32 %v10609, 0.0
    %v10674 = vmax.f32 %v10610, 0.0
    %v10675 = vmax.f32 %v10611, 0.0
    %v10676 = vmax.f32 %v10612, 0.0
    %v10677 = vmax.f32 %v10613, 0.0
    %v10678 = vmax.f32 %v10614, 0.0
    %v10679 = vadd.f32 %v10615, %v10616
    %v10680 = vadd.f32 %v10679, %v10617
    %v10681 = vadd.f32 %v10680, %v10618
    %v10682 = vadd.f32 %v10681, %v10619
    %v10683 = vadd.f32 %v10682, %v10620
    %v10684 = vadd.f32 %v10683, %v10621
    %v10685 = vadd.f32 %v10684, %v10622
    %v10686 = vadd.f32 %v10685, %v10623
    %v10687 = vadd.f32 %v10686, %v10624
    %v10688 = vadd.f32 %v10687, %v10625
    %v10689 = vadd.f32 %v10688, %v10626
    %v10690 = vadd.f32 %v10689, %v10627
    %v10691 = vadd.f32 %v10690, %v10628
    %v10692 = vadd.f32 %v10691, %v10629
    %v10693 = vadd.f32 %v10692, %v10630
    %v10694 = vadd.f32 %v10693, %v10631
    %v10695 = vadd.f32 %v10694, %v10632
    %v10696 = vadd.f32 %v10695, %v10633
    %v10697 = vadd.f32 %v10696, %v10634
    %v10698 = vadd.f32 %v10697, %v10635
    %v10699 = vadd.f32 %v10698, %v10636
    %v10700 = vadd.f32 %v10699, %v10637
    %v10701 = vadd.f32 %v10700, %v10638
    %v10702 = vadd.f32 %v10701, %v10639
    %v10703 = vadd.f32 %v10702, %v10640
    %v10704 = vadd.f32 %v10703, %v10641
    %v10705 = vadd.f32 %v10704, %v10642
    %v10706 = vadd.f32 %v10705, %v10643
    %v10707 = vadd.f32 %v10706, %v10644
    %v10708 = vadd.f32 %v10707, %v10645
    %v10709 = vadd.f32 %v10708, %v10646
    %v10710 = vrot.slane %v10709, 4
    %v10711 = vadd.f32 %v10709, %v10710
    %v10712 = vrot.slane %v10711, 2
    %v10713 = vadd.f32 %v10711, %v10712
    %v10714 = vrot.slane %v10713, 1
    %v10715 = vadd.f32 %v10713, %v10714
    %v10716 = vmul.f32 %v10715, 0.00390625
    %v10717 = vadd.f32 %v10647, %v10648
    %v10718 = vadd.f32 %v10717, %v10649
    %v10719 = vadd.f32 %v10718, %v10650
    %v10720 = vadd.f32 %v10719, %v10651
    %v10721 = vadd.f32 %v10720, %v10652
    %v10722 = vadd.f32 %v10721, %v10653
    %v10723 = vadd.f32 %v10722, %v10654
    %v10724 = vadd.f32 %v10723, %v10655
    %v10725 = vadd.f32 %v10724, %v10656
    %v10726 = vadd.f32 %v10725, %v10657
    %v10727 = vadd.f32 %v10726, %v10658
    %v10728 = vadd.f32 %v10727, %v10659
    %v10729 = vadd.f32 %v10728, %v10660
    %v10730 = vadd.f32 %v10729, %v10661
    %v10731 = vadd.f32 %v10730, %v10662
    %v10732 = vadd.f32 %v10731, %v10663
    %v10733 = vadd.f32 %v10732, %v10664
    %v10734 = vadd.f32 %v10733, %v10665
    %v10735 = vadd.f32 %v10734, %v10666
    %v10736 = vadd.f32 %v10735, %v10667
    %v10737 = vadd.f32 %v10736, %v10668
    %v10738 = vadd.f32 %v10737, %v10669
    %v10739 = vadd.f32 %v10738, %v10670
    %v10740 = vadd.f32 %v10739, %v10671
    %v10741 = vadd.f32 %v10740, %v10672
    %v10742 = vadd.f32 %v10741, %v10673
    %v10743 = vadd.f32 %v10742, %v10674
    %v10744 = vadd.f32 %v10743, %v10675
    %v10745 = vadd.f32 %v10744, %v10676
    %v10746 = vadd.f32 %v10745, %v10677
    %v10747 = vadd.f32 %v10746, %v10678
    %v10748 = vrot.slane %v10747, 4
    %v10749 = vadd.f32 %v10747, %v10748
    %v10750 = vrot.slane %v10749, 2
    %v10751 = vadd.f32 %v10749, %v10750
    %v10752 = vrot.slane %v10751, 1
    %v10753 = vadd.f32 %v10751, %v10752
    %v10754 = vmul.f32 %v10753, 0.00390625
    %vm10755 = vcmask 1040384
    %v10756 = vsel %vm10755, %v10716, %v10754
    %v10757 = vpack.c.bf16 %v10756, %v10756
    %v10758 = vld [vmem:[%s8] sm:$0xf]
    %v10759 = vld [vmem:[%s8 + $0x4] sm:$0xf]
    %v10760 = vld [vmem:[%s8 + $0x8] sm:$0xf]
    %v10761 = vld [vmem:[%s8 + $0xc] sm:$0xf]
    %v10762 = vld [vmem:[%s8 + $0x10] sm:$0xf]
    %v10763 = vld [vmem:[%s8 + $0x14] sm:$0xf]
    %v10764 = vld [vmem:[%s8 + $0x18] sm:$0xf]
    %v10765 = vld [vmem:[%s8 + $0x1c] sm:$0xf]
    %v10766 = vld [vmem:[%s8 + $0x20] sm:$0xf]
    %v10767 = vld [vmem:[%s8 + $0x24] sm:$0xf]
    %v10768 = vld [vmem:[%s8 + $0x28] sm:$0xf]
    %v10769 = vld [vmem:[%s8 + $0x2c] sm:$0xf]
    %v10770 = vld [vmem:[%s8 + $0x30] sm:$0xf]
    %v10771 = vld [vmem:[%s8 + $0x34] sm:$0xf]
    %v10772 = vld [vmem:[%s8 + $0x38] sm:$0xf]
    %v10773 = vld [vmem:[%s8 + $0x3c] sm:$0xf]
    %v10774 = vld [vmem:[%s9] sm:$0x1]
    %v10776 = vlaneseq
    %v10777 = vshrl.u32 %v10776, 7
    %v10778 = vsub.s32 0, %v10777
    %v10779 = vrot.slane %v10774, %v10778
    %v10797 = vunpack.c.l.b16 %v10758
    %v10798 = vunpack.c.l.b16 %v10759
    %v10799 = vunpack.c.l.b16 %v10760
    %v10800 = vunpack.c.l.b16 %v10761
    %v10801 = vunpack.c.l.b16 %v10762
    %v10802 = vunpack.c.l.b16 %v10763
    %v10803 = vunpack.c.l.b16 %v10764
    %v10804 = vunpack.c.l.b16 %v10765
    %v10805 = vunpack.c.l.b16 %v10766
    %v10806 = vunpack.c.l.b16 %v10767
    %v10807 = vunpack.c.l.b16 %v10768
    %v10808 = vunpack.c.l.b16 %v10769
    %v10809 = vunpack.c.l.b16 %v10770
    %v10810 = vunpack.c.l.b16 %v10771
    %v10811 = vunpack.c.l.b16 %v10772
    %v10812 = vunpack.c.l.b16 %v10773
    %v10813 = vpack.c.b16 %v10798, %v10797
    %v10814 = vpack.c.b16 %v10800, %v10799
    %v10815 = vpack.c.b16 %v10802, %v10801
    %v10816 = vpack.c.b16 %v10804, %v10803
    %v10817 = vpack.c.b16 %v10806, %v10805
    %v10818 = vpack.c.b16 %v10808, %v10807
    %v10819 = vpack.c.b16 %v10810, %v10809
    %v10820 = vpack.c.b16 %v10812, %v10811
    %10829 = vmatprep.subr.bf16.mxu0 0
    %10830 = vmatpush1.bf16.msra.mxu0 %v10820
    %10831 = vmatprep.subr.bf16.mxu0 0
    %10832 = vmatpush1.bf16.msra.mxu0 %v10819
    %10833 = vmatprep.subr.bf16.mxu0 0
    %10834 = vmatpush1.bf16.msra.mxu0 %v10818
    %10835 = vmatprep.subr.bf16.mxu0 0
    %10836 = vmatpush1.bf16.msra.mxu0 %v10817
    %10837 = vmatprep.subr.bf16.mxu0 0
    %10838 = vmatpush1.bf16.msra.mxu0 %v10816
    %10839 = vmatprep.subr.bf16.mxu0 0
    %10840 = vmatpush1.bf16.msra.mxu0 %v10815
    %10841 = vmatprep.subr.bf16.mxu0 0
    %10842 = vmatpush1.bf16.msra.mxu0 %v10814
    %10843 = vmatprep.subr.bf16.mxu0 0
    %10844 = vmatpush1.bf16.msra.mxu0 %v10813
    %10845 = vmatprep.subr.bf16.mxu0 0
    %10846 = vmatpush2.bf16.msra.mxu0 0
    %10847 = vmatprep.subr.bf16.mxu0 0
    %10848 = vmatpush2.bf16.msra.mxu0 0
    %10849 = vmatprep.subr.bf16.mxu0 0
    %10850 = vmatpush2.bf16.msra.mxu0 0
    %10851 = vmatprep.subr.bf16.mxu0 0
    %10852 = vmatpush2.bf16.msra.mxu0 0
    %10853 = vmatprep.subr.bf16.mxu0 0
    %10854 = vmatpush2.bf16.msra.mxu0 0
    %10855 = vmatprep.subr.bf16.mxu0 0
    %10856 = vmatpush2.bf16.msra.mxu0 0
    %10857 = vmatprep.subr.bf16.mxu0 0
    %10858 = vmatpush2.bf16.msra.mxu0 0
    %10859 = vmatprep.subr.bf16.mxu0 0
    %10860 = vmatpush2.bf16.msra.mxu0 0
    %10861 = vmatprep.mubr.bf16.mxu0 0
    %10862 = vmatmul.mubr.bf16.gmra.mxu0 %v10757
    %v10863 = vpop.f32.mrf.mxu0
    %v10864 = vadd.f32 %v10779, %v10863
    %v10865 = vpop.f32.mrf.mxu0
    %v10866 = vpop.f32.mrf.mxu0
    %v10867 = vpop.f32.mrf.mxu0
    %10868 = vdwg.mxu0
    %10869 = vst [vmem:[#allocation2] sm:$0x3] %v10864
    %v10870 = vlaneseq
    %v10871 = vand.u32 %v10870, 127
    %vm10872 = vcmp.lt.s32.totalorder %v10871, 8
    %v10873 = vld [vmem:[%s10] sm:$0x3]
    %10874 = vset.pattern.permute.xlu0 0
    %10875 = vperm.xlu0 %10874, %v10873
    %v10876 = vpop.permute.xlu0 %10875
    %vm10877 = vcmp.eq.s32.totalorder %v10871, %v10876
    %v10878 = vsel %vm10877, 1, 0
    %v10879 = vcvt.s32.f32 %v10878
    %v10880 = vsel %vm10872, %v10864, -1e+30
    %vm10881 = vcmask 1041408
    %v10882 = vsel %vm10881, %v10880, -inf
    %10883 = vmax.xlane.f32.xlu0 %v10882
    %v10884 = vpop.xlane.xlu0 %10883
    %v10885 = vsub.f32 %v10880, %v10884
    %v10886 = vmul.f32 %v10885, 1.442695
    %v10887 = vpow.pop %v10886
    %v10888 = vsel %vm10881, %v10887, 0.0
    %10889 = vadd.xlane.f32.xlu0 %v10888
    %v10890 = vpop.xlane.xlu0 %10889
    %v10891 = vlog2.pop %v10890
    %v10892 = vmul.f32 %v10891, 0.6931472
    %v10893 = vsub.f32 %v10885, %v10892
    %v10894 = vmul.f32 %v10879, 0.9
    %v10895 = vsel %vm10872, 1, 0
    %v10896 = vcvt.s32.f32 %v10895
    %v10897 = vmul.f32 %v10896, 0.0125
    %v10898 = vadd.f32 %v10894, %v10897
    %v10899 = vmul.f32 %v10898, %v10893
    %v10900 = vsel %vm10881, %v10899, 0.0
    %10901 = vadd.xlane.f32.xlu0 %v10900
    %v10902 = vpop.xlane.xlu0 %10901
    %v10903 = vsub.f32 0.0, %v10902
    %v10904 = vsel %vm10881, %v10903, 0.0
    %v10905 = vrot.slane %v10904, 4
    %v10906 = vadd.f32 %v10904, %v10905
    %v10907 = vrot.slane %v10906, 2
    %v10908 = vadd.f32 %v10906, %v10907
    %v10909 = vrot.slane %v10908, 1
    %v10910 = vadd.f32 %v10908, %v10909
    %v10911 = vrcp.pop 2.0
    %v10912 = vmul.f32 %v10910, %v10911
    %vm10913 = vcmask 0
    %10914 = vst.msk [vmem:[#allocation4] sm:$0x1] %vm10913, %v10912
    // Predicated region
    $region46: #{_forward_impl.1} parent=1 // pred_check
      _
    $region47: #{_forward_impl.1} parent=1 // pred_check_branch
      %10916 = sbr.rel (0) target = $region49
    $region48: #{_forward_impl.1} parent=1 // pred_region
      %s10918 = ssub.s32 32, 32
      %10919 = vsyncadd [#allocation3], %s10918
      %s10921 = sshll.u32 [#allocation2], 4
      %s10922 = int_to_ptr.vmem [resolvable:$true] %s10921
      %10924 = dma.vmem_to_hbm [thread:$0]  %s10922, 32, %s11, [#allocation3]
    $region49: #{_forward_impl.1} parent=1 // pred_fallthru
      _
    // Predicated region
    $region50: #{_forward_impl.1} parent=1 // pred_check
      _
    $region51: #{_forward_impl.1} parent=1 // pred_check_branch
      %10926 = sbr.rel (0) target = $region53
    $region52: #{_forward_impl.1} parent=1 // pred_region
      %s10928 = ssub.s32 16, 16
      %10929 = vsyncadd [#allocation5], %s10928
      %s10931 = sshll.u32 [#allocation4], 4
      %s10932 = int_to_ptr.vmem [resolvable:$true] %s10931
      %10934 = dma.vmem_to_hbm [thread:$0]  %s10932, 16, %s12, [#allocation5]
    $region53: #{_forward_impl.1} parent=1 // pred_fallthru
      _
    // Predicated region
    $region54: #{_forward_impl.1} parent=1 // pred_check
      _
    $region55: #{_forward_impl.1} parent=1 // pred_check_branch
      %10936 = sbr.rel (0) target = $region57
    $region56: #{_forward_impl.1} parent=1 // pred_region
      %10937 = dma.done [#allocation3], 32
    $region57: #{_forward_impl.1} parent=1 // pred_fallthru
      _
    // Predicated region
    $region58: #{_forward_impl.1} parent=1 // pred_check
      _
    $region59: #{_forward_impl.1} parent=1 // pred_check_branch
      %10939 = sbr.rel (0) target = $region61
    $region60: #{_forward_impl.1} parent=1 // pred_region
      %10940 = dma.done [#allocation5], 16
    $region61: #{_forward_impl.1} parent=1 // pred_fallthru
      _
    %10941 = vsyncpa [#allocation3], 1
    %10942 = vsyncpa [#allocation5], 1

</llo_original>
